<compile_context>
chip_gen: v7x
topology: tpu7x:2x2x1
jax: 0.10.0
libtpu: 0.0.40
codegen_flags: <defaults>
</compile_context>

<pallas_src>
import functools

import jax
import jax.numpy as jnp
from jax.experimental import pallas as pl
from jax.experimental.pallas import tpu as pltpu

IMG_DEPTH = 3
NGF = 32

_TM = 1024                       # max row tile per grid step
_VMEM_LIMIT = 32 * 1024 * 1024   # explicit scoped-VMEM cap


def _round_up(x, m):
    return ((x + m - 1) // m) * m


def _row_tile(m):
    """Large row tile, but small enough to give >= 2 grid steps (v7x 2 TCs)."""
    return max(16, min(_TM, _round_up(pl.cdiv(m, 2), 16)))


# ----------------------------------------------------------------------------
# Pallas kernels
# ----------------------------------------------------------------------------
def _gemm_kernel(a_ref, b_ref, bias_ref, o_ref, *, act, slope):
    """Tiled GEMM (bf16 operands, f32 accum): o = act(a @ b + bias)."""
    y = jnp.dot(a_ref[...], b_ref[...], preferred_element_type=jnp.float32)
    y = y + bias_ref[...]
    if act == "leaky":
        y = jnp.where(y >= 0.0, y, slope * y)
    elif act == "tanh":
        y = jnp.tanh(y)
    o_ref[...] = y.astype(o_ref.dtype)


def _conv_tap_kernel(x_hbm, w_ref, o_ref, xbuf, sem,
                     *, tap_offs, tm, win, n_inner, act):
    """Fused stride-1 conv on flattened rows.

    Double-buffered manual DMA of a row window + ONE stacked matmul with
    K = kh*kw*Cin (taps concatenated along the contraction dim).
    """
    o = pl.program_id(0)
    i = pl.program_id(1)
    row0 = pl.multiple_of((o * n_inner + i) * tm, 8)
    slot = i % 2

    # Prime slot 0 on the first inner step (runs once per outer step, so it is
    # safe when the outer axis is sharded across TensorCores).
    @pl.when(i == 0)
    def _():
        pltpu.make_async_copy(x_hbm.at[pl.ds(row0, win)], xbuf.at[0],
                              sem.at[0]).start()

    # Prefetch the next window into the other slot while we compute this one.
    @pl.when(i + 1 < n_inner)
    def _():
        nxt = pl.multiple_of(row0 + tm, 8)
        pltpu.make_async_copy(x_hbm.at[pl.ds(nxt, win)], xbuf.at[1 - slot],
                              sem.at[1 - slot]).start()

    # Wait for the current slot's window.
    pltpu.make_async_copy(x_hbm.at[pl.ds(row0, win)], xbuf.at[slot],
                          sem.at[slot]).wait()

    xw = xbuf[slot]                                   # (win, cinp) bf16
    stacked = jnp.concatenate([xw[off:off + tm, :] for off in tap_offs],
                              axis=1)                 # (tm, kh*kw*cinp)
    y = jnp.dot(stacked, w_ref[...], preferred_element_type=jnp.float32)
    if act == "leaky":
        y = jnp.where(y >= 0.0, y, 0.2 * y)
    elif act == "tanh":
        y = jnp.tanh(y)
    o_ref[...] = y.astype(o_ref.dtype)


def _inorm_kernel(x_ref, o_ref, *, eps, act, slope):
    """Instance norm on a (1, H*W, C) block: reduce over H*W, channels on lanes."""
    x = x_ref[...].astype(jnp.float32)
    mean = jnp.mean(x, axis=1, keepdims=True)
    var = jnp.mean(jnp.square(x - mean), axis=1, keepdims=True)
    y = (x - mean) * jax.lax.rsqrt(var + eps)
    if act == "leaky":
        y = jnp.where(y >= 0.0, y, slope * y)
    elif act == "relu":
        y = jnp.maximum(y, 0.0)
    o_ref[...] = y.astype(o_ref.dtype)


def _bn_fused_kernel(*refs, rows, eps, has_res):
    """Single-pass BatchNorm (+ optional residual) + ReLU, whole block in VMEM."""
    if has_res:
        x_ref, g_ref, b_ref, r_ref, o_ref = refs
    else:
        x_ref, g_ref, b_ref, o_ref = refs
    x = x_ref[...].astype(jnp.float32)
    inv_n = 1.0 / rows
    mean = jnp.sum(x, axis=0, keepdims=True) * inv_n          # zero pad rows OK
    ridx = jax.lax.broadcasted_iota(jnp.int32, x.shape, 0)
    d = jnp.where(ridx < rows, x - mean, 0.0)                 # mask pad rows
    var = jnp.sum(d * d, axis=0, keepdims=True) * inv_n       # centered, stable
    y = (x - mean) * jax.lax.rsqrt(var + eps) * g_ref[...] + b_ref[...]
    if has_res:
        y = y + r_ref[...].astype(jnp.float32)
    o_ref[...] = jnp.maximum(y, 0.0).astype(o_ref.dtype)


def _bn_stats_kernel(x_ref, o_ref, *, count, eps):
    """(Fallback) accumulate per-channel sum/sumsq over row tiles; finalize."""
    i = pl.program_id(0)

    @pl.when(i == 0)
    def _():
        o_ref[...] = jnp.zeros_like(o_ref)

    x = x_ref[...].astype(jnp.float32)
    part = jnp.concatenate(
        [jnp.sum(x, axis=0, keepdims=True),
         jnp.sum(x * x, axis=0, keepdims=True)], axis=0)
    o_ref[...] = o_ref[...] + part

    @pl.when(i == pl.num_programs(0) - 1)
    def _():
        s = o_ref[...]
        mean = s[0:1, :] / count
        var = jnp.maximum(s[1:2, :] / count - mean * mean, 0.0)
        o_ref[...] = jnp.concatenate([mean, jax.lax.rsqrt(var + eps)], axis=0)


def _bn_apply_kernel(*refs, has_res):
    """(Fallback) y = relu((x - mean) * invstd * gamma + beta [+ residual])."""
    if has_res:
        x_ref, s_ref, g_ref, b_ref, r_ref, o_ref = refs
    else:
        x_ref, s_ref, g_ref, b_ref, o_ref = refs
    x = x_ref[...].astype(jnp.float32)
    s = s_ref[...]
    y = (x - s[0:1, :]) * s[1:2, :] * g_ref[...] + b_ref[...]
    if has_res:
        y = y + r_ref[...].astype(jnp.float32)
    o_ref[...] = jnp.maximum(y, 0.0).astype(o_ref.dtype)


# ----------------------------------------------------------------------------
# Pallas wrappers
# ----------------------------------------------------------------------------
def gemm_bias_act(a, b, bias, *, act="none", slope=0.2, out_dtype=jnp.bfloat16):
    """act(a @ b + bias): bf16 MXU operands, f32 accum, lane-dense padded output."""
    M, K = a.shape
    _, ncols = b.shape
    npad = _round_up(ncols, 128)
    kpad = _round_up(K, 8)
    tm = _row_tile(M)
    mpad = _round_up(M, tm)

    a = jnp.pad(a.astype(jnp.bfloat16), ((0, mpad - M), (0, kpad - K)))
    b = jnp.pad(b.astype(jnp.bfloat16), ((0, kpad - K), (0, npad - ncols)))
    if bias is None:
        bias_row = jnp.zeros((1, npad), jnp.float32)
    else:
        bias_row = jnp.pad(bias.reshape(1, ncols).astype(jnp.float32),
                           ((0, 0), (0, npad - ncols)))

    y = pl.pallas_call(
        functools.partial(_gemm_kernel, act=act, slope=slope),
        out_shape=jax.ShapeDtypeStruct((mpad, npad), out_dtype),
        grid=(mpad // tm,),
        in_specs=[
            pl.BlockSpec((tm, kpad), lambda i: (i, 0)),
            pl.BlockSpec((kpad, npad), lambda i: (0, 0)),   # resident weights
            pl.BlockSpec((1, npad), lambda i: (0, 0)),      # resident bias
        ],
        out_specs=pl.BlockSpec((tm, npad), lambda i: (i, 0)),
        compiler_params=pltpu.CompilerParams(
            dimension_semantics=("parallel",),
            vmem_limit_bytes=_VMEM_LIMIT),
    )(a, b, bias_row)
    return y[:M, :ncols]


def conv2d_fused(x_nhwc, w_oihw, *, pad, act="none", out_dtype=jnp.bfloat16):
    """Stride-1 conv via flattened row-window DMA + one stacked-tap matmul."""
    cout, cin, kh, kw = w_oihw.shape
    pads = ((pad, pad), (pad, pad)) if isinstance(pad, int) else pad
    (pt, pb), (pleft, pright) = pads
    N, H, W, C = x_nhwc.shape
    assert C == cin
    Hp, Wp = H + pt + pb, W + pleft + pright
    Ho, Wo = Hp - kh + 1, Wp - kw + 1

    cinp = _round_up(cin, 128)         # lane-dense window / 128-aligned tap concat
    coutp = _round_up(cout, 128)

    xp = jnp.pad(x_nhwc.astype(jnp.bfloat16),
                 ((0, 0), (pt, pb), (pleft, pright), (0, cinp - cin)))
    xf = xp.reshape(N * Hp * Wp, cinp)

    # Flat-row offset of each tap relative to the output position.
    deltas = [(ki - pt) * Wp + (kj - pleft) for ki in range(kh) for kj in range(kw)]
    dmin, dmax = min(deltas), max(deltas)
    halo = dmax - dmin

    # NOTE: outputs are produced for all padded positions and sliced afterwards;
    # the waste is ~(H+2)(W+2)/(HW) and only matters at small spatial sizes.
    M = N * Hp * Wp
    tm = _row_tile(M)
    n_tiles = pl.cdiv(M, tm)
    n_outer = 2 if n_tiles >= 2 else 1          # "parallel" axis for v7x's 2 TCs
    n_inner = pl.cdiv(n_tiles, n_outer)         # "arbitrary" axis (double buffer)
    mpad = n_outer * n_inner * tm

    win = _round_up(tm + halo, 16)              # DMA window rows per grid step
    guard_lo = -dmin
    guard_hi = win - tm - guard_lo
    xf = jnp.pad(xf, ((guard_lo, (mpad - M) + guard_hi), (0, 0)))

    K = kh * kw * cinp
    w_taps = jnp.transpose(w_oihw, (2, 3, 1, 0)).reshape(kh * kw, cin, cout)
    w_taps = jnp.pad(w_taps, ((0, 0), (0, cinp - cin), (0, coutp - cout)))
    w_mat = w_taps.reshape(K, coutp).astype(jnp.bfloat16)

    kernel = functools.partial(
        _conv_tap_kernel,
        tap_offs=tuple(d - dmin for d in deltas),
        tm=tm, win=win, n_inner=n_inner, act=act)

    y = pl.pallas_call(
        kernel,
        out_shape=jax.ShapeDtypeStruct((mpad, coutp), out_dtype),
        grid=(n_outer, n_inner),
        in_specs=[
            pl.BlockSpec(memory_space=pl.ANY),                 # raw HBM rows
            pl.BlockSpec((K, coutp), lambda o, i: (0, 0)),     # resident weights
        ],
        out_specs=pl.BlockSpec((tm, coutp),
                               lambda o, i: (o * n_inner + i, 0)),
        scratch_shapes=[
            pltpu.VMEM((2, win, cinp), jnp.bfloat16),          # double buffer
            pltpu.SemaphoreType.DMA((2,)),
        ],
        compiler_params=pltpu.CompilerParams(
            dimension_semantics=("parallel", "arbitrary"),
            vmem_limit_bytes=_VMEM_LIMIT),
    )(xf, w_mat)

    y = y[:M, :cout].reshape(N, Hp, Wp, cout)
    return y[:, pt:pt + Ho, pleft:pleft + Wo, :]


def instance_norm_act(x_nhwc, *, act, slope=0.2, eps=1e-5):
    # TODO(synk): add a tiled (two-pass) fallback for very large H*W per image.
    N, H, W, C = x_nhwc.shape
    x3 = x_nhwc.reshape(N, H * W, C).astype(jnp.bfloat16)
    y = pl.pallas_call(
        functools.partial(_inorm_kernel, eps=eps, act=act, slope=slope),
        out_shape=jax.ShapeDtypeStruct(x3.shape, jnp.bfloat16),
        grid=(N,),
        in_specs=[pl.BlockSpec((1, H * W, C), lambda i: (i, 0, 0))],
        out_specs=pl.BlockSpec((1, H * W, C), lambda i: (i, 0, 0)),
        compiler_params=pltpu.CompilerParams(
            dimension_semantics=("parallel",),
            vmem_limit_bytes=_VMEM_LIMIT),
    )(x3)
    return y.reshape(N, H, W, C)


def batch_norm_relu(x_nhwc, gamma, beta, residual=None, eps=1e-5):
    """Training-mode BatchNorm (+ optional residual) + ReLU."""
    N, H, W, C = x_nhwc.shape
    R = N * H * W
    rpad = _round_up(R, 16)
    x2 = jnp.pad(x_nhwc.reshape(R, C).astype(jnp.bfloat16), ((0, rpad - R), (0, 0)))
    g = gamma.reshape(1, C).astype(jnp.float32)
    b = beta.reshape(1, C).astype(jnp.float32)
    has_res = residual is not None
    r2 = None
    if has_res:
        r2 = jnp.pad(residual.reshape(R, C).astype(jnp.bfloat16),
                     ((0, rpad - R), (0, 0)))

    # Fused single pass when the whole activation fits comfortably in VMEM.
    if rpad * C * 4 * 8 <= _VMEM_LIMIT // 2:
        ins = [x2, g, b] + ([r2] if has_res else [])
        in_specs = [pl.BlockSpec((rpad, C), lambda i: (0, 0)),
                    pl.BlockSpec((1, C), lambda i: (0, 0)),
                    pl.BlockSpec((1, C), lambda i: (0, 0))]
        if has_res:
            in_specs.append(pl.BlockSpec((rpad, C), lambda i: (0, 0)))
        y = pl.pallas_call(
            functools.partial(_bn_fused_kernel, rows=R, eps=eps, has_res=has_res),
            out_shape=jax.ShapeDtypeStruct((rpad, C), jnp.bfloat16),
            grid=(1,),
            in_specs=in_specs,
            out_specs=pl.BlockSpec((rpad, C), lambda i: (0, 0)),
            compiler_params=pltpu.CompilerParams(
                dimension_semantics=("arbitrary",),
                vmem_limit_bytes=_VMEM_LIMIT),
        )(*ins)
        return y[:R].reshape(N, H, W, C)

    # Fallback: two-pass tiled scheme for large activations.
    tr = _row_tile(R)
    rpad = _round_up(R, tr)
    x2 = jnp.pad(x_nhwc.reshape(R, C).astype(jnp.bfloat16), ((0, rpad - R), (0, 0)))
    stats = pl.pallas_call(
        functools.partial(_bn_stats_kernel, count=float(R), eps=eps),
        out_shape=jax.ShapeDtypeStruct((2, C), jnp.float32),
        grid=(rpad // tr,),
        in_specs=[pl.BlockSpec((tr, C), lambda i: (i, 0))],
        out_specs=pl.BlockSpec((2, C), lambda i: (0, 0)),
        compiler_params=pltpu.CompilerParams(
            dimension_semantics=("arbitrary",),
            vmem_limit_bytes=_VMEM_LIMIT),
    )(x2)
    ins = [x2, stats, g, b]
    in_specs = [pl.BlockSpec((tr, C), lambda i: (i, 0)),
                pl.BlockSpec((2, C), lambda i: (0, 0)),
                pl.BlockSpec((1, C), lambda i: (0, 0)),
                pl.BlockSpec((1, C), lambda i: (0, 0))]
    if has_res:
        r2 = jnp.pad(residual.reshape(R, C).astype(jnp.bfloat16),
                     ((0, rpad - R), (0, 0)))
        ins.append(r2)
        in_specs.append(pl.BlockSpec((tr, C), lambda i: (i, 0)))
    y = pl.pallas_call(
        functools.partial(_bn_apply_kernel, has_res=has_res),
        out_shape=jax.ShapeDtypeStruct((rpad, C), jnp.bfloat16),
        grid=(rpad // tr,),
        in_specs=in_specs,
        out_specs=pl.BlockSpec((tr, C), lambda i: (i, 0)),
        compiler_params=pltpu.CompilerParams(
            dimension_semantics=("parallel",),
            vmem_limit_bytes=_VMEM_LIMIT),
    )(*ins)
    return y[:R].reshape(N, H, W, C)


# ----------------------------------------------------------------------------
# Convolution front-ends
# ----------------------------------------------------------------------------
def _extract_patches(x_nhwc, kh, kw, stride, pad):
    x = jnp.pad(x_nhwc, ((0, 0), (pad, pad), (pad, pad), (0, 0)))
    N, H, W, C = x.shape
    oh = (H - kh) // stride + 1
    ow = (W - kw) // stride + 1
    cols = []
    for i in range(kh):
        for j in range(kw):
            cols.append(x[:, i:i + stride * oh:stride, j:j + stride * ow:stride, :])
    patches = jnp.concatenate(cols, axis=-1)              # (N, oh, ow, kh*kw*C)
    return patches.reshape(N * oh * ow, kh * kw * C), (N, oh, ow)


def conv2d_im2col(x_nhwc, w_oihw, bias, *, stride, pad, act="none", slope=0.2):
    # TODO(synk): the stride-2 encoder convs (e2/e3) and the 3-channel stem still
    # use im2col + GEMM; a strided tap kernel would remove the patch-matrix HBM blowup.
    cout, cin, kh, kw = w_oihw.shape
    patches, (N, oh, ow) = _extract_patches(
        x_nhwc.astype(jnp.bfloat16), kh, kw, stride, pad)
    w_mat = jnp.transpose(w_oihw, (2, 3, 1, 0)).reshape(kh * kw * cin, cout)
    y = gemm_bias_act(patches, w_mat, bias, act=act, slope=slope)
    return y.reshape(N, oh, ow, cout)


def conv_transpose2d_s2(x_nhwc, w_iohw):
    """ConvTranspose2d(k=4, s=2, p=1) as ONE fused 2x2 stride-1 conv (4*cout chans)."""
    cin, cout, kh, kw = w_iohw.shape
    assert kh == 4 and kw == 4
    N, H, W, _ = x_nhwc.shape
    taps = {0: (3, 1), 1: (2, 0)}            # sub-kernel taps per output parity
    subs = []
    for a in (0, 1):
        ri = jnp.array(taps[a])
        for b in (0, 1):
            ci = jnp.array(taps[b])
            w_sub = w_iohw[:, :, ri, :][:, :, :, ci]        # (cin, cout, 2, 2)
            subs.append(jnp.transpose(w_sub, (1, 0, 2, 3))) # (cout, cin, 2, 2)
    w_fused = jnp.concatenate(subs, axis=0)                 # (4*cout, cin, 2, 2)

    y = conv2d_fused(x_nhwc, w_fused, pad=1)                # (N, H+1, W+1, 4*cout)

    # Parity (a, b) output lives at spatial offset (a, b) and channel group 2a+b.
    rows = []
    for a in (0, 1):
        cols = []
        for b in (0, 1):
            idx = 2 * a + b
            cols.append(y[:, a:a + H, b:b + W, idx * cout:(idx + 1) * cout])
        rows.append(jnp.stack(cols, axis=3))                # (N, H, W, 2, cout)
    z = jnp.stack(rows, axis=2)                             # (N, H, 2, W, 2, cout)
    return z.reshape(N, 2 * H, 2 * W, cout)


# ----------------------------------------------------------------------------
# Parameters (deterministic synthetic init)
# ----------------------------------------------------------------------------
def init_params(key):
    keys = iter(jax.random.split(key, 64))

    def conv_w(shape):          # (out, in, kh, kw)
        fan_in = shape[1] * shape[2] * shape[3]
        return jax.random.normal(next(keys), shape, jnp.float32) / jnp.sqrt(fan_in)

    def deconv_w(shape):        # (in, out, kh, kw)
        fan_in = shape[0] * shape[2] * shape[3]
        return jax.random.normal(next(keys), shape, jnp.float32) / jnp.sqrt(fan_in)

    params = {
        "e1_w": conv_w((NGF, IMG_DEPTH, 7, 7)),
        "e1_b": 0.01 * jax.random.normal(next(keys), (NGF,), jnp.float32),
        "e2_w": conv_w((NGF * 2, NGF, 4, 4)),
        "e3_w": conv_w((NGF * 4, NGF * 2, 4, 4)),
        "blocks": [],
        "d1_w": deconv_w((NGF * 4, NGF * 2, 4, 4)),
        "d2_w": deconv_w((NGF * 2, NGF, 4, 4)),
        "d3_w": conv_w((IMG_DEPTH, NGF, 3, 3)),
    }
    dim = NGF * 4
    for _ in range(6):
        params["blocks"].append({
            "w1": conv_w((dim, dim, 3, 3)),
            "g1": jnp.ones((dim,), jnp.float32),   # BatchNorm default affine
            "b1": jnp.zeros((dim,), jnp.float32),
            "w2": conv_w((dim, dim, 3, 3)),
            "g2": jnp.ones((dim,), jnp.float32),
            "b2": jnp.zeros((dim,), jnp.float32),
        })
    return params


# ----------------------------------------------------------------------------
# Generator forward
# ----------------------------------------------------------------------------
def generator_forward(params, x_nchw):
    x = jnp.transpose(x_nchw, (0, 2, 3, 1)).astype(jnp.float32)   # NCHW -> NHWC

    # encode
    x = conv2d_im2col(x, params["e1_w"], params["e1_b"], stride=1, pad=3, act="leaky")
    x = conv2d_im2col(x, params["e2_w"], None, stride=2, pad=1)
    x = instance_norm_act(x, act="leaky")
    x = conv2d_im2col(x, params["e3_w"], None, stride=2, pad=1)
    x = instance_norm_act(x, act="leaky")

    # transform: 6 residual blocks (conv-BN-ReLU-conv-BN, then relu(F(x)+x))
    for blk in params["blocks"]:
        skip = x
        h = conv2d_fused(x, blk["w1"], pad=1)
        h = batch_norm_relu(h, blk["g1"], blk["b1"])
        h = conv2d_fused(h, blk["w2"], pad=1)
        x = batch_norm_relu(h, blk["g2"], blk["b2"], residual=skip)

    # decode
    x = conv_transpose2d_s2(x, params["d1_w"])
    x = instance_norm_act(x, act="relu")
    x = conv_transpose2d_s2(x, params["d2_w"])
    x = instance_norm_act(x, act="relu")
    x = conv2d_fused(x, params["d3_w"], pad=1, act="tanh", out_dtype=jnp.float32)

    return jnp.transpose(x, (0, 3, 1, 2))                         # NHWC -> NCHW


# ----------------------------------------------------------------------------
if __name__ == "__main__":
    key = jax.random.PRNGKey(0)
    pkey, xkey = jax.random.split(key)
    params = init_params(pkey)

    # small input consistent with the module: NCHW, 3 channels
    x = jax.random.normal(xkey, (2, IMG_DEPTH, 16, 16), jnp.float32)

    fwd = jax.jit(generator_forward)
    out = fwd(params, x)
    out = jax.block_until_ready(out)

    assert out.shape == (2, IMG_DEPTH, 16, 16)
    assert out.dtype == jnp.float32
    assert bool(jnp.all(jnp.isfinite(out)))
    assert bool(jnp.all(jnp.abs(out) <= 1.0))   # tanh output range
    print("KERNEL_OK")
</pallas_src>

<mosaic_0001>
module attributes {stable_mosaic.version = 11 : i64} {
  func.func @_gemm_kernel(%arg0: i32, %arg1: memref<256x152xbf16, #tpu.memory_space<vmem>>, %arg2: memref<152x128xbf16, #tpu.memory_space<vmem>>, %arg3: memref<1x128xf32, #tpu.memory_space<vmem>>, %arg4: memref<256x128xbf16, #tpu.memory_space<vmem>>) attributes {dimension_semantics = [#tpu.dimension_semantics<parallel>], iteration_bounds = array<i64: 2>, scalar_prefetch = 0 : i64, scratch_operands = 0 : i64, tpu.core_type = #tpu.core_type<tc>, window_params = [{transform_indices = @transform_0, window_bounds = array<i64: 256, 152>}, {pipeline_mode = #tpu.pipeline_mode<synchronous>, transform_indices = @transform_1, window_bounds = array<i64: 152, 128>}, {pipeline_mode = #tpu.pipeline_mode<synchronous>, transform_indices = @transform_2, window_bounds = array<i64: 1, 128>}, {transform_indices = @transform_3, window_bounds = array<i64: 256, 128>}]} {
    %c0 = arith.constant 0 : index
    %c0_0 = arith.constant 0 : index
    %0 = vector.load %arg1[%c0, %c0_0] : memref<256x152xbf16, #tpu.memory_space<vmem>>, vector<256x152xbf16>
    %c0_1 = arith.constant 0 : index
    %c0_2 = arith.constant 0 : index
    %1 = vector.load %arg2[%c0_1, %c0_2] : memref<152x128xbf16, #tpu.memory_space<vmem>>, vector<152x128xbf16>
    %cst = arith.constant dense<0.000000e+00> : vector<256x128xf32>
    %2 = tpu.matmul %0, %1, %cst {dimension_numbers = #tpu.dot_dimension_numbers<[1], [0], [0], [1], [0, 0, 1, 1], [], []>} : vector<256x152xbf16>, vector<152x128xbf16>, vector<256x128xf32> -> vector<256x128xf32>
    %c0_3 = arith.constant 0 : index
    %c0_4 = arith.constant 0 : index
    %3 = vector.load %arg3[%c0_3, %c0_4] : memref<1x128xf32, #tpu.memory_space<vmem>>, vector<1x128xf32>
    %4 = vector.broadcast %3 : vector<1x128xf32> to vector<256x128xf32>
    %5 = arith.addf %2, %4 : vector<256x128xf32>
    %cst_5 = arith.constant 0.000000e+00 : f32
    %6 = vector.broadcast %cst_5 : f32 to vector<256x128xf32>
    %7 = arith.cmpf oge, %5, %6 : vector<256x128xf32>
    %cst_6 = arith.constant 2.000000e-01 : f32
    %8 = vector.broadcast %cst_6 : f32 to vector<256x128xf32>
    %9 = arith.mulf %8, %5 : vector<256x128xf32>
    %10 = arith.select %7, %5, %9 : vector<256x128xi1>, vector<256x128xf32>
    %11 = arith.truncf %10 : vector<256x128xf32> to vector<256x128xbf16>
    %c0_7 = arith.constant 0 : index
    %c0_8 = arith.constant 0 : index
    %12 = vector.load %arg4[%c0_7, %c0_8] : memref<256x128xbf16, #tpu.memory_space<vmem>>, vector<256x128xbf16>
    tpu.vector_store %arg4[%c0_7, %c0_8], %11 {strides = array<i32>} : memref<256x128xbf16, #tpu.memory_space<vmem>>, vector<256x128xbf16>,
    return
  }
  func.func @transform_0(%arg0: i32) -> (i32, i32) {
    %c0_i32 = arith.constant 0 : i32
    %c0_i32_0 = arith.constant 0 : i32
    return %arg0, %c0_i32 : i32, i32
  }
  func.func @transform_1(%arg0: i32) -> (i32, i32) {
    %c0_i32 = arith.constant 0 : i32
    %c0_i32_0 = arith.constant 0 : i32
    %c0_i32_1 = arith.constant 0 : i32
    return %c0_i32, %c0_i32_0 : i32, i32
  }
  func.func @transform_2(%arg0: i32) -> (i32, i32) {
    %c0_i32 = arith.constant 0 : i32
    %c0_i32_0 = arith.constant 0 : i32
    %c0_i32_1 = arith.constant 0 : i32
    return %c0_i32, %c0_i32_0 : i32, i32
  }
  func.func @transform_3(%arg0: i32) -> (i32, i32) {
    %c0_i32 = arith.constant 0 : i32
    %c0_i32_0 = arith.constant 0 : i32
    return %arg0, %c0_i32 : i32, i32
  }
}

module attributes {stable_mosaic.version = 11 : i64} {
  func.func @_gemm_kernel(%arg0: i32, %arg1: memref<64x512xbf16, #tpu.memory_space<vmem>>, %arg2: memref<512x128xbf16, #tpu.memory_space<vmem>>, %arg3: memref<1x128xf32, #tpu.memory_space<vmem>>, %arg4: memref<64x128xbf16, #tpu.memory_space<vmem>>) attributes {dimension_semantics = [#tpu.dimension_semantics<parallel>], iteration_bounds = array<i64: 2>, scalar_prefetch = 0 : i64, scratch_operands = 0 : i64, tpu.core_type = #tpu.core_type<tc>, window_params = [{transform_indices = @transform_0, window_bounds = array<i64: 64, 512>}, {pipeline_mode = #tpu.pipeline_mode<synchronous>, transform_indices = @transform_1, window_bounds = array<i64: 512, 128>}, {pipeline_mode = #tpu.pipeline_mode<synchronous>, transform_indices = @transform_2, window_bounds = array<i64: 1, 128>}, {transform_indices = @transform_3, window_bounds = array<i64: 64, 128>}]} {
    %c0 = arith.constant 0 : index
    %c0_0 = arith.constant 0 : index
    %0 = vector.load %arg1[%c0, %c0_0] : memref<64x512xbf16, #tpu.memory_space<vmem>>, vector<64x512xbf16>
    %c0_1 = arith.constant 0 : index
    %c0_2 = arith.constant 0 : index
    %1 = vector.load %arg2[%c0_1, %c0_2] : memref<512x128xbf16, #tpu.memory_space<vmem>>, vector<512x128xbf16>
    %cst = arith.constant dense<0.000000e+00> : vector<64x128xf32>
    %2 = tpu.matmul %0, %1, %cst {dimension_numbers = #tpu.dot_dimension_numbers<[1], [0], [0], [1], [0, 0, 1, 1], [], []>} : vector<64x512xbf16>, vector<512x128xbf16>, vector<64x128xf32> -> vector<64x128xf32>
    %c0_3 = arith.constant 0 : index
    %c0_4 = arith.constant 0 : index
    %3 = vector.load %arg3[%c0_3, %c0_4] : memref<1x128xf32, #tpu.memory_space<vmem>>, vector<1x128xf32>
    %4 = vector.broadcast %3 : vector<1x128xf32> to vector<64x128xf32>
    %5 = arith.addf %2, %4 : vector<64x128xf32>
    %6 = arith.truncf %5 : vector<64x128xf32> to vector<64x128xbf16>
    %c0_5 = arith.constant 0 : index
    %c0_6 = arith.constant 0 : index
    %7 = vector.load %arg4[%c0_5, %c0_6] : memref<64x128xbf16, #tpu.memory_space<vmem>>, vector<64x128xbf16>
    tpu.vector_store %arg4[%c0_5, %c0_6], %6 {strides = array<i32>} : memref<64x128xbf16, #tpu.memory_space<vmem>>, vector<64x128xbf16>,
    return
  }
  func.func @transform_0(%arg0: i32) -> (i32, i32) {
    %c0_i32 = arith.constant 0 : i32
    %c0_i32_0 = arith.constant 0 : i32
    return %arg0, %c0_i32 : i32, i32
  }
  func.func @transform_1(%arg0: i32) -> (i32, i32) {
    %c0_i32 = arith.constant 0 : i32
    %c0_i32_0 = arith.constant 0 : i32
    %c0_i32_1 = arith.constant 0 : i32
    return %c0_i32, %c0_i32_0 : i32, i32
  }
  func.func @transform_2(%arg0: i32) -> (i32, i32) {
    %c0_i32 = arith.constant 0 : i32
    %c0_i32_0 = arith.constant 0 : i32
    %c0_i32_1 = arith.constant 0 : i32
    return %c0_i32, %c0_i32_0 : i32, i32
  }
  func.func @transform_3(%arg0: i32) -> (i32, i32) {
    %c0_i32 = arith.constant 0 : i32
    %c0_i32_0 = arith.constant 0 : i32
    return %arg0, %c0_i32 : i32, i32
  }
}

module attributes {stable_mosaic.version = 11 : i64} {
  func.func @_inorm_kernel(%arg0: i32, %arg1: memref<1x64x64xbf16, #tpu.memory_space<vmem>>, %arg2: memref<1x64x64xbf16, #tpu.memory_space<vmem>>) attributes {dimension_semantics = [#tpu.dimension_semantics<parallel>], iteration_bounds = array<i64: 2>, scalar_prefetch = 0 : i64, scratch_operands = 0 : i64, tpu.core_type = #tpu.core_type<tc>, window_params = [{transform_indices = @transform_0, window_bounds = array<i64: 1, 64, 64>}, {transform_indices = @transform_1, window_bounds = array<i64: 1, 64, 64>}]} {
    %c0 = arith.constant 0 : index
    %c0_0 = arith.constant 0 : index
    %c0_1 = arith.constant 0 : index
    %0 = vector.load %arg1[%c0, %c0_0, %c0_1] : memref<1x64x64xbf16, #tpu.memory_space<vmem>>, vector<1x64x64xbf16>
    %1 = arith.extf %0 : vector<1x64x64xbf16> to vector<1x64x64xf32>
    %cst = arith.constant dense<0.000000e+00> : vector<1x64xf32>
    %2 = vector.multi_reduction <add>, %1, %cst [1] : vector<1x64x64xf32> to vector<1x64xf32>
    %3 = vector.shape_cast %2 : vector<1x64xf32> to vector<1x1x64xf32>
    %cst_2 = arith.constant 6.400000e+01 : f32
    %4 = vector.broadcast %cst_2 : f32 to vector<1x1x64xf32>
    %5 = arith.divf %3, %4 : vector<1x1x64xf32>
    %6 = vector.broadcast %5 : vector<1x1x64xf32> to vector<1x64x64xf32>
    %7 = arith.subf %1, %6 : vector<1x64x64xf32>
    %8 = arith.mulf %7, %7 : vector<1x64x64xf32>
    %cst_3 = arith.constant dense<0.000000e+00> : vector<1x64xf32>
    %9 = vector.multi_reduction <add>, %8, %cst_3 [1] : vector<1x64x64xf32> to vector<1x64xf32>
    %10 = vector.shape_cast %9 : vector<1x64xf32> to vector<1x1x64xf32>
    %cst_4 = arith.constant 6.400000e+01 : f32
    %11 = vector.broadcast %cst_4 : f32 to vector<1x1x64xf32>
    %12 = arith.divf %10, %11 : vector<1x1x64xf32>
    %13 = vector.broadcast %5 : vector<1x1x64xf32> to vector<1x64x64xf32>
    %14 = arith.subf %1, %13 : vector<1x64x64xf32>
    %cst_5 = arith.constant 9.99999974E-6 : f32
    %15 = vector.broadcast %cst_5 : f32 to vector<1x1x64xf32>
    %16 = arith.addf %12, %15 : vector<1x1x64xf32>
    %17 = math.rsqrt %16 : vector<1x1x64xf32>
    %18 = vector.broadcast %17 : vector<1x1x64xf32> to vector<1x64x64xf32>
    %19 = arith.mulf %14, %18 : vector<1x64x64xf32>
    %cst_6 = arith.constant 0.000000e+00 : f32
    %20 = vector.broadcast %cst_6 : f32 to vector<1x64x64xf32>
    %21 = arith.cmpf oge, %19, %20 : vector<1x64x64xf32>
    %cst_7 = arith.constant 2.000000e-01 : f32
    %22 = vector.broadcast %cst_7 : f32 to vector<1x64x64xf32>
    %23 = arith.mulf %22, %19 : vector<1x64x64xf32>
    %24 = arith.select %21, %19, %23 : vector<1x64x64xi1>, vector<1x64x64xf32>
    %25 = arith.truncf %24 : vector<1x64x64xf32> to vector<1x64x64xbf16>
    %c0_8 = arith.constant 0 : index
    %c0_9 = arith.constant 0 : index
    %c0_10 = arith.constant 0 : index
    %26 = vector.load %arg2[%c0_8, %c0_9, %c0_10] : memref<1x64x64xbf16, #tpu.memory_space<vmem>>, vector<1x64x64xbf16>
    tpu.vector_store %arg2[%c0_8, %c0_9, %c0_10], %25 {strides = array<i32>} : memref<1x64x64xbf16, #tpu.memory_space<vmem>>, vector<1x64x64xbf16>,
    return
  }
  func.func @transform_0(%arg0: i32) -> (i32, i32, i32) {
    %c0_i32 = arith.constant 0 : i32
    %c0_i32_0 = arith.constant 0 : i32
    %c0_i32_1 = arith.constant 0 : i32
    return %arg0, %c0_i32, %c0_i32_0 : i32, i32, i32
  }
  func.func @transform_1(%arg0: i32) -> (i32, i32, i32) {
    %c0_i32 = arith.constant 0 : i32
    %c0_i32_0 = arith.constant 0 : i32
    %c0_i32_1 = arith.constant 0 : i32
    return %arg0, %c0_i32, %c0_i32_0 : i32, i32, i32
  }
}

module attributes {stable_mosaic.version = 11 : i64} {
  func.func @_gemm_kernel(%arg0: i32, %arg1: memref<16x1024xbf16, #tpu.memory_space<vmem>>, %arg2: memref<1024x128xbf16, #tpu.memory_space<vmem>>, %arg3: memref<1x128xf32, #tpu.memory_space<vmem>>, %arg4: memref<16x128xbf16, #tpu.memory_space<vmem>>) attributes {dimension_semantics = [#tpu.dimension_semantics<parallel>], iteration_bounds = array<i64: 2>, scalar_prefetch = 0 : i64, scratch_operands = 0 : i64, tpu.core_type = #tpu.core_type<tc>, window_params = [{transform_indices = @transform_0, window_bounds = array<i64: 16, 1024>}, {pipeline_mode = #tpu.pipeline_mode<synchronous>, transform_indices = @transform_1, window_bounds = array<i64: 1024, 128>}, {pipeline_mode = #tpu.pipeline_mode<synchronous>, transform_indices = @transform_2, window_bounds = array<i64: 1, 128>}, {transform_indices = @transform_3, window_bounds = array<i64: 16, 128>}]} {
    %c0 = arith.constant 0 : index
    %c0_0 = arith.constant 0 : index
    %0 = vector.load %arg1[%c0, %c0_0] : memref<16x1024xbf16, #tpu.memory_space<vmem>>, vector<16x1024xbf16>
    %c0_1 = arith.constant 0 : index
    %c0_2 = arith.constant 0 : index
    %1 = vector.load %arg2[%c0_1, %c0_2] : memref<1024x128xbf16, #tpu.memory_space<vmem>>, vector<1024x128xbf16>
    %cst = arith.constant dense<0.000000e+00> : vector<16x128xf32>
    %2 = tpu.matmul %0, %1, %cst {dimension_numbers = #tpu.dot_dimension_numbers<[1], [0], [0], [1], [0, 0, 1, 1], [], []>} : vector<16x1024xbf16>, vector<1024x128xbf16>, vector<16x128xf32> -> vector<16x128xf32>
    %c0_3 = arith.constant 0 : index
    %c0_4 = arith.constant 0 : index
    %3 = vector.load %arg3[%c0_3, %c0_4] : memref<1x128xf32, #tpu.memory_space<vmem>>, vector<1x128xf32>
    %4 = vector.broadcast %3 : vector<1x128xf32> to vector<16x128xf32>
    %5 = arith.addf %2, %4 : vector<16x128xf32>
    %6 = arith.truncf %5 : vector<16x128xf32> to vector<16x128xbf16>
    %c0_5 = arith.constant 0 : index
    %c0_6 = arith.constant 0 : index
    %7 = vector.load %arg4[%c0_5, %c0_6] : memref<16x128xbf16, #tpu.memory_space<vmem>>, vector<16x128xbf16>
    tpu.vector_store %arg4[%c0_5, %c0_6], %6 {strides = array<i32>} : memref<16x128xbf16, #tpu.memory_space<vmem>>, vector<16x128xbf16>,
    return
  }
  func.func @transform_0(%arg0: i32) -> (i32, i32) {
    %c0_i32 = arith.constant 0 : i32
    %c0_i32_0 = arith.constant 0 : i32
    return %arg0, %c0_i32 : i32, i32
  }
  func.func @transform_1(%arg0: i32) -> (i32, i32) {
    %c0_i32 = arith.constant 0 : i32
    %c0_i32_0 = arith.constant 0 : i32
    %c0_i32_1 = arith.constant 0 : i32
    return %c0_i32, %c0_i32_0 : i32, i32
  }
  func.func @transform_2(%arg0: i32) -> (i32, i32) {
    %c0_i32 = arith.constant 0 : i32
    %c0_i32_0 = arith.constant 0 : i32
    %c0_i32_1 = arith.constant 0 : i32
    return %c0_i32, %c0_i32_0 : i32, i32
  }
  func.func @transform_3(%arg0: i32) -> (i32, i32) {
    %c0_i32 = arith.constant 0 : i32
    %c0_i32_0 = arith.constant 0 : i32
    return %arg0, %c0_i32 : i32, i32
  }
}

module attributes {stable_mosaic.version = 11 : i64} {
  func.func @_inorm_kernel(%arg0: i32, %arg1: memref<1x16x128xbf16, #tpu.memory_space<vmem>>, %arg2: memref<1x16x128xbf16, #tpu.memory_space<vmem>>) attributes {dimension_semantics = [#tpu.dimension_semantics<parallel>], iteration_bounds = array<i64: 2>, scalar_prefetch = 0 : i64, scratch_operands = 0 : i64, tpu.core_type = #tpu.core_type<tc>, window_params = [{transform_indices = @transform_0, window_bounds = array<i64: 1, 16, 128>}, {transform_indices = @transform_1, window_bounds = array<i64: 1, 16, 128>}]} {
    %c0 = arith.constant 0 : index
    %c0_0 = arith.constant 0 : index
    %c0_1 = arith.constant 0 : index
    %0 = vector.load %arg1[%c0, %c0_0, %c0_1] : memref<1x16x128xbf16, #tpu.memory_space<vmem>>, vector<1x16x128xbf16>
    %1 = arith.extf %0 : vector<1x16x128xbf16> to vector<1x16x128xf32>
    %cst = arith.constant dense<0.000000e+00> : vector<1x128xf32>
    %2 = vector.multi_reduction <add>, %1, %cst [1] : vector<1x16x128xf32> to vector<1x128xf32>
    %3 = vector.shape_cast %2 : vector<1x128xf32> to vector<1x1x128xf32>
    %cst_2 = arith.constant 1.600000e+01 : f32
    %4 = vector.broadcast %cst_2 : f32 to vector<1x1x128xf32>
    %5 = arith.divf %3, %4 : vector<1x1x128xf32>
    %6 = vector.broadcast %5 : vector<1x1x128xf32> to vector<1x16x128xf32>
    %7 = arith.subf %1, %6 : vector<1x16x128xf32>
    %8 = arith.mulf %7, %7 : vector<1x16x128xf32>
    %cst_3 = arith.constant dense<0.000000e+00> : vector<1x128xf32>
    %9 = vector.multi_reduction <add>, %8, %cst_3 [1] : vector<1x16x128xf32> to vector<1x128xf32>
    %10 = vector.shape_cast %9 : vector<1x128xf32> to vector<1x1x128xf32>
    %cst_4 = arith.constant 1.600000e+01 : f32
    %11 = vector.broadcast %cst_4 : f32 to vector<1x1x128xf32>
    %12 = arith.divf %10, %11 : vector<1x1x128xf32>
    %13 = vector.broadcast %5 : vector<1x1x128xf32> to vector<1x16x128xf32>
    %14 = arith.subf %1, %13 : vector<1x16x128xf32>
    %cst_5 = arith.constant 9.99999974E-6 : f32
    %15 = vector.broadcast %cst_5 : f32 to vector<1x1x128xf32>
    %16 = arith.addf %12, %15 : vector<1x1x128xf32>
    %17 = math.rsqrt %16 : vector<1x1x128xf32>
    %18 = vector.broadcast %17 : vector<1x1x128xf32> to vector<1x16x128xf32>
    %19 = arith.mulf %14, %18 : vector<1x16x128xf32>
    %cst_6 = arith.constant 0.000000e+00 : f32
    %20 = vector.broadcast %cst_6 : f32 to vector<1x16x128xf32>
    %21 = arith.cmpf oge, %19, %20 : vector<1x16x128xf32>
    %cst_7 = arith.constant 2.000000e-01 : f32
    %22 = vector.broadcast %cst_7 : f32 to vector<1x16x128xf32>
    %23 = arith.mulf %22, %19 : vector<1x16x128xf32>
    %24 = arith.select %21, %19, %23 : vector<1x16x128xi1>, vector<1x16x128xf32>
    %25 = arith.truncf %24 : vector<1x16x128xf32> to vector<1x16x128xbf16>
    %c0_8 = arith.constant 0 : index
    %c0_9 = arith.constant 0 : index
    %c0_10 = arith.constant 0 : index
    %26 = vector.load %arg2[%c0_8, %c0_9, %c0_10] : memref<1x16x128xbf16, #tpu.memory_space<vmem>>, vector<1x16x128xbf16>
    tpu.vector_store %arg2[%c0_8, %c0_9, %c0_10], %25 {strides = array<i32>} : memref<1x16x128xbf16, #tpu.memory_space<vmem>>, vector<1x16x128xbf16>,
    return
  }
  func.func @transform_0(%arg0: i32) -> (i32, i32, i32) {
    %c0_i32 = arith.constant 0 : i32
    %c0_i32_0 = arith.constant 0 : i32
    %c0_i32_1 = arith.constant 0 : i32
    return %arg0, %c0_i32, %c0_i32_0 : i32, i32, i32
  }
  func.func @transform_1(%arg0: i32) -> (i32, i32, i32) {
    %c0_i32 = arith.constant 0 : i32
    %c0_i32_0 = arith.constant 0 : i32
    %c0_i32_1 = arith.constant 0 : i32
    return %arg0, %c0_i32, %c0_i32_0 : i32, i32, i32
  }
}

module attributes {stable_mosaic.version = 11 : i64} {
  func.func @_conv_tap_kernel(%arg0: i32, %arg1: i32, %arg2: memref<112x128xbf16, #tpu.memory_space<any>>, %arg3: memref<1152x128xbf16, #tpu.memory_space<vmem>>, %arg4: memref<48x128xbf16, #tpu.memory_space<vmem>>, %arg5: memref<2x64x128xbf16, #tpu.memory_space<vmem>>, %arg6: memref<2x!tpu.dma_semaphore, #tpu.memory_space<semaphore_mem>>) attributes {dimension_semantics = [#tpu.dimension_semantics<parallel>, #tpu.dimension_semantics<arbitrary>], iteration_bounds = array<i64: 2, 1>, scalar_prefetch = 0 : i64, scratch_operands = 2 : i64, tpu.core_type = #tpu.core_type<tc>, window_params = [{}, {pipeline_mode = #tpu.pipeline_mode<synchronous>, transform_indices = @transform_1, window_bounds = array<i64: 1152, 128>}, {transform_indices = @transform_2, window_bounds = array<i64: 48, 128>}]} {
    %c1_i32 = arith.constant 1 : i32
    %0 = arith.muli %arg0, %c1_i32 : i32
    %1 = arith.addi %0, %arg1 : i32
    %c48_i32 = arith.constant 48 : i32
    %2 = arith.muli %1, %c48_i32 : i32
    %3 = tpu.assume_multiple %2, 8 : i32
    %c2_i32 = arith.constant 2 : i32
    %c0_i32 = arith.constant 0 : i32
    %4 = arith.cmpi eq, %c2_i32, %c0_i32 : i32
    %c1_i32_0 = arith.constant 1 : i32
    %5 = arith.select %4, %c1_i32_0, %c2_i32 : i32
    %6 = arith.remsi %arg1, %5 : i32
    %c0_i32_1 = arith.constant 0 : i32
    %7 = arith.cmpi ne, %6, %c0_i32_1 : i32
    %c0_i32_2 = arith.constant 0 : i32
    %8 = arith.cmpi slt, %6, %c0_i32_2 : i32
    %c0_i32_3 = arith.constant 0 : i32
    %9 = arith.cmpi slt, %5, %c0_i32_3 : i32
    %10 = arith.xori %8, %9 : i1
    %11 = arith.andi %10, %7 : i1
    %12 = arith.addi %6, %5 : i32
    %13 = arith.select %11, %12, %6 : i32
    %c0_i32_4 = arith.constant 0 : i32
    %14 = arith.cmpi eq, %arg1, %c0_i32_4 : i32
    %15 = arith.extui %14 : i1 to i32
    %c0_i32_5 = arith.constant 0 : i32
    %16 = arith.cmpi ne, %15, %c0_i32_5 : i32
    scf.if %16 {
      %c0_i32_17 = arith.constant 0 : i32
      %c0_i32_18 = arith.constant 0 : i32
      %c0_i32_19 = arith.constant 0 : i32
      %43 = tpu.memref_slice %arg2[%3, %c0_i32_19] : memref<112x128xbf16, #tpu.memory_space<any>> -> memref<64x128xbf16, #tpu.memory_space<any>>
      %c0_i32_20 = arith.constant 0 : i32
      %c0_i32_21 = arith.constant 0 : i32
      %44 = tpu.memref_slice %arg5[%c0_i32_17, %c0_i32_20, %c0_i32_21] : memref<2x64x128xbf16, #tpu.memory_space<vmem>> -> memref<1x64x128xbf16, #tpu.memory_space<vmem>>
      %45 = tpu.memref_squeeze %44 : memref<1x64x128xbf16, #tpu.memory_space<vmem>> -> memref<64x128xbf16, #tpu.memory_space<vmem>>
      %46 = tpu.memref_slice %arg6[%c0_i32_18] : memref<2x!tpu.dma_semaphore, #tpu.memory_space<semaphore_mem>> -> memref<1x!tpu.dma_semaphore, #tpu.memory_space<semaphore_mem>>
      %47 = tpu.memref_squeeze %46 : memref<1x!tpu.dma_semaphore, #tpu.memory_space<semaphore_mem>> -> memref<!tpu.dma_semaphore, #tpu.memory_space<semaphore_mem>>
      tpu.enqueue_dma source(%43 : memref<64x128xbf16, #tpu.memory_space<any>>) target(%45 : memref<64x128xbf16, #tpu.memory_space<vmem>>) target_semaphore(%47 : memref<!tpu.dma_semaphore, #tpu.memory_space<semaphore_mem>>)
    } else {
    }
    %c1_i32_6 = arith.constant 1 : i32
    %17 = arith.addi %arg1, %c1_i32_6 : i32
    %c1_i32_7 = arith.constant 1 : i32
    %18 = arith.cmpi slt, %17, %c1_i32_7 : i32
    %19 = arith.extui %18 : i1 to i32
    %c0_i32_8 = arith.constant 0 : i32
    %20 = arith.cmpi ne, %19, %c0_i32_8 : i32
    scf.if %20 {
      %c48_i32_17 = arith.constant 48 : i32
      %43 = arith.addi %3, %c48_i32_17 : i32
      %44 = tpu.assume_multiple %43, 8 : i32
      %c1_i32_18 = arith.constant 1 : i32
      %45 = arith.subi %c1_i32_18, %13 : i32
      %c1_i32_19 = arith.constant 1 : i32
      %46 = arith.subi %c1_i32_19, %13 : i32
      %c0_i32_20 = arith.constant 0 : i32
      %47 = tpu.memref_slice %arg2[%44, %c0_i32_20] : memref<112x128xbf16, #tpu.memory_space<any>> -> memref<64x128xbf16, #tpu.memory_space<any>>
      %c0_i32_21 = arith.constant 0 : i32
      %c0_i32_22 = arith.constant 0 : i32
      %48 = tpu.memref_slice %arg5[%45, %c0_i32_21, %c0_i32_22] : memref<2x64x128xbf16, #tpu.memory_space<vmem>> -> memref<1x64x128xbf16, #tpu.memory_space<vmem>>
      %49 = tpu.memref_squeeze %48 : memref<1x64x128xbf16, #tpu.memory_space<vmem>> -> memref<64x128xbf16, #tpu.memory_space<vmem>>
      %50 = tpu.memref_slice %arg6[%46] : memref<2x!tpu.dma_semaphore, #tpu.memory_space<semaphore_mem>> -> memref<1x!tpu.dma_semaphore, #tpu.memory_space<semaphore_mem>>
      %51 = tpu.memref_squeeze %50 : memref<1x!tpu.dma_semaphore, #tpu.memory_space<semaphore_mem>> -> memref<!tpu.dma_semaphore, #tpu.memory_space<semaphore_mem>>
      tpu.enqueue_dma source(%47 : memref<64x128xbf16, #tpu.memory_space<any>>) target(%49 : memref<64x128xbf16, #tpu.memory_space<vmem>>) target_semaphore(%51 : memref<!tpu.dma_semaphore, #tpu.memory_space<semaphore_mem>>)
    } else {
    }
    %c0_i32_9 = arith.constant 0 : i32
    %21 = tpu.memref_slice %arg2[%3, %c0_i32_9] : memref<112x128xbf16, #tpu.memory_space<any>> -> memref<64x128xbf16, #tpu.memory_space<any>>
    %c0_i32_10 = arith.constant 0 : i32
    %c0_i32_11 = arith.constant 0 : i32
    %22 = tpu.memref_slice %arg5[%13, %c0_i32_10, %c0_i32_11] : memref<2x64x128xbf16, #tpu.memory_space<vmem>> -> memref<1x64x128xbf16, #tpu.memory_space<vmem>>
    %23 = tpu.memref_squeeze %22 : memref<1x64x128xbf16, #tpu.memory_space<vmem>> -> memref<64x128xbf16, #tpu.memory_space<vmem>>
    %24 = tpu.memref_slice %arg6[%13] : memref<2x!tpu.dma_semaphore, #tpu.memory_space<semaphore_mem>> -> memref<1x!tpu.dma_semaphore, #tpu.memory_space<semaphore_mem>>
    %25 = tpu.memref_squeeze %24 : memref<1x!tpu.dma_semaphore, #tpu.memory_space<semaphore_mem>> -> memref<!tpu.dma_semaphore, #tpu.memory_space<semaphore_mem>>
    tpu.wait_dma2 semaphore(%25 : memref<!tpu.dma_semaphore, #tpu.memory_space<semaphore_mem>>) src(%21 : memref<64x128xbf16, #tpu.memory_space<any>>) dst(%23 : memref<64x128xbf16, #tpu.memory_space<vmem>>)
    %26 = arith.index_cast %13 : i32 to index
    %c0 = arith.constant 0 : index
    %c0_12 = arith.constant 0 : index
    %27 = vector.load %arg5[%26, %c0, %c0_12] : memref<2x64x128xbf16, #tpu.memory_space<vmem>>, vector<1x64x128xbf16>
    %28 = vector.shape_cast %27 : vector<1x64x128xbf16> to vector<64x128xbf16>
    %29 = vector.extract_strided_slice %28 {offsets = [0, 0], sizes = [48, 128], strides = [1, 1]} : vector<64x128xbf16> to vector<48x128xbf16>
    %30 = vector.extract_strided_slice %28 {offsets = [1, 0], sizes = [48, 128], strides = [1, 1]} : vector<64x128xbf16> to vector<48x128xbf16>
    %31 = vector.extract_strided_slice %28 {offsets = [2, 0], sizes = [48, 128], strides = [1, 1]} : vector<64x128xbf16> to vector<48x128xbf16>
    %32 = vector.extract_strided_slice %28 {offsets = [6, 0], sizes = [48, 128], strides = [1, 1]} : vector<64x128xbf16> to vector<48x128xbf16>
    %33 = vector.extract_strided_slice %28 {offsets = [7, 0], sizes = [48, 128], strides = [1, 1]} : vector<64x128xbf16> to vector<48x128xbf16>
    %34 = vector.extract_strided_slice %28 {offsets = [8, 0], sizes = [48, 128], strides = [1, 1]} : vector<64x128xbf16> to vector<48x128xbf16>
    %35 = vector.extract_strided_slice %28 {offsets = [12, 0], sizes = [48, 128], strides = [1, 1]} : vector<64x128xbf16> to vector<48x128xbf16>
    %36 = vector.extract_strided_slice %28 {offsets = [13, 0], sizes = [48, 128], strides = [1, 1]} : vector<64x128xbf16> to vector<48x128xbf16>
    %37 = vector.extract_strided_slice %28 {offsets = [14, 0], sizes = [48, 128], strides = [1, 1]} : vector<64x128xbf16> to vector<48x128xbf16>
    %38 = tpu.concatenate %29, %30, %31, %32, %33, %34, %35, %36, %37 in 1 : vector<48x128xbf16>, vector<48x128xbf16>, vector<48x128xbf16>, vector<48x128xbf16>, vector<48x128xbf16>, vector<48x128xbf16>, vector<48x128xbf16>, vector<48x128xbf16>, vector<48x128xbf16> -> vector<48x1152xbf16>
    %c0_13 = arith.constant 0 : index
    %c0_14 = arith.constant 0 : index
    %39 = vector.load %arg3[%c0_13, %c0_14] : memref<1152x128xbf16, #tpu.memory_space<vmem>>, vector<1152x128xbf16>
    %cst = arith.constant dense<0.000000e+00> : vector<48x128xf32>
    %40 = tpu.matmul %38, %39, %cst {dimension_numbers = #tpu.dot_dimension_numbers<[1], [0], [0], [1], [0, 0, 1, 1], [], []>} : vector<48x1152xbf16>, vector<1152x128xbf16>, vector<48x128xf32> -> vector<48x128xf32>
    %41 = arith.truncf %40 : vector<48x128xf32> to vector<48x128xbf16>
    %c0_15 = arith.constant 0 : index
    %c0_16 = arith.constant 0 : index
    %42 = vector.load %arg4[%c0_15, %c0_16] : memref<48x128xbf16, #tpu.memory_space<vmem>>, vector<48x128xbf16>
    tpu.vector_store %arg4[%c0_15, %c0_16], %41 {strides = array<i32>} : memref<48x128xbf16, #tpu.memory_space<vmem>>, vector<48x128xbf16>,
    return
  }
  func.func @transform_1(%arg0: i32, %arg1: i32) -> (i32, i32) {
    %c0_i32 = arith.constant 0 : i32
    %c0_i32_0 = arith.constant 0 : i32
    %c0_i32_1 = arith.constant 0 : i32
    return %c0_i32, %c0_i32_0 : i32, i32
  }
  func.func @transform_2(%arg0: i32, %arg1: i32) -> (i32, i32) {
    %c1_i32 = arith.constant 1 : i32
    %0 = arith.muli %arg0, %c1_i32 : i32
    %1 = arith.addi %0, %arg1 : i32
    %c0_i32 = arith.constant 0 : i32
    %c0_i32_0 = arith.constant 0 : i32
    return %1, %c0_i32 : i32, i32
  }
}

module attributes {stable_mosaic.version = 11 : i64} {
  func.func @_bn_fused_kernel(%arg0: i32, %arg1: memref<32x128xbf16, #tpu.memory_space<vmem>>, %arg2: memref<1x128xf32, #tpu.memory_space<vmem>>, %arg3: memref<1x128xf32, #tpu.memory_space<vmem>>, %arg4: memref<32x128xbf16, #tpu.memory_space<vmem>>, %arg5: memref<32x128xbf16, #tpu.memory_space<vmem>>) attributes {dimension_semantics = [#tpu.dimension_semantics<arbitrary>], iteration_bounds = array<i64: 1>, scalar_prefetch = 0 : i64, scratch_operands = 0 : i64, tpu.core_type = #tpu.core_type<tc>, window_params = [{pipeline_mode = #tpu.pipeline_mode<synchronous>, transform_indices = @transform_0, window_bounds = array<i64: 32, 128>}, {pipeline_mode = #tpu.pipeline_mode<synchronous>, transform_indices = @transform_1, window_bounds = array<i64: 1, 128>}, {pipeline_mode = #tpu.pipeline_mode<synchronous>, transform_indices = @transform_2, window_bounds = array<i64: 1, 128>}, {pipeline_mode = #tpu.pipeline_mode<synchronous>, transform_indices = @transform_3, window_bounds = array<i64: 32, 128>}, {pipeline_mode = #tpu.pipeline_mode<synchronous>, transform_indices = @transform_4, window_bounds = array<i64: 32, 128>}]} {
    %c0 = arith.constant 0 : index
    %c0_0 = arith.constant 0 : index
    %0 = vector.load %arg1[%c0, %c0_0] : memref<32x128xbf16, #tpu.memory_space<vmem>>, vector<32x128xbf16>
    %1 = arith.extf %0 : vector<32x128xbf16> to vector<32x128xf32>
    %cst = arith.constant dense<0.000000e+00> : vector<128xf32>
    %2 = vector.multi_reduction <add>, %1, %cst [0] : vector<32x128xf32> to vector<128xf32>
    %3 = vector.shape_cast %2 : vector<128xf32> to vector<1x128xf32>
    %cst_1 = arith.constant 3.125000e-02 : f32
    %4 = vector.broadcast %cst_1 : f32 to vector<1x128xf32>
    %5 = arith.mulf %3, %4 : vector<1x128xf32>
    %6 = tpu.iota {dimensions = array<i32: 0>} : vector<32x128xi32>
    %c32_i32 = arith.constant 32 : i32
    %7 = vector.broadcast %c32_i32 : i32 to vector<32x128xi32>
    %8 = arith.cmpi slt, %6, %7 : vector<32x128xi32>
    %9 = vector.broadcast %5 : vector<1x128xf32> to vector<32x128xf32>
    %10 = arith.subf %1, %9 : vector<32x128xf32>
    %cst_2 = arith.constant 0.000000e+00 : f32
    %11 = vector.broadcast %cst_2 : f32 to vector<32x128xf32>
    %12 = arith.select %8, %10, %11 : vector<32x128xi1>, vector<32x128xf32>
    %13 = arith.mulf %12, %12 : vector<32x128xf32>
    %cst_3 = arith.constant dense<0.000000e+00> : vector<128xf32>
    %14 = vector.multi_reduction <add>, %13, %cst_3 [0] : vector<32x128xf32> to vector<128xf32>
    %15 = vector.shape_cast %14 : vector<128xf32> to vector<1x128xf32>
    %cst_4 = arith.constant 3.125000e-02 : f32
    %16 = vector.broadcast %cst_4 : f32 to vector<1x128xf32>
    %17 = arith.mulf %15, %16 : vector<1x128xf32>
    %18 = vector.broadcast %5 : vector<1x128xf32> to vector<32x128xf32>
    %19 = arith.subf %1, %18 : vector<32x128xf32>
    %cst_5 = arith.constant 9.99999974E-6 : f32
    %20 = vector.broadcast %cst_5 : f32 to vector<1x128xf32>
    %21 = arith.addf %17, %20 : vector<1x128xf32>
    %22 = math.rsqrt %21 : vector<1x128xf32>
    %23 = vector.broadcast %22 : vector<1x128xf32> to vector<32x128xf32>
    %24 = arith.mulf %19, %23 : vector<32x128xf32>
    %c0_6 = arith.constant 0 : index
    %c0_7 = arith.constant 0 : index
    %25 = vector.load %arg2[%c0_6, %c0_7] : memref<1x128xf32, #tpu.memory_space<vmem>>, vector<1x128xf32>
    %26 = vector.broadcast %25 : vector<1x128xf32> to vector<32x128xf32>
    %27 = arith.mulf %24, %26 : vector<32x128xf32>
    %c0_8 = arith.constant 0 : index
    %c0_9 = arith.constant 0 : index
    %28 = vector.load %arg3[%c0_8, %c0_9] : memref<1x128xf32, #tpu.memory_space<vmem>>, vector<1x128xf32>
    %29 = vector.broadcast %28 : vector<1x128xf32> to vector<32x128xf32>
    %30 = arith.addf %27, %29 : vector<32x128xf32>
    %c0_10 = arith.constant 0 : index
    %c0_11 = arith.constant 0 : index
    %31 = vector.load %arg4[%c0_10, %c0_11] : memref<32x128xbf16, #tpu.memory_space<vmem>>, vector<32x128xbf16>
    %32 = arith.extf %31 : vector<32x128xbf16> to vector<32x128xf32>
    %33 = arith.addf %30, %32 : vector<32x128xf32>
    %cst_12 = arith.constant 0.000000e+00 : f32
    %34 = vector.broadcast %cst_12 : f32 to vector<32x128xf32>
    %35 = arith.maximumf %33, %34 : vector<32x128xf32>
    %36 = arith.truncf %35 : vector<32x128xf32> to vector<32x128xbf16>
    %c0_13 = arith.constant 0 : index
    %c0_14 = arith.constant 0 : index
    %37 = vector.load %arg5[%c0_13, %c0_14] : memref<32x128xbf16, #tpu.memory_space<vmem>>, vector<32x128xbf16>
    tpu.vector_store %arg5[%c0_13, %c0_14], %36 {strides = array<i32>} : memref<32x128xbf16, #tpu.memory_space<vmem>>, vector<32x128xbf16>,
    return
  }
  func.func @transform_0(%arg0: i32) -> (i32, i32) {
    %c0_i32 = arith.constant 0 : i32
    %c0_i32_0 = arith.constant 0 : i32
    %c0_i32_1 = arith.constant 0 : i32
    return %c0_i32, %c0_i32_0 : i32, i32
  }
  func.func @transform_1(%arg0: i32) -> (i32, i32) {
    %c0_i32 = arith.constant 0 : i32
    %c0_i32_0 = arith.constant 0 : i32
    %c0_i32_1 = arith.constant 0 : i32
    return %c0_i32, %c0_i32_0 : i32, i32
  }
  func.func @transform_2(%arg0: i32) -> (i32, i32) {
    %c0_i32 = arith.constant 0 : i32
    %c0_i32_0 = arith.constant 0 : i32
    %c0_i32_1 = arith.constant 0 : i32
    return %c0_i32, %c0_i32_0 : i32, i32
  }
  func.func @transform_3(%arg0: i32) -> (i32, i32) {
    %c0_i32 = arith.constant 0 : i32
    %c0_i32_0 = arith.constant 0 : i32
    %c0_i32_1 = arith.constant 0 : i32
    return %c0_i32, %c0_i32_0 : i32, i32
  }
  func.func @transform_4(%arg0: i32) -> (i32, i32) {
    %c0_i32 = arith.constant 0 : i32
    %c0_i32_0 = arith.constant 0 : i32
    %c0_i32_1 = arith.constant 0 : i32
    return %c0_i32, %c0_i32_0 : i32, i32
  }
}

module attributes {stable_mosaic.version = 11 : i64} {
  func.func @_bn_fused_kernel(%arg0: i32, %arg1: memref<32x128xbf16, #tpu.memory_space<vmem>>, %arg2: memref<1x128xf32, #tpu.memory_space<vmem>>, %arg3: memref<1x128xf32, #tpu.memory_space<vmem>>, %arg4: memref<32x128xbf16, #tpu.memory_space<vmem>>) attributes {dimension_semantics = [#tpu.dimension_semantics<arbitrary>], iteration_bounds = array<i64: 1>, scalar_prefetch = 0 : i64, scratch_operands = 0 : i64, tpu.core_type = #tpu.core_type<tc>, window_params = [{pipeline_mode = #tpu.pipeline_mode<synchronous>, transform_indices = @transform_0, window_bounds = array<i64: 32, 128>}, {pipeline_mode = #tpu.pipeline_mode<synchronous>, transform_indices = @transform_1, window_bounds = array<i64: 1, 128>}, {pipeline_mode = #tpu.pipeline_mode<synchronous>, transform_indices = @transform_2, window_bounds = array<i64: 1, 128>}, {pipeline_mode = #tpu.pipeline_mode<synchronous>, transform_indices = @transform_3, window_bounds = array<i64: 32, 128>}]} {
    %c0 = arith.constant 0 : index
    %c0_0 = arith.constant 0 : index
    %0 = vector.load %arg1[%c0, %c0_0] : memref<32x128xbf16, #tpu.memory_space<vmem>>, vector<32x128xbf16>
    %1 = arith.extf %0 : vector<32x128xbf16> to vector<32x128xf32>
    %cst = arith.constant dense<0.000000e+00> : vector<128xf32>
    %2 = vector.multi_reduction <add>, %1, %cst [0] : vector<32x128xf32> to vector<128xf32>
    %3 = vector.shape_cast %2 : vector<128xf32> to vector<1x128xf32>
    %cst_1 = arith.constant 3.125000e-02 : f32
    %4 = vector.broadcast %cst_1 : f32 to vector<1x128xf32>
    %5 = arith.mulf %3, %4 : vector<1x128xf32>
    %6 = tpu.iota {dimensions = array<i32: 0>} : vector<32x128xi32>
    %c32_i32 = arith.constant 32 : i32
    %7 = vector.broadcast %c32_i32 : i32 to vector<32x128xi32>
    %8 = arith.cmpi slt, %6, %7 : vector<32x128xi32>
    %9 = vector.broadcast %5 : vector<1x128xf32> to vector<32x128xf32>
    %10 = arith.subf %1, %9 : vector<32x128xf32>
    %cst_2 = arith.constant 0.000000e+00 : f32
    %11 = vector.broadcast %cst_2 : f32 to vector<32x128xf32>
    %12 = arith.select %8, %10, %11 : vector<32x128xi1>, vector<32x128xf32>
    %13 = arith.mulf %12, %12 : vector<32x128xf32>
    %cst_3 = arith.constant dense<0.000000e+00> : vector<128xf32>
    %14 = vector.multi_reduction <add>, %13, %cst_3 [0] : vector<32x128xf32> to vector<128xf32>
    %15 = vector.shape_cast %14 : vector<128xf32> to vector<1x128xf32>
    %cst_4 = arith.constant 3.125000e-02 : f32
    %16 = vector.broadcast %cst_4 : f32 to vector<1x128xf32>
    %17 = arith.mulf %15, %16 : vector<1x128xf32>
    %18 = vector.broadcast %5 : vector<1x128xf32> to vector<32x128xf32>
    %19 = arith.subf %1, %18 : vector<32x128xf32>
    %cst_5 = arith.constant 9.99999974E-6 : f32
    %20 = vector.broadcast %cst_5 : f32 to vector<1x128xf32>
    %21 = arith.addf %17, %20 : vector<1x128xf32>
    %22 = math.rsqrt %21 : vector<1x128xf32>
    %23 = vector.broadcast %22 : vector<1x128xf32> to vector<32x128xf32>
    %24 = arith.mulf %19, %23 : vector<32x128xf32>
    %c0_6 = arith.constant 0 : index
    %c0_7 = arith.constant 0 : index
    %25 = vector.load %arg2[%c0_6, %c0_7] : memref<1x128xf32, #tpu.memory_space<vmem>>, vector<1x128xf32>
    %26 = vector.broadcast %25 : vector<1x128xf32> to vector<32x128xf32>
    %27 = arith.mulf %24, %26 : vector<32x128xf32>
    %c0_8 = arith.constant 0 : index
    %c0_9 = arith.constant 0 : index
    %28 = vector.load %arg3[%c0_8, %c0_9] : memref<1x128xf32, #tpu.memory_space<vmem>>, vector<1x128xf32>
    %29 = vector.broadcast %28 : vector<1x128xf32> to vector<32x128xf32>
    %30 = arith.addf %27, %29 : vector<32x128xf32>
    %cst_10 = arith.constant 0.000000e+00 : f32
    %31 = vector.broadcast %cst_10 : f32 to vector<32x128xf32>
    %32 = arith.maximumf %30, %31 : vector<32x128xf32>
    %33 = arith.truncf %32 : vector<32x128xf32> to vector<32x128xbf16>
    %c0_11 = arith.constant 0 : index
    %c0_12 = arith.constant 0 : index
    %34 = vector.load %arg4[%c0_11, %c0_12] : memref<32x128xbf16, #tpu.memory_space<vmem>>, vector<32x128xbf16>
    tpu.vector_store %arg4[%c0_11, %c0_12], %33 {strides = array<i32>} : memref<32x128xbf16, #tpu.memory_space<vmem>>, vector<32x128xbf16>,
    return
  }
  func.func @transform_0(%arg0: i32) -> (i32, i32) {
    %c0_i32 = arith.constant 0 : i32
    %c0_i32_0 = arith.constant 0 : i32
    %c0_i32_1 = arith.constant 0 : i32
    return %c0_i32, %c0_i32_0 : i32, i32
  }
  func.func @transform_1(%arg0: i32) -> (i32, i32) {
    %c0_i32 = arith.constant 0 : i32
    %c0_i32_0 = arith.constant 0 : i32
    %c0_i32_1 = arith.constant 0 : i32
    return %c0_i32, %c0_i32_0 : i32, i32
  }
  func.func @transform_2(%arg0: i32) -> (i32, i32) {
    %c0_i32 = arith.constant 0 : i32
    %c0_i32_0 = arith.constant 0 : i32
    %c0_i32_1 = arith.constant 0 : i32
    return %c0_i32, %c0_i32_0 : i32, i32
  }
  func.func @transform_3(%arg0: i32) -> (i32, i32) {
    %c0_i32 = arith.constant 0 : i32
    %c0_i32_0 = arith.constant 0 : i32
    %c0_i32_1 = arith.constant 0 : i32
    return %c0_i32, %c0_i32_0 : i32, i32
  }
}

module attributes {stable_mosaic.version = 11 : i64} {
  func.func @_conv_tap_kernel(%arg0: i32, %arg1: i32, %arg2: memref<112x128xbf16, #tpu.memory_space<any>>, %arg3: memref<512x256xbf16, #tpu.memory_space<vmem>>, %arg4: memref<48x256xbf16, #tpu.memory_space<vmem>>, %arg5: memref<2x64x128xbf16, #tpu.memory_space<vmem>>, %arg6: memref<2x!tpu.dma_semaphore, #tpu.memory_space<semaphore_mem>>) attributes {dimension_semantics = [#tpu.dimension_semantics<parallel>, #tpu.dimension_semantics<arbitrary>], iteration_bounds = array<i64: 2, 1>, scalar_prefetch = 0 : i64, scratch_operands = 2 : i64, tpu.core_type = #tpu.core_type<tc>, window_params = [{}, {pipeline_mode = #tpu.pipeline_mode<synchronous>, transform_indices = @transform_1, window_bounds = array<i64: 512, 256>}, {transform_indices = @transform_2, window_bounds = array<i64: 48, 256>}]} {
    %c1_i32 = arith.constant 1 : i32
    %0 = arith.muli %arg0, %c1_i32 : i32
    %1 = arith.addi %0, %arg1 : i32
    %c48_i32 = arith.constant 48 : i32
    %2 = arith.muli %1, %c48_i32 : i32
    %3 = tpu.assume_multiple %2, 8 : i32
    %c2_i32 = arith.constant 2 : i32
    %c0_i32 = arith.constant 0 : i32
    %4 = arith.cmpi eq, %c2_i32, %c0_i32 : i32
    %c1_i32_0 = arith.constant 1 : i32
    %5 = arith.select %4, %c1_i32_0, %c2_i32 : i32
    %6 = arith.remsi %arg1, %5 : i32
    %c0_i32_1 = arith.constant 0 : i32
    %7 = arith.cmpi ne, %6, %c0_i32_1 : i32
    %c0_i32_2 = arith.constant 0 : i32
    %8 = arith.cmpi slt, %6, %c0_i32_2 : i32
    %c0_i32_3 = arith.constant 0 : i32
    %9 = arith.cmpi slt, %5, %c0_i32_3 : i32
    %10 = arith.xori %8, %9 : i1
    %11 = arith.andi %10, %7 : i1
    %12 = arith.addi %6, %5 : i32
    %13 = arith.select %11, %12, %6 : i32
    %c0_i32_4 = arith.constant 0 : i32
    %14 = arith.cmpi eq, %arg1, %c0_i32_4 : i32
    %15 = arith.extui %14 : i1 to i32
    %c0_i32_5 = arith.constant 0 : i32
    %16 = arith.cmpi ne, %15, %c0_i32_5 : i32
    scf.if %16 {
      %c0_i32_17 = arith.constant 0 : i32
      %c0_i32_18 = arith.constant 0 : i32
      %c0_i32_19 = arith.constant 0 : i32
      %38 = tpu.memref_slice %arg2[%3, %c0_i32_19] : memref<112x128xbf16, #tpu.memory_space<any>> -> memref<64x128xbf16, #tpu.memory_space<any>>
      %c0_i32_20 = arith.constant 0 : i32
      %c0_i32_21 = arith.constant 0 : i32
      %39 = tpu.memref_slice %arg5[%c0_i32_17, %c0_i32_20, %c0_i32_21] : memref<2x64x128xbf16, #tpu.memory_space<vmem>> -> memref<1x64x128xbf16, #tpu.memory_space<vmem>>
      %40 = tpu.memref_squeeze %39 : memref<1x64x128xbf16, #tpu.memory_space<vmem>> -> memref<64x128xbf16, #tpu.memory_space<vmem>>
      %41 = tpu.memref_slice %arg6[%c0_i32_18] : memref<2x!tpu.dma_semaphore, #tpu.memory_space<semaphore_mem>> -> memref<1x!tpu.dma_semaphore, #tpu.memory_space<semaphore_mem>>
      %42 = tpu.memref_squeeze %41 : memref<1x!tpu.dma_semaphore, #tpu.memory_space<semaphore_mem>> -> memref<!tpu.dma_semaphore, #tpu.memory_space<semaphore_mem>>
      tpu.enqueue_dma source(%38 : memref<64x128xbf16, #tpu.memory_space<any>>) target(%40 : memref<64x128xbf16, #tpu.memory_space<vmem>>) target_semaphore(%42 : memref<!tpu.dma_semaphore, #tpu.memory_space<semaphore_mem>>)
    } else {
    }
    %c1_i32_6 = arith.constant 1 : i32
    %17 = arith.addi %arg1, %c1_i32_6 : i32
    %c1_i32_7 = arith.constant 1 : i32
    %18 = arith.cmpi slt, %17, %c1_i32_7 : i32
    %19 = arith.extui %18 : i1 to i32
    %c0_i32_8 = arith.constant 0 : i32
    %20 = arith.cmpi ne, %19, %c0_i32_8 : i32
    scf.if %20 {
      %c48_i32_17 = arith.constant 48 : i32
      %38 = arith.addi %3, %c48_i32_17 : i32
      %39 = tpu.assume_multiple %38, 8 : i32
      %c1_i32_18 = arith.constant 1 : i32
      %40 = arith.subi %c1_i32_18, %13 : i32
      %c1_i32_19 = arith.constant 1 : i32
      %41 = arith.subi %c1_i32_19, %13 : i32
      %c0_i32_20 = arith.constant 0 : i32
      %42 = tpu.memref_slice %arg2[%39, %c0_i32_20] : memref<112x128xbf16, #tpu.memory_space<any>> -> memref<64x128xbf16, #tpu.memory_space<any>>
      %c0_i32_21 = arith.constant 0 : i32
      %c0_i32_22 = arith.constant 0 : i32
      %43 = tpu.memref_slice %arg5[%40, %c0_i32_21, %c0_i32_22] : memref<2x64x128xbf16, #tpu.memory_space<vmem>> -> memref<1x64x128xbf16, #tpu.memory_space<vmem>>
      %44 = tpu.memref_squeeze %43 : memref<1x64x128xbf16, #tpu.memory_space<vmem>> -> memref<64x128xbf16, #tpu.memory_space<vmem>>
      %45 = tpu.memref_slice %arg6[%41] : memref<2x!tpu.dma_semaphore, #tpu.memory_space<semaphore_mem>> -> memref<1x!tpu.dma_semaphore, #tpu.memory_space<semaphore_mem>>
      %46 = tpu.memref_squeeze %45 : memref<1x!tpu.dma_semaphore, #tpu.memory_space<semaphore_mem>> -> memref<!tpu.dma_semaphore, #tpu.memory_space<semaphore_mem>>
      tpu.enqueue_dma source(%42 : memref<64x128xbf16, #tpu.memory_space<any>>) target(%44 : memref<64x128xbf16, #tpu.memory_space<vmem>>) target_semaphore(%46 : memref<!tpu.dma_semaphore, #tpu.memory_space<semaphore_mem>>)
    } else {
    }
    %c0_i32_9 = arith.constant 0 : i32
    %21 = tpu.memref_slice %arg2[%3, %c0_i32_9] : memref<112x128xbf16, #tpu.memory_space<any>> -> memref<64x128xbf16, #tpu.memory_space<any>>
    %c0_i32_10 = arith.constant 0 : i32
    %c0_i32_11 = arith.constant 0 : i32
    %22 = tpu.memref_slice %arg5[%13, %c0_i32_10, %c0_i32_11] : memref<2x64x128xbf16, #tpu.memory_space<vmem>> -> memref<1x64x128xbf16, #tpu.memory_space<vmem>>
    %23 = tpu.memref_squeeze %22 : memref<1x64x128xbf16, #tpu.memory_space<vmem>> -> memref<64x128xbf16, #tpu.memory_space<vmem>>
    %24 = tpu.memref_slice %arg6[%13] : memref<2x!tpu.dma_semaphore, #tpu.memory_space<semaphore_mem>> -> memref<1x!tpu.dma_semaphore, #tpu.memory_space<semaphore_mem>>
    %25 = tpu.memref_squeeze %24 : memref<1x!tpu.dma_semaphore, #tpu.memory_space<semaphore_mem>> -> memref<!tpu.dma_semaphore, #tpu.memory_space<semaphore_mem>>
    tpu.wait_dma2 semaphore(%25 : memref<!tpu.dma_semaphore, #tpu.memory_space<semaphore_mem>>) src(%21 : memref<64x128xbf16, #tpu.memory_space<any>>) dst(%23 : memref<64x128xbf16, #tpu.memory_space<vmem>>)
    %26 = arith.index_cast %13 : i32 to index
    %c0 = arith.constant 0 : index
    %c0_12 = arith.constant 0 : index
    %27 = vector.load %arg5[%26, %c0, %c0_12] : memref<2x64x128xbf16, #tpu.memory_space<vmem>>, vector<1x64x128xbf16>
    %28 = vector.shape_cast %27 : vector<1x64x128xbf16> to vector<64x128xbf16>
    %29 = vector.extract_strided_slice %28 {offsets = [0, 0], sizes = [48, 128], strides = [1, 1]} : vector<64x128xbf16> to vector<48x128xbf16>
    %30 = vector.extract_strided_slice %28 {offsets = [1, 0], sizes = [48, 128], strides = [1, 1]} : vector<64x128xbf16> to vector<48x128xbf16>
    %31 = vector.extract_strided_slice %28 {offsets = [6, 0], sizes = [48, 128], strides = [1, 1]} : vector<64x128xbf16> to vector<48x128xbf16>
    %32 = vector.extract_strided_slice %28 {offsets = [7, 0], sizes = [48, 128], strides = [1, 1]} : vector<64x128xbf16> to vector<48x128xbf16>
    %33 = tpu.concatenate %29, %30, %31, %32 in 1 : vector<48x128xbf16>, vector<48x128xbf16>, vector<48x128xbf16>, vector<48x128xbf16> -> vector<48x512xbf16>
    %c0_13 = arith.constant 0 : index
    %c0_14 = arith.constant 0 : index
    %34 = vector.load %arg3[%c0_13, %c0_14] : memref<512x256xbf16, #tpu.memory_space<vmem>>, vector<512x256xbf16>
    %cst = arith.constant dense<0.000000e+00> : vector<48x256xf32>
    %35 = tpu.matmul %33, %34, %cst {dimension_numbers = #tpu.dot_dimension_numbers<[1], [0], [0], [1], [0, 0, 1, 1], [], []>} : vector<48x512xbf16>, vector<512x256xbf16>, vector<48x256xf32> -> vector<48x256xf32>
    %36 = arith.truncf %35 : vector<48x256xf32> to vector<48x256xbf16>
    %c0_15 = arith.constant 0 : index
    %c0_16 = arith.constant 0 : index
    %37 = vector.load %arg4[%c0_15, %c0_16] : memref<48x256xbf16, #tpu.memory_space<vmem>>, vector<48x256xbf16>
    tpu.vector_store %arg4[%c0_15, %c0_16], %36 {strides = array<i32>} : memref<48x256xbf16, #tpu.memory_space<vmem>>, vector<48x256xbf16>,
    return
  }
  func.func @transform_1(%arg0: i32, %arg1: i32) -> (i32, i32) {
    %c0_i32 = arith.constant 0 : i32
    %c0_i32_0 = arith.constant 0 : i32
    %c0_i32_1 = arith.constant 0 : i32
    return %c0_i32, %c0_i32_0 : i32, i32
  }
  func.func @transform_2(%arg0: i32, %arg1: i32) -> (i32, i32) {
    %c1_i32 = arith.constant 1 : i32
    %0 = arith.muli %arg0, %c1_i32 : i32
    %1 = arith.addi %0, %arg1 : i32
    %c0_i32 = arith.constant 0 : i32
    %c0_i32_0 = arith.constant 0 : i32
    return %1, %c0_i32 : i32, i32
  }
}

module attributes {stable_mosaic.version = 11 : i64} {
  func.func @_inorm_kernel(%arg0: i32, %arg1: memref<1x64x64xbf16, #tpu.memory_space<vmem>>, %arg2: memref<1x64x64xbf16, #tpu.memory_space<vmem>>) attributes {dimension_semantics = [#tpu.dimension_semantics<parallel>], iteration_bounds = array<i64: 2>, scalar_prefetch = 0 : i64, scratch_operands = 0 : i64, tpu.core_type = #tpu.core_type<tc>, window_params = [{transform_indices = @transform_0, window_bounds = array<i64: 1, 64, 64>}, {transform_indices = @transform_1, window_bounds = array<i64: 1, 64, 64>}]} {
    %c0 = arith.constant 0 : index
    %c0_0 = arith.constant 0 : index
    %c0_1 = arith.constant 0 : index
    %0 = vector.load %arg1[%c0, %c0_0, %c0_1] : memref<1x64x64xbf16, #tpu.memory_space<vmem>>, vector<1x64x64xbf16>
    %1 = arith.extf %0 : vector<1x64x64xbf16> to vector<1x64x64xf32>
    %cst = arith.constant dense<0.000000e+00> : vector<1x64xf32>
    %2 = vector.multi_reduction <add>, %1, %cst [1] : vector<1x64x64xf32> to vector<1x64xf32>
    %3 = vector.shape_cast %2 : vector<1x64xf32> to vector<1x1x64xf32>
    %cst_2 = arith.constant 6.400000e+01 : f32
    %4 = vector.broadcast %cst_2 : f32 to vector<1x1x64xf32>
    %5 = arith.divf %3, %4 : vector<1x1x64xf32>
    %6 = vector.broadcast %5 : vector<1x1x64xf32> to vector<1x64x64xf32>
    %7 = arith.subf %1, %6 : vector<1x64x64xf32>
    %8 = arith.mulf %7, %7 : vector<1x64x64xf32>
    %cst_3 = arith.constant dense<0.000000e+00> : vector<1x64xf32>
    %9 = vector.multi_reduction <add>, %8, %cst_3 [1] : vector<1x64x64xf32> to vector<1x64xf32>
    %10 = vector.shape_cast %9 : vector<1x64xf32> to vector<1x1x64xf32>
    %cst_4 = arith.constant 6.400000e+01 : f32
    %11 = vector.broadcast %cst_4 : f32 to vector<1x1x64xf32>
    %12 = arith.divf %10, %11 : vector<1x1x64xf32>
    %13 = vector.broadcast %5 : vector<1x1x64xf32> to vector<1x64x64xf32>
    %14 = arith.subf %1, %13 : vector<1x64x64xf32>
    %cst_5 = arith.constant 9.99999974E-6 : f32
    %15 = vector.broadcast %cst_5 : f32 to vector<1x1x64xf32>
    %16 = arith.addf %12, %15 : vector<1x1x64xf32>
    %17 = math.rsqrt %16 : vector<1x1x64xf32>
    %18 = vector.broadcast %17 : vector<1x1x64xf32> to vector<1x64x64xf32>
    %19 = arith.mulf %14, %18 : vector<1x64x64xf32>
    %cst_6 = arith.constant 0.000000e+00 : f32
    %20 = vector.broadcast %cst_6 : f32 to vector<1x64x64xf32>
    %21 = arith.maximumf %19, %20 : vector<1x64x64xf32>
    %22 = arith.truncf %21 : vector<1x64x64xf32> to vector<1x64x64xbf16>
    %c0_7 = arith.constant 0 : index
    %c0_8 = arith.constant 0 : index
    %c0_9 = arith.constant 0 : index
    %23 = vector.load %arg2[%c0_7, %c0_8, %c0_9] : memref<1x64x64xbf16, #tpu.memory_space<vmem>>, vector<1x64x64xbf16>
    tpu.vector_store %arg2[%c0_7, %c0_8, %c0_9], %22 {strides = array<i32>} : memref<1x64x64xbf16, #tpu.memory_space<vmem>>, vector<1x64x64xbf16>,
    return
  }
  func.func @transform_0(%arg0: i32) -> (i32, i32, i32) {
    %c0_i32 = arith.constant 0 : i32
    %c0_i32_0 = arith.constant 0 : i32
    %c0_i32_1 = arith.constant 0 : i32
    return %arg0, %c0_i32, %c0_i32_0 : i32, i32, i32
  }
  func.func @transform_1(%arg0: i32) -> (i32, i32, i32) {
    %c0_i32 = arith.constant 0 : i32
    %c0_i32_0 = arith.constant 0 : i32
    %c0_i32_1 = arith.constant 0 : i32
    return %arg0, %c0_i32, %c0_i32_0 : i32, i32, i32
  }
}

module attributes {stable_mosaic.version = 11 : i64} {
  func.func @_conv_tap_kernel(%arg0: i32, %arg1: i32, %arg2: memref<240x128xbf16, #tpu.memory_space<any>>, %arg3: memref<512x128xbf16, #tpu.memory_space<vmem>>, %arg4: memref<112x128xbf16, #tpu.memory_space<vmem>>, %arg5: memref<2x128x128xbf16, #tpu.memory_space<vmem>>, %arg6: memref<2x!tpu.dma_semaphore, #tpu.memory_space<semaphore_mem>>) attributes {dimension_semantics = [#tpu.dimension_semantics<parallel>, #tpu.dimension_semantics<arbitrary>], iteration_bounds = array<i64: 2, 1>, scalar_prefetch = 0 : i64, scratch_operands = 2 : i64, tpu.core_type = #tpu.core_type<tc>, window_params = [{}, {pipeline_mode = #tpu.pipeline_mode<synchronous>, transform_indices = @transform_1, window_bounds = array<i64: 512, 128>}, {transform_indices = @transform_2, window_bounds = array<i64: 112, 128>}]} {
    %c1_i32 = arith.constant 1 : i32
    %0 = arith.muli %arg0, %c1_i32 : i32
    %1 = arith.addi %0, %arg1 : i32
    %c112_i32 = arith.constant 112 : i32
    %2 = arith.muli %1, %c112_i32 : i32
    %3 = tpu.assume_multiple %2, 8 : i32
    %c2_i32 = arith.constant 2 : i32
    %c0_i32 = arith.constant 0 : i32
    %4 = arith.cmpi eq, %c2_i32, %c0_i32 : i32
    %c1_i32_0 = arith.constant 1 : i32
    %5 = arith.select %4, %c1_i32_0, %c2_i32 : i32
    %6 = arith.remsi %arg1, %5 : i32
    %c0_i32_1 = arith.constant 0 : i32
    %7 = arith.cmpi ne, %6, %c0_i32_1 : i32
    %c0_i32_2 = arith.constant 0 : i32
    %8 = arith.cmpi slt, %6, %c0_i32_2 : i32
    %c0_i32_3 = arith.constant 0 : i32
    %9 = arith.cmpi slt, %5, %c0_i32_3 : i32
    %10 = arith.xori %8, %9 : i1
    %11 = arith.andi %10, %7 : i1
    %12 = arith.addi %6, %5 : i32
    %13 = arith.select %11, %12, %6 : i32
    %c0_i32_4 = arith.constant 0 : i32
    %14 = arith.cmpi eq, %arg1, %c0_i32_4 : i32
    %15 = arith.extui %14 : i1 to i32
    %c0_i32_5 = arith.constant 0 : i32
    %16 = arith.cmpi ne, %15, %c0_i32_5 : i32
    scf.if %16 {
      %c0_i32_17 = arith.constant 0 : i32
      %c0_i32_18 = arith.constant 0 : i32
      %c0_i32_19 = arith.constant 0 : i32
      %38 = tpu.memref_slice %arg2[%3, %c0_i32_19] : memref<240x128xbf16, #tpu.memory_space<any>> -> memref<128x128xbf16, #tpu.memory_space<any>>
      %c0_i32_20 = arith.constant 0 : i32
      %c0_i32_21 = arith.constant 0 : i32
      %39 = tpu.memref_slice %arg5[%c0_i32_17, %c0_i32_20, %c0_i32_21] : memref<2x128x128xbf16, #tpu.memory_space<vmem>> -> memref<1x128x128xbf16, #tpu.memory_space<vmem>>
      %40 = tpu.memref_squeeze %39 : memref<1x128x128xbf16, #tpu.memory_space<vmem>> -> memref<128x128xbf16, #tpu.memory_space<vmem>>
      %41 = tpu.memref_slice %arg6[%c0_i32_18] : memref<2x!tpu.dma_semaphore, #tpu.memory_space<semaphore_mem>> -> memref<1x!tpu.dma_semaphore, #tpu.memory_space<semaphore_mem>>
      %42 = tpu.memref_squeeze %41 : memref<1x!tpu.dma_semaphore, #tpu.memory_space<semaphore_mem>> -> memref<!tpu.dma_semaphore, #tpu.memory_space<semaphore_mem>>
      tpu.enqueue_dma source(%38 : memref<128x128xbf16, #tpu.memory_space<any>>) target(%40 : memref<128x128xbf16, #tpu.memory_space<vmem>>) target_semaphore(%42 : memref<!tpu.dma_semaphore, #tpu.memory_space<semaphore_mem>>)
    } else {
    }
    %c1_i32_6 = arith.constant 1 : i32
    %17 = arith.addi %arg1, %c1_i32_6 : i32
    %c1_i32_7 = arith.constant 1 : i32
    %18 = arith.cmpi slt, %17, %c1_i32_7 : i32
    %19 = arith.extui %18 : i1 to i32
    %c0_i32_8 = arith.constant 0 : i32
    %20 = arith.cmpi ne, %19, %c0_i32_8 : i32
    scf.if %20 {
      %c112_i32_17 = arith.constant 112 : i32
      %38 = arith.addi %3, %c112_i32_17 : i32
      %39 = tpu.assume_multiple %38, 8 : i32
      %c1_i32_18 = arith.constant 1 : i32
      %40 = arith.subi %c1_i32_18, %13 : i32
      %c1_i32_19 = arith.constant 1 : i32
      %41 = arith.subi %c1_i32_19, %13 : i32
      %c0_i32_20 = arith.constant 0 : i32
      %42 = tpu.memref_slice %arg2[%39, %c0_i32_20] : memref<240x128xbf16, #tpu.memory_space<any>> -> memref<128x128xbf16, #tpu.memory_space<any>>
      %c0_i32_21 = arith.constant 0 : i32
      %c0_i32_22 = arith.constant 0 : i32
      %43 = tpu.memref_slice %arg5[%40, %c0_i32_21, %c0_i32_22] : memref<2x128x128xbf16, #tpu.memory_space<vmem>> -> memref<1x128x128xbf16, #tpu.memory_space<vmem>>
      %44 = tpu.memref_squeeze %43 : memref<1x128x128xbf16, #tpu.memory_space<vmem>> -> memref<128x128xbf16, #tpu.memory_space<vmem>>
      %45 = tpu.memref_slice %arg6[%41] : memref<2x!tpu.dma_semaphore, #tpu.memory_space<semaphore_mem>> -> memref<1x!tpu.dma_semaphore, #tpu.memory_space<semaphore_mem>>
      %46 = tpu.memref_squeeze %45 : memref<1x!tpu.dma_semaphore, #tpu.memory_space<semaphore_mem>> -> memref<!tpu.dma_semaphore, #tpu.memory_space<semaphore_mem>>
      tpu.enqueue_dma source(%42 : memref<128x128xbf16, #tpu.memory_space<any>>) target(%44 : memref<128x128xbf16, #tpu.memory_space<vmem>>) target_semaphore(%46 : memref<!tpu.dma_semaphore, #tpu.memory_space<semaphore_mem>>)
    } else {
    }
    %c0_i32_9 = arith.constant 0 : i32
    %21 = tpu.memref_slice %arg2[%3, %c0_i32_9] : memref<240x128xbf16, #tpu.memory_space<any>> -> memref<128x128xbf16, #tpu.memory_space<any>>
    %c0_i32_10 = arith.constant 0 : i32
    %c0_i32_11 = arith.constant 0 : i32
    %22 = tpu.memref_slice %arg5[%13, %c0_i32_10, %c0_i32_11] : memref<2x128x128xbf16, #tpu.memory_space<vmem>> -> memref<1x128x128xbf16, #tpu.memory_space<vmem>>
    %23 = tpu.memref_squeeze %22 : memref<1x128x128xbf16, #tpu.memory_space<vmem>> -> memref<128x128xbf16, #tpu.memory_space<vmem>>
    %24 = tpu.memref_slice %arg6[%13] : memref<2x!tpu.dma_semaphore, #tpu.memory_space<semaphore_mem>> -> memref<1x!tpu.dma_semaphore, #tpu.memory_space<semaphore_mem>>
    %25 = tpu.memref_squeeze %24 : memref<1x!tpu.dma_semaphore, #tpu.memory_space<semaphore_mem>> -> memref<!tpu.dma_semaphore, #tpu.memory_space<semaphore_mem>>
    tpu.wait_dma2 semaphore(%25 : memref<!tpu.dma_semaphore, #tpu.memory_space<semaphore_mem>>) src(%21 : memref<128x128xbf16, #tpu.memory_space<any>>) dst(%23 : memref<128x128xbf16, #tpu.memory_space<vmem>>)
    %26 = arith.index_cast %13 : i32 to index
    %c0 = arith.constant 0 : index
    %c0_12 = arith.constant 0 : index
    %27 = vector.load %arg5[%26, %c0, %c0_12] : memref<2x128x128xbf16, #tpu.memory_space<vmem>>, vector<1x128x128xbf16>
    %28 = vector.shape_cast %27 : vector<1x128x128xbf16> to vector<128x128xbf16>
    %29 = vector.extract_strided_slice %28 {offsets = [0, 0], sizes = [112, 128], strides = [1, 1]} : vector<128x128xbf16> to vector<112x128xbf16>
    %30 = vector.extract_strided_slice %28 {offsets = [1, 0], sizes = [112, 128], strides = [1, 1]} : vector<128x128xbf16> to vector<112x128xbf16>
    %31 = vector.extract_strided_slice %28 {offsets = [10, 0], sizes = [112, 128], strides = [1, 1]} : vector<128x128xbf16> to vector<112x128xbf16>
    %32 = vector.extract_strided_slice %28 {offsets = [11, 0], sizes = [112, 128], strides = [1, 1]} : vector<128x128xbf16> to vector<112x128xbf16>
    %33 = tpu.concatenate %29, %30, %31, %32 in 1 : vector<112x128xbf16>, vector<112x128xbf16>, vector<112x128xbf16>, vector<112x128xbf16> -> vector<112x512xbf16>
    %c0_13 = arith.constant 0 : index
    %c0_14 = arith.constant 0 : index
    %34 = vector.load %arg3[%c0_13, %c0_14] : memref<512x128xbf16, #tpu.memory_space<vmem>>, vector<512x128xbf16>
    %cst = arith.constant dense<0.000000e+00> : vector<112x128xf32>
    %35 = tpu.matmul %33, %34, %cst {dimension_numbers = #tpu.dot_dimension_numbers<[1], [0], [0], [1], [0, 0, 1, 1], [], []>} : vector<112x512xbf16>, vector<512x128xbf16>, vector<112x128xf32> -> vector<112x128xf32>
    %36 = arith.truncf %35 : vector<112x128xf32> to vector<112x128xbf16>
    %c0_15 = arith.constant 0 : index
    %c0_16 = arith.constant 0 : index
    %37 = vector.load %arg4[%c0_15, %c0_16] : memref<112x128xbf16, #tpu.memory_space<vmem>>, vector<112x128xbf16>
    tpu.vector_store %arg4[%c0_15, %c0_16], %36 {strides = array<i32>} : memref<112x128xbf16, #tpu.memory_space<vmem>>, vector<112x128xbf16>,
    return
  }
  func.func @transform_1(%arg0: i32, %arg1: i32) -> (i32, i32) {
    %c0_i32 = arith.constant 0 : i32
    %c0_i32_0 = arith.constant 0 : i32
    %c0_i32_1 = arith.constant 0 : i32
    return %c0_i32, %c0_i32_0 : i32, i32
  }
  func.func @transform_2(%arg0: i32, %arg1: i32) -> (i32, i32) {
    %c1_i32 = arith.constant 1 : i32
    %0 = arith.muli %arg0, %c1_i32 : i32
    %1 = arith.addi %0, %arg1 : i32
    %c0_i32 = arith.constant 0 : i32
    %c0_i32_0 = arith.constant 0 : i32
    return %1, %c0_i32 : i32, i32
  }
}

module attributes {stable_mosaic.version = 11 : i64} {
  func.func @_inorm_kernel(%arg0: i32, %arg1: memref<1x256x32xbf16, #tpu.memory_space<vmem>>, %arg2: memref<1x256x32xbf16, #tpu.memory_space<vmem>>) attributes {dimension_semantics = [#tpu.dimension_semantics<parallel>], iteration_bounds = array<i64: 2>, scalar_prefetch = 0 : i64, scratch_operands = 0 : i64, tpu.core_type = #tpu.core_type<tc>, window_params = [{transform_indices = @transform_0, window_bounds = array<i64: 1, 256, 32>}, {transform_indices = @transform_1, window_bounds = array<i64: 1, 256, 32>}]} {
    %c0 = arith.constant 0 : index
    %c0_0 = arith.constant 0 : index
    %c0_1 = arith.constant 0 : index
    %0 = vector.load %arg1[%c0, %c0_0, %c0_1] : memref<1x256x32xbf16, #tpu.memory_space<vmem>>, vector<1x256x32xbf16>
    %1 = arith.extf %0 : vector<1x256x32xbf16> to vector<1x256x32xf32>
    %cst = arith.constant dense<0.000000e+00> : vector<1x32xf32>
    %2 = vector.multi_reduction <add>, %1, %cst [1] : vector<1x256x32xf32> to vector<1x32xf32>
    %3 = vector.shape_cast %2 : vector<1x32xf32> to vector<1x1x32xf32>
    %cst_2 = arith.constant 2.560000e+02 : f32
    %4 = vector.broadcast %cst_2 : f32 to vector<1x1x32xf32>
    %5 = arith.divf %3, %4 : vector<1x1x32xf32>
    %6 = vector.broadcast %5 : vector<1x1x32xf32> to vector<1x256x32xf32>
    %7 = arith.subf %1, %6 : vector<1x256x32xf32>
    %8 = arith.mulf %7, %7 : vector<1x256x32xf32>
    %cst_3 = arith.constant dense<0.000000e+00> : vector<1x32xf32>
    %9 = vector.multi_reduction <add>, %8, %cst_3 [1] : vector<1x256x32xf32> to vector<1x32xf32>
    %10 = vector.shape_cast %9 : vector<1x32xf32> to vector<1x1x32xf32>
    %cst_4 = arith.constant 2.560000e+02 : f32
    %11 = vector.broadcast %cst_4 : f32 to vector<1x1x32xf32>
    %12 = arith.divf %10, %11 : vector<1x1x32xf32>
    %13 = vector.broadcast %5 : vector<1x1x32xf32> to vector<1x256x32xf32>
    %14 = arith.subf %1, %13 : vector<1x256x32xf32>
    %cst_5 = arith.constant 9.99999974E-6 : f32
    %15 = vector.broadcast %cst_5 : f32 to vector<1x1x32xf32>
    %16 = arith.addf %12, %15 : vector<1x1x32xf32>
    %17 = math.rsqrt %16 : vector<1x1x32xf32>
    %18 = vector.broadcast %17 : vector<1x1x32xf32> to vector<1x256x32xf32>
    %19 = arith.mulf %14, %18 : vector<1x256x32xf32>
    %cst_6 = arith.constant 0.000000e+00 : f32
    %20 = vector.broadcast %cst_6 : f32 to vector<1x256x32xf32>
    %21 = arith.maximumf %19, %20 : vector<1x256x32xf32>
    %22 = arith.truncf %21 : vector<1x256x32xf32> to vector<1x256x32xbf16>
    %c0_7 = arith.constant 0 : index
    %c0_8 = arith.constant 0 : index
    %c0_9 = arith.constant 0 : index
    %23 = vector.load %arg2[%c0_7, %c0_8, %c0_9] : memref<1x256x32xbf16, #tpu.memory_space<vmem>>, vector<1x256x32xbf16>
    tpu.vector_store %arg2[%c0_7, %c0_8, %c0_9], %22 {strides = array<i32>} : memref<1x256x32xbf16, #tpu.memory_space<vmem>>, vector<1x256x32xbf16>,
    return
  }
  func.func @transform_0(%arg0: i32) -> (i32, i32, i32) {
    %c0_i32 = arith.constant 0 : i32
    %c0_i32_0 = arith.constant 0 : i32
    %c0_i32_1 = arith.constant 0 : i32
    return %arg0, %c0_i32, %c0_i32_0 : i32, i32, i32
  }
  func.func @transform_1(%arg0: i32) -> (i32, i32, i32) {
    %c0_i32 = arith.constant 0 : i32
    %c0_i32_0 = arith.constant 0 : i32
    %c0_i32_1 = arith.constant 0 : i32
    return %arg0, %c0_i32, %c0_i32_0 : i32, i32, i32
  }
}

module attributes {stable_mosaic.version = 11 : i64} {
  func.func @_conv_tap_kernel(%arg0: i32, %arg1: i32, %arg2: memref<720x128xbf16, #tpu.memory_space<any>>, %arg3: memref<1152x128xbf16, #tpu.memory_space<vmem>>, %arg4: memref<336x128xf32, #tpu.memory_space<vmem>>, %arg5: memref<2x384x128xbf16, #tpu.memory_space<vmem>>, %arg6: memref<2x!tpu.dma_semaphore, #tpu.memory_space<semaphore_mem>>) attributes {dimension_semantics = [#tpu.dimension_semantics<parallel>, #tpu.dimension_semantics<arbitrary>], iteration_bounds = array<i64: 2, 1>, scalar_prefetch = 0 : i64, scratch_operands = 2 : i64, tpu.core_type = #tpu.core_type<tc>, window_params = [{}, {pipeline_mode = #tpu.pipeline_mode<synchronous>, transform_indices = @transform_1, window_bounds = array<i64: 1152, 128>}, {transform_indices = @transform_2, window_bounds = array<i64: 336, 128>}]} {
    %c1_i32 = arith.constant 1 : i32
    %0 = arith.muli %arg0, %c1_i32 : i32
    %1 = arith.addi %0, %arg1 : i32
    %c336_i32 = arith.constant 336 : i32
    %2 = arith.muli %1, %c336_i32 : i32
    %3 = tpu.assume_multiple %2, 8 : i32
    %c2_i32 = arith.constant 2 : i32
    %c0_i32 = arith.constant 0 : i32
    %4 = arith.cmpi eq, %c2_i32, %c0_i32 : i32
    %c1_i32_0 = arith.constant 1 : i32
    %5 = arith.select %4, %c1_i32_0, %c2_i32 : i32
    %6 = arith.remsi %arg1, %5 : i32
    %c0_i32_1 = arith.constant 0 : i32
    %7 = arith.cmpi ne, %6, %c0_i32_1 : i32
    %c0_i32_2 = arith.constant 0 : i32
    %8 = arith.cmpi slt, %6, %c0_i32_2 : i32
    %c0_i32_3 = arith.constant 0 : i32
    %9 = arith.cmpi slt, %5, %c0_i32_3 : i32
    %10 = arith.xori %8, %9 : i1
    %11 = arith.andi %10, %7 : i1
    %12 = arith.addi %6, %5 : i32
    %13 = arith.select %11, %12, %6 : i32
    %c0_i32_4 = arith.constant 0 : i32
    %14 = arith.cmpi eq, %arg1, %c0_i32_4 : i32
    %15 = arith.extui %14 : i1 to i32
    %c0_i32_5 = arith.constant 0 : i32
    %16 = arith.cmpi ne, %15, %c0_i32_5 : i32
    scf.if %16 {
      %c0_i32_17 = arith.constant 0 : i32
      %c0_i32_18 = arith.constant 0 : i32
      %c0_i32_19 = arith.constant 0 : i32
      %43 = tpu.memref_slice %arg2[%3, %c0_i32_19] : memref<720x128xbf16, #tpu.memory_space<any>> -> memref<384x128xbf16, #tpu.memory_space<any>>
      %c0_i32_20 = arith.constant 0 : i32
      %c0_i32_21 = arith.constant 0 : i32
      %44 = tpu.memref_slice %arg5[%c0_i32_17, %c0_i32_20, %c0_i32_21] : memref<2x384x128xbf16, #tpu.memory_space<vmem>> -> memref<1x384x128xbf16, #tpu.memory_space<vmem>>
      %45 = tpu.memref_squeeze %44 : memref<1x384x128xbf16, #tpu.memory_space<vmem>> -> memref<384x128xbf16, #tpu.memory_space<vmem>>
      %46 = tpu.memref_slice %arg6[%c0_i32_18] : memref<2x!tpu.dma_semaphore, #tpu.memory_space<semaphore_mem>> -> memref<1x!tpu.dma_semaphore, #tpu.memory_space<semaphore_mem>>
      %47 = tpu.memref_squeeze %46 : memref<1x!tpu.dma_semaphore, #tpu.memory_space<semaphore_mem>> -> memref<!tpu.dma_semaphore, #tpu.memory_space<semaphore_mem>>
      tpu.enqueue_dma source(%43 : memref<384x128xbf16, #tpu.memory_space<any>>) target(%45 : memref<384x128xbf16, #tpu.memory_space<vmem>>) target_semaphore(%47 : memref<!tpu.dma_semaphore, #tpu.memory_space<semaphore_mem>>)
    } else {
    }
    %c1_i32_6 = arith.constant 1 : i32
    %17 = arith.addi %arg1, %c1_i32_6 : i32
    %c1_i32_7 = arith.constant 1 : i32
    %18 = arith.cmpi slt, %17, %c1_i32_7 : i32
    %19 = arith.extui %18 : i1 to i32
    %c0_i32_8 = arith.constant 0 : i32
    %20 = arith.cmpi ne, %19, %c0_i32_8 : i32
    scf.if %20 {
      %c336_i32_17 = arith.constant 336 : i32
      %43 = arith.addi %3, %c336_i32_17 : i32
      %44 = tpu.assume_multiple %43, 8 : i32
      %c1_i32_18 = arith.constant 1 : i32
      %45 = arith.subi %c1_i32_18, %13 : i32
      %c1_i32_19 = arith.constant 1 : i32
      %46 = arith.subi %c1_i32_19, %13 : i32
      %c0_i32_20 = arith.constant 0 : i32
      %47 = tpu.memref_slice %arg2[%44, %c0_i32_20] : memref<720x128xbf16, #tpu.memory_space<any>> -> memref<384x128xbf16, #tpu.memory_space<any>>
      %c0_i32_21 = arith.constant 0 : i32
      %c0_i32_22 = arith.constant 0 : i32
      %48 = tpu.memref_slice %arg5[%45, %c0_i32_21, %c0_i32_22] : memref<2x384x128xbf16, #tpu.memory_space<vmem>> -> memref<1x384x128xbf16, #tpu.memory_space<vmem>>
      %49 = tpu.memref_squeeze %48 : memref<1x384x128xbf16, #tpu.memory_space<vmem>> -> memref<384x128xbf16, #tpu.memory_space<vmem>>
      %50 = tpu.memref_slice %arg6[%46] : memref<2x!tpu.dma_semaphore, #tpu.memory_space<semaphore_mem>> -> memref<1x!tpu.dma_semaphore, #tpu.memory_space<semaphore_mem>>
      %51 = tpu.memref_squeeze %50 : memref<1x!tpu.dma_semaphore, #tpu.memory_space<semaphore_mem>> -> memref<!tpu.dma_semaphore, #tpu.memory_space<semaphore_mem>>
      tpu.enqueue_dma source(%47 : memref<384x128xbf16, #tpu.memory_space<any>>) target(%49 : memref<384x128xbf16, #tpu.memory_space<vmem>>) target_semaphore(%51 : memref<!tpu.dma_semaphore, #tpu.memory_space<semaphore_mem>>)
    } else {
    }
    %c0_i32_9 = arith.constant 0 : i32
    %21 = tpu.memref_slice %arg2[%3, %c0_i32_9] : memref<720x128xbf16, #tpu.memory_space<any>> -> memref<384x128xbf16, #tpu.memory_space<any>>
    %c0_i32_10 = arith.constant 0 : i32
    %c0_i32_11 = arith.constant 0 : i32
    %22 = tpu.memref_slice %arg5[%13, %c0_i32_10, %c0_i32_11] : memref<2x384x128xbf16, #tpu.memory_space<vmem>> -> memref<1x384x128xbf16, #tpu.memory_space<vmem>>
    %23 = tpu.memref_squeeze %22 : memref<1x384x128xbf16, #tpu.memory_space<vmem>> -> memref<384x128xbf16, #tpu.memory_space<vmem>>
    %24 = tpu.memref_slice %arg6[%13] : memref<2x!tpu.dma_semaphore, #tpu.memory_space<semaphore_mem>> -> memref<1x!tpu.dma_semaphore, #tpu.memory_space<semaphore_mem>>
    %25 = tpu.memref_squeeze %24 : memref<1x!tpu.dma_semaphore, #tpu.memory_space<semaphore_mem>> -> memref<!tpu.dma_semaphore, #tpu.memory_space<semaphore_mem>>
    tpu.wait_dma2 semaphore(%25 : memref<!tpu.dma_semaphore, #tpu.memory_space<semaphore_mem>>) src(%21 : memref<384x128xbf16, #tpu.memory_space<any>>) dst(%23 : memref<384x128xbf16, #tpu.memory_space<vmem>>)
    %26 = arith.index_cast %13 : i32 to index
    %c0 = arith.constant 0 : index
    %c0_12 = arith.constant 0 : index
    %27 = vector.load %arg5[%26, %c0, %c0_12] : memref<2x384x128xbf16, #tpu.memory_space<vmem>>, vector<1x384x128xbf16>
    %28 = vector.shape_cast %27 : vector<1x384x128xbf16> to vector<384x128xbf16>
    %29 = vector.extract_strided_slice %28 {offsets = [0, 0], sizes = [336, 128], strides = [1, 1]} : vector<384x128xbf16> to vector<336x128xbf16>
    %30 = vector.extract_strided_slice %28 {offsets = [1, 0], sizes = [336, 128], strides = [1, 1]} : vector<384x128xbf16> to vector<336x128xbf16>
    %31 = vector.extract_strided_slice %28 {offsets = [2, 0], sizes = [336, 128], strides = [1, 1]} : vector<384x128xbf16> to vector<336x128xbf16>
    %32 = vector.extract_strided_slice %28 {offsets = [18, 0], sizes = [336, 128], strides = [1, 1]} : vector<384x128xbf16> to vector<336x128xbf16>
    %33 = vector.extract_strided_slice %28 {offsets = [19, 0], sizes = [336, 128], strides = [1, 1]} : vector<384x128xbf16> to vector<336x128xbf16>
    %34 = vector.extract_strided_slice %28 {offsets = [20, 0], sizes = [336, 128], strides = [1, 1]} : vector<384x128xbf16> to vector<336x128xbf16>
    %35 = vector.extract_strided_slice %28 {offsets = [36, 0], sizes = [336, 128], strides = [1, 1]} : vector<384x128xbf16> to vector<336x128xbf16>
    %36 = vector.extract_strided_slice %28 {offsets = [37, 0], sizes = [336, 128], strides = [1, 1]} : vector<384x128xbf16> to vector<336x128xbf16>
    %37 = vector.extract_strided_slice %28 {offsets = [38, 0], sizes = [336, 128], strides = [1, 1]} : vector<384x128xbf16> to vector<336x128xbf16>
    %38 = tpu.concatenate %29, %30, %31, %32, %33, %34, %35, %36, %37 in 1 : vector<336x128xbf16>, vector<336x128xbf16>, vector<336x128xbf16>, vector<336x128xbf16>, vector<336x128xbf16>, vector<336x128xbf16>, vector<336x128xbf16>, vector<336x128xbf16>, vector<336x128xbf16> -> vector<336x1152xbf16>
    %c0_13 = arith.constant 0 : index
    %c0_14 = arith.constant 0 : index
    %39 = vector.load %arg3[%c0_13, %c0_14] : memref<1152x128xbf16, #tpu.memory_space<vmem>>, vector<1152x128xbf16>
    %cst = arith.constant dense<0.000000e+00> : vector<336x128xf32>
    %40 = tpu.matmul %38, %39, %cst {dimension_numbers = #tpu.dot_dimension_numbers<[1], [0], [0], [1], [0, 0, 1, 1], [], []>} : vector<336x1152xbf16>, vector<1152x128xbf16>, vector<336x128xf32> -> vector<336x128xf32>
    %41 = math.tanh %40 : vector<336x128xf32>
    %c0_15 = arith.constant 0 : index
    %c0_16 = arith.constant 0 : index
    %42 = vector.load %arg4[%c0_15, %c0_16] : memref<336x128xf32, #tpu.memory_space<vmem>>, vector<336x128xf32>
    tpu.vector_store %arg4[%c0_15, %c0_16], %41 {strides = array<i32>} : memref<336x128xf32, #tpu.memory_space<vmem>>, vector<336x128xf32>,
    return
  }
  func.func @transform_1(%arg0: i32, %arg1: i32) -> (i32, i32) {
    %c0_i32 = arith.constant 0 : i32
    %c0_i32_0 = arith.constant 0 : i32
    %c0_i32_1 = arith.constant 0 : i32
    return %c0_i32, %c0_i32_0 : i32, i32
  }
  func.func @transform_2(%arg0: i32, %arg1: i32) -> (i32, i32) {
    %c1_i32 = arith.constant 1 : i32
    %0 = arith.muli %arg0, %c1_i32 : i32
    %1 = arith.addi %0, %arg1 : i32
    %c0_i32 = arith.constant 0 : i32
    %c0_i32_0 = arith.constant 0 : i32
    return %1, %c0_i32 : i32, i32
  }
}

</mosaic_0001>

<llo_original>
// kernel: generator_forward.34
$region0: #{generator_forward.34}
  #allocation0 [shape = 'u32[]', space=smem, size = 0x4, offset = 0x4, fixed_abs, tag = 'smem constant byte address 0x4 - core index']
  #allocation1 [shape = 'u32[144,128]{1,0:T(1,128)}', space=vmem, size = 0x12000, scoped, tag = 'internal scratch']
  %s0 = inlined_call_operand.vmem [shape: bf16[512,152], index: 0, kind: input, shape index: {}]
  %s1 = inlined_call_operand.vmem [shape: bf16[152,128], index: 1, kind: input, shape index: {}]
  %s2 = inlined_call_operand.vmem [shape: f32[1,128], index: 2, kind: input, shape index: {}]
  %s3 = inlined_call_operand.vmem [shape: bf16[512,128], index: 3, kind: output, shape index: {}]
  %s4 = sld [smem:[#allocation0]]
  $region45: #{generator_forward.34} parent=0
    _
  %s6 = ssub.s32 1, %s4
  %s7 = scalar_select 0, %s6, %s4
  loop: start=0, step=1, limit=4
  $region2: #{generator_forward.34} parent=0 // loop_pre_header
    _
  $region3: #{generator_forward.34} parent=0 // loop_header
    %s9 = sphi 0, %s13
    %p10 = scmp.ge.s32.totalorder %s9, 4
    %s19 = sphi 0, %s21
    %s22 = sphi 0, %s19
    %s23 = sphi 0, %s22
    %s39 = sphi 0, %s23
    %s43 = sphi 0, %s43
    %s45 = sphi 0, %s43
    %s46 = sphi 0, %s45
    %s60 = sphi 0, %s46
    %s64 = sphi 0, %s64
    %s66 = sphi 0, %s64
    %s67 = sphi 0, %s66
    %s81 = sphi 0, %s67
    %s87 = sphi 0, %s89
    %s90 = sphi 0, %s87
    %s91 = sphi 0, %s90
    %s107 = sphi 0, %s91
  $region4: #{generator_forward.34} parent=0 // loop_header_branch
    %12 = sbr.rel (%p10) target = $region8
  $region5: #{generator_forward.34} parent=0 // loop_body
    %s14 = ssub.s32 %s9, 1
    %s15 = ssub.s32 %s9, 2
    %s16 = sadd.s32 %s9, 1
    %s17 = ssub.s32 %s9, %s16
    %p18 = scmp.eq.s32.totalorder %s17, 0
    %s20 = sadd.s32 %s19, 1
    %s21 = scalar_select %p18, %s19, %s20
    %p24 = pneg %p18
    %p25 = scmp.eq.s32.totalorder %s9, 1
    %p26 = por %p24, %p25
    %p27 = scmp.ne.s32.totalorder %s19, %s22
    %p28 = scmp.eq.s32.totalorder %s9, 0
    %p29 = por %p27, %p28
    %p30 = scmp.ne.s32.totalorder %s19, %s22
    %p31 = scmp.eq.s32.totalorder %s14, 1
    %p32 = por %p30, %p31
    %p33 = scmp.ne.s32.totalorder %s22, %s23
    %p34 = scmp.eq.s32.totalorder %s14, 0
    %p35 = por %p33, %p34
    %p36 = scmp.ne.s32.totalorder %s22, %s23
    %p37 = scmp.eq.s32.totalorder %s15, 1
    %p38 = por %p36, %p37
    %p40 = scmp.ne.s32.totalorder %s23, %s39
    %p41 = scmp.eq.s32.totalorder %s15, 0
    %p42 = por %p40, %p41
    %s44 = sadd.s32 %s43, 1
    %p47 = scmp.eq.s32.totalorder %s9, 1
    %p48 = scmp.ne.s32.totalorder %s43, %s45
    %p49 = scmp.eq.s32.totalorder %s9, 0
    %p50 = por %p48, %p49
    %p51 = scmp.ne.s32.totalorder %s43, %s45
    %p52 = scmp.eq.s32.totalorder %s14, 1
    %p53 = por %p51, %p52
    %p54 = scmp.ne.s32.totalorder %s45, %s46
    %p55 = scmp.eq.s32.totalorder %s14, 0
    %p56 = por %p54, %p55
    %p57 = scmp.ne.s32.totalorder %s45, %s46
    %p58 = scmp.eq.s32.totalorder %s15, 1
    %p59 = por %p57, %p58
    %p61 = scmp.ne.s32.totalorder %s46, %s60
    %p62 = scmp.eq.s32.totalorder %s15, 0
    %p63 = por %p61, %p62
    %s65 = sadd.s32 %s64, 1
    %p68 = scmp.eq.s32.totalorder %s9, 1
    %p69 = scmp.ne.s32.totalorder %s64, %s66
    %p70 = scmp.eq.s32.totalorder %s9, 0
    %p71 = por %p69, %p70
    %p72 = scmp.ne.s32.totalorder %s64, %s66
    %p73 = scmp.eq.s32.totalorder %s14, 1
    %p74 = por %p72, %p73
    %p75 = scmp.ne.s32.totalorder %s66, %s67
    %p76 = scmp.eq.s32.totalorder %s14, 0
    %p77 = por %p75, %p76
    %p78 = scmp.ne.s32.totalorder %s66, %s67
    %p79 = scmp.eq.s32.totalorder %s15, 1
    %p80 = por %p78, %p79
    %p82 = scmp.ne.s32.totalorder %s67, %s81
    %p83 = scmp.eq.s32.totalorder %s15, 0
    %p84 = por %p82, %p83
    %s85 = ssub.s32 %s9, %s16
    %p86 = scmp.eq.s32.totalorder %s85, 0
    %s88 = sadd.s32 %s87, 1
    %s89 = scalar_select %p86, %s87, %s88
    %p92 = pneg %p86
    %p93 = scmp.eq.s32.totalorder %s9, 1
    %p94 = por %p92, %p93
    %p95 = scmp.ne.s32.totalorder %s87, %s90
    %p96 = scmp.eq.s32.totalorder %s9, 0
    %p97 = por %p95, %p96
    %p98 = scmp.ne.s32.totalorder %s87, %s90
    %p99 = scmp.eq.s32.totalorder %s14, 1
    %p100 = por %p98, %p99
    %p101 = scmp.ne.s32.totalorder %s90, %s91
    %p102 = scmp.eq.s32.totalorder %s14, 0
    %p103 = por %p101, %p102
    %p104 = scmp.ne.s32.totalorder %s90, %s91
    %p105 = scmp.eq.s32.totalorder %s15, 1
    %p106 = por %p104, %p105
    %p108 = scmp.ne.s32.totalorder %s91, %s107
    %p109 = scmp.eq.s32.totalorder %s15, 0
    %p110 = por %p108, %p109
    %p111 = scmp.le.s32.totalorder 1, %s9
    %p112 = scmp.lt.s32.totalorder %s9, 3
    %p113 = pnand %p111, %p112
    %p114 = pneg %p113
    // Predicated region
    $region9: #{generator_forward.34} parent=5 // pred_check
      _
    $region10: #{generator_forward.34} parent=5 // pred_check_branch
      %116 = sbr.rel (%p113) target = $region12
    $region11: #{generator_forward.34} parent=5 // pred_region
      %s117 = ssub.s32 %s9, 1
      // Predicated region
      $region13: #{generator_forward.34} parent=11 // pred_check
        %p118 = pneg %p56
      $region14: #{generator_forward.34} parent=11 // pred_check_branch
        %120 = sbr.rel (%p118) target = $region16
      $region15: #{generator_forward.34} parent=11 // pred_region
        _
      $region16: #{generator_forward.34} parent=11 // pred_fallthru
        _
      // Predicated region
      $region17: #{generator_forward.34} parent=11 // pred_check
        %p121 = pneg %p77
      $region18: #{generator_forward.34} parent=11 // pred_check_branch
        %123 = sbr.rel (%p121) target = $region20
      $region19: #{generator_forward.34} parent=11 // pred_region
        _
      $region20: #{generator_forward.34} parent=11 // pred_fallthru
        _
    $region12: #{generator_forward.34} parent=5 // pred_fallthru
      _
    %p124 = scmp.lt.s32.totalorder %s9, 2
    // Predicated region
    $region21: #{generator_forward.34} parent=5 // pred_check
      %p125 = pneg %p124
    $region22: #{generator_forward.34} parent=5 // pred_check_branch
      %127 = sbr.rel (%p125) target = $region24
    $region23: #{generator_forward.34} parent=5 // pred_region
      // Predicated region
      $region25: #{generator_forward.34} parent=23 // pred_check
        %p128 = pneg %p29
      $region26: #{generator_forward.34} parent=23 // pred_check_branch
        %130 = sbr.rel (%p128) target = $region28
      $region27: #{generator_forward.34} parent=23 // pred_region
        %s131 = smul.u32 32, %s9
        %p132 = scmp.lt.s32.totalorder %s131, 63
        %s133 = scalar_select %p132, %s131, 63
        %s134 = smul.addr %s133, 2
        %s135 = smul.addr %s134, 4
        %s136 = scalar_lea.vmem %s0, %s135
        %s137 = smul.u32 32, %s9
      $region28: #{generator_forward.34} parent=23 // pred_fallthru
        _
    $region24: #{generator_forward.34} parent=5 // pred_fallthru
      _
    %p138 = scmp.le.s32.totalorder 1, %s9
    %p139 = scmp.lt.s32.totalorder %s9, 3
    %p140 = pnand %p138, %p139
    %p141 = pneg %p140
    // Predicated region
    $region29: #{generator_forward.34} parent=5 // pred_check
      _
    $region30: #{generator_forward.34} parent=5 // pred_check_branch
      %143 = sbr.rel (%p140) target = $region32
    $region31: #{generator_forward.34} parent=5 // pred_region
      %s144 = ssub.s32 %s9, 1
      %s145 = smul.u32 32, %s14
      %p146 = scmp.lt.s32.totalorder %s145, 63
      %s147 = scalar_select %p146, %s145, 63
      %s148 = smul.addr %s147, 2
      %s149 = smul.addr %s148, 4
      %s150 = scalar_lea.vmem %s0, %s149
      %p151 = pneg %p35
      %p152 = pneg %p32
      %p153 = pneg %p56
      %p154 = pneg %p53
      %p155 = pneg %p77
      %p156 = pneg %p74
      %p157 = pneg %p103
      %p158 = pneg %p100
      %s159 = smul.u32 32, %s14
      %p160 = scmp.lt.s32.totalorder %s159, 63
      %s161 = scalar_select %p160, %s159, 63
      %s162 = smul.addr %s161, 4
      %s163 = scalar_lea.vmem %s3, %s162
      %s164 = smul.u32 32, %s14
      %p165 = scmp.lt.s32.totalorder %s164, 63
      %s166 = scalar_select %p165, %s164, 63
      %s167 = smul.addr %s166, 2
      %s168 = smul.addr %s167, 4
      %s169 = scalar_lea.vmem %s0, %s168
      %s170 = smul.u32 32, %s14
      %s171 = smul.u32 32, %s14
      %p172 = scmp.lt.s32.totalorder %s171, 63
      %s173 = scalar_select %p172, %s171, 63
      %s174 = smul.addr %s173, 4
      %s175 = scalar_lea.vmem %s3, %s174
      %s176 = smul.u32 32, %s14
      %v178 = vld [vmem:[%s169] sm:$0xff]
      %v179 = vld [vmem:[%s169 + $0x8] sm:$0xff]
      %v180 = vld [vmem:[%s169 + $0x10] sm:$0xff]
      %v181 = vld [vmem:[%s169 + $0x18] sm:$0xff]
      %v182 = vld [vmem:[%s169 + $0x20] sm:$0xff]
      %v183 = vld [vmem:[%s169 + $0x28] sm:$0xff]
      %v184 = vld [vmem:[%s169 + $0x30] sm:$0xff]
      %v185 = vld [vmem:[%s169 + $0x38] sm:$0xff]
      %v186 = vld [vmem:[%s169 + $0x40] sm:$0xff]
      %v187 = vld [vmem:[%s169 + $0x48] sm:$0xff]
      %v188 = vld [vmem:[%s169 + $0x50] sm:$0xff]
      %v189 = vld [vmem:[%s169 + $0x58] sm:$0xff]
      %v190 = vld [vmem:[%s169 + $0x60] sm:$0xff]
      %v191 = vld [vmem:[%s169 + $0x68] sm:$0xff]
      %v192 = vld [vmem:[%s169 + $0x70] sm:$0xff]
      %v193 = vld [vmem:[%s169 + $0x78] sm:$0xff]
      %v194 = vld [vmem:[%s169 + $0x80] sm:$0xff]
      %v195 = vld [vmem:[%s169 + $0x88] sm:$0xff]
      %v196 = vld [vmem:[%s169 + $0x90] sm:$0xff]
      %v197 = vld [vmem:[%s169 + $0x98] sm:$0xff]
      %v198 = vld [vmem:[%s169 + $0xa0] sm:$0xff]
      %v199 = vld [vmem:[%s169 + $0xa8] sm:$0xff]
      %v200 = vld [vmem:[%s169 + $0xb0] sm:$0xff]
      %v201 = vld [vmem:[%s169 + $0xb8] sm:$0xff]
      %v202 = vld [vmem:[%s169 + $0xc0] sm:$0xff]
      %v203 = vld [vmem:[%s169 + $0xc8] sm:$0xff]
      %v204 = vld [vmem:[%s169 + $0xd0] sm:$0xff]
      %v205 = vld [vmem:[%s169 + $0xd8] sm:$0xff]
      %v206 = vld [vmem:[%s169 + $0xe0] sm:$0xff]
      %v207 = vld [vmem:[%s169 + $0xe8] sm:$0xff]
      %v208 = vld [vmem:[%s169 + $0xf0] sm:$0xff]
      %v209 = vld [vmem:[%s169 + $0xf8] sm:$0xff]
      %v210 = vld [vmem:[%s1] sm:$0xf]
      %v211 = vld [vmem:[%s1 + $0x4] sm:$0xf]
      %v212 = vld [vmem:[%s1 + $0x8] sm:$0xf]
      %v213 = vld [vmem:[%s1 + $0xc] sm:$0xf]
      %v214 = vld [vmem:[%s1 + $0x10] sm:$0xf]
      %v215 = vld [vmem:[%s1 + $0x14] sm:$0xf]
      %v216 = vld [vmem:[%s1 + $0x18] sm:$0xf]
      %v217 = vld [vmem:[%s1 + $0x1c] sm:$0xf]
      %v218 = vld [vmem:[%s1 + $0x20] sm:$0xf]
      %v219 = vld [vmem:[%s1 + $0x24] sm:$0xf]
      %v220 = vld [vmem:[%s1 + $0x28] sm:$0xf]
      %v221 = vld [vmem:[%s1 + $0x2c] sm:$0xf]
      %v222 = vld [vmem:[%s1 + $0x30] sm:$0xf]
      %v223 = vld [vmem:[%s1 + $0x34] sm:$0xf]
      %v224 = vld [vmem:[%s1 + $0x38] sm:$0xf]
      %v225 = vld [vmem:[%s1 + $0x3c] sm:$0xf]
      %v226 = vld [vmem:[%s1 + $0x40] sm:$0xf]
      %v227 = vld [vmem:[%s1 + $0x44] sm:$0xf]
      %v228 = vld [vmem:[%s1 + $0x48] sm:$0xf]
      %v229 = vld [vmem:[%s2] sm:$0x1]
      %v231 = vlaneseq
      %v232 = vshrl.u32 %v231, 7
      %v233 = vsub.s32 0, %v232
      %v234 = vrot.slane %v229, %v233
      %v268 = vunpack.c.l.b16 %v178
      %v269 = vunpack.c.h.b16 %v178
      %v270 = vunpack.c.l.b16 %v179
      %v271 = vunpack.c.h.b16 %v179
      %v272 = vunpack.c.l.b16 %v180
      %v273 = vunpack.c.h.b16 %v180
      %v274 = vunpack.c.l.b16 %v181
      %v275 = vunpack.c.h.b16 %v181
      %v276 = vunpack.c.l.b16 %v182
      %v277 = vunpack.c.h.b16 %v182
      %v278 = vunpack.c.l.b16 %v183
      %v279 = vunpack.c.h.b16 %v183
      %v280 = vunpack.c.l.b16 %v184
      %v281 = vunpack.c.h.b16 %v184
      %v282 = vunpack.c.l.b16 %v185
      %v283 = vunpack.c.h.b16 %v185
      %v284 = vunpack.c.l.b16 %v186
      %v285 = vunpack.c.h.b16 %v186
      %v286 = vunpack.c.l.b16 %v187
      %v287 = vunpack.c.h.b16 %v187
      %v288 = vunpack.c.l.b16 %v188
      %v289 = vunpack.c.h.b16 %v188
      %v290 = vunpack.c.l.b16 %v189
      %v291 = vunpack.c.h.b16 %v189
      %v292 = vunpack.c.l.b16 %v190
      %v293 = vunpack.c.h.b16 %v190
      %v294 = vunpack.c.l.b16 %v191
      %v295 = vunpack.c.h.b16 %v191
      %v296 = vunpack.c.l.b16 %v192
      %v297 = vunpack.c.h.b16 %v192
      %v298 = vunpack.c.l.b16 %v193
      %v299 = vunpack.c.h.b16 %v193
      %v300 = vunpack.c.l.b16 %v194
      %v301 = vunpack.c.h.b16 %v194
      %v302 = vunpack.c.l.b16 %v195
      %v303 = vunpack.c.h.b16 %v195
      %v304 = vunpack.c.l.b16 %v196
      %v305 = vunpack.c.h.b16 %v196
      %v306 = vunpack.c.l.b16 %v197
      %v307 = vunpack.c.h.b16 %v197
      %v308 = vunpack.c.l.b16 %v198
      %v309 = vunpack.c.h.b16 %v198
      %v310 = vunpack.c.l.b16 %v199
      %v311 = vunpack.c.h.b16 %v199
      %v312 = vunpack.c.l.b16 %v200
      %v313 = vunpack.c.h.b16 %v200
      %v314 = vunpack.c.l.b16 %v201
      %v315 = vunpack.c.h.b16 %v201
      %v316 = vunpack.c.l.b16 %v202
      %v317 = vunpack.c.h.b16 %v202
      %v318 = vunpack.c.l.b16 %v203
      %v319 = vunpack.c.h.b16 %v203
      %v320 = vunpack.c.l.b16 %v204
      %v321 = vunpack.c.h.b16 %v204
      %v322 = vunpack.c.l.b16 %v205
      %v323 = vunpack.c.h.b16 %v205
      %v324 = vunpack.c.l.b16 %v206
      %v325 = vunpack.c.h.b16 %v206
      %v326 = vunpack.c.l.b16 %v207
      %v327 = vunpack.c.h.b16 %v207
      %v328 = vunpack.c.l.b16 %v208
      %v329 = vunpack.c.h.b16 %v208
      %v330 = vunpack.c.l.b16 %v209
      %v331 = vunpack.c.h.b16 %v209
      %v332 = vpack.c.b16 %v270, %v268
      %v333 = vpack.c.b16 %v271, %v269
      %v334 = vpack.c.b16 %v274, %v272
      %v335 = vpack.c.b16 %v275, %v273
      %v336 = vpack.c.b16 %v278, %v276
      %v337 = vpack.c.b16 %v279, %v277
      %v338 = vpack.c.b16 %v282, %v280
      %v339 = vpack.c.b16 %v283, %v281
      %v340 = vpack.c.b16 %v286, %v284
      %v341 = vpack.c.b16 %v287, %v285
      %v342 = vpack.c.b16 %v290, %v288
      %v343 = vpack.c.b16 %v291, %v289
      %v344 = vpack.c.b16 %v294, %v292
      %v345 = vpack.c.b16 %v295, %v293
      %v346 = vpack.c.b16 %v298, %v296
      %v347 = vpack.c.b16 %v299, %v297
      %v348 = vpack.c.b16 %v302, %v300
      %v349 = vpack.c.b16 %v303, %v301
      %v350 = vpack.c.b16 %v306, %v304
      %v351 = vpack.c.b16 %v307, %v305
      %v352 = vpack.c.b16 %v310, %v308
      %v353 = vpack.c.b16 %v311, %v309
      %v354 = vpack.c.b16 %v314, %v312
      %v355 = vpack.c.b16 %v315, %v313
      %v356 = vpack.c.b16 %v318, %v316
      %v357 = vpack.c.b16 %v319, %v317
      %v358 = vpack.c.b16 %v322, %v320
      %v359 = vpack.c.b16 %v323, %v321
      %v360 = vpack.c.b16 %v326, %v324
      %v361 = vpack.c.b16 %v327, %v325
      %v362 = vpack.c.b16 %v330, %v328
      %v363 = vpack.c.b16 %v331, %v329
      %v399 = vunpack.c.l.b16 %v210
      %v400 = vunpack.c.l.b16 %v211
      %v401 = vunpack.c.l.b16 %v212
      %v402 = vunpack.c.l.b16 %v213
      %v403 = vunpack.c.l.b16 %v214
      %v404 = vunpack.c.l.b16 %v215
      %v405 = vunpack.c.l.b16 %v216
      %v406 = vunpack.c.l.b16 %v217
      %v407 = vunpack.c.l.b16 %v218
      %v408 = vunpack.c.l.b16 %v219
      %v409 = vunpack.c.l.b16 %v220
      %v410 = vunpack.c.l.b16 %v221
      %v411 = vunpack.c.l.b16 %v222
      %v412 = vunpack.c.l.b16 %v223
      %v413 = vunpack.c.l.b16 %v224
      %v414 = vunpack.c.l.b16 %v225
      %v415 = vunpack.c.l.b16 %v226
      %v416 = vunpack.c.l.b16 %v227
      %v417 = vunpack.c.l.b16 %v228
      %v418 = vpack.c.b16 %v400, %v399
      %v419 = vpack.c.b16 %v402, %v401
      %v420 = vpack.c.b16 %v404, %v403
      %v421 = vpack.c.b16 %v406, %v405
      %v422 = vpack.c.b16 %v408, %v407
      %v423 = vpack.c.b16 %v410, %v409
      %v424 = vpack.c.b16 %v412, %v411
      %v425 = vpack.c.b16 %v414, %v413
      %v426 = vpack.c.b16 %v416, %v415
      %v427 = vpack.c.b16 %v417, %v417
      %vm437 = vcmask 195584
      %v439 = vsel %vm437, %v333, 0
      %v442 = vsel %vm437, %v335, 0
      %v445 = vsel %vm437, %v337, 0
      %v448 = vsel %vm437, %v339, 0
      %v451 = vsel %vm437, %v341, 0
      %v454 = vsel %vm437, %v343, 0
      %v457 = vsel %vm437, %v345, 0
      %v460 = vsel %vm437, %v347, 0
      %v463 = vsel %vm437, %v349, 0
      %v466 = vsel %vm437, %v351, 0
      %v469 = vsel %vm437, %v353, 0
      %v472 = vsel %vm437, %v355, 0
      %v475 = vsel %vm437, %v357, 0
      %v478 = vsel %vm437, %v359, 0
      %v481 = vsel %vm437, %v361, 0
      %v484 = vsel %vm437, %v363, 0
      %vm486 = vcmask 1043456
      %v488 = vsel %vm486, %v427, 0
      %490 = vmatprep.subr.bf16.mxu0 0
      %491 = vmatpush1.bf16.msra.mxu0 %v418
      %492 = vmatprep.subr.bf16.mxu0 0
      %493 = vmatpush1.bf16.msra.mxu0 %v419
      %494 = vmatprep.subr.bf16.mxu0 0
      %495 = vmatpush1.bf16.msra.mxu0 %v420
      %496 = vmatprep.subr.bf16.mxu0 0
      %497 = vmatpush1.bf16.msra.mxu0 %v421
      %498 = vmatprep.subr.bf16.mxu0 0
      %499 = vmatpush1.bf16.msra.mxu0 %v422
      %500 = vmatprep.subr.bf16.mxu0 0
      %501 = vmatpush1.bf16.msra.mxu0 %v423
      %502 = vmatprep.subr.bf16.mxu0 0
      %503 = vmatpush1.bf16.msra.mxu0 %v424
      %504 = vmatprep.subr.bf16.mxu0 0
      %505 = vmatpush1.bf16.msra.mxu0 %v425
      %506 = vmatprep.subr.bf16.mxu0 0
      %507 = vmatpush1.bf16.msra.mxu0 %v426
      %508 = vmatprep.subr.bf16.mxu0 0
      %509 = vmatpush1.bf16.msra.mxu0 %v488
      %510 = vmatprep.subr.bf16.mxu0 0
      %511 = vmatpush1.bf16.msra.mxu0 0
      %512 = vmatprep.subr.bf16.mxu0 0
      %513 = vmatpush1.bf16.msra.mxu0 0
      %514 = vmatprep.subr.bf16.mxu0 0
      %515 = vmatpush1.bf16.msra.mxu0 0
      %516 = vmatprep.subr.bf16.mxu0 0
      %517 = vmatpush1.bf16.msra.mxu0 0
      %518 = vmatprep.subr.bf16.mxu0 0
      %519 = vmatpush1.bf16.msra.mxu0 0
      %520 = vmatprep.subr.bf16.mxu0 0
      %521 = vmatpush1.bf16.msra.mxu0 0
      %522 = vmatprep.mubr.bf16.mxu0 %v439
      %523 = vmatmul.mubr.bf16.gmra.mrb[0].mxu0 %v332
      %v524 = vpop.f32.mrb[0].mxu0
      %v525 = vadd.f32 %v234, %v524
      %v526 = vpop.f32.mrb[0].mxu0
      %v527 = vpop.f32.mrb[0].mxu0
      %v528 = vadd.f32 %v234, %v527
      %v529 = vpop.f32.mrb[0].mxu0
      %530 = vmatprep.mubr.bf16.mxu0 %v442
      %531 = vmatmul.mubr.bf16.gmra.mrb[0].mxu0 %v334
      %v532 = vpop.f32.mrb[0].mxu0
      %v533 = vadd.f32 %v234, %v532
      %v534 = vpop.f32.mrb[0].mxu0
      %v535 = vpop.f32.mrb[0].mxu0
      %v536 = vadd.f32 %v234, %v535
      %v537 = vpop.f32.mrb[0].mxu0
      %538 = vmatprep.mubr.bf16.mxu0 %v445
      %539 = vmatmul.mubr.bf16.gmra.mrb[0].mxu0 %v336
      %v540 = vpop.f32.mrb[0].mxu0
      %v541 = vadd.f32 %v234, %v540
      %v542 = vpop.f32.mrb[0].mxu0
      %v543 = vpop.f32.mrb[0].mxu0
      %v544 = vadd.f32 %v234, %v543
      %v545 = vpop.f32.mrb[0].mxu0
      %546 = vmatprep.mubr.bf16.mxu0 %v448
      %547 = vmatmul.mubr.bf16.gmra.mrb[0].mxu0 %v338
      %v548 = vpop.f32.mrb[0].mxu0
      %v549 = vadd.f32 %v234, %v548
      %v550 = vpop.f32.mrb[0].mxu0
      %v551 = vpop.f32.mrb[0].mxu0
      %v552 = vadd.f32 %v234, %v551
      %v553 = vpop.f32.mrb[0].mxu0
      %554 = vmatprep.mubr.bf16.mxu0 %v451
      %555 = vmatmul.mubr.bf16.gmra.mrb[0].mxu0 %v340
      %v556 = vpop.f32.mrb[0].mxu0
      %v557 = vadd.f32 %v234, %v556
      %v558 = vpop.f32.mrb[0].mxu0
      %v559 = vpop.f32.mrb[0].mxu0
      %v560 = vadd.f32 %v234, %v559
      %v561 = vpop.f32.mrb[0].mxu0
      %562 = vmatprep.mubr.bf16.mxu0 %v454
      %563 = vmatmul.mubr.bf16.gmra.mrb[0].mxu0 %v342
      %v564 = vpop.f32.mrb[0].mxu0
      %v565 = vadd.f32 %v234, %v564
      %v566 = vpop.f32.mrb[0].mxu0
      %v567 = vpop.f32.mrb[0].mxu0
      %v568 = vadd.f32 %v234, %v567
      %v569 = vpop.f32.mrb[0].mxu0
      %570 = vmatprep.mubr.bf16.mxu0 %v457
      %571 = vmatmul.mubr.bf16.gmra.mrb[0].mxu0 %v344
      %v572 = vpop.f32.mrb[0].mxu0
      %v573 = vadd.f32 %v234, %v572
      %v574 = vpop.f32.mrb[0].mxu0
      %v575 = vpop.f32.mrb[0].mxu0
      %v576 = vadd.f32 %v234, %v575
      %v577 = vpop.f32.mrb[0].mxu0
      %578 = vmatprep.mubr.bf16.mxu0 %v460
      %579 = vmatmul.mubr.bf16.gmra.mrb[0].mxu0 %v346
      %v580 = vpop.f32.mrb[0].mxu0
      %v581 = vadd.f32 %v234, %v580
      %v582 = vpop.f32.mrb[0].mxu0
      %v583 = vpop.f32.mrb[0].mxu0
      %v584 = vadd.f32 %v234, %v583
      %v585 = vpop.f32.mrb[0].mxu0
      %586 = vmatprep.mubr.bf16.mxu0 %v463
      %587 = vmatmul.mubr.bf16.gmra.mrb[0].mxu0 %v348
      %v588 = vpop.f32.mrb[0].mxu0
      %v589 = vadd.f32 %v234, %v588
      %v590 = vpop.f32.mrb[0].mxu0
      %v591 = vpop.f32.mrb[0].mxu0
      %v592 = vadd.f32 %v234, %v591
      %v593 = vpop.f32.mrb[0].mxu0
      %594 = vmatprep.mubr.bf16.mxu0 %v466
      %595 = vmatmul.mubr.bf16.gmra.mrb[0].mxu0 %v350
      %v596 = vpop.f32.mrb[0].mxu0
      %v597 = vadd.f32 %v234, %v596
      %v598 = vpop.f32.mrb[0].mxu0
      %v599 = vpop.f32.mrb[0].mxu0
      %v600 = vadd.f32 %v234, %v599
      %v601 = vpop.f32.mrb[0].mxu0
      %602 = vmatprep.mubr.bf16.mxu0 %v469
      %603 = vmatmul.mubr.bf16.gmra.mrb[0].mxu0 %v352
      %v604 = vpop.f32.mrb[0].mxu0
      %v605 = vadd.f32 %v234, %v604
      %v606 = vpop.f32.mrb[0].mxu0
      %v607 = vpop.f32.mrb[0].mxu0
      %v608 = vadd.f32 %v234, %v607
      %v609 = vpop.f32.mrb[0].mxu0
      %610 = vmatprep.mubr.bf16.mxu0 %v472
      %611 = vmatmul.mubr.bf16.gmra.mrb[0].mxu0 %v354
      %v612 = vpop.f32.mrb[0].mxu0
      %v613 = vadd.f32 %v234, %v612
      %v614 = vpop.f32.mrb[0].mxu0
      %v615 = vpop.f32.mrb[0].mxu0
      %v616 = vadd.f32 %v234, %v615
      %v617 = vpop.f32.mrb[0].mxu0
      %618 = vmatprep.mubr.bf16.mxu0 %v475
      %619 = vmatmul.mubr.bf16.gmra.mrb[0].mxu0 %v356
      %v620 = vpop.f32.mrb[0].mxu0
      %v621 = vadd.f32 %v234, %v620
      %v622 = vpop.f32.mrb[0].mxu0
      %v623 = vpop.f32.mrb[0].mxu0
      %v624 = vadd.f32 %v234, %v623
      %v625 = vpop.f32.mrb[0].mxu0
      %626 = vmatprep.mubr.bf16.mxu0 %v478
      %627 = vmatmul.mubr.bf16.gmra.mrb[0].mxu0 %v358
      %v628 = vpop.f32.mrb[0].mxu0
      %v629 = vadd.f32 %v234, %v628
      %v630 = vpop.f32.mrb[0].mxu0
      %v631 = vpop.f32.mrb[0].mxu0
      %v632 = vadd.f32 %v234, %v631
      %v633 = vpop.f32.mrb[0].mxu0
      %634 = vmatprep.mubr.bf16.mxu0 %v481
      %635 = vmatmul.mubr.bf16.gmra.mrb[0].mxu0 %v360
      %v636 = vpop.f32.mrb[0].mxu0
      %v637 = vadd.f32 %v234, %v636
      %v638 = vpop.f32.mrb[0].mxu0
      %v639 = vpop.f32.mrb[0].mxu0
      %v640 = vadd.f32 %v234, %v639
      %v641 = vpop.f32.mrb[0].mxu0
      %642 = vmatprep.mubr.bf16.mxu0 %v484
      %643 = vmatmul.mubr.bf16.gmra.mrb[0].mxu0 %v362
      %v644 = vpop.f32.mrb[0].mxu0
      %v645 = vadd.f32 %v234, %v644
      %v646 = vpop.f32.mrb[0].mxu0
      %v647 = vpop.f32.mrb[0].mxu0
      %v648 = vadd.f32 %v234, %v647
      %v649 = vpop.f32.mrb[0].mxu0
      %650 = vdwg.mxu0
      %vm651 = vcmp.ge.f32.partialorder %v525, 0.0
      %vm652 = vcmp.ge.f32.partialorder %v528, 0.0
      %vm653 = vcmp.ge.f32.partialorder %v533, 0.0
      %vm654 = vcmp.ge.f32.partialorder %v536, 0.0
      %vm655 = vcmp.ge.f32.partialorder %v541, 0.0
      %vm656 = vcmp.ge.f32.partialorder %v544, 0.0
      %vm657 = vcmp.ge.f32.partialorder %v549, 0.0
      %vm658 = vcmp.ge.f32.partialorder %v552, 0.0
      %vm659 = vcmp.ge.f32.partialorder %v557, 0.0
      %vm660 = vcmp.ge.f32.partialorder %v560, 0.0
      %vm661 = vcmp.ge.f32.partialorder %v565, 0.0
      %vm662 = vcmp.ge.f32.partialorder %v568, 0.0
      %vm663 = vcmp.ge.f32.partialorder %v573, 0.0
      %vm664 = vcmp.ge.f32.partialorder %v576, 0.0
      %vm665 = vcmp.ge.f32.partialorder %v581, 0.0
      %vm666 = vcmp.ge.f32.partialorder %v584, 0.0
      %vm667 = vcmp.ge.f32.partialorder %v589, 0.0
      %vm668 = vcmp.ge.f32.partialorder %v592, 0.0
      %vm669 = vcmp.ge.f32.partialorder %v597, 0.0
      %vm670 = vcmp.ge.f32.partialorder %v600, 0.0
      %vm671 = vcmp.ge.f32.partialorder %v605, 0.0
      %vm672 = vcmp.ge.f32.partialorder %v608, 0.0
      %vm673 = vcmp.ge.f32.partialorder %v613, 0.0
      %vm674 = vcmp.ge.f32.partialorder %v616, 0.0
      %vm675 = vcmp.ge.f32.partialorder %v621, 0.0
      %vm676 = vcmp.ge.f32.partialorder %v624, 0.0
      %vm677 = vcmp.ge.f32.partialorder %v629, 0.0
      %vm678 = vcmp.ge.f32.partialorder %v632, 0.0
      %vm679 = vcmp.ge.f32.partialorder %v637, 0.0
      %vm680 = vcmp.ge.f32.partialorder %v640, 0.0
      %vm681 = vcmp.ge.f32.partialorder %v645, 0.0
      %vm682 = vcmp.ge.f32.partialorder %v648, 0.0
      %v683 = vmul.f32 %v525, 0.2
      %v684 = vmul.f32 %v528, 0.2
      %v685 = vmul.f32 %v533, 0.2
      %v686 = vmul.f32 %v536, 0.2
      %v687 = vmul.f32 %v541, 0.2
      %v688 = vmul.f32 %v544, 0.2
      %v689 = vmul.f32 %v549, 0.2
      %v690 = vmul.f32 %v552, 0.2
      %v691 = vmul.f32 %v557, 0.2
      %v692 = vmul.f32 %v560, 0.2
      %v693 = vmul.f32 %v565, 0.2
      %v694 = vmul.f32 %v568, 0.2
      %v695 = vmul.f32 %v573, 0.2
      %v696 = vmul.f32 %v576, 0.2
      %v697 = vmul.f32 %v581, 0.2
      %v698 = vmul.f32 %v584, 0.2
      %v699 = vmul.f32 %v589, 0.2
      %v700 = vmul.f32 %v592, 0.2
      %v701 = vmul.f32 %v597, 0.2
      %v702 = vmul.f32 %v600, 0.2
      %v703 = vmul.f32 %v605, 0.2
      %v704 = vmul.f32 %v608, 0.2
      %v705 = vmul.f32 %v613, 0.2
      %v706 = vmul.f32 %v616, 0.2
      %v707 = vmul.f32 %v621, 0.2
      %v708 = vmul.f32 %v624, 0.2
      %v709 = vmul.f32 %v629, 0.2
      %v710 = vmul.f32 %v632, 0.2
      %v711 = vmul.f32 %v637, 0.2
      %v712 = vmul.f32 %v640, 0.2
      %v713 = vmul.f32 %v645, 0.2
      %v714 = vmul.f32 %v648, 0.2
      %v715 = vsel %vm651, %v525, %v683
      %v716 = vsel %vm652, %v528, %v684
      %v717 = vsel %vm653, %v533, %v685
      %v718 = vsel %vm654, %v536, %v686
      %v719 = vsel %vm655, %v541, %v687
      %v720 = vsel %vm656, %v544, %v688
      %v721 = vsel %vm657, %v549, %v689
      %v722 = vsel %vm658, %v552, %v690
      %v723 = vsel %vm659, %v557, %v691
      %v724 = vsel %vm660, %v560, %v692
      %v725 = vsel %vm661, %v565, %v693
      %v726 = vsel %vm662, %v568, %v694
      %v727 = vsel %vm663, %v573, %v695
      %v728 = vsel %vm664, %v576, %v696
      %v729 = vsel %vm665, %v581, %v697
      %v730 = vsel %vm666, %v584, %v698
      %v731 = vsel %vm667, %v589, %v699
      %v732 = vsel %vm668, %v592, %v700
      %v733 = vsel %vm669, %v597, %v701
      %v734 = vsel %vm670, %v600, %v702
      %v735 = vsel %vm671, %v605, %v703
      %v736 = vsel %vm672, %v608, %v704
      %v737 = vsel %vm673, %v613, %v705
      %v738 = vsel %vm674, %v616, %v706
      %v739 = vsel %vm675, %v621, %v707
      %v740 = vsel %vm676, %v624, %v708
      %v741 = vsel %vm677, %v629, %v709
      %v742 = vsel %vm678, %v632, %v710
      %v743 = vsel %vm679, %v637, %v711
      %v744 = vsel %vm680, %v640, %v712
      %v745 = vsel %vm681, %v645, %v713
      %v746 = vsel %vm682, %v648, %v714
      %v747 = vpack.c.bf16 %v716, %v715
      %v748 = vpack.c.bf16 %v718, %v717
      %v749 = vpack.c.bf16 %v720, %v719
      %v750 = vpack.c.bf16 %v722, %v721
      %v751 = vpack.c.bf16 %v724, %v723
      %v752 = vpack.c.bf16 %v726, %v725
      %v753 = vpack.c.bf16 %v728, %v727
      %v754 = vpack.c.bf16 %v730, %v729
      %v755 = vpack.c.bf16 %v732, %v731
      %v756 = vpack.c.bf16 %v734, %v733
      %v757 = vpack.c.bf16 %v736, %v735
      %v758 = vpack.c.bf16 %v738, %v737
      %v759 = vpack.c.bf16 %v740, %v739
      %v760 = vpack.c.bf16 %v742, %v741
      %v761 = vpack.c.bf16 %v744, %v743
      %v762 = vpack.c.bf16 %v746, %v745
      %v779 = vunpack.c.l.b16 %v747
      %v780 = vunpack.c.h.b16 %v747
      %v781 = vunpack.c.l.b16 %v748
      %v782 = vunpack.c.h.b16 %v748
      %v783 = vunpack.c.l.b16 %v749
      %v784 = vunpack.c.h.b16 %v749
      %v785 = vunpack.c.l.b16 %v750
      %v786 = vunpack.c.h.b16 %v750
      %v787 = vunpack.c.l.b16 %v751
      %v788 = vunpack.c.h.b16 %v751
      %v789 = vunpack.c.l.b16 %v752
      %v790 = vunpack.c.h.b16 %v752
      %v791 = vunpack.c.l.b16 %v753
      %v792 = vunpack.c.h.b16 %v753
      %v793 = vunpack.c.l.b16 %v754
      %v794 = vunpack.c.h.b16 %v754
      %v795 = vunpack.c.l.b16 %v755
      %v796 = vunpack.c.h.b16 %v755
      %v797 = vunpack.c.l.b16 %v756
      %v798 = vunpack.c.h.b16 %v756
      %v799 = vunpack.c.l.b16 %v757
      %v800 = vunpack.c.h.b16 %v757
      %v801 = vunpack.c.l.b16 %v758
      %v802 = vunpack.c.h.b16 %v758
      %v803 = vunpack.c.l.b16 %v759
      %v804 = vunpack.c.h.b16 %v759
      %v805 = vunpack.c.l.b16 %v760
      %v806 = vunpack.c.h.b16 %v760
      %v807 = vunpack.c.l.b16 %v761
      %v808 = vunpack.c.h.b16 %v761
      %v809 = vunpack.c.l.b16 %v762
      %v810 = vunpack.c.h.b16 %v762
      %v811 = vpack.c.b16 %v779, %v779
      %v812 = vpack.c.b16 %v780, %v780
      %v813 = vpack.c.b16 %v781, %v781
      %v814 = vpack.c.b16 %v782, %v782
      %v815 = vpack.c.b16 %v783, %v783
      %v816 = vpack.c.b16 %v784, %v784
      %v817 = vpack.c.b16 %v785, %v785
      %v818 = vpack.c.b16 %v786, %v786
      %v819 = vpack.c.b16 %v787, %v787
      %v820 = vpack.c.b16 %v788, %v788
      %v821 = vpack.c.b16 %v789, %v789
      %v822 = vpack.c.b16 %v790, %v790
      %v823 = vpack.c.b16 %v791, %v791
      %v824 = vpack.c.b16 %v792, %v792
      %v825 = vpack.c.b16 %v793, %v793
      %v826 = vpack.c.b16 %v794, %v794
      %v827 = vpack.c.b16 %v795, %v795
      %v828 = vpack.c.b16 %v796, %v796
      %v829 = vpack.c.b16 %v797, %v797
      %v830 = vpack.c.b16 %v798, %v798
      %v831 = vpack.c.b16 %v799, %v799
      %v832 = vpack.c.b16 %v800, %v800
      %v833 = vpack.c.b16 %v801, %v801
      %v834 = vpack.c.b16 %v802, %v802
      %v835 = vpack.c.b16 %v803, %v803
      %v836 = vpack.c.b16 %v804, %v804
      %v837 = vpack.c.b16 %v805, %v805
      %v838 = vpack.c.b16 %v806, %v806
      %v839 = vpack.c.b16 %v807, %v807
      %v840 = vpack.c.b16 %v808, %v808
      %v841 = vpack.c.b16 %v809, %v809
      %v842 = vpack.c.b16 %v810, %v810
      %875 = vst [vmem:[%s175] sm:$0xf] %v811
      %876 = vst [vmem:[%s175 + $0x4] sm:$0xf] %v812
      %877 = vst [vmem:[%s175 + $0x8] sm:$0xf] %v813
      %878 = vst [vmem:[%s175 + $0xc] sm:$0xf] %v814
      %879 = vst [vmem:[%s175 + $0x10] sm:$0xf] %v815
      %880 = vst [vmem:[%s175 + $0x14] sm:$0xf] %v816
      %881 = vst [vmem:[%s175 + $0x18] sm:$0xf] %v817
      %882 = vst [vmem:[%s175 + $0x1c] sm:$0xf] %v818
      %883 = vst [vmem:[%s175 + $0x20] sm:$0xf] %v819
      %884 = vst [vmem:[%s175 + $0x24] sm:$0xf] %v820
      %885 = vst [vmem:[%s175 + $0x28] sm:$0xf] %v821
      %886 = vst [vmem:[%s175 + $0x2c] sm:$0xf] %v822
      %887 = vst [vmem:[%s175 + $0x30] sm:$0xf] %v823
      %888 = vst [vmem:[%s175 + $0x34] sm:$0xf] %v824
      %889 = vst [vmem:[%s175 + $0x38] sm:$0xf] %v825
      %890 = vst [vmem:[%s175 + $0x3c] sm:$0xf] %v826
      %891 = vst [vmem:[%s175 + $0x40] sm:$0xf] %v827
      %892 = vst [vmem:[%s175 + $0x44] sm:$0xf] %v828
      %893 = vst [vmem:[%s175 + $0x48] sm:$0xf] %v829
      %894 = vst [vmem:[%s175 + $0x4c] sm:$0xf] %v830
      %895 = vst [vmem:[%s175 + $0x50] sm:$0xf] %v831
      %896 = vst [vmem:[%s175 + $0x54] sm:$0xf] %v832
      %897 = vst [vmem:[%s175 + $0x58] sm:$0xf] %v833
      %898 = vst [vmem:[%s175 + $0x5c] sm:$0xf] %v834
      %899 = vst [vmem:[%s175 + $0x60] sm:$0xf] %v835
      %900 = vst [vmem:[%s175 + $0x64] sm:$0xf] %v836
      %901 = vst [vmem:[%s175 + $0x68] sm:$0xf] %v837
      %902 = vst [vmem:[%s175 + $0x6c] sm:$0xf] %v838
      %903 = vst [vmem:[%s175 + $0x70] sm:$0xf] %v839
      %904 = vst [vmem:[%s175 + $0x74] sm:$0xf] %v840
      %905 = vst [vmem:[%s175 + $0x78] sm:$0xf] %v841
      %906 = vst [vmem:[%s175 + $0x7c] sm:$0xf] %v842
      %s907 = smul.u32 32, %s14
      %p908 = scmp.lt.s32.totalorder %s907, 63
      %s909 = scalar_select %p908, %s907, 63
      %s910 = smul.addr %s909, 4
      %s911 = scalar_lea.vmem %s3, %s910
      // Predicated region
      $region33: #{generator_forward.34} parent=31 // pred_check
        %p912 = pneg %p100
      $region34: #{generator_forward.34} parent=31 // pred_check_branch
        %914 = sbr.rel (%p912) target = $region36
      $region35: #{generator_forward.34} parent=31 // pred_region
        %s915 = smul.u32 32, %s14
      $region36: #{generator_forward.34} parent=31 // pred_fallthru
        _
    $region32: #{generator_forward.34} parent=5 // pred_fallthru
      _
    %p916 = scmp.le.s32.totalorder 2, %s9
    // Predicated region
    $region37: #{generator_forward.34} parent=5 // pred_check
      %p917 = pneg %p916
    $region38: #{generator_forward.34} parent=5 // pred_check_branch
      %919 = sbr.rel (%p917) target = $region40
    $region39: #{generator_forward.34} parent=5 // pred_region
      %s920 = ssub.s32 %s9, 2
      // Predicated region
      $region41: #{generator_forward.34} parent=39 // pred_check
        %p921 = pneg %p106
      $region42: #{generator_forward.34} parent=39 // pred_check_branch
        %923 = sbr.rel (%p921) target = $region44
      $region43: #{generator_forward.34} parent=39 // pred_region
        %s924 = smul.u32 32, %s15
        %p925 = scmp.lt.s32.totalorder %s924, 63
        %s926 = scalar_select %p925, %s924, 63
        %s927 = smul.addr %s926, 4
        %s928 = scalar_lea.vmem %s3, %s927
      $region44: #{generator_forward.34} parent=39 // pred_fallthru
        _
    $region40: #{generator_forward.34} parent=5 // pred_fallthru
      _
  $region6: #{generator_forward.34} parent=0 // loop_footer
    %s13 = sadd.s32 1, %s9
  $region7: #{generator_forward.34} parent=0 // loop_footer_branch
    %8 = sbr.rel target = $region3
  $region8: #{generator_forward.34} parent=0 // loop_exit
    _

// kernel: generator_forward.36
$region0: #{generator_forward.36}
  #allocation0 [shape = 'u32[]', space=smem, size = 0x4, offset = 0x4, fixed_abs, tag = 'smem constant byte address 0x4 - core index']
  #allocation1 [shape = 'u32[144,128]{1,0:T(1,128)}', space=vmem, size = 0x12000, scoped, tag = 'internal scratch']
  %s0 = inlined_call_operand.vmem [shape: bf16[2,64,64], index: 0, kind: input, shape index: {}]
  %s1 = inlined_call_operand.vmem [shape: bf16[2,64,64], index: 1, kind: output, shape index: {}]
  %s2 = sld [smem:[#allocation0]]
  $region37: #{generator_forward.36} parent=0
    _
  %s4 = ssub.s32 1, %s2
  %s5 = scalar_select 0, %s4, %s2
  loop: start=0, step=1, limit=4
  $region2: #{generator_forward.36} parent=0 // loop_pre_header
    _
  $region3: #{generator_forward.36} parent=0 // loop_header
    %s7 = sphi 0, %s11
    %p8 = scmp.ge.s32.totalorder %s7, 4
    %s17 = sphi 0, %s19
    %s20 = sphi 0, %s17
    %s21 = sphi 0, %s20
    %s37 = sphi 0, %s21
    %s43 = sphi 0, %s45
    %s46 = sphi 0, %s43
    %s47 = sphi 0, %s46
    %s63 = sphi 0, %s47
  $region4: #{generator_forward.36} parent=0 // loop_header_branch
    %10 = sbr.rel (%p8) target = $region8
  $region5: #{generator_forward.36} parent=0 // loop_body
    %s12 = ssub.s32 %s7, 1
    %s13 = ssub.s32 %s7, 2
    %s14 = sadd.s32 %s7, 1
    %s15 = ssub.s32 %s7, %s14
    %p16 = scmp.eq.s32.totalorder %s15, 0
    %s18 = sadd.s32 %s17, 1
    %s19 = scalar_select %p16, %s17, %s18
    %p22 = pneg %p16
    %p23 = scmp.eq.s32.totalorder %s7, 1
    %p24 = por %p22, %p23
    %p25 = scmp.ne.s32.totalorder %s17, %s20
    %p26 = scmp.eq.s32.totalorder %s7, 0
    %p27 = por %p25, %p26
    %p28 = scmp.ne.s32.totalorder %s17, %s20
    %p29 = scmp.eq.s32.totalorder %s12, 1
    %p30 = por %p28, %p29
    %p31 = scmp.ne.s32.totalorder %s20, %s21
    %p32 = scmp.eq.s32.totalorder %s12, 0
    %p33 = por %p31, %p32
    %p34 = scmp.ne.s32.totalorder %s20, %s21
    %p35 = scmp.eq.s32.totalorder %s13, 1
    %p36 = por %p34, %p35
    %p38 = scmp.ne.s32.totalorder %s21, %s37
    %p39 = scmp.eq.s32.totalorder %s13, 0
    %p40 = por %p38, %p39
    %s41 = ssub.s32 %s7, %s14
    %p42 = scmp.eq.s32.totalorder %s41, 0
    %s44 = sadd.s32 %s43, 1
    %s45 = scalar_select %p42, %s43, %s44
    %p48 = pneg %p42
    %p49 = scmp.eq.s32.totalorder %s7, 1
    %p50 = por %p48, %p49
    %p51 = scmp.ne.s32.totalorder %s43, %s46
    %p52 = scmp.eq.s32.totalorder %s7, 0
    %p53 = por %p51, %p52
    %p54 = scmp.ne.s32.totalorder %s43, %s46
    %p55 = scmp.eq.s32.totalorder %s12, 1
    %p56 = por %p54, %p55
    %p57 = scmp.ne.s32.totalorder %s46, %s47
    %p58 = scmp.eq.s32.totalorder %s12, 0
    %p59 = por %p57, %p58
    %p60 = scmp.ne.s32.totalorder %s46, %s47
    %p61 = scmp.eq.s32.totalorder %s13, 1
    %p62 = por %p60, %p61
    %p64 = scmp.ne.s32.totalorder %s47, %s63
    %p65 = scmp.eq.s32.totalorder %s13, 0
    %p66 = por %p64, %p65
    %p67 = scmp.le.s32.totalorder 1, %s7
    %p68 = scmp.lt.s32.totalorder %s7, 3
    %p69 = pnand %p67, %p68
    %p70 = pneg %p69
    // Predicated region
    $region9: #{generator_forward.36} parent=5 // pred_check
      _
    $region10: #{generator_forward.36} parent=5 // pred_check_branch
      %72 = sbr.rel (%p69) target = $region12
    $region11: #{generator_forward.36} parent=5 // pred_region
      %s73 = ssub.s32 %s7, 1
    $region12: #{generator_forward.36} parent=5 // pred_fallthru
      _
    %p74 = scmp.lt.s32.totalorder %s7, 2
    // Predicated region
    $region13: #{generator_forward.36} parent=5 // pred_check
      %p75 = pneg %p74
    $region14: #{generator_forward.36} parent=5 // pred_check_branch
      %77 = sbr.rel (%p75) target = $region16
    $region15: #{generator_forward.36} parent=5 // pred_region
      // Predicated region
      $region17: #{generator_forward.36} parent=15 // pred_check
        %p78 = pneg %p27
      $region18: #{generator_forward.36} parent=15 // pred_check_branch
        %80 = sbr.rel (%p78) target = $region20
      $region19: #{generator_forward.36} parent=15 // pred_region
        %p81 = scmp.lt.s32.totalorder %s7, 1
        %s82 = scalar_select %p81, %s7, 1
        %s83 = smul.addr %s82, 8
        %s84 = smul.addr %s83, 4
        %s85 = scalar_lea.vmem %s0, %s84
      $region20: #{generator_forward.36} parent=15 // pred_fallthru
        _
    $region16: #{generator_forward.36} parent=5 // pred_fallthru
      _
    %p86 = scmp.le.s32.totalorder 1, %s7
    %p87 = scmp.lt.s32.totalorder %s7, 3
    %p88 = pnand %p86, %p87
    %p89 = pneg %p88
    // Predicated region
    $region21: #{generator_forward.36} parent=5 // pred_check
      _
    $region22: #{generator_forward.36} parent=5 // pred_check_branch
      %91 = sbr.rel (%p88) target = $region24
    $region23: #{generator_forward.36} parent=5 // pred_region
      %s92 = ssub.s32 %s7, 1
      %p93 = scmp.lt.s32.totalorder %s12, 1
      %s94 = scalar_select %p93, %s12, 1
      %s95 = smul.addr %s94, 8
      %s96 = smul.addr %s95, 4
      %s97 = scalar_lea.vmem %s0, %s96
      %p98 = pneg %p33
      %p99 = pneg %p30
      %p100 = pneg %p59
      %p101 = pneg %p56
      %p102 = scmp.lt.s32.totalorder %s12, 1
      %s103 = scalar_select %p102, %s12, 1
      %s104 = smul.addr %s103, 8
      %s105 = smul.addr %s104, 4
      %s106 = scalar_lea.vmem %s1, %s105
      %p107 = scmp.lt.s32.totalorder %s12, 1
      %s108 = scalar_select %p107, %s12, 1
      %s109 = smul.addr %s108, 8
      %s110 = smul.addr %s109, 4
      %s111 = scalar_lea.vmem %s0, %s110
      %p112 = scmp.lt.s32.totalorder %s12, 1
      %s113 = scalar_select %p112, %s12, 1
      %s114 = smul.addr %s113, 8
      %s115 = smul.addr %s114, 4
      %s116 = scalar_lea.vmem %s1, %s115
      %v117 = vld [vmem:[%s111] sm:$0xf]
      %v118 = vld [vmem:[%s111 + $0x4] sm:$0xf]
      %v119 = vld [vmem:[%s111 + $0x8] sm:$0xf]
      %v120 = vld [vmem:[%s111 + $0xc] sm:$0xf]
      %v121 = vld [vmem:[%s111 + $0x10] sm:$0xf]
      %v122 = vld [vmem:[%s111 + $0x14] sm:$0xf]
      %v123 = vld [vmem:[%s111 + $0x18] sm:$0xf]
      %v124 = vld [vmem:[%s111 + $0x1c] sm:$0xf]
      %v125 = vunpack.c.l.bf16 %v117
      %v126 = vunpack.c.l.bf16 %v118
      %v127 = vunpack.c.l.bf16 %v119
      %v128 = vunpack.c.l.bf16 %v120
      %v129 = vunpack.c.l.bf16 %v121
      %v130 = vunpack.c.l.bf16 %v122
      %v131 = vunpack.c.l.bf16 %v123
      %v132 = vunpack.c.l.bf16 %v124
      %vm133 = vcmask 523264
      %v134 = vsel %vm133, %v125, 0.0
      %v135 = vsel %vm133, %v126, 0.0
      %v136 = vadd.f32 %v134, %v135
      %v137 = vsel %vm133, %v127, 0.0
      %v138 = vadd.f32 %v136, %v137
      %v139 = vsel %vm133, %v128, 0.0
      %v140 = vadd.f32 %v138, %v139
      %v141 = vsel %vm133, %v129, 0.0
      %v142 = vadd.f32 %v140, %v141
      %v143 = vsel %vm133, %v130, 0.0
      %v144 = vadd.f32 %v142, %v143
      %v145 = vsel %vm133, %v131, 0.0
      %v146 = vadd.f32 %v144, %v145
      %v147 = vsel %vm133, %v132, 0.0
      %v148 = vadd.f32 %v146, %v147
      %v149 = vrot.slane %v148, 4
      %v150 = vadd.f32 %v148, %v149
      %v151 = vrot.slane %v150, 2
      %v152 = vadd.f32 %v150, %v151
      %v153 = vrot.slane %v152, 1
      %v154 = vadd.f32 %v152, %v153
      %v155 = vrcp.pop 64.0
      %v156 = vmul.f32 %v154, %v155
      %v157 = vsub.f32 %v125, %v156
      %v158 = vsub.f32 %v126, %v156
      %v159 = vsub.f32 %v127, %v156
      %v160 = vsub.f32 %v128, %v156
      %v161 = vsub.f32 %v129, %v156
      %v162 = vsub.f32 %v130, %v156
      %v163 = vsub.f32 %v131, %v156
      %v164 = vsub.f32 %v132, %v156
      %v165 = vmul.f32 %v157, %v157
      %v166 = vmul.f32 %v158, %v158
      %v167 = vmul.f32 %v159, %v159
      %v168 = vmul.f32 %v160, %v160
      %v169 = vmul.f32 %v161, %v161
      %v170 = vmul.f32 %v162, %v162
      %v171 = vmul.f32 %v163, %v163
      %v172 = vmul.f32 %v164, %v164
      %v173 = vsel %vm133, %v165, 0.0
      %v174 = vsel %vm133, %v166, 0.0
      %v175 = vadd.f32 %v173, %v174
      %v176 = vsel %vm133, %v167, 0.0
      %v177 = vadd.f32 %v175, %v176
      %v178 = vsel %vm133, %v168, 0.0
      %v179 = vadd.f32 %v177, %v178
      %v180 = vsel %vm133, %v169, 0.0
      %v181 = vadd.f32 %v179, %v180
      %v182 = vsel %vm133, %v170, 0.0
      %v183 = vadd.f32 %v181, %v182
      %v184 = vsel %vm133, %v171, 0.0
      %v185 = vadd.f32 %v183, %v184
      %v186 = vsel %vm133, %v172, 0.0
      %v187 = vadd.f32 %v185, %v186
      %v188 = vrot.slane %v187, 4
      %v189 = vadd.f32 %v187, %v188
      %v190 = vrot.slane %v189, 2
      %v191 = vadd.f32 %v189, %v190
      %v192 = vrot.slane %v191, 1
      %v193 = vadd.f32 %v191, %v192
      %v194 = vmul.f32 %v193, %v155
      %v195 = vadd.f32 %v194, 1e-05
      %v196 = vrsqrt.pop %v195
      %v197 = vmul.f32 %v157, %v196
      %v198 = vmul.f32 %v158, %v196
      %v199 = vmul.f32 %v159, %v196
      %v200 = vmul.f32 %v160, %v196
      %v201 = vmul.f32 %v161, %v196
      %v202 = vmul.f32 %v162, %v196
      %v203 = vmul.f32 %v163, %v196
      %v204 = vmul.f32 %v164, %v196
      %vm205 = vcmp.ge.f32.partialorder %v197, 0.0
      %vm206 = vcmp.ge.f32.partialorder %v198, 0.0
      %vm207 = vcmp.ge.f32.partialorder %v199, 0.0
      %vm208 = vcmp.ge.f32.partialorder %v200, 0.0
      %vm209 = vcmp.ge.f32.partialorder %v201, 0.0
      %vm210 = vcmp.ge.f32.partialorder %v202, 0.0
      %vm211 = vcmp.ge.f32.partialorder %v203, 0.0
      %vm212 = vcmp.ge.f32.partialorder %v204, 0.0
      %v213 = vmul.f32 %v197, 0.2
      %v214 = vmul.f32 %v198, 0.2
      %v215 = vmul.f32 %v199, 0.2
      %v216 = vmul.f32 %v200, 0.2
      %v217 = vmul.f32 %v201, 0.2
      %v218 = vmul.f32 %v202, 0.2
      %v219 = vmul.f32 %v203, 0.2
      %v220 = vmul.f32 %v204, 0.2
      %v221 = vsel %vm205, %v197, %v213
      %v222 = vsel %vm206, %v198, %v214
      %v223 = vsel %vm207, %v199, %v215
      %v224 = vsel %vm208, %v200, %v216
      %v225 = vsel %vm209, %v201, %v217
      %v226 = vsel %vm210, %v202, %v218
      %v227 = vsel %vm211, %v203, %v219
      %v228 = vsel %vm212, %v204, %v220
      %v229 = vpack.c.bf16 %v222, %v221
      %v230 = vpack.c.bf16 %v224, %v223
      %v231 = vpack.c.bf16 %v226, %v225
      %v232 = vpack.c.bf16 %v228, %v227
      %v237 = vunpack.c.l.b16 %v229
      %v238 = vunpack.c.h.b16 %v229
      %v239 = vunpack.c.l.b16 %v230
      %v240 = vunpack.c.h.b16 %v230
      %v241 = vunpack.c.l.b16 %v231
      %v242 = vunpack.c.h.b16 %v231
      %v243 = vunpack.c.l.b16 %v232
      %v244 = vunpack.c.h.b16 %v232
      %v245 = vpack.c.b16 %v237, %v237
      %v246 = vpack.c.b16 %v238, %v238
      %v247 = vpack.c.b16 %v239, %v239
      %v248 = vpack.c.b16 %v240, %v240
      %v249 = vpack.c.b16 %v241, %v241
      %v250 = vpack.c.b16 %v242, %v242
      %v251 = vpack.c.b16 %v243, %v243
      %v252 = vpack.c.b16 %v244, %v244
      %vm261 = vcmask 519168
      %262 = vst.msk [vmem:[%s116] sm:$0xf] %vm261, %v245
      %263 = vst.msk [vmem:[%s116 + $0x4] sm:$0xf] %vm261, %v246
      %264 = vst.msk [vmem:[%s116 + $0x8] sm:$0xf] %vm261, %v247
      %265 = vst.msk [vmem:[%s116 + $0xc] sm:$0xf] %vm261, %v248
      %266 = vst.msk [vmem:[%s116 + $0x10] sm:$0xf] %vm261, %v249
      %267 = vst.msk [vmem:[%s116 + $0x14] sm:$0xf] %vm261, %v250
      %268 = vst.msk [vmem:[%s116 + $0x18] sm:$0xf] %vm261, %v251
      %269 = vst.msk [vmem:[%s116 + $0x1c] sm:$0xf] %vm261, %v252
      %p270 = scmp.lt.s32.totalorder %s12, 1
      %s271 = scalar_select %p270, %s12, 1
      %s272 = smul.addr %s271, 8
      %s273 = smul.addr %s272, 4
      %s274 = scalar_lea.vmem %s1, %s273
      // Predicated region
      $region25: #{generator_forward.36} parent=23 // pred_check
        %p275 = pneg %p56
      $region26: #{generator_forward.36} parent=23 // pred_check_branch
        %277 = sbr.rel (%p275) target = $region28
      $region27: #{generator_forward.36} parent=23 // pred_region
        _
      $region28: #{generator_forward.36} parent=23 // pred_fallthru
        _
    $region24: #{generator_forward.36} parent=5 // pred_fallthru
      _
    %p278 = scmp.le.s32.totalorder 2, %s7
    // Predicated region
    $region29: #{generator_forward.36} parent=5 // pred_check
      %p279 = pneg %p278
    $region30: #{generator_forward.36} parent=5 // pred_check_branch
      %281 = sbr.rel (%p279) target = $region32
    $region31: #{generator_forward.36} parent=5 // pred_region
      %s282 = ssub.s32 %s7, 2
      // Predicated region
      $region33: #{generator_forward.36} parent=31 // pred_check
        %p283 = pneg %p62
      $region34: #{generator_forward.36} parent=31 // pred_check_branch
        %285 = sbr.rel (%p283) target = $region36
      $region35: #{generator_forward.36} parent=31 // pred_region
        %p286 = scmp.lt.s32.totalorder %s13, 1
        %s287 = scalar_select %p286, %s13, 1
        %s288 = smul.addr %s287, 8
        %s289 = smul.addr %s288, 4
        %s290 = scalar_lea.vmem %s1, %s289
      $region36: #{generator_forward.36} parent=31 // pred_fallthru
        _
    $region32: #{generator_forward.36} parent=5 // pred_fallthru
      _
  $region6: #{generator_forward.36} parent=0 // loop_footer
    %s11 = sadd.s32 1, %s7
  $region7: #{generator_forward.36} parent=0 // loop_footer_branch
    %6 = sbr.rel target = $region3
  $region8: #{generator_forward.36} parent=0 // loop_exit
    _

// kernel: generator_forward.35
$region0: #{generator_forward.35}
  #allocation0 [shape = 'u32[]', space=smem, size = 0x4, offset = 0x4, fixed_abs, tag = 'smem constant byte address 0x4 - core index']
  #allocation1 [shape = 'u32[144,128]{1,0:T(1,128)}', space=vmem, size = 0x12000, scoped, tag = 'internal scratch']
  %s0 = inlined_call_operand.vmem [shape: bf16[128,512], index: 0, kind: input, shape index: {}]
  %s1 = inlined_call_operand.vmem [shape: bf16[512,128], index: 1, kind: input, shape index: {}]
  %s2 = inlined_call_operand.vmem [shape: f32[1,128], index: 2, kind: input, shape index: {}]
  %s3 = inlined_call_operand.vmem [shape: bf16[128,128], index: 3, kind: output, shape index: {}]
  %s4 = sld [smem:[#allocation0]]
  $region45: #{generator_forward.35} parent=0
    _
  %s6 = ssub.s32 1, %s4
  %s7 = scalar_select 0, %s6, %s4
  loop: start=0, step=1, limit=4
  $region2: #{generator_forward.35} parent=0 // loop_pre_header
    _
  $region3: #{generator_forward.35} parent=0 // loop_header
    %s9 = sphi 0, %s13
    %p10 = scmp.ge.s32.totalorder %s9, 4
    %s19 = sphi 0, %s21
    %s22 = sphi 0, %s19
    %s23 = sphi 0, %s22
    %s39 = sphi 0, %s23
    %s43 = sphi 0, %s43
    %s45 = sphi 0, %s43
    %s46 = sphi 0, %s45
    %s60 = sphi 0, %s46
    %s64 = sphi 0, %s64
    %s66 = sphi 0, %s64
    %s67 = sphi 0, %s66
    %s81 = sphi 0, %s67
    %s87 = sphi 0, %s89
    %s90 = sphi 0, %s87
    %s91 = sphi 0, %s90
    %s107 = sphi 0, %s91
  $region4: #{generator_forward.35} parent=0 // loop_header_branch
    %12 = sbr.rel (%p10) target = $region8
  $region5: #{generator_forward.35} parent=0 // loop_body
    %s14 = ssub.s32 %s9, 1
    %s15 = ssub.s32 %s9, 2
    %s16 = sadd.s32 %s9, 1
    %s17 = ssub.s32 %s9, %s16
    %p18 = scmp.eq.s32.totalorder %s17, 0
    %s20 = sadd.s32 %s19, 1
    %s21 = scalar_select %p18, %s19, %s20
    %p24 = pneg %p18
    %p25 = scmp.eq.s32.totalorder %s9, 1
    %p26 = por %p24, %p25
    %p27 = scmp.ne.s32.totalorder %s19, %s22
    %p28 = scmp.eq.s32.totalorder %s9, 0
    %p29 = por %p27, %p28
    %p30 = scmp.ne.s32.totalorder %s19, %s22
    %p31 = scmp.eq.s32.totalorder %s14, 1
    %p32 = por %p30, %p31
    %p33 = scmp.ne.s32.totalorder %s22, %s23
    %p34 = scmp.eq.s32.totalorder %s14, 0
    %p35 = por %p33, %p34
    %p36 = scmp.ne.s32.totalorder %s22, %s23
    %p37 = scmp.eq.s32.totalorder %s15, 1
    %p38 = por %p36, %p37
    %p40 = scmp.ne.s32.totalorder %s23, %s39
    %p41 = scmp.eq.s32.totalorder %s15, 0
    %p42 = por %p40, %p41
    %s44 = sadd.s32 %s43, 1
    %p47 = scmp.eq.s32.totalorder %s9, 1
    %p48 = scmp.ne.s32.totalorder %s43, %s45
    %p49 = scmp.eq.s32.totalorder %s9, 0
    %p50 = por %p48, %p49
    %p51 = scmp.ne.s32.totalorder %s43, %s45
    %p52 = scmp.eq.s32.totalorder %s14, 1
    %p53 = por %p51, %p52
    %p54 = scmp.ne.s32.totalorder %s45, %s46
    %p55 = scmp.eq.s32.totalorder %s14, 0
    %p56 = por %p54, %p55
    %p57 = scmp.ne.s32.totalorder %s45, %s46
    %p58 = scmp.eq.s32.totalorder %s15, 1
    %p59 = por %p57, %p58
    %p61 = scmp.ne.s32.totalorder %s46, %s60
    %p62 = scmp.eq.s32.totalorder %s15, 0
    %p63 = por %p61, %p62
    %s65 = sadd.s32 %s64, 1
    %p68 = scmp.eq.s32.totalorder %s9, 1
    %p69 = scmp.ne.s32.totalorder %s64, %s66
    %p70 = scmp.eq.s32.totalorder %s9, 0
    %p71 = por %p69, %p70
    %p72 = scmp.ne.s32.totalorder %s64, %s66
    %p73 = scmp.eq.s32.totalorder %s14, 1
    %p74 = por %p72, %p73
    %p75 = scmp.ne.s32.totalorder %s66, %s67
    %p76 = scmp.eq.s32.totalorder %s14, 0
    %p77 = por %p75, %p76
    %p78 = scmp.ne.s32.totalorder %s66, %s67
    %p79 = scmp.eq.s32.totalorder %s15, 1
    %p80 = por %p78, %p79
    %p82 = scmp.ne.s32.totalorder %s67, %s81
    %p83 = scmp.eq.s32.totalorder %s15, 0
    %p84 = por %p82, %p83
    %s85 = ssub.s32 %s9, %s16
    %p86 = scmp.eq.s32.totalorder %s85, 0
    %s88 = sadd.s32 %s87, 1
    %s89 = scalar_select %p86, %s87, %s88
    %p92 = pneg %p86
    %p93 = scmp.eq.s32.totalorder %s9, 1
    %p94 = por %p92, %p93
    %p95 = scmp.ne.s32.totalorder %s87, %s90
    %p96 = scmp.eq.s32.totalorder %s9, 0
    %p97 = por %p95, %p96
    %p98 = scmp.ne.s32.totalorder %s87, %s90
    %p99 = scmp.eq.s32.totalorder %s14, 1
    %p100 = por %p98, %p99
    %p101 = scmp.ne.s32.totalorder %s90, %s91
    %p102 = scmp.eq.s32.totalorder %s14, 0
    %p103 = por %p101, %p102
    %p104 = scmp.ne.s32.totalorder %s90, %s91
    %p105 = scmp.eq.s32.totalorder %s15, 1
    %p106 = por %p104, %p105
    %p108 = scmp.ne.s32.totalorder %s91, %s107
    %p109 = scmp.eq.s32.totalorder %s15, 0
    %p110 = por %p108, %p109
    %p111 = scmp.le.s32.totalorder 1, %s9
    %p112 = scmp.lt.s32.totalorder %s9, 3
    %p113 = pnand %p111, %p112
    %p114 = pneg %p113
    // Predicated region
    $region9: #{generator_forward.35} parent=5 // pred_check
      _
    $region10: #{generator_forward.35} parent=5 // pred_check_branch
      %116 = sbr.rel (%p113) target = $region12
    $region11: #{generator_forward.35} parent=5 // pred_region
      %s117 = ssub.s32 %s9, 1
      // Predicated region
      $region13: #{generator_forward.35} parent=11 // pred_check
        %p118 = pneg %p56
      $region14: #{generator_forward.35} parent=11 // pred_check_branch
        %120 = sbr.rel (%p118) target = $region16
      $region15: #{generator_forward.35} parent=11 // pred_region
        _
      $region16: #{generator_forward.35} parent=11 // pred_fallthru
        _
      // Predicated region
      $region17: #{generator_forward.35} parent=11 // pred_check
        %p121 = pneg %p77
      $region18: #{generator_forward.35} parent=11 // pred_check_branch
        %123 = sbr.rel (%p121) target = $region20
      $region19: #{generator_forward.35} parent=11 // pred_region
        _
      $region20: #{generator_forward.35} parent=11 // pred_fallthru
        _
    $region12: #{generator_forward.35} parent=5 // pred_fallthru
      _
    %p124 = scmp.lt.s32.totalorder %s9, 2
    // Predicated region
    $region21: #{generator_forward.35} parent=5 // pred_check
      %p125 = pneg %p124
    $region22: #{generator_forward.35} parent=5 // pred_check_branch
      %127 = sbr.rel (%p125) target = $region24
    $region23: #{generator_forward.35} parent=5 // pred_region
      // Predicated region
      $region25: #{generator_forward.35} parent=23 // pred_check
        %p128 = pneg %p29
      $region26: #{generator_forward.35} parent=23 // pred_check_branch
        %130 = sbr.rel (%p128) target = $region28
      $region27: #{generator_forward.35} parent=23 // pred_region
        %s131 = smul.u32 8, %s9
        %p132 = scmp.lt.s32.totalorder %s131, 15
        %s133 = scalar_select %p132, %s131, 15
        %s134 = smul.addr %s133, 4
        %s135 = smul.addr %s134, 4
        %s136 = scalar_lea.vmem %s0, %s135
        %s137 = smul.u32 8, %s9
      $region28: #{generator_forward.35} parent=23 // pred_fallthru
        _
    $region24: #{generator_forward.35} parent=5 // pred_fallthru
      _
    %p138 = scmp.le.s32.totalorder 1, %s9
    %p139 = scmp.lt.s32.totalorder %s9, 3
    %p140 = pnand %p138, %p139
    %p141 = pneg %p140
    // Predicated region
    $region29: #{generator_forward.35} parent=5 // pred_check
      _
    $region30: #{generator_forward.35} parent=5 // pred_check_branch
      %143 = sbr.rel (%p140) target = $region32
    $region31: #{generator_forward.35} parent=5 // pred_region
      %s144 = ssub.s32 %s9, 1
      %s145 = smul.u32 8, %s14
      %p146 = scmp.lt.s32.totalorder %s145, 15
      %s147 = scalar_select %p146, %s145, 15
      %s148 = smul.addr %s147, 4
      %s149 = smul.addr %s148, 4
      %s150 = scalar_lea.vmem %s0, %s149
      %p151 = pneg %p35
      %p152 = pneg %p32
      %p153 = pneg %p56
      %p154 = pneg %p53
      %p155 = pneg %p77
      %p156 = pneg %p74
      %p157 = pneg %p103
      %p158 = pneg %p100
      %s159 = smul.u32 8, %s14
      %p160 = scmp.lt.s32.totalorder %s159, 15
      %s161 = scalar_select %p160, %s159, 15
      %s162 = smul.addr %s161, 4
      %s163 = scalar_lea.vmem %s3, %s162
      %s164 = smul.u32 8, %s14
      %p165 = scmp.lt.s32.totalorder %s164, 15
      %s166 = scalar_select %p165, %s164, 15
      %s167 = smul.addr %s166, 4
      %s168 = smul.addr %s167, 4
      %s169 = scalar_lea.vmem %s0, %s168
      %s170 = smul.u32 8, %s14
      %s171 = smul.u32 8, %s14
      %p172 = scmp.lt.s32.totalorder %s171, 15
      %s173 = scalar_select %p172, %s171, 15
      %s174 = smul.addr %s173, 4
      %s175 = scalar_lea.vmem %s3, %s174
      %s176 = smul.u32 8, %s14
      %v178 = vld [vmem:[%s169] sm:$0xff]
      %v179 = vld [vmem:[%s169 + $0x8] sm:$0xff]
      %v180 = vld [vmem:[%s169 + $0x10] sm:$0xff]
      %v181 = vld [vmem:[%s169 + $0x18] sm:$0xff]
      %v182 = vld [vmem:[%s169 + $0x20] sm:$0xff]
      %v183 = vld [vmem:[%s169 + $0x28] sm:$0xff]
      %v184 = vld [vmem:[%s169 + $0x30] sm:$0xff]
      %v185 = vld [vmem:[%s169 + $0x38] sm:$0xff]
      %v186 = vld [vmem:[%s169 + $0x40] sm:$0xff]
      %v187 = vld [vmem:[%s169 + $0x48] sm:$0xff]
      %v188 = vld [vmem:[%s169 + $0x50] sm:$0xff]
      %v189 = vld [vmem:[%s169 + $0x58] sm:$0xff]
      %v190 = vld [vmem:[%s169 + $0x60] sm:$0xff]
      %v191 = vld [vmem:[%s169 + $0x68] sm:$0xff]
      %v192 = vld [vmem:[%s169 + $0x70] sm:$0xff]
      %v193 = vld [vmem:[%s169 + $0x78] sm:$0xff]
      %v194 = vld [vmem:[%s1] sm:$0xf]
      %v195 = vld [vmem:[%s1 + $0x4] sm:$0xf]
      %v196 = vld [vmem:[%s1 + $0x8] sm:$0xf]
      %v197 = vld [vmem:[%s1 + $0xc] sm:$0xf]
      %v198 = vld [vmem:[%s1 + $0x10] sm:$0xf]
      %v199 = vld [vmem:[%s1 + $0x14] sm:$0xf]
      %v200 = vld [vmem:[%s1 + $0x18] sm:$0xf]
      %v201 = vld [vmem:[%s1 + $0x1c] sm:$0xf]
      %v202 = vld [vmem:[%s1 + $0x20] sm:$0xf]
      %v203 = vld [vmem:[%s1 + $0x24] sm:$0xf]
      %v204 = vld [vmem:[%s1 + $0x28] sm:$0xf]
      %v205 = vld [vmem:[%s1 + $0x2c] sm:$0xf]
      %v206 = vld [vmem:[%s1 + $0x30] sm:$0xf]
      %v207 = vld [vmem:[%s1 + $0x34] sm:$0xf]
      %v208 = vld [vmem:[%s1 + $0x38] sm:$0xf]
      %v209 = vld [vmem:[%s1 + $0x3c] sm:$0xf]
      %v210 = vld [vmem:[%s1 + $0x40] sm:$0xf]
      %v211 = vld [vmem:[%s1 + $0x44] sm:$0xf]
      %v212 = vld [vmem:[%s1 + $0x48] sm:$0xf]
      %v213 = vld [vmem:[%s1 + $0x4c] sm:$0xf]
      %v214 = vld [vmem:[%s1 + $0x50] sm:$0xf]
      %v215 = vld [vmem:[%s1 + $0x54] sm:$0xf]
      %v216 = vld [vmem:[%s1 + $0x58] sm:$0xf]
      %v217 = vld [vmem:[%s1 + $0x5c] sm:$0xf]
      %v218 = vld [vmem:[%s1 + $0x60] sm:$0xf]
      %v219 = vld [vmem:[%s1 + $0x64] sm:$0xf]
      %v220 = vld [vmem:[%s1 + $0x68] sm:$0xf]
      %v221 = vld [vmem:[%s1 + $0x6c] sm:$0xf]
      %v222 = vld [vmem:[%s1 + $0x70] sm:$0xf]
      %v223 = vld [vmem:[%s1 + $0x74] sm:$0xf]
      %v224 = vld [vmem:[%s1 + $0x78] sm:$0xf]
      %v225 = vld [vmem:[%s1 + $0x7c] sm:$0xf]
      %v226 = vld [vmem:[%s1 + $0x80] sm:$0xf]
      %v227 = vld [vmem:[%s1 + $0x84] sm:$0xf]
      %v228 = vld [vmem:[%s1 + $0x88] sm:$0xf]
      %v229 = vld [vmem:[%s1 + $0x8c] sm:$0xf]
      %v230 = vld [vmem:[%s1 + $0x90] sm:$0xf]
      %v231 = vld [vmem:[%s1 + $0x94] sm:$0xf]
      %v232 = vld [vmem:[%s1 + $0x98] sm:$0xf]
      %v233 = vld [vmem:[%s1 + $0x9c] sm:$0xf]
      %v234 = vld [vmem:[%s1 + $0xa0] sm:$0xf]
      %v235 = vld [vmem:[%s1 + $0xa4] sm:$0xf]
      %v236 = vld [vmem:[%s1 + $0xa8] sm:$0xf]
      %v237 = vld [vmem:[%s1 + $0xac] sm:$0xf]
      %v238 = vld [vmem:[%s1 + $0xb0] sm:$0xf]
      %v239 = vld [vmem:[%s1 + $0xb4] sm:$0xf]
      %v240 = vld [vmem:[%s1 + $0xb8] sm:$0xf]
      %v241 = vld [vmem:[%s1 + $0xbc] sm:$0xf]
      %v242 = vld [vmem:[%s1 + $0xc0] sm:$0xf]
      %v243 = vld [vmem:[%s1 + $0xc4] sm:$0xf]
      %v244 = vld [vmem:[%s1 + $0xc8] sm:$0xf]
      %v245 = vld [vmem:[%s1 + $0xcc] sm:$0xf]
      %v246 = vld [vmem:[%s1 + $0xd0] sm:$0xf]
      %v247 = vld [vmem:[%s1 + $0xd4] sm:$0xf]
      %v248 = vld [vmem:[%s1 + $0xd8] sm:$0xf]
      %v249 = vld [vmem:[%s1 + $0xdc] sm:$0xf]
      %v250 = vld [vmem:[%s1 + $0xe0] sm:$0xf]
      %v251 = vld [vmem:[%s1 + $0xe4] sm:$0xf]
      %v252 = vld [vmem:[%s1 + $0xe8] sm:$0xf]
      %v253 = vld [vmem:[%s1 + $0xec] sm:$0xf]
      %v254 = vld [vmem:[%s1 + $0xf0] sm:$0xf]
      %v255 = vld [vmem:[%s1 + $0xf4] sm:$0xf]
      %v256 = vld [vmem:[%s1 + $0xf8] sm:$0xf]
      %v257 = vld [vmem:[%s1 + $0xfc] sm:$0xf]
      %v258 = vld [vmem:[%s2] sm:$0x1]
      %v260 = vlaneseq
      %v261 = vshrl.u32 %v260, 7
      %v262 = vsub.s32 0, %v261
      %v263 = vrot.slane %v258, %v262
      %v281 = vunpack.c.l.b16 %v178
      %v282 = vunpack.c.h.b16 %v178
      %v283 = vunpack.c.l.b16 %v179
      %v284 = vunpack.c.h.b16 %v179
      %v285 = vunpack.c.l.b16 %v180
      %v286 = vunpack.c.h.b16 %v180
      %v287 = vunpack.c.l.b16 %v181
      %v288 = vunpack.c.h.b16 %v181
      %v289 = vunpack.c.l.b16 %v182
      %v290 = vunpack.c.h.b16 %v182
      %v291 = vunpack.c.l.b16 %v183
      %v292 = vunpack.c.h.b16 %v183
      %v293 = vunpack.c.l.b16 %v184
      %v294 = vunpack.c.h.b16 %v184
      %v295 = vunpack.c.l.b16 %v185
      %v296 = vunpack.c.h.b16 %v185
      %v297 = vunpack.c.l.b16 %v186
      %v298 = vunpack.c.h.b16 %v186
      %v299 = vunpack.c.l.b16 %v187
      %v300 = vunpack.c.h.b16 %v187
      %v301 = vunpack.c.l.b16 %v188
      %v302 = vunpack.c.h.b16 %v188
      %v303 = vunpack.c.l.b16 %v189
      %v304 = vunpack.c.h.b16 %v189
      %v305 = vunpack.c.l.b16 %v190
      %v306 = vunpack.c.h.b16 %v190
      %v307 = vunpack.c.l.b16 %v191
      %v308 = vunpack.c.h.b16 %v191
      %v309 = vunpack.c.l.b16 %v192
      %v310 = vunpack.c.h.b16 %v192
      %v311 = vunpack.c.l.b16 %v193
      %v312 = vunpack.c.h.b16 %v193
      %v313 = vpack.c.b16 %v285, %v281
      %v314 = vpack.c.b16 %v286, %v282
      %v315 = vpack.c.b16 %v287, %v283
      %v316 = vpack.c.b16 %v288, %v284
      %v317 = vpack.c.b16 %v293, %v289
      %v318 = vpack.c.b16 %v294, %v290
      %v319 = vpack.c.b16 %v295, %v291
      %v320 = vpack.c.b16 %v296, %v292
      %v321 = vpack.c.b16 %v301, %v297
      %v322 = vpack.c.b16 %v302, %v298
      %v323 = vpack.c.b16 %v303, %v299
      %v324 = vpack.c.b16 %v304, %v300
      %v325 = vpack.c.b16 %v309, %v305
      %v326 = vpack.c.b16 %v310, %v306
      %v327 = vpack.c.b16 %v311, %v307
      %v328 = vpack.c.b16 %v312, %v308
      %v409 = vunpack.c.l.b16 %v194
      %v410 = vunpack.c.l.b16 %v195
      %v411 = vunpack.c.l.b16 %v196
      %v412 = vunpack.c.l.b16 %v197
      %v413 = vunpack.c.l.b16 %v198
      %v414 = vunpack.c.l.b16 %v199
      %v415 = vunpack.c.l.b16 %v200
      %v416 = vunpack.c.l.b16 %v201
      %v417 = vunpack.c.l.b16 %v202
      %v418 = vunpack.c.l.b16 %v203
      %v419 = vunpack.c.l.b16 %v204
      %v420 = vunpack.c.l.b16 %v205
      %v421 = vunpack.c.l.b16 %v206
      %v422 = vunpack.c.l.b16 %v207
      %v423 = vunpack.c.l.b16 %v208
      %v424 = vunpack.c.l.b16 %v209
      %v425 = vunpack.c.l.b16 %v210
      %v426 = vunpack.c.l.b16 %v211
      %v427 = vunpack.c.l.b16 %v212
      %v428 = vunpack.c.l.b16 %v213
      %v429 = vunpack.c.l.b16 %v214
      %v430 = vunpack.c.l.b16 %v215
      %v431 = vunpack.c.l.b16 %v216
      %v432 = vunpack.c.l.b16 %v217
      %v433 = vunpack.c.l.b16 %v218
      %v434 = vunpack.c.l.b16 %v219
      %v435 = vunpack.c.l.b16 %v220
      %v436 = vunpack.c.l.b16 %v221
      %v437 = vunpack.c.l.b16 %v222
      %v438 = vunpack.c.l.b16 %v223
      %v439 = vunpack.c.l.b16 %v224
      %v440 = vunpack.c.l.b16 %v225
      %v441 = vunpack.c.l.b16 %v226
      %v442 = vunpack.c.l.b16 %v227
      %v443 = vunpack.c.l.b16 %v228
      %v444 = vunpack.c.l.b16 %v229
      %v445 = vunpack.c.l.b16 %v230
      %v446 = vunpack.c.l.b16 %v231
      %v447 = vunpack.c.l.b16 %v232
      %v448 = vunpack.c.l.b16 %v233
      %v449 = vunpack.c.l.b16 %v234
      %v450 = vunpack.c.l.b16 %v235
      %v451 = vunpack.c.l.b16 %v236
      %v452 = vunpack.c.l.b16 %v237
      %v453 = vunpack.c.l.b16 %v238
      %v454 = vunpack.c.l.b16 %v239
      %v455 = vunpack.c.l.b16 %v240
      %v456 = vunpack.c.l.b16 %v241
      %v457 = vunpack.c.l.b16 %v242
      %v458 = vunpack.c.l.b16 %v243
      %v459 = vunpack.c.l.b16 %v244
      %v460 = vunpack.c.l.b16 %v245
      %v461 = vunpack.c.l.b16 %v246
      %v462 = vunpack.c.l.b16 %v247
      %v463 = vunpack.c.l.b16 %v248
      %v464 = vunpack.c.l.b16 %v249
      %v465 = vunpack.c.l.b16 %v250
      %v466 = vunpack.c.l.b16 %v251
      %v467 = vunpack.c.l.b16 %v252
      %v468 = vunpack.c.l.b16 %v253
      %v469 = vunpack.c.l.b16 %v254
      %v470 = vunpack.c.l.b16 %v255
      %v471 = vunpack.c.l.b16 %v256
      %v472 = vunpack.c.l.b16 %v257
      %v473 = vpack.c.b16 %v410, %v409
      %v474 = vpack.c.b16 %v412, %v411
      %v475 = vpack.c.b16 %v414, %v413
      %v476 = vpack.c.b16 %v416, %v415
      %v477 = vpack.c.b16 %v418, %v417
      %v478 = vpack.c.b16 %v420, %v419
      %v479 = vpack.c.b16 %v422, %v421
      %v480 = vpack.c.b16 %v424, %v423
      %v481 = vpack.c.b16 %v426, %v425
      %v482 = vpack.c.b16 %v428, %v427
      %v483 = vpack.c.b16 %v430, %v429
      %v484 = vpack.c.b16 %v432, %v431
      %v485 = vpack.c.b16 %v434, %v433
      %v486 = vpack.c.b16 %v436, %v435
      %v487 = vpack.c.b16 %v438, %v437
      %v488 = vpack.c.b16 %v440, %v439
      %v489 = vpack.c.b16 %v442, %v441
      %v490 = vpack.c.b16 %v444, %v443
      %v491 = vpack.c.b16 %v446, %v445
      %v492 = vpack.c.b16 %v448, %v447
      %v493 = vpack.c.b16 %v450, %v449
      %v494 = vpack.c.b16 %v452, %v451
      %v495 = vpack.c.b16 %v454, %v453
      %v496 = vpack.c.b16 %v456, %v455
      %v497 = vpack.c.b16 %v458, %v457
      %v498 = vpack.c.b16 %v460, %v459
      %v499 = vpack.c.b16 %v462, %v461
      %v500 = vpack.c.b16 %v464, %v463
      %v501 = vpack.c.b16 %v466, %v465
      %v502 = vpack.c.b16 %v468, %v467
      %v503 = vpack.c.b16 %v470, %v469
      %v504 = vpack.c.b16 %v472, %v471
      %537 = vmatprep.subr.bf16.mxu0 0
      %538 = vmatpush1.bf16.msra.mxu0 %v473
      %539 = vmatprep.subr.bf16.mxu0 0
      %540 = vmatpush1.bf16.msra.mxu0 %v474
      %541 = vmatprep.subr.bf16.mxu0 0
      %542 = vmatpush1.bf16.msra.mxu0 %v475
      %543 = vmatprep.subr.bf16.mxu0 0
      %544 = vmatpush1.bf16.msra.mxu0 %v476
      %545 = vmatprep.subr.bf16.mxu0 0
      %546 = vmatpush1.bf16.msra.mxu0 %v477
      %547 = vmatprep.subr.bf16.mxu0 0
      %548 = vmatpush1.bf16.msra.mxu0 %v478
      %549 = vmatprep.subr.bf16.mxu0 0
      %550 = vmatpush1.bf16.msra.mxu0 %v479
      %551 = vmatprep.subr.bf16.mxu0 0
      %552 = vmatpush1.bf16.msra.mxu0 %v480
      %553 = vmatprep.subr.bf16.mxu0 0
      %554 = vmatpush1.bf16.msra.mxu0 %v481
      %555 = vmatprep.subr.bf16.mxu0 0
      %556 = vmatpush1.bf16.msra.mxu0 %v482
      %557 = vmatprep.subr.bf16.mxu0 0
      %558 = vmatpush1.bf16.msra.mxu0 %v483
      %559 = vmatprep.subr.bf16.mxu0 0
      %560 = vmatpush1.bf16.msra.mxu0 %v484
      %561 = vmatprep.subr.bf16.mxu0 0
      %562 = vmatpush1.bf16.msra.mxu0 %v485
      %563 = vmatprep.subr.bf16.mxu0 0
      %564 = vmatpush1.bf16.msra.mxu0 %v486
      %565 = vmatprep.subr.bf16.mxu0 0
      %566 = vmatpush1.bf16.msra.mxu0 %v487
      %567 = vmatprep.subr.bf16.mxu0 0
      %568 = vmatpush1.bf16.msra.mxu0 %v488
      %569 = vmatprep.mubr.bf16.mxu0 %v314
      %570 = vmatmul.mubr.bf16.gmra.mrb[0].mxu0 %v313
      %v571 = vpop.f32.mrb[0].mxu0
      %v572 = vadd.f32 %v263, %v571
      %v573 = vpop.f32.mrb[0].mxu0
      %v574 = vpop.f32.mrb[0].mxu0
      %v575 = vadd.f32 %v263, %v574
      %v576 = vpop.f32.mrb[0].mxu0
      %577 = vmatprep.mubr.bf16.mxu0 %v318
      %578 = vmatmul.mubr.bf16.gmra.mrb[0].mxu0 %v317
      %v579 = vpop.f32.mrb[0].mxu0
      %v580 = vadd.f32 %v263, %v579
      %v581 = vpop.f32.mrb[0].mxu0
      %v582 = vpop.f32.mrb[0].mxu0
      %v583 = vadd.f32 %v263, %v582
      %v584 = vpop.f32.mrb[0].mxu0
      %585 = vmatprep.mubr.bf16.mxu0 %v322
      %586 = vmatmul.mubr.bf16.gmra.mrb[0].mxu0 %v321
      %v587 = vpop.f32.mrb[0].mxu0
      %v588 = vadd.f32 %v263, %v587
      %v589 = vpop.f32.mrb[0].mxu0
      %v590 = vpop.f32.mrb[0].mxu0
      %v591 = vadd.f32 %v263, %v590
      %v592 = vpop.f32.mrb[0].mxu0
      %593 = vmatprep.mubr.bf16.mxu0 %v326
      %594 = vmatmul.mubr.bf16.gmra.mrb[0].mxu0 %v325
      %v595 = vpop.f32.mrb[0].mxu0
      %v596 = vadd.f32 %v263, %v595
      %v597 = vpop.f32.mrb[0].mxu0
      %v598 = vpop.f32.mrb[0].mxu0
      %v599 = vadd.f32 %v263, %v598
      %v600 = vpop.f32.mrb[0].mxu0
      %601 = vdwg.mxu0
      %602 = vmatprep.subr.bf16.mxu0 0
      %603 = vmatpush1.bf16.msra.mxu0 %v489
      %604 = vmatprep.subr.bf16.mxu0 0
      %605 = vmatpush1.bf16.msra.mxu0 %v490
      %606 = vmatprep.subr.bf16.mxu0 0
      %607 = vmatpush1.bf16.msra.mxu0 %v491
      %608 = vmatprep.subr.bf16.mxu0 0
      %609 = vmatpush1.bf16.msra.mxu0 %v492
      %610 = vmatprep.subr.bf16.mxu0 0
      %611 = vmatpush1.bf16.msra.mxu0 %v493
      %612 = vmatprep.subr.bf16.mxu0 0
      %613 = vmatpush1.bf16.msra.mxu0 %v494
      %614 = vmatprep.subr.bf16.mxu0 0
      %615 = vmatpush1.bf16.msra.mxu0 %v495
      %616 = vmatprep.subr.bf16.mxu0 0
      %617 = vmatpush1.bf16.msra.mxu0 %v496
      %618 = vmatprep.subr.bf16.mxu0 0
      %619 = vmatpush1.bf16.msra.mxu0 %v497
      %620 = vmatprep.subr.bf16.mxu0 0
      %621 = vmatpush1.bf16.msra.mxu0 %v498
      %622 = vmatprep.subr.bf16.mxu0 0
      %623 = vmatpush1.bf16.msra.mxu0 %v499
      %624 = vmatprep.subr.bf16.mxu0 0
      %625 = vmatpush1.bf16.msra.mxu0 %v500
      %626 = vmatprep.subr.bf16.mxu0 0
      %627 = vmatpush1.bf16.msra.mxu0 %v501
      %628 = vmatprep.subr.bf16.mxu0 0
      %629 = vmatpush1.bf16.msra.mxu0 %v502
      %630 = vmatprep.subr.bf16.mxu0 0
      %631 = vmatpush1.bf16.msra.mxu0 %v503
      %632 = vmatprep.subr.bf16.mxu0 0
      %633 = vmatpush1.bf16.msra.mxu0 %v504
      %634 = vmatprep.mubr.bf16.mxu0 %v316
      %635 = vmatmul.mubr.bf16.gmra.mrb[0].mxu0 %v315
      %v636 = vpop.f32.mrb[0].mxu0
      %v637 = vadd.f32 %v572, %v636
      %v638 = vpop.f32.mrb[0].mxu0
      %v639 = vpop.f32.mrb[0].mxu0
      %v640 = vadd.f32 %v575, %v639
      %v641 = vpop.f32.mrb[0].mxu0
      %642 = vmatprep.mubr.bf16.mxu0 %v320
      %643 = vmatmul.mubr.bf16.gmra.mrb[0].mxu0 %v319
      %v644 = vpop.f32.mrb[0].mxu0
      %v645 = vadd.f32 %v580, %v644
      %v646 = vpop.f32.mrb[0].mxu0
      %v647 = vpop.f32.mrb[0].mxu0
      %v648 = vadd.f32 %v583, %v647
      %v649 = vpop.f32.mrb[0].mxu0
      %650 = vmatprep.mubr.bf16.mxu0 %v324
      %651 = vmatmul.mubr.bf16.gmra.mrb[0].mxu0 %v323
      %v652 = vpop.f32.mrb[0].mxu0
      %v653 = vadd.f32 %v588, %v652
      %v654 = vpop.f32.mrb[0].mxu0
      %v655 = vpop.f32.mrb[0].mxu0
      %v656 = vadd.f32 %v591, %v655
      %v657 = vpop.f32.mrb[0].mxu0
      %658 = vmatprep.mubr.bf16.mxu0 %v328
      %659 = vmatmul.mubr.bf16.gmra.mrb[0].mxu0 %v327
      %v660 = vpop.f32.mrb[0].mxu0
      %v661 = vadd.f32 %v596, %v660
      %v662 = vpop.f32.mrb[0].mxu0
      %v663 = vpop.f32.mrb[0].mxu0
      %v664 = vadd.f32 %v599, %v663
      %v665 = vpop.f32.mrb[0].mxu0
      %666 = vdwg.mxu0
      %v667 = vpack.c.bf16 %v640, %v637
      %v668 = vpack.c.bf16 %v648, %v645
      %v669 = vpack.c.bf16 %v656, %v653
      %v670 = vpack.c.bf16 %v664, %v661
      %v675 = vunpack.c.l.b16 %v667
      %v676 = vunpack.c.h.b16 %v667
      %v677 = vunpack.c.l.b16 %v668
      %v678 = vunpack.c.h.b16 %v668
      %v679 = vunpack.c.l.b16 %v669
      %v680 = vunpack.c.h.b16 %v669
      %v681 = vunpack.c.l.b16 %v670
      %v682 = vunpack.c.h.b16 %v670
      %v683 = vpack.c.b16 %v675, %v675
      %v684 = vpack.c.b16 %v676, %v676
      %v685 = vpack.c.b16 %v677, %v677
      %v686 = vpack.c.b16 %v678, %v678
      %v687 = vpack.c.b16 %v679, %v679
      %v688 = vpack.c.b16 %v680, %v680
      %v689 = vpack.c.b16 %v681, %v681
      %v690 = vpack.c.b16 %v682, %v682
      %699 = vst [vmem:[%s175] sm:$0xf] %v683
      %700 = vst [vmem:[%s175 + $0x4] sm:$0xf] %v684
      %701 = vst [vmem:[%s175 + $0x8] sm:$0xf] %v685
      %702 = vst [vmem:[%s175 + $0xc] sm:$0xf] %v686
      %703 = vst [vmem:[%s175 + $0x10] sm:$0xf] %v687
      %704 = vst [vmem:[%s175 + $0x14] sm:$0xf] %v688
      %705 = vst [vmem:[%s175 + $0x18] sm:$0xf] %v689
      %706 = vst [vmem:[%s175 + $0x1c] sm:$0xf] %v690
      %s707 = smul.u32 8, %s14
      %p708 = scmp.lt.s32.totalorder %s707, 15
      %s709 = scalar_select %p708, %s707, 15
      %s710 = smul.addr %s709, 4
      %s711 = scalar_lea.vmem %s3, %s710
      // Predicated region
      $region33: #{generator_forward.35} parent=31 // pred_check
        %p712 = pneg %p100
      $region34: #{generator_forward.35} parent=31 // pred_check_branch
        %714 = sbr.rel (%p712) target = $region36
      $region35: #{generator_forward.35} parent=31 // pred_region
        %s715 = smul.u32 8, %s14
      $region36: #{generator_forward.35} parent=31 // pred_fallthru
        _
    $region32: #{generator_forward.35} parent=5 // pred_fallthru
      _
    %p716 = scmp.le.s32.totalorder 2, %s9
    // Predicated region
    $region37: #{generator_forward.35} parent=5 // pred_check
      %p717 = pneg %p716
    $region38: #{generator_forward.35} parent=5 // pred_check_branch
      %719 = sbr.rel (%p717) target = $region40
    $region39: #{generator_forward.35} parent=5 // pred_region
      %s720 = ssub.s32 %s9, 2
      // Predicated region
      $region41: #{generator_forward.35} parent=39 // pred_check
        %p721 = pneg %p106
      $region42: #{generator_forward.35} parent=39 // pred_check_branch
        %723 = sbr.rel (%p721) target = $region44
      $region43: #{generator_forward.35} parent=39 // pred_region
        %s724 = smul.u32 8, %s15
        %p725 = scmp.lt.s32.totalorder %s724, 15
        %s726 = scalar_select %p725, %s724, 15
        %s727 = smul.addr %s726, 4
        %s728 = scalar_lea.vmem %s3, %s727
      $region44: #{generator_forward.35} parent=39 // pred_fallthru
        _
    $region40: #{generator_forward.35} parent=5 // pred_fallthru
      _
  $region6: #{generator_forward.35} parent=0 // loop_footer
    %s13 = sadd.s32 1, %s9
  $region7: #{generator_forward.35} parent=0 // loop_footer_branch
    %8 = sbr.rel target = $region3
  $region8: #{generator_forward.35} parent=0 // loop_exit
    _

// kernel: generator_forward.38
$region0: #{generator_forward.38}
  #allocation0 [shape = 'u32[]', space=smem, size = 0x4, offset = 0x4, fixed_abs, tag = 'smem constant byte address 0x4 - core index']
  #allocation1 [shape = 'u32[144,128]{1,0:T(1,128)}', space=vmem, size = 0x12000, scoped, tag = 'internal scratch']
  %s0 = inlined_call_operand.vmem [shape: bf16[2,16,128], index: 0, kind: input, shape index: {}]
  %s1 = inlined_call_operand.vmem [shape: bf16[2,16,128], index: 1, kind: output, shape index: {}]
  %s2 = sld [smem:[#allocation0]]
  $region37: #{generator_forward.38} parent=0
    _
  %s4 = ssub.s32 1, %s2
  %s5 = scalar_select 0, %s4, %s2
  loop: start=0, step=1, limit=4
  $region2: #{generator_forward.38} parent=0 // loop_pre_header
    _
  $region3: #{generator_forward.38} parent=0 // loop_header
    %s7 = sphi 0, %s11
    %p8 = scmp.ge.s32.totalorder %s7, 4
    %s17 = sphi 0, %s19
    %s20 = sphi 0, %s17
    %s21 = sphi 0, %s20
    %s37 = sphi 0, %s21
    %s43 = sphi 0, %s45
    %s46 = sphi 0, %s43
    %s47 = sphi 0, %s46
    %s63 = sphi 0, %s47
  $region4: #{generator_forward.38} parent=0 // loop_header_branch
    %10 = sbr.rel (%p8) target = $region8
  $region5: #{generator_forward.38} parent=0 // loop_body
    %s12 = ssub.s32 %s7, 1
    %s13 = ssub.s32 %s7, 2
    %s14 = sadd.s32 %s7, 1
    %s15 = ssub.s32 %s7, %s14
    %p16 = scmp.eq.s32.totalorder %s15, 0
    %s18 = sadd.s32 %s17, 1
    %s19 = scalar_select %p16, %s17, %s18
    %p22 = pneg %p16
    %p23 = scmp.eq.s32.totalorder %s7, 1
    %p24 = por %p22, %p23
    %p25 = scmp.ne.s32.totalorder %s17, %s20
    %p26 = scmp.eq.s32.totalorder %s7, 0
    %p27 = por %p25, %p26
    %p28 = scmp.ne.s32.totalorder %s17, %s20
    %p29 = scmp.eq.s32.totalorder %s12, 1
    %p30 = por %p28, %p29
    %p31 = scmp.ne.s32.totalorder %s20, %s21
    %p32 = scmp.eq.s32.totalorder %s12, 0
    %p33 = por %p31, %p32
    %p34 = scmp.ne.s32.totalorder %s20, %s21
    %p35 = scmp.eq.s32.totalorder %s13, 1
    %p36 = por %p34, %p35
    %p38 = scmp.ne.s32.totalorder %s21, %s37
    %p39 = scmp.eq.s32.totalorder %s13, 0
    %p40 = por %p38, %p39
    %s41 = ssub.s32 %s7, %s14
    %p42 = scmp.eq.s32.totalorder %s41, 0
    %s44 = sadd.s32 %s43, 1
    %s45 = scalar_select %p42, %s43, %s44
    %p48 = pneg %p42
    %p49 = scmp.eq.s32.totalorder %s7, 1
    %p50 = por %p48, %p49
    %p51 = scmp.ne.s32.totalorder %s43, %s46
    %p52 = scmp.eq.s32.totalorder %s7, 0
    %p53 = por %p51, %p52
    %p54 = scmp.ne.s32.totalorder %s43, %s46
    %p55 = scmp.eq.s32.totalorder %s12, 1
    %p56 = por %p54, %p55
    %p57 = scmp.ne.s32.totalorder %s46, %s47
    %p58 = scmp.eq.s32.totalorder %s12, 0
    %p59 = por %p57, %p58
    %p60 = scmp.ne.s32.totalorder %s46, %s47
    %p61 = scmp.eq.s32.totalorder %s13, 1
    %p62 = por %p60, %p61
    %p64 = scmp.ne.s32.totalorder %s47, %s63
    %p65 = scmp.eq.s32.totalorder %s13, 0
    %p66 = por %p64, %p65
    %p67 = scmp.le.s32.totalorder 1, %s7
    %p68 = scmp.lt.s32.totalorder %s7, 3
    %p69 = pnand %p67, %p68
    %p70 = pneg %p69
    // Predicated region
    $region9: #{generator_forward.38} parent=5 // pred_check
      _
    $region10: #{generator_forward.38} parent=5 // pred_check_branch
      %72 = sbr.rel (%p69) target = $region12
    $region11: #{generator_forward.38} parent=5 // pred_region
      %s73 = ssub.s32 %s7, 1
    $region12: #{generator_forward.38} parent=5 // pred_fallthru
      _
    %p74 = scmp.lt.s32.totalorder %s7, 2
    // Predicated region
    $region13: #{generator_forward.38} parent=5 // pred_check
      %p75 = pneg %p74
    $region14: #{generator_forward.38} parent=5 // pred_check_branch
      %77 = sbr.rel (%p75) target = $region16
    $region15: #{generator_forward.38} parent=5 // pred_region
      // Predicated region
      $region17: #{generator_forward.38} parent=15 // pred_check
        %p78 = pneg %p27
      $region18: #{generator_forward.38} parent=15 // pred_check_branch
        %80 = sbr.rel (%p78) target = $region20
      $region19: #{generator_forward.38} parent=15 // pred_region
        %p81 = scmp.lt.s32.totalorder %s7, 1
        %s82 = scalar_select %p81, %s7, 1
        %s83 = smul.addr %s82, 2
        %s84 = smul.addr %s83, 4
        %s85 = scalar_lea.vmem %s0, %s84
      $region20: #{generator_forward.38} parent=15 // pred_fallthru
        _
    $region16: #{generator_forward.38} parent=5 // pred_fallthru
      _
    %p86 = scmp.le.s32.totalorder 1, %s7
    %p87 = scmp.lt.s32.totalorder %s7, 3
    %p88 = pnand %p86, %p87
    %p89 = pneg %p88
    // Predicated region
    $region21: #{generator_forward.38} parent=5 // pred_check
      _
    $region22: #{generator_forward.38} parent=5 // pred_check_branch
      %91 = sbr.rel (%p88) target = $region24
    $region23: #{generator_forward.38} parent=5 // pred_region
      %s92 = ssub.s32 %s7, 1
      %p93 = scmp.lt.s32.totalorder %s12, 1
      %s94 = scalar_select %p93, %s12, 1
      %s95 = smul.addr %s94, 2
      %s96 = smul.addr %s95, 4
      %s97 = scalar_lea.vmem %s0, %s96
      %p98 = pneg %p33
      %p99 = pneg %p30
      %p100 = pneg %p59
      %p101 = pneg %p56
      %p102 = scmp.lt.s32.totalorder %s12, 1
      %s103 = scalar_select %p102, %s12, 1
      %s104 = smul.addr %s103, 2
      %s105 = smul.addr %s104, 4
      %s106 = scalar_lea.vmem %s1, %s105
      %p107 = scmp.lt.s32.totalorder %s12, 1
      %s108 = scalar_select %p107, %s12, 1
      %s109 = smul.addr %s108, 2
      %s110 = smul.addr %s109, 4
      %s111 = scalar_lea.vmem %s0, %s110
      %p112 = scmp.lt.s32.totalorder %s12, 1
      %s113 = scalar_select %p112, %s12, 1
      %s114 = smul.addr %s113, 2
      %s115 = smul.addr %s114, 4
      %s116 = scalar_lea.vmem %s1, %s115
      %v117 = vld [vmem:[%s111] sm:$0xf]
      %v118 = vld [vmem:[%s111 + $0x4] sm:$0xf]
      %v119 = vunpack.c.l.bf16 %v117
      %v120 = vunpack.c.l.bf16 %v118
      %v121 = vadd.f32 %v119, %v120
      %v122 = vrot.slane %v121, 4
      %v123 = vadd.f32 %v121, %v122
      %v124 = vrot.slane %v123, 2
      %v125 = vadd.f32 %v123, %v124
      %v126 = vrot.slane %v125, 1
      %v127 = vadd.f32 %v125, %v126
      %v128 = vrcp.pop 16.0
      %v129 = vmul.f32 %v127, %v128
      %v130 = vsub.f32 %v119, %v129
      %v131 = vsub.f32 %v120, %v129
      %v132 = vmul.f32 %v130, %v130
      %v133 = vmul.f32 %v131, %v131
      %v134 = vadd.f32 %v132, %v133
      %v135 = vrot.slane %v134, 4
      %v136 = vadd.f32 %v134, %v135
      %v137 = vrot.slane %v136, 2
      %v138 = vadd.f32 %v136, %v137
      %v139 = vrot.slane %v138, 1
      %v140 = vadd.f32 %v138, %v139
      %v141 = vmul.f32 %v140, %v128
      %v142 = vadd.f32 %v141, 1e-05
      %v143 = vrsqrt.pop %v142
      %v144 = vmul.f32 %v130, %v143
      %v145 = vmul.f32 %v131, %v143
      %vm146 = vcmp.ge.f32.partialorder %v144, 0.0
      %vm147 = vcmp.ge.f32.partialorder %v145, 0.0
      %v148 = vmul.f32 %v144, 0.2
      %v149 = vmul.f32 %v145, 0.2
      %v150 = vsel %vm146, %v144, %v148
      %v151 = vsel %vm147, %v145, %v149
      %v152 = vpack.c.bf16 %v151, %v150
      %v154 = vunpack.c.l.b16 %v152
      %v155 = vunpack.c.h.b16 %v152
      %v156 = vpack.c.b16 %v154, %v154
      %v157 = vpack.c.b16 %v155, %v155
      %160 = vst [vmem:[%s116] sm:$0xf] %v156
      %161 = vst [vmem:[%s116 + $0x4] sm:$0xf] %v157
      %p162 = scmp.lt.s32.totalorder %s12, 1
      %s163 = scalar_select %p162, %s12, 1
      %s164 = smul.addr %s163, 2
      %s165 = smul.addr %s164, 4
      %s166 = scalar_lea.vmem %s1, %s165
      // Predicated region
      $region25: #{generator_forward.38} parent=23 // pred_check
        %p167 = pneg %p56
      $region26: #{generator_forward.38} parent=23 // pred_check_branch
        %169 = sbr.rel (%p167) target = $region28
      $region27: #{generator_forward.38} parent=23 // pred_region
        _
      $region28: #{generator_forward.38} parent=23 // pred_fallthru
        _
    $region24: #{generator_forward.38} parent=5 // pred_fallthru
      _
    %p170 = scmp.le.s32.totalorder 2, %s7
    // Predicated region
    $region29: #{generator_forward.38} parent=5 // pred_check
      %p171 = pneg %p170
    $region30: #{generator_forward.38} parent=5 // pred_check_branch
      %173 = sbr.rel (%p171) target = $region32
    $region31: #{generator_forward.38} parent=5 // pred_region
      %s174 = ssub.s32 %s7, 2
      // Predicated region
      $region33: #{generator_forward.38} parent=31 // pred_check
        %p175 = pneg %p62
      $region34: #{generator_forward.38} parent=31 // pred_check_branch
        %177 = sbr.rel (%p175) target = $region36
      $region35: #{generator_forward.38} parent=31 // pred_region
        %p178 = scmp.lt.s32.totalorder %s13, 1
        %s179 = scalar_select %p178, %s13, 1
        %s180 = smul.addr %s179, 2
        %s181 = smul.addr %s180, 4
        %s182 = scalar_lea.vmem %s1, %s181
      $region36: #{generator_forward.38} parent=31 // pred_fallthru
        _
    $region32: #{generator_forward.38} parent=5 // pred_fallthru
      _
  $region6: #{generator_forward.38} parent=0 // loop_footer
    %s11 = sadd.s32 1, %s7
  $region7: #{generator_forward.38} parent=0 // loop_footer_branch
    %6 = sbr.rel target = $region3
  $region8: #{generator_forward.38} parent=0 // loop_exit
    _

// kernel: generator_forward.37
$region0: #{generator_forward.37}
  #allocation0 [shape = 'u32[]', space=smem, size = 0x4, offset = 0x4, fixed_abs, tag = 'smem constant byte address 0x4 - core index']
  #allocation1 [shape = 'u32[144,128]{1,0:T(1,128)}', space=vmem, size = 0x12000, scoped, tag = 'internal scratch']
  %s0 = inlined_call_operand.vmem [shape: bf16[32,1024], index: 0, kind: input, shape index: {}]
  %s1 = inlined_call_operand.vmem [shape: bf16[1024,128], index: 1, kind: input, shape index: {}]
  %s2 = inlined_call_operand.vmem [shape: f32[1,128], index: 2, kind: input, shape index: {}]
  %s3 = inlined_call_operand.vmem [shape: bf16[32,128], index: 3, kind: output, shape index: {}]
  %s4 = sld [smem:[#allocation0]]
  $region45: #{generator_forward.37} parent=0
    _
  %s6 = ssub.s32 1, %s4
  %s7 = scalar_select 0, %s6, %s4
  loop: start=0, step=1, limit=4
  $region2: #{generator_forward.37} parent=0 // loop_pre_header
    _
  $region3: #{generator_forward.37} parent=0 // loop_header
    %s9 = sphi 0, %s13
    %p10 = scmp.ge.s32.totalorder %s9, 4
    %s19 = sphi 0, %s21
    %s22 = sphi 0, %s19
    %s23 = sphi 0, %s22
    %s39 = sphi 0, %s23
    %s43 = sphi 0, %s43
    %s45 = sphi 0, %s43
    %s46 = sphi 0, %s45
    %s60 = sphi 0, %s46
    %s64 = sphi 0, %s64
    %s66 = sphi 0, %s64
    %s67 = sphi 0, %s66
    %s81 = sphi 0, %s67
    %s87 = sphi 0, %s89
    %s90 = sphi 0, %s87
    %s91 = sphi 0, %s90
    %s107 = sphi 0, %s91
  $region4: #{generator_forward.37} parent=0 // loop_header_branch
    %12 = sbr.rel (%p10) target = $region8
  $region5: #{generator_forward.37} parent=0 // loop_body
    %s14 = ssub.s32 %s9, 1
    %s15 = ssub.s32 %s9, 2
    %s16 = sadd.s32 %s9, 1
    %s17 = ssub.s32 %s9, %s16
    %p18 = scmp.eq.s32.totalorder %s17, 0
    %s20 = sadd.s32 %s19, 1
    %s21 = scalar_select %p18, %s19, %s20
    %p24 = pneg %p18
    %p25 = scmp.eq.s32.totalorder %s9, 1
    %p26 = por %p24, %p25
    %p27 = scmp.ne.s32.totalorder %s19, %s22
    %p28 = scmp.eq.s32.totalorder %s9, 0
    %p29 = por %p27, %p28
    %p30 = scmp.ne.s32.totalorder %s19, %s22
    %p31 = scmp.eq.s32.totalorder %s14, 1
    %p32 = por %p30, %p31
    %p33 = scmp.ne.s32.totalorder %s22, %s23
    %p34 = scmp.eq.s32.totalorder %s14, 0
    %p35 = por %p33, %p34
    %p36 = scmp.ne.s32.totalorder %s22, %s23
    %p37 = scmp.eq.s32.totalorder %s15, 1
    %p38 = por %p36, %p37
    %p40 = scmp.ne.s32.totalorder %s23, %s39
    %p41 = scmp.eq.s32.totalorder %s15, 0
    %p42 = por %p40, %p41
    %s44 = sadd.s32 %s43, 1
    %p47 = scmp.eq.s32.totalorder %s9, 1
    %p48 = scmp.ne.s32.totalorder %s43, %s45
    %p49 = scmp.eq.s32.totalorder %s9, 0
    %p50 = por %p48, %p49
    %p51 = scmp.ne.s32.totalorder %s43, %s45
    %p52 = scmp.eq.s32.totalorder %s14, 1
    %p53 = por %p51, %p52
    %p54 = scmp.ne.s32.totalorder %s45, %s46
    %p55 = scmp.eq.s32.totalorder %s14, 0
    %p56 = por %p54, %p55
    %p57 = scmp.ne.s32.totalorder %s45, %s46
    %p58 = scmp.eq.s32.totalorder %s15, 1
    %p59 = por %p57, %p58
    %p61 = scmp.ne.s32.totalorder %s46, %s60
    %p62 = scmp.eq.s32.totalorder %s15, 0
    %p63 = por %p61, %p62
    %s65 = sadd.s32 %s64, 1
    %p68 = scmp.eq.s32.totalorder %s9, 1
    %p69 = scmp.ne.s32.totalorder %s64, %s66
    %p70 = scmp.eq.s32.totalorder %s9, 0
    %p71 = por %p69, %p70
    %p72 = scmp.ne.s32.totalorder %s64, %s66
    %p73 = scmp.eq.s32.totalorder %s14, 1
    %p74 = por %p72, %p73
    %p75 = scmp.ne.s32.totalorder %s66, %s67
    %p76 = scmp.eq.s32.totalorder %s14, 0
    %p77 = por %p75, %p76
    %p78 = scmp.ne.s32.totalorder %s66, %s67
    %p79 = scmp.eq.s32.totalorder %s15, 1
    %p80 = por %p78, %p79
    %p82 = scmp.ne.s32.totalorder %s67, %s81
    %p83 = scmp.eq.s32.totalorder %s15, 0
    %p84 = por %p82, %p83
    %s85 = ssub.s32 %s9, %s16
    %p86 = scmp.eq.s32.totalorder %s85, 0
    %s88 = sadd.s32 %s87, 1
    %s89 = scalar_select %p86, %s87, %s88
    %p92 = pneg %p86
    %p93 = scmp.eq.s32.totalorder %s9, 1
    %p94 = por %p92, %p93
    %p95 = scmp.ne.s32.totalorder %s87, %s90
    %p96 = scmp.eq.s32.totalorder %s9, 0
    %p97 = por %p95, %p96
    %p98 = scmp.ne.s32.totalorder %s87, %s90
    %p99 = scmp.eq.s32.totalorder %s14, 1
    %p100 = por %p98, %p99
    %p101 = scmp.ne.s32.totalorder %s90, %s91
    %p102 = scmp.eq.s32.totalorder %s14, 0
    %p103 = por %p101, %p102
    %p104 = scmp.ne.s32.totalorder %s90, %s91
    %p105 = scmp.eq.s32.totalorder %s15, 1
    %p106 = por %p104, %p105
    %p108 = scmp.ne.s32.totalorder %s91, %s107
    %p109 = scmp.eq.s32.totalorder %s15, 0
    %p110 = por %p108, %p109
    %p111 = scmp.le.s32.totalorder 1, %s9
    %p112 = scmp.lt.s32.totalorder %s9, 3
    %p113 = pnand %p111, %p112
    %p114 = pneg %p113
    // Predicated region
    $region9: #{generator_forward.37} parent=5 // pred_check
      _
    $region10: #{generator_forward.37} parent=5 // pred_check_branch
      %116 = sbr.rel (%p113) target = $region12
    $region11: #{generator_forward.37} parent=5 // pred_region
      %s117 = ssub.s32 %s9, 1
      // Predicated region
      $region13: #{generator_forward.37} parent=11 // pred_check
        %p118 = pneg %p56
      $region14: #{generator_forward.37} parent=11 // pred_check_branch
        %120 = sbr.rel (%p118) target = $region16
      $region15: #{generator_forward.37} parent=11 // pred_region
        _
      $region16: #{generator_forward.37} parent=11 // pred_fallthru
        _
      // Predicated region
      $region17: #{generator_forward.37} parent=11 // pred_check
        %p121 = pneg %p77
      $region18: #{generator_forward.37} parent=11 // pred_check_branch
        %123 = sbr.rel (%p121) target = $region20
      $region19: #{generator_forward.37} parent=11 // pred_region
        _
      $region20: #{generator_forward.37} parent=11 // pred_fallthru
        _
    $region12: #{generator_forward.37} parent=5 // pred_fallthru
      _
    %p124 = scmp.lt.s32.totalorder %s9, 2
    // Predicated region
    $region21: #{generator_forward.37} parent=5 // pred_check
      %p125 = pneg %p124
    $region22: #{generator_forward.37} parent=5 // pred_check_branch
      %127 = sbr.rel (%p125) target = $region24
    $region23: #{generator_forward.37} parent=5 // pred_region
      // Predicated region
      $region25: #{generator_forward.37} parent=23 // pred_check
        %p128 = pneg %p29
      $region26: #{generator_forward.37} parent=23 // pred_check_branch
        %130 = sbr.rel (%p128) target = $region28
      $region27: #{generator_forward.37} parent=23 // pred_region
        %s131 = smul.u32 2, %s9
        %p132 = scmp.lt.s32.totalorder %s131, 3
        %s133 = scalar_select %p132, %s131, 3
        %s134 = smul.addr %s133, 8
        %s135 = smul.addr %s134, 4
        %s136 = scalar_lea.vmem %s0, %s135
        %s137 = smul.u32 2, %s9
      $region28: #{generator_forward.37} parent=23 // pred_fallthru
        _
    $region24: #{generator_forward.37} parent=5 // pred_fallthru
      _
    %p138 = scmp.le.s32.totalorder 1, %s9
    %p139 = scmp.lt.s32.totalorder %s9, 3
    %p140 = pnand %p138, %p139
    %p141 = pneg %p140
    // Predicated region
    $region29: #{generator_forward.37} parent=5 // pred_check
      _
    $region30: #{generator_forward.37} parent=5 // pred_check_branch
      %143 = sbr.rel (%p140) target = $region32
    $region31: #{generator_forward.37} parent=5 // pred_region
      %s144 = ssub.s32 %s9, 1
      %s145 = smul.u32 2, %s14
      %p146 = scmp.lt.s32.totalorder %s145, 3
      %s147 = scalar_select %p146, %s145, 3
      %s148 = smul.addr %s147, 8
      %s149 = smul.addr %s148, 4
      %s150 = scalar_lea.vmem %s0, %s149
      %p151 = pneg %p35
      %p152 = pneg %p32
      %p153 = pneg %p56
      %p154 = pneg %p53
      %p155 = pneg %p77
      %p156 = pneg %p74
      %p157 = pneg %p103
      %p158 = pneg %p100
      %s159 = smul.u32 2, %s14
      %p160 = scmp.lt.s32.totalorder %s159, 3
      %s161 = scalar_select %p160, %s159, 3
      %s162 = smul.addr %s161, 4
      %s163 = scalar_lea.vmem %s3, %s162
      %s164 = smul.u32 2, %s14
      %p165 = scmp.lt.s32.totalorder %s164, 3
      %s166 = scalar_select %p165, %s164, 3
      %s167 = smul.addr %s166, 8
      %s168 = smul.addr %s167, 4
      %s169 = scalar_lea.vmem %s0, %s168
      %s170 = smul.u32 2, %s14
      %s171 = smul.u32 2, %s14
      %p172 = scmp.lt.s32.totalorder %s171, 3
      %s173 = scalar_select %p172, %s171, 3
      %s174 = smul.addr %s173, 4
      %s175 = scalar_lea.vmem %s3, %s174
      %s176 = smul.u32 2, %s14
      %v178 = vld [vmem:[%s169] sm:$0xff]
      %v179 = vld [vmem:[%s169 + $0x8] sm:$0xff]
      %v180 = vld [vmem:[%s169 + $0x10] sm:$0xff]
      %v181 = vld [vmem:[%s169 + $0x18] sm:$0xff]
      %v182 = vld [vmem:[%s169 + $0x20] sm:$0xff]
      %v183 = vld [vmem:[%s169 + $0x28] sm:$0xff]
      %v184 = vld [vmem:[%s169 + $0x30] sm:$0xff]
      %v185 = vld [vmem:[%s169 + $0x38] sm:$0xff]
      %v186 = vld [vmem:[%s1] sm:$0xf]
      %v187 = vld [vmem:[%s1 + $0x4] sm:$0xf]
      %v188 = vld [vmem:[%s1 + $0x8] sm:$0xf]
      %v189 = vld [vmem:[%s1 + $0xc] sm:$0xf]
      %v190 = vld [vmem:[%s1 + $0x10] sm:$0xf]
      %v191 = vld [vmem:[%s1 + $0x14] sm:$0xf]
      %v192 = vld [vmem:[%s1 + $0x18] sm:$0xf]
      %v193 = vld [vmem:[%s1 + $0x1c] sm:$0xf]
      %v194 = vld [vmem:[%s1 + $0x20] sm:$0xf]
      %v195 = vld [vmem:[%s1 + $0x24] sm:$0xf]
      %v196 = vld [vmem:[%s1 + $0x28] sm:$0xf]
      %v197 = vld [vmem:[%s1 + $0x2c] sm:$0xf]
      %v198 = vld [vmem:[%s1 + $0x30] sm:$0xf]
      %v199 = vld [vmem:[%s1 + $0x34] sm:$0xf]
      %v200 = vld [vmem:[%s1 + $0x38] sm:$0xf]
      %v201 = vld [vmem:[%s1 + $0x3c] sm:$0xf]
      %v202 = vld [vmem:[%s1 + $0x40] sm:$0xf]
      %v203 = vld [vmem:[%s1 + $0x44] sm:$0xf]
      %v204 = vld [vmem:[%s1 + $0x48] sm:$0xf]
      %v205 = vld [vmem:[%s1 + $0x4c] sm:$0xf]
      %v206 = vld [vmem:[%s1 + $0x50] sm:$0xf]
      %v207 = vld [vmem:[%s1 + $0x54] sm:$0xf]
      %v208 = vld [vmem:[%s1 + $0x58] sm:$0xf]
      %v209 = vld [vmem:[%s1 + $0x5c] sm:$0xf]
      %v210 = vld [vmem:[%s1 + $0x60] sm:$0xf]
      %v211 = vld [vmem:[%s1 + $0x64] sm:$0xf]
      %v212 = vld [vmem:[%s1 + $0x68] sm:$0xf]
      %v213 = vld [vmem:[%s1 + $0x6c] sm:$0xf]
      %v214 = vld [vmem:[%s1 + $0x70] sm:$0xf]
      %v215 = vld [vmem:[%s1 + $0x74] sm:$0xf]
      %v216 = vld [vmem:[%s1 + $0x78] sm:$0xf]
      %v217 = vld [vmem:[%s1 + $0x7c] sm:$0xf]
      %v218 = vld [vmem:[%s1 + $0x80] sm:$0xf]
      %v219 = vld [vmem:[%s1 + $0x84] sm:$0xf]
      %v220 = vld [vmem:[%s1 + $0x88] sm:$0xf]
      %v221 = vld [vmem:[%s1 + $0x8c] sm:$0xf]
      %v222 = vld [vmem:[%s1 + $0x90] sm:$0xf]
      %v223 = vld [vmem:[%s1 + $0x94] sm:$0xf]
      %v224 = vld [vmem:[%s1 + $0x98] sm:$0xf]
      %v225 = vld [vmem:[%s1 + $0x9c] sm:$0xf]
      %v226 = vld [vmem:[%s1 + $0xa0] sm:$0xf]
      %v227 = vld [vmem:[%s1 + $0xa4] sm:$0xf]
      %v228 = vld [vmem:[%s1 + $0xa8] sm:$0xf]
      %v229 = vld [vmem:[%s1 + $0xac] sm:$0xf]
      %v230 = vld [vmem:[%s1 + $0xb0] sm:$0xf]
      %v231 = vld [vmem:[%s1 + $0xb4] sm:$0xf]
      %v232 = vld [vmem:[%s1 + $0xb8] sm:$0xf]
      %v233 = vld [vmem:[%s1 + $0xbc] sm:$0xf]
      %v234 = vld [vmem:[%s1 + $0xc0] sm:$0xf]
      %v235 = vld [vmem:[%s1 + $0xc4] sm:$0xf]
      %v236 = vld [vmem:[%s1 + $0xc8] sm:$0xf]
      %v237 = vld [vmem:[%s1 + $0xcc] sm:$0xf]
      %v238 = vld [vmem:[%s1 + $0xd0] sm:$0xf]
      %v239 = vld [vmem:[%s1 + $0xd4] sm:$0xf]
      %v240 = vld [vmem:[%s1 + $0xd8] sm:$0xf]
      %v241 = vld [vmem:[%s1 + $0xdc] sm:$0xf]
      %v242 = vld [vmem:[%s1 + $0xe0] sm:$0xf]
      %v243 = vld [vmem:[%s1 + $0xe4] sm:$0xf]
      %v244 = vld [vmem:[%s1 + $0xe8] sm:$0xf]
      %v245 = vld [vmem:[%s1 + $0xec] sm:$0xf]
      %v246 = vld [vmem:[%s1 + $0xf0] sm:$0xf]
      %v247 = vld [vmem:[%s1 + $0xf4] sm:$0xf]
      %v248 = vld [vmem:[%s1 + $0xf8] sm:$0xf]
      %v249 = vld [vmem:[%s1 + $0xfc] sm:$0xf]
      %v250 = vld [vmem:[%s1 + $0x100] sm:$0xf]
      %v251 = vld [vmem:[%s1 + $0x104] sm:$0xf]
      %v252 = vld [vmem:[%s1 + $0x108] sm:$0xf]
      %v253 = vld [vmem:[%s1 + $0x10c] sm:$0xf]
      %v254 = vld [vmem:[%s1 + $0x110] sm:$0xf]
      %v255 = vld [vmem:[%s1 + $0x114] sm:$0xf]
      %v256 = vld [vmem:[%s1 + $0x118] sm:$0xf]
      %v257 = vld [vmem:[%s1 + $0x11c] sm:$0xf]
      %v258 = vld [vmem:[%s1 + $0x120] sm:$0xf]
      %v259 = vld [vmem:[%s1 + $0x124] sm:$0xf]
      %v260 = vld [vmem:[%s1 + $0x128] sm:$0xf]
      %v261 = vld [vmem:[%s1 + $0x12c] sm:$0xf]
      %v262 = vld [vmem:[%s1 + $0x130] sm:$0xf]
      %v263 = vld [vmem:[%s1 + $0x134] sm:$0xf]
      %v264 = vld [vmem:[%s1 + $0x138] sm:$0xf]
      %v265 = vld [vmem:[%s1 + $0x13c] sm:$0xf]
      %v266 = vld [vmem:[%s1 + $0x140] sm:$0xf]
      %v267 = vld [vmem:[%s1 + $0x144] sm:$0xf]
      %v268 = vld [vmem:[%s1 + $0x148] sm:$0xf]
      %v269 = vld [vmem:[%s1 + $0x14c] sm:$0xf]
      %v270 = vld [vmem:[%s1 + $0x150] sm:$0xf]
      %v271 = vld [vmem:[%s1 + $0x154] sm:$0xf]
      %v272 = vld [vmem:[%s1 + $0x158] sm:$0xf]
      %v273 = vld [vmem:[%s1 + $0x15c] sm:$0xf]
      %v274 = vld [vmem:[%s1 + $0x160] sm:$0xf]
      %v275 = vld [vmem:[%s1 + $0x164] sm:$0xf]
      %v276 = vld [vmem:[%s1 + $0x168] sm:$0xf]
      %v277 = vld [vmem:[%s1 + $0x16c] sm:$0xf]
      %v278 = vld [vmem:[%s1 + $0x170] sm:$0xf]
      %v279 = vld [vmem:[%s1 + $0x174] sm:$0xf]
      %v280 = vld [vmem:[%s1 + $0x178] sm:$0xf]
      %v281 = vld [vmem:[%s1 + $0x17c] sm:$0xf]
      %v282 = vld [vmem:[%s1 + $0x180] sm:$0xf]
      %v283 = vld [vmem:[%s1 + $0x184] sm:$0xf]
      %v284 = vld [vmem:[%s1 + $0x188] sm:$0xf]
      %v285 = vld [vmem:[%s1 + $0x18c] sm:$0xf]
      %v286 = vld [vmem:[%s1 + $0x190] sm:$0xf]
      %v287 = vld [vmem:[%s1 + $0x194] sm:$0xf]
      %v288 = vld [vmem:[%s1 + $0x198] sm:$0xf]
      %v289 = vld [vmem:[%s1 + $0x19c] sm:$0xf]
      %v290 = vld [vmem:[%s1 + $0x1a0] sm:$0xf]
      %v291 = vld [vmem:[%s1 + $0x1a4] sm:$0xf]
      %v292 = vld [vmem:[%s1 + $0x1a8] sm:$0xf]
      %v293 = vld [vmem:[%s1 + $0x1ac] sm:$0xf]
      %v294 = vld [vmem:[%s1 + $0x1b0] sm:$0xf]
      %v295 = vld [vmem:[%s1 + $0x1b4] sm:$0xf]
      %v296 = vld [vmem:[%s1 + $0x1b8] sm:$0xf]
      %v297 = vld [vmem:[%s1 + $0x1bc] sm:$0xf]
      %v298 = vld [vmem:[%s1 + $0x1c0] sm:$0xf]
      %v299 = vld [vmem:[%s1 + $0x1c4] sm:$0xf]
      %v300 = vld [vmem:[%s1 + $0x1c8] sm:$0xf]
      %v301 = vld [vmem:[%s1 + $0x1cc] sm:$0xf]
      %v302 = vld [vmem:[%s1 + $0x1d0] sm:$0xf]
      %v303 = vld [vmem:[%s1 + $0x1d4] sm:$0xf]
      %v304 = vld [vmem:[%s1 + $0x1d8] sm:$0xf]
      %v305 = vld [vmem:[%s1 + $0x1dc] sm:$0xf]
      %v306 = vld [vmem:[%s1 + $0x1e0] sm:$0xf]
      %v307 = vld [vmem:[%s1 + $0x1e4] sm:$0xf]
      %v308 = vld [vmem:[%s1 + $0x1e8] sm:$0xf]
      %v309 = vld [vmem:[%s1 + $0x1ec] sm:$0xf]
      %v310 = vld [vmem:[%s1 + $0x1f0] sm:$0xf]
      %v311 = vld [vmem:[%s1 + $0x1f4] sm:$0xf]
      %v312 = vld [vmem:[%s1 + $0x1f8] sm:$0xf]
      %v313 = vld [vmem:[%s1 + $0x1fc] sm:$0xf]
      %v314 = vld [vmem:[%s2] sm:$0x1]
      %v316 = vlaneseq
      %v317 = vshrl.u32 %v316, 7
      %v318 = vsub.s32 0, %v317
      %v319 = vrot.slane %v314, %v318
      %v329 = vunpack.c.l.b16 %v178
      %v330 = vunpack.c.h.b16 %v178
      %v331 = vunpack.c.l.b16 %v179
      %v332 = vunpack.c.h.b16 %v179
      %v333 = vunpack.c.l.b16 %v180
      %v334 = vunpack.c.h.b16 %v180
      %v335 = vunpack.c.l.b16 %v181
      %v336 = vunpack.c.h.b16 %v181
      %v337 = vunpack.c.l.b16 %v182
      %v338 = vunpack.c.h.b16 %v182
      %v339 = vunpack.c.l.b16 %v183
      %v340 = vunpack.c.h.b16 %v183
      %v341 = vunpack.c.l.b16 %v184
      %v342 = vunpack.c.h.b16 %v184
      %v343 = vunpack.c.l.b16 %v185
      %v344 = vunpack.c.h.b16 %v185
      %v345 = vpack.c.b16 %v337, %v329
      %v346 = vpack.c.b16 %v338, %v330
      %v347 = vpack.c.b16 %v339, %v331
      %v348 = vpack.c.b16 %v340, %v332
      %v349 = vpack.c.b16 %v341, %v333
      %v350 = vpack.c.b16 %v342, %v334
      %v351 = vpack.c.b16 %v343, %v335
      %v352 = vpack.c.b16 %v344, %v336
      %v489 = vunpack.c.l.b16 %v186
      %v490 = vunpack.c.l.b16 %v187
      %v491 = vunpack.c.l.b16 %v188
      %v492 = vunpack.c.l.b16 %v189
      %v493 = vunpack.c.l.b16 %v190
      %v494 = vunpack.c.l.b16 %v191
      %v495 = vunpack.c.l.b16 %v192
      %v496 = vunpack.c.l.b16 %v193
      %v497 = vunpack.c.l.b16 %v194
      %v498 = vunpack.c.l.b16 %v195
      %v499 = vunpack.c.l.b16 %v196
      %v500 = vunpack.c.l.b16 %v197
      %v501 = vunpack.c.l.b16 %v198
      %v502 = vunpack.c.l.b16 %v199
      %v503 = vunpack.c.l.b16 %v200
      %v504 = vunpack.c.l.b16 %v201
      %v505 = vunpack.c.l.b16 %v202
      %v506 = vunpack.c.l.b16 %v203
      %v507 = vunpack.c.l.b16 %v204
      %v508 = vunpack.c.l.b16 %v205
      %v509 = vunpack.c.l.b16 %v206
      %v510 = vunpack.c.l.b16 %v207
      %v511 = vunpack.c.l.b16 %v208
      %v512 = vunpack.c.l.b16 %v209
      %v513 = vunpack.c.l.b16 %v210
      %v514 = vunpack.c.l.b16 %v211
      %v515 = vunpack.c.l.b16 %v212
      %v516 = vunpack.c.l.b16 %v213
      %v517 = vunpack.c.l.b16 %v214
      %v518 = vunpack.c.l.b16 %v215
      %v519 = vunpack.c.l.b16 %v216
      %v520 = vunpack.c.l.b16 %v217
      %v521 = vunpack.c.l.b16 %v218
      %v522 = vunpack.c.l.b16 %v219
      %v523 = vunpack.c.l.b16 %v220
      %v524 = vunpack.c.l.b16 %v221
      %v525 = vunpack.c.l.b16 %v222
      %v526 = vunpack.c.l.b16 %v223
      %v527 = vunpack.c.l.b16 %v224
      %v528 = vunpack.c.l.b16 %v225
      %v529 = vunpack.c.l.b16 %v226
      %v530 = vunpack.c.l.b16 %v227
      %v531 = vunpack.c.l.b16 %v228
      %v532 = vunpack.c.l.b16 %v229
      %v533 = vunpack.c.l.b16 %v230
      %v534 = vunpack.c.l.b16 %v231
      %v535 = vunpack.c.l.b16 %v232
      %v536 = vunpack.c.l.b16 %v233
      %v537 = vunpack.c.l.b16 %v234
      %v538 = vunpack.c.l.b16 %v235
      %v539 = vunpack.c.l.b16 %v236
      %v540 = vunpack.c.l.b16 %v237
      %v541 = vunpack.c.l.b16 %v238
      %v542 = vunpack.c.l.b16 %v239
      %v543 = vunpack.c.l.b16 %v240
      %v544 = vunpack.c.l.b16 %v241
      %v545 = vunpack.c.l.b16 %v242
      %v546 = vunpack.c.l.b16 %v243
      %v547 = vunpack.c.l.b16 %v244
      %v548 = vunpack.c.l.b16 %v245
      %v549 = vunpack.c.l.b16 %v246
      %v550 = vunpack.c.l.b16 %v247
      %v551 = vunpack.c.l.b16 %v248
      %v552 = vunpack.c.l.b16 %v249
      %v553 = vunpack.c.l.b16 %v250
      %v554 = vunpack.c.l.b16 %v251
      %v555 = vunpack.c.l.b16 %v252
      %v556 = vunpack.c.l.b16 %v253
      %v557 = vunpack.c.l.b16 %v254
      %v558 = vunpack.c.l.b16 %v255
      %v559 = vunpack.c.l.b16 %v256
      %v560 = vunpack.c.l.b16 %v257
      %v561 = vunpack.c.l.b16 %v258
      %v562 = vunpack.c.l.b16 %v259
      %v563 = vunpack.c.l.b16 %v260
      %v564 = vunpack.c.l.b16 %v261
      %v565 = vunpack.c.l.b16 %v262
      %v566 = vunpack.c.l.b16 %v263
      %v567 = vunpack.c.l.b16 %v264
      %v568 = vunpack.c.l.b16 %v265
      %v569 = vunpack.c.l.b16 %v266
      %v570 = vunpack.c.l.b16 %v267
      %v571 = vunpack.c.l.b16 %v268
      %v572 = vunpack.c.l.b16 %v269
      %v573 = vunpack.c.l.b16 %v270
      %v574 = vunpack.c.l.b16 %v271
      %v575 = vunpack.c.l.b16 %v272
      %v576 = vunpack.c.l.b16 %v273
      %v577 = vunpack.c.l.b16 %v274
      %v578 = vunpack.c.l.b16 %v275
      %v579 = vunpack.c.l.b16 %v276
      %v580 = vunpack.c.l.b16 %v277
      %v581 = vunpack.c.l.b16 %v278
      %v582 = vunpack.c.l.b16 %v279
      %v583 = vunpack.c.l.b16 %v280
      %v584 = vunpack.c.l.b16 %v281
      %v585 = vunpack.c.l.b16 %v282
      %v586 = vunpack.c.l.b16 %v283
      %v587 = vunpack.c.l.b16 %v284
      %v588 = vunpack.c.l.b16 %v285
      %v589 = vunpack.c.l.b16 %v286
      %v590 = vunpack.c.l.b16 %v287
      %v591 = vunpack.c.l.b16 %v288
      %v592 = vunpack.c.l.b16 %v289
      %v593 = vunpack.c.l.b16 %v290
      %v594 = vunpack.c.l.b16 %v291
      %v595 = vunpack.c.l.b16 %v292
      %v596 = vunpack.c.l.b16 %v293
      %v597 = vunpack.c.l.b16 %v294
      %v598 = vunpack.c.l.b16 %v295
      %v599 = vunpack.c.l.b16 %v296
      %v600 = vunpack.c.l.b16 %v297
      %v601 = vunpack.c.l.b16 %v298
      %v602 = vunpack.c.l.b16 %v299
      %v603 = vunpack.c.l.b16 %v300
      %v604 = vunpack.c.l.b16 %v301
      %v605 = vunpack.c.l.b16 %v302
      %v606 = vunpack.c.l.b16 %v303
      %v607 = vunpack.c.l.b16 %v304
      %v608 = vunpack.c.l.b16 %v305
      %v609 = vunpack.c.l.b16 %v306
      %v610 = vunpack.c.l.b16 %v307
      %v611 = vunpack.c.l.b16 %v308
      %v612 = vunpack.c.l.b16 %v309
      %v613 = vunpack.c.l.b16 %v310
      %v614 = vunpack.c.l.b16 %v311
      %v615 = vunpack.c.l.b16 %v312
      %v616 = vunpack.c.l.b16 %v313
      %v617 = vpack.c.b16 %v490, %v489
      %v618 = vpack.c.b16 %v492, %v491
      %v619 = vpack.c.b16 %v494, %v493
      %v620 = vpack.c.b16 %v496, %v495
      %v621 = vpack.c.b16 %v498, %v497
      %v622 = vpack.c.b16 %v500, %v499
      %v623 = vpack.c.b16 %v502, %v501
      %v624 = vpack.c.b16 %v504, %v503
      %v625 = vpack.c.b16 %v506, %v505
      %v626 = vpack.c.b16 %v508, %v507
      %v627 = vpack.c.b16 %v510, %v509
      %v628 = vpack.c.b16 %v512, %v511
      %v629 = vpack.c.b16 %v514, %v513
      %v630 = vpack.c.b16 %v516, %v515
      %v631 = vpack.c.b16 %v518, %v517
      %v632 = vpack.c.b16 %v520, %v519
      %v633 = vpack.c.b16 %v522, %v521
      %v634 = vpack.c.b16 %v524, %v523
      %v635 = vpack.c.b16 %v526, %v525
      %v636 = vpack.c.b16 %v528, %v527
      %v637 = vpack.c.b16 %v530, %v529
      %v638 = vpack.c.b16 %v532, %v531
      %v639 = vpack.c.b16 %v534, %v533
      %v640 = vpack.c.b16 %v536, %v535
      %v641 = vpack.c.b16 %v538, %v537
      %v642 = vpack.c.b16 %v540, %v539
      %v643 = vpack.c.b16 %v542, %v541
      %v644 = vpack.c.b16 %v544, %v543
      %v645 = vpack.c.b16 %v546, %v545
      %v646 = vpack.c.b16 %v548, %v547
      %v647 = vpack.c.b16 %v550, %v549
      %v648 = vpack.c.b16 %v552, %v551
      %v649 = vpack.c.b16 %v554, %v553
      %v650 = vpack.c.b16 %v556, %v555
      %v651 = vpack.c.b16 %v558, %v557
      %v652 = vpack.c.b16 %v560, %v559
      %v653 = vpack.c.b16 %v562, %v561
      %v654 = vpack.c.b16 %v564, %v563
      %v655 = vpack.c.b16 %v566, %v565
      %v656 = vpack.c.b16 %v568, %v567
      %v657 = vpack.c.b16 %v570, %v569
      %v658 = vpack.c.b16 %v572, %v571
      %v659 = vpack.c.b16 %v574, %v573
      %v660 = vpack.c.b16 %v576, %v575
      %v661 = vpack.c.b16 %v578, %v577
      %v662 = vpack.c.b16 %v580, %v579
      %v663 = vpack.c.b16 %v582, %v581
      %v664 = vpack.c.b16 %v584, %v583
      %v665 = vpack.c.b16 %v586, %v585
      %v666 = vpack.c.b16 %v588, %v587
      %v667 = vpack.c.b16 %v590, %v589
      %v668 = vpack.c.b16 %v592, %v591
      %v669 = vpack.c.b16 %v594, %v593
      %v670 = vpack.c.b16 %v596, %v595
      %v671 = vpack.c.b16 %v598, %v597
      %v672 = vpack.c.b16 %v600, %v599
      %v673 = vpack.c.b16 %v602, %v601
      %v674 = vpack.c.b16 %v604, %v603
      %v675 = vpack.c.b16 %v606, %v605
      %v676 = vpack.c.b16 %v608, %v607
      %v677 = vpack.c.b16 %v610, %v609
      %v678 = vpack.c.b16 %v612, %v611
      %v679 = vpack.c.b16 %v614, %v613
      %v680 = vpack.c.b16 %v616, %v615
      %745 = vmatprep.subr.bf16.mxu0 0
      %746 = vmatpush1.bf16.msra.mxu0 %v617
      %747 = vmatprep.subr.bf16.mxu0 0
      %748 = vmatpush1.bf16.msra.mxu0 %v618
      %749 = vmatprep.subr.bf16.mxu0 0
      %750 = vmatpush1.bf16.msra.mxu0 %v619
      %751 = vmatprep.subr.bf16.mxu0 0
      %752 = vmatpush1.bf16.msra.mxu0 %v620
      %753 = vmatprep.subr.bf16.mxu0 0
      %754 = vmatpush1.bf16.msra.mxu0 %v621
      %755 = vmatprep.subr.bf16.mxu0 0
      %756 = vmatpush1.bf16.msra.mxu0 %v622
      %757 = vmatprep.subr.bf16.mxu0 0
      %758 = vmatpush1.bf16.msra.mxu0 %v623
      %759 = vmatprep.subr.bf16.mxu0 0
      %760 = vmatpush1.bf16.msra.mxu0 %v624
      %761 = vmatprep.subr.bf16.mxu0 0
      %762 = vmatpush1.bf16.msra.mxu0 %v625
      %763 = vmatprep.subr.bf16.mxu0 0
      %764 = vmatpush1.bf16.msra.mxu0 %v626
      %765 = vmatprep.subr.bf16.mxu0 0
      %766 = vmatpush1.bf16.msra.mxu0 %v627
      %767 = vmatprep.subr.bf16.mxu0 0
      %768 = vmatpush1.bf16.msra.mxu0 %v628
      %769 = vmatprep.subr.bf16.mxu0 0
      %770 = vmatpush1.bf16.msra.mxu0 %v629
      %771 = vmatprep.subr.bf16.mxu0 0
      %772 = vmatpush1.bf16.msra.mxu0 %v630
      %773 = vmatprep.subr.bf16.mxu0 0
      %774 = vmatpush1.bf16.msra.mxu0 %v631
      %775 = vmatprep.subr.bf16.mxu0 0
      %776 = vmatpush1.bf16.msra.mxu0 %v632
      %777 = vmatprep.mubr.bf16.mxu0 %v346
      %778 = vmatmul.mubr.bf16.gmra.mrb[0].mxu0 %v345
      %v779 = vpop.f32.mrb[0].mxu0
      %v780 = vadd.f32 %v319, %v779
      %v781 = vpop.f32.mrb[0].mxu0
      %v782 = vpop.f32.mrb[0].mxu0
      %v783 = vadd.f32 %v319, %v782
      %v784 = vpop.f32.mrb[0].mxu0
      %785 = vdwg.mxu0
      %786 = vmatprep.subr.bf16.mxu0 0
      %787 = vmatpush1.bf16.msra.mxu0 %v633
      %788 = vmatprep.subr.bf16.mxu0 0
      %789 = vmatpush1.bf16.msra.mxu0 %v634
      %790 = vmatprep.subr.bf16.mxu0 0
      %791 = vmatpush1.bf16.msra.mxu0 %v635
      %792 = vmatprep.subr.bf16.mxu0 0
      %793 = vmatpush1.bf16.msra.mxu0 %v636
      %794 = vmatprep.subr.bf16.mxu0 0
      %795 = vmatpush1.bf16.msra.mxu0 %v637
      %796 = vmatprep.subr.bf16.mxu0 0
      %797 = vmatpush1.bf16.msra.mxu0 %v638
      %798 = vmatprep.subr.bf16.mxu0 0
      %799 = vmatpush1.bf16.msra.mxu0 %v639
      %800 = vmatprep.subr.bf16.mxu0 0
      %801 = vmatpush1.bf16.msra.mxu0 %v640
      %802 = vmatprep.subr.bf16.mxu0 0
      %803 = vmatpush1.bf16.msra.mxu0 %v641
      %804 = vmatprep.subr.bf16.mxu0 0
      %805 = vmatpush1.bf16.msra.mxu0 %v642
      %806 = vmatprep.subr.bf16.mxu0 0
      %807 = vmatpush1.bf16.msra.mxu0 %v643
      %808 = vmatprep.subr.bf16.mxu0 0
      %809 = vmatpush1.bf16.msra.mxu0 %v644
      %810 = vmatprep.subr.bf16.mxu0 0
      %811 = vmatpush1.bf16.msra.mxu0 %v645
      %812 = vmatprep.subr.bf16.mxu0 0
      %813 = vmatpush1.bf16.msra.mxu0 %v646
      %814 = vmatprep.subr.bf16.mxu0 0
      %815 = vmatpush1.bf16.msra.mxu0 %v647
      %816 = vmatprep.subr.bf16.mxu0 0
      %817 = vmatpush1.bf16.msra.mxu0 %v648
      %818 = vmatprep.mubr.bf16.mxu0 %v348
      %819 = vmatmul.mubr.bf16.gmra.mrb[0].mxu0 %v347
      %v820 = vpop.f32.mrb[0].mxu0
      %v821 = vadd.f32 %v780, %v820
      %v822 = vpop.f32.mrb[0].mxu0
      %v823 = vpop.f32.mrb[0].mxu0
      %v824 = vadd.f32 %v783, %v823
      %v825 = vpop.f32.mrb[0].mxu0
      %826 = vdwg.mxu0
      %827 = vmatprep.subr.bf16.mxu0 0
      %828 = vmatpush1.bf16.msra.mxu0 %v649
      %829 = vmatprep.subr.bf16.mxu0 0
      %830 = vmatpush1.bf16.msra.mxu0 %v650
      %831 = vmatprep.subr.bf16.mxu0 0
      %832 = vmatpush1.bf16.msra.mxu0 %v651
      %833 = vmatprep.subr.bf16.mxu0 0
      %834 = vmatpush1.bf16.msra.mxu0 %v652
      %835 = vmatprep.subr.bf16.mxu0 0
      %836 = vmatpush1.bf16.msra.mxu0 %v653
      %837 = vmatprep.subr.bf16.mxu0 0
      %838 = vmatpush1.bf16.msra.mxu0 %v654
      %839 = vmatprep.subr.bf16.mxu0 0
      %840 = vmatpush1.bf16.msra.mxu0 %v655
      %841 = vmatprep.subr.bf16.mxu0 0
      %842 = vmatpush1.bf16.msra.mxu0 %v656
      %843 = vmatprep.subr.bf16.mxu0 0
      %844 = vmatpush1.bf16.msra.mxu0 %v657
      %845 = vmatprep.subr.bf16.mxu0 0
      %846 = vmatpush1.bf16.msra.mxu0 %v658
      %847 = vmatprep.subr.bf16.mxu0 0
      %848 = vmatpush1.bf16.msra.mxu0 %v659
      %849 = vmatprep.subr.bf16.mxu0 0
      %850 = vmatpush1.bf16.msra.mxu0 %v660
      %851 = vmatprep.subr.bf16.mxu0 0
      %852 = vmatpush1.bf16.msra.mxu0 %v661
      %853 = vmatprep.subr.bf16.mxu0 0
      %854 = vmatpush1.bf16.msra.mxu0 %v662
      %855 = vmatprep.subr.bf16.mxu0 0
      %856 = vmatpush1.bf16.msra.mxu0 %v663
      %857 = vmatprep.subr.bf16.mxu0 0
      %858 = vmatpush1.bf16.msra.mxu0 %v664
      %859 = vmatprep.mubr.bf16.mxu0 %v350
      %860 = vmatmul.mubr.bf16.gmra.mrb[0].mxu0 %v349
      %v861 = vpop.f32.mrb[0].mxu0
      %v862 = vadd.f32 %v821, %v861
      %v863 = vpop.f32.mrb[0].mxu0
      %v864 = vpop.f32.mrb[0].mxu0
      %v865 = vadd.f32 %v824, %v864
      %v866 = vpop.f32.mrb[0].mxu0
      %867 = vdwg.mxu0
      %868 = vmatprep.subr.bf16.mxu0 0
      %869 = vmatpush1.bf16.msra.mxu0 %v665
      %870 = vmatprep.subr.bf16.mxu0 0
      %871 = vmatpush1.bf16.msra.mxu0 %v666
      %872 = vmatprep.subr.bf16.mxu0 0
      %873 = vmatpush1.bf16.msra.mxu0 %v667
      %874 = vmatprep.subr.bf16.mxu0 0
      %875 = vmatpush1.bf16.msra.mxu0 %v668
      %876 = vmatprep.subr.bf16.mxu0 0
      %877 = vmatpush1.bf16.msra.mxu0 %v669
      %878 = vmatprep.subr.bf16.mxu0 0
      %879 = vmatpush1.bf16.msra.mxu0 %v670
      %880 = vmatprep.subr.bf16.mxu0 0
      %881 = vmatpush1.bf16.msra.mxu0 %v671
      %882 = vmatprep.subr.bf16.mxu0 0
      %883 = vmatpush1.bf16.msra.mxu0 %v672
      %884 = vmatprep.subr.bf16.mxu0 0
      %885 = vmatpush1.bf16.msra.mxu0 %v673
      %886 = vmatprep.subr.bf16.mxu0 0
      %887 = vmatpush1.bf16.msra.mxu0 %v674
      %888 = vmatprep.subr.bf16.mxu0 0
      %889 = vmatpush1.bf16.msra.mxu0 %v675
      %890 = vmatprep.subr.bf16.mxu0 0
      %891 = vmatpush1.bf16.msra.mxu0 %v676
      %892 = vmatprep.subr.bf16.mxu0 0
      %893 = vmatpush1.bf16.msra.mxu0 %v677
      %894 = vmatprep.subr.bf16.mxu0 0
      %895 = vmatpush1.bf16.msra.mxu0 %v678
      %896 = vmatprep.subr.bf16.mxu0 0
      %897 = vmatpush1.bf16.msra.mxu0 %v679
      %898 = vmatprep.subr.bf16.mxu0 0
      %899 = vmatpush1.bf16.msra.mxu0 %v680
      %900 = vmatprep.mubr.bf16.mxu0 %v352
      %901 = vmatmul.mubr.bf16.gmra.mrb[0].mxu0 %v351
      %v902 = vpop.f32.mrb[0].mxu0
      %v903 = vadd.f32 %v862, %v902
      %v904 = vpop.f32.mrb[0].mxu0
      %v905 = vpop.f32.mrb[0].mxu0
      %v906 = vadd.f32 %v865, %v905
      %v907 = vpop.f32.mrb[0].mxu0
      %908 = vdwg.mxu0
      %v909 = vpack.c.bf16 %v906, %v903
      %v911 = vunpack.c.l.b16 %v909
      %v912 = vunpack.c.h.b16 %v909
      %v913 = vpack.c.b16 %v911, %v911
      %v914 = vpack.c.b16 %v912, %v912
      %917 = vst [vmem:[%s175] sm:$0xf] %v913
      %918 = vst [vmem:[%s175 + $0x4] sm:$0xf] %v914
      %s919 = smul.u32 2, %s14
      %p920 = scmp.lt.s32.totalorder %s919, 3
      %s921 = scalar_select %p920, %s919, 3
      %s922 = smul.addr %s921, 4
      %s923 = scalar_lea.vmem %s3, %s922
      // Predicated region
      $region33: #{generator_forward.37} parent=31 // pred_check
        %p924 = pneg %p100
      $region34: #{generator_forward.37} parent=31 // pred_check_branch
        %926 = sbr.rel (%p924) target = $region36
      $region35: #{generator_forward.37} parent=31 // pred_region
        %s927 = smul.u32 2, %s14
      $region36: #{generator_forward.37} parent=31 // pred_fallthru
        _
    $region32: #{generator_forward.37} parent=5 // pred_fallthru
      _
    %p928 = scmp.le.s32.totalorder 2, %s9
    // Predicated region
    $region37: #{generator_forward.37} parent=5 // pred_check
      %p929 = pneg %p928
    $region38: #{generator_forward.37} parent=5 // pred_check_branch
      %931 = sbr.rel (%p929) target = $region40
    $region39: #{generator_forward.37} parent=5 // pred_region
      %s932 = ssub.s32 %s9, 2
      // Predicated region
      $region41: #{generator_forward.37} parent=39 // pred_check
        %p933 = pneg %p106
      $region42: #{generator_forward.37} parent=39 // pred_check_branch
        %935 = sbr.rel (%p933) target = $region44
      $region43: #{generator_forward.37} parent=39 // pred_region
        %s936 = smul.u32 2, %s15
        %p937 = scmp.lt.s32.totalorder %s936, 3
        %s938 = scalar_select %p937, %s936, 3
        %s939 = smul.addr %s938, 4
        %s940 = scalar_lea.vmem %s3, %s939
      $region44: #{generator_forward.37} parent=39 // pred_fallthru
        _
    $region40: #{generator_forward.37} parent=5 // pred_fallthru
      _
  $region6: #{generator_forward.37} parent=0 // loop_footer
    %s13 = sadd.s32 1, %s9
  $region7: #{generator_forward.37} parent=0 // loop_footer_branch
    %8 = sbr.rel target = $region3
  $region8: #{generator_forward.37} parent=0 // loop_exit
    _

// kernel: generator_forward.42
$region0: #{generator_forward.42}
  #allocation0 [shape = 'u32[]', space=smem, size = 0x4, offset = 0x4, fixed_abs, tag = 'smem constant byte address 0x4 - core index']
  #allocation1 [shape = 'u32[144,128]{1,0:T(1,128)}', space=vmem, size = 0x12000, scoped, tag = 'internal scratch']
  %s0 = inlined_call_operand.vmem [shape: bf16[32,128], index: 0, kind: input, shape index: {}]
  %s1 = inlined_call_operand.vmem [shape: f32[1,128], index: 1, kind: input, shape index: {}]
  %s2 = inlined_call_operand.vmem [shape: f32[1,128], index: 2, kind: input, shape index: {}]
  %s3 = inlined_call_operand.vmem [shape: bf16[32,128], index: 3, kind: input, shape index: {}]
  %s4 = inlined_call_operand.vmem [shape: bf16[32,128], index: 4, kind: output, shape index: {}]
  %s5 = sld [smem:[#allocation0]]
  $region26: #{generator_forward.42} parent=0
    _
  %s7 = ssub.s32 1, %s5
  %s8 = scalar_select 0, %s7, %s5
  // Predicated region
  $region2: #{generator_forward.42} parent=0 // pred_check
    _
  $region3: #{generator_forward.42} parent=0 // pred_check_branch
    %10 = sbr.rel (0) target = $region5
  $region4: #{generator_forward.42} parent=0 // pred_region
    _
  $region5: #{generator_forward.42} parent=0 // pred_fallthru
    _
  // Predicated region
  $region6: #{generator_forward.42} parent=0 // pred_check
    _
  $region7: #{generator_forward.42} parent=0 // pred_check_branch
    %12 = sbr.rel (0) target = $region9
  $region8: #{generator_forward.42} parent=0 // pred_region
    _
  $region9: #{generator_forward.42} parent=0 // pred_fallthru
    _
  // Predicated region
  $region10: #{generator_forward.42} parent=0 // pred_check
    _
  $region11: #{generator_forward.42} parent=0 // pred_check_branch
    %14 = sbr.rel (0) target = $region13
  $region12: #{generator_forward.42} parent=0 // pred_region
    _
  $region13: #{generator_forward.42} parent=0 // pred_fallthru
    _
  // Predicated region
  $region14: #{generator_forward.42} parent=0 // pred_check
    _
  $region15: #{generator_forward.42} parent=0 // pred_check_branch
    %16 = sbr.rel (0) target = $region17
  $region16: #{generator_forward.42} parent=0 // pred_region
    _
  $region17: #{generator_forward.42} parent=0 // pred_fallthru
    _
  %v17 = vld [vmem:[%s0] sm:$0xf]
  %v18 = vld [vmem:[%s0 + $0x4] sm:$0xf]
  %v19 = vld [vmem:[%s0 + $0x8] sm:$0xf]
  %v20 = vld [vmem:[%s0 + $0xc] sm:$0xf]
  %v21 = vunpack.c.l.bf16 %v17
  %v22 = vunpack.c.l.bf16 %v18
  %v23 = vunpack.c.l.bf16 %v19
  %v24 = vunpack.c.l.bf16 %v20
  %v25 = vadd.f32 %v21, %v22
  %v26 = vadd.f32 %v25, %v23
  %v27 = vadd.f32 %v26, %v24
  %v28 = vrot.slane %v27, 4
  %v29 = vadd.f32 %v27, %v28
  %v30 = vrot.slane %v29, 2
  %v31 = vadd.f32 %v29, %v30
  %v32 = vrot.slane %v31, 1
  %v33 = vadd.f32 %v31, %v32
  %v34 = vmul.f32 %v33, 0.03125
  %v35 = vlaneseq
  %v36 = vshrl.u32 %v35, 7
  %v37 = vadd.s32 %v36, 8
  %v38 = vadd.s32 %v36, 16
  %v39 = vadd.s32 %v36, 24
  %vm40 = vcmp.lt.s32.totalorder %v36, 32
  %vm41 = vcmp.lt.s32.totalorder %v37, 32
  %vm42 = vcmp.lt.s32.totalorder %v38, 32
  %vm43 = vcmp.lt.s32.totalorder %v39, 32
  %v44 = vsub.f32 %v21, %v34
  %v45 = vsub.f32 %v22, %v34
  %v46 = vsub.f32 %v23, %v34
  %v47 = vsub.f32 %v24, %v34
  %v48 = vsel %vm40, %v44, 0.0
  %v49 = vsel %vm41, %v45, 0.0
  %v50 = vsel %vm42, %v46, 0.0
  %v51 = vsel %vm43, %v47, 0.0
  %v52 = vmul.f32 %v48, %v48
  %v53 = vmul.f32 %v49, %v49
  %v54 = vmul.f32 %v50, %v50
  %v55 = vmul.f32 %v51, %v51
  %v56 = vadd.f32 %v52, %v53
  %v57 = vadd.f32 %v56, %v54
  %v58 = vadd.f32 %v57, %v55
  %v59 = vrot.slane %v58, 4
  %v60 = vadd.f32 %v58, %v59
  %v61 = vrot.slane %v60, 2
  %v62 = vadd.f32 %v60, %v61
  %v63 = vrot.slane %v62, 1
  %v64 = vadd.f32 %v62, %v63
  %v65 = vmul.f32 %v64, 0.03125
  %v66 = vadd.f32 %v65, 1e-05
  %v67 = vrsqrt.pop %v66
  %v68 = vmul.f32 %v44, %v67
  %v69 = vmul.f32 %v45, %v67
  %v70 = vmul.f32 %v46, %v67
  %v71 = vmul.f32 %v47, %v67
  %v72 = vld [vmem:[%s1] sm:$0x1]
  %v74 = vlaneseq
  %v75 = vshrl.u32 %v74, 7
  %v76 = vsub.s32 0, %v75
  %v77 = vrot.slane %v72, %v76
  %v79 = vmul.f32 %v68, %v77
  %v80 = vmul.f32 %v69, %v77
  %v81 = vmul.f32 %v70, %v77
  %v82 = vmul.f32 %v71, %v77
  %v83 = vld [vmem:[%s2] sm:$0x1]
  %v85 = vlaneseq
  %v86 = vshrl.u32 %v85, 7
  %v87 = vsub.s32 0, %v86
  %v88 = vrot.slane %v83, %v87
  %v90 = vadd.f32 %v79, %v88
  %v91 = vadd.f32 %v80, %v88
  %v92 = vadd.f32 %v81, %v88
  %v93 = vadd.f32 %v82, %v88
  %v94 = vld [vmem:[%s3] sm:$0xf]
  %v95 = vld [vmem:[%s3 + $0x4] sm:$0xf]
  %v96 = vld [vmem:[%s3 + $0x8] sm:$0xf]
  %v97 = vld [vmem:[%s3 + $0xc] sm:$0xf]
  %v98 = vunpack.c.l.bf16 %v94
  %v99 = vunpack.c.l.bf16 %v95
  %v100 = vunpack.c.l.bf16 %v96
  %v101 = vunpack.c.l.bf16 %v97
  %v102 = vadd.f32 %v90, %v98
  %v103 = vadd.f32 %v91, %v99
  %v104 = vadd.f32 %v92, %v100
  %v105 = vadd.f32 %v93, %v101
  %v106 = vmax.f32 %v102, 0.0
  %v107 = vmax.f32 %v103, 0.0
  %v108 = vmax.f32 %v104, 0.0
  %v109 = vmax.f32 %v105, 0.0
  %v110 = vpack.c.bf16 %v107, %v106
  %v111 = vpack.c.bf16 %v109, %v108
  %v114 = vunpack.c.l.b16 %v110
  %v115 = vunpack.c.h.b16 %v110
  %v116 = vunpack.c.l.b16 %v111
  %v117 = vunpack.c.h.b16 %v111
  %v118 = vpack.c.b16 %v114, %v114
  %v119 = vpack.c.b16 %v115, %v115
  %v120 = vpack.c.b16 %v116, %v116
  %v121 = vpack.c.b16 %v117, %v117
  %126 = vst [vmem:[%s4] sm:$0xf] %v118
  %127 = vst [vmem:[%s4 + $0x4] sm:$0xf] %v119
  %128 = vst [vmem:[%s4 + $0x8] sm:$0xf] %v120
  %129 = vst [vmem:[%s4 + $0xc] sm:$0xf] %v121
  // Predicated region
  $region18: #{generator_forward.42} parent=0 // pred_check
    _
  $region19: #{generator_forward.42} parent=0 // pred_check_branch
    %131 = sbr.rel (0) target = $region21
  $region20: #{generator_forward.42} parent=0 // pred_region
    _
  $region21: #{generator_forward.42} parent=0 // pred_fallthru
    _
  // Predicated region
  $region22: #{generator_forward.42} parent=0 // pred_check
    _
  $region23: #{generator_forward.42} parent=0 // pred_check_branch
    %133 = sbr.rel (0) target = $region25
  $region24: #{generator_forward.42} parent=0 // pred_region
    _
  $region25: #{generator_forward.42} parent=0 // pred_fallthru
    _

// kernel: generator_forward.40
$region0: #{generator_forward.40}
  #allocation0 [shape = 'u32[]', space=smem, size = 0x4, offset = 0x4, fixed_abs, tag = 'smem constant byte address 0x4 - core index']
  #allocation1 [shape = 'u32[144,128]{1,0:T(1,128)}', space=vmem, size = 0x12000, scoped, tag = 'internal scratch']
  %s0 = inlined_call_operand.vmem [shape: bf16[32,128], index: 0, kind: input, shape index: {}]
  %s1 = inlined_call_operand.vmem [shape: f32[1,128], index: 1, kind: input, shape index: {}]
  %s2 = inlined_call_operand.vmem [shape: f32[1,128], index: 2, kind: input, shape index: {}]
  %s3 = inlined_call_operand.vmem [shape: bf16[32,128], index: 3, kind: output, shape index: {}]
  %s4 = sld [smem:[#allocation0]]
  $region22: #{generator_forward.40} parent=0
    _
  %s6 = ssub.s32 1, %s4
  %s7 = scalar_select 0, %s6, %s4
  // Predicated region
  $region2: #{generator_forward.40} parent=0 // pred_check
    _
  $region3: #{generator_forward.40} parent=0 // pred_check_branch
    %9 = sbr.rel (0) target = $region5
  $region4: #{generator_forward.40} parent=0 // pred_region
    _
  $region5: #{generator_forward.40} parent=0 // pred_fallthru
    _
  // Predicated region
  $region6: #{generator_forward.40} parent=0 // pred_check
    _
  $region7: #{generator_forward.40} parent=0 // pred_check_branch
    %11 = sbr.rel (0) target = $region9
  $region8: #{generator_forward.40} parent=0 // pred_region
    _
  $region9: #{generator_forward.40} parent=0 // pred_fallthru
    _
  // Predicated region
  $region10: #{generator_forward.40} parent=0 // pred_check
    _
  $region11: #{generator_forward.40} parent=0 // pred_check_branch
    %13 = sbr.rel (0) target = $region13
  $region12: #{generator_forward.40} parent=0 // pred_region
    _
  $region13: #{generator_forward.40} parent=0 // pred_fallthru
    _
  %v14 = vld [vmem:[%s0] sm:$0xf]
  %v15 = vld [vmem:[%s0 + $0x4] sm:$0xf]
  %v16 = vld [vmem:[%s0 + $0x8] sm:$0xf]
  %v17 = vld [vmem:[%s0 + $0xc] sm:$0xf]
  %v18 = vunpack.c.l.bf16 %v14
  %v19 = vunpack.c.l.bf16 %v15
  %v20 = vunpack.c.l.bf16 %v16
  %v21 = vunpack.c.l.bf16 %v17
  %v22 = vadd.f32 %v18, %v19
  %v23 = vadd.f32 %v22, %v20
  %v24 = vadd.f32 %v23, %v21
  %v25 = vrot.slane %v24, 4
  %v26 = vadd.f32 %v24, %v25
  %v27 = vrot.slane %v26, 2
  %v28 = vadd.f32 %v26, %v27
  %v29 = vrot.slane %v28, 1
  %v30 = vadd.f32 %v28, %v29
  %v31 = vmul.f32 %v30, 0.03125
  %v32 = vlaneseq
  %v33 = vshrl.u32 %v32, 7
  %v34 = vadd.s32 %v33, 8
  %v35 = vadd.s32 %v33, 16
  %v36 = vadd.s32 %v33, 24
  %vm37 = vcmp.lt.s32.totalorder %v33, 32
  %vm38 = vcmp.lt.s32.totalorder %v34, 32
  %vm39 = vcmp.lt.s32.totalorder %v35, 32
  %vm40 = vcmp.lt.s32.totalorder %v36, 32
  %v41 = vsub.f32 %v18, %v31
  %v42 = vsub.f32 %v19, %v31
  %v43 = vsub.f32 %v20, %v31
  %v44 = vsub.f32 %v21, %v31
  %v45 = vsel %vm37, %v41, 0.0
  %v46 = vsel %vm38, %v42, 0.0
  %v47 = vsel %vm39, %v43, 0.0
  %v48 = vsel %vm40, %v44, 0.0
  %v49 = vmul.f32 %v45, %v45
  %v50 = vmul.f32 %v46, %v46
  %v51 = vmul.f32 %v47, %v47
  %v52 = vmul.f32 %v48, %v48
  %v53 = vadd.f32 %v49, %v50
  %v54 = vadd.f32 %v53, %v51
  %v55 = vadd.f32 %v54, %v52
  %v56 = vrot.slane %v55, 4
  %v57 = vadd.f32 %v55, %v56
  %v58 = vrot.slane %v57, 2
  %v59 = vadd.f32 %v57, %v58
  %v60 = vrot.slane %v59, 1
  %v61 = vadd.f32 %v59, %v60
  %v62 = vmul.f32 %v61, 0.03125
  %v63 = vadd.f32 %v62, 1e-05
  %v64 = vrsqrt.pop %v63
  %v65 = vmul.f32 %v41, %v64
  %v66 = vmul.f32 %v42, %v64
  %v67 = vmul.f32 %v43, %v64
  %v68 = vmul.f32 %v44, %v64
  %v69 = vld [vmem:[%s1] sm:$0x1]
  %v71 = vlaneseq
  %v72 = vshrl.u32 %v71, 7
  %v73 = vsub.s32 0, %v72
  %v74 = vrot.slane %v69, %v73
  %v76 = vmul.f32 %v65, %v74
  %v77 = vmul.f32 %v66, %v74
  %v78 = vmul.f32 %v67, %v74
  %v79 = vmul.f32 %v68, %v74
  %v80 = vld [vmem:[%s2] sm:$0x1]
  %v82 = vlaneseq
  %v83 = vshrl.u32 %v82, 7
  %v84 = vsub.s32 0, %v83
  %v85 = vrot.slane %v80, %v84
  %v87 = vadd.f32 %v76, %v85
  %v88 = vadd.f32 %v77, %v85
  %v89 = vadd.f32 %v78, %v85
  %v90 = vadd.f32 %v79, %v85
  %v91 = vmax.f32 %v87, 0.0
  %v92 = vmax.f32 %v88, 0.0
  %v93 = vmax.f32 %v89, 0.0
  %v94 = vmax.f32 %v90, 0.0
  %v95 = vpack.c.bf16 %v92, %v91
  %v96 = vpack.c.bf16 %v94, %v93
  %v99 = vunpack.c.l.b16 %v95
  %v100 = vunpack.c.h.b16 %v95
  %v101 = vunpack.c.l.b16 %v96
  %v102 = vunpack.c.h.b16 %v96
  %v103 = vpack.c.b16 %v99, %v99
  %v104 = vpack.c.b16 %v100, %v100
  %v105 = vpack.c.b16 %v101, %v101
  %v106 = vpack.c.b16 %v102, %v102
  %111 = vst [vmem:[%s3] sm:$0xf] %v103
  %112 = vst [vmem:[%s3 + $0x4] sm:$0xf] %v104
  %113 = vst [vmem:[%s3 + $0x8] sm:$0xf] %v105
  %114 = vst [vmem:[%s3 + $0xc] sm:$0xf] %v106
  // Predicated region
  $region14: #{generator_forward.40} parent=0 // pred_check
    _
  $region15: #{generator_forward.40} parent=0 // pred_check_branch
    %116 = sbr.rel (0) target = $region17
  $region16: #{generator_forward.40} parent=0 // pred_region
    _
  $region17: #{generator_forward.40} parent=0 // pred_fallthru
    _
  // Predicated region
  $region18: #{generator_forward.40} parent=0 // pred_check
    _
  $region19: #{generator_forward.40} parent=0 // pred_check_branch
    %118 = sbr.rel (0) target = $region21
  $region20: #{generator_forward.40} parent=0 // pred_region
    _
  $region21: #{generator_forward.40} parent=0 // pred_fallthru
    _

// kernel: generator_forward.39
$region0: #{generator_forward.39}
  #allocation0 [shape = 'u32[]', space=smem, size = 0x4, offset = 0x4, fixed_abs, tag = 'smem constant byte address 0x4 - core index']
  #allocation1 [shape = 'u32[144,128]{1,0:T(1,128)}', space=vmem, size = 0x12000, scoped, tag = 'internal scratch']
  #allocation2 [shape = 'bf16[2,64,128]{2,1,0:T(16,128)(2,1)}', space=vmem, size = 0x8000, scoped, tag = 'scratch operand']
  #allocation3 [shape = 's32[2]{0}', space=sflag, size = 0x8, scoped, tag = 'scratch operand']
  #allocation4 [shape = 's32[]', space=sflag, size = 0x4, offset = 0, fixed_abs, tag = 'sflag constant byte address 0x0 - dummy sync flag']
  #allocation5 [shape = 's32[]', space=sflag, size = 0x4, offset = 0, fixed_abs, tag = 'sflag constant byte address 0x0 - dummy sync flag']
  %s0 = inlined_call_operand.vmem [shape: bf16[112,128], index: 0, kind: input, shape index: {}]
  %s1 = inlined_call_operand.vmem [shape: bf16[1152,128], index: 1, kind: input, shape index: {}]
  %s2 = inlined_call_operand.vmem [shape: bf16[96,128], index: 2, kind: output, shape index: {}]
  %s3 = sld [smem:[#allocation0]]
  $region113: #{generator_forward.39} parent=0
    _
  %s5 = ssub.s32 1, %s3
  %s6 = scalar_select 0, %s5, %s3
  loop: start=0, step=1, limit=4
  $region2: #{generator_forward.39} parent=0 // loop_pre_header
    _
  $region3: #{generator_forward.39} parent=0 // loop_header
    %s8 = sphi 0, %s12
    %p9 = scmp.ge.s32.totalorder %s8, 4
    %s15 = sphi 0, %s27
    %s16 = sphi 0, %s23
    %s17 = sphi 0, %s15
    %s18 = sphi 0, %s16
    %s19 = sphi 0, %s17
    %s20 = sphi 0, %s18
    %s28 = sphi 0, %s28
    %s30 = sphi 0, %s28
    %s31 = sphi 0, %s30
    %s45 = sphi 0, %s31
    %s53 = sphi 0, %s55
    %s56 = sphi 0, %s53
    %s57 = sphi 0, %s56
    %s73 = sphi 0, %s57
  $region4: #{generator_forward.39} parent=0 // loop_header_branch
    %11 = sbr.rel (%p9) target = $region8
  $region5: #{generator_forward.39} parent=0 // loop_body
    %s13 = ssub.s32 %s8, 1
    %s14 = ssub.s32 %s8, 2
    %s21 = sadd.s32 1, %s16
    %p22 = scmp.ge.s32.totalorder %s21, 1
    %s23 = scalar_select %p22, 0, %s21
    %s24 = sadd.s32 1, %s15
    %s25 = scalar_select %p22, %s24, %s15
    %p26 = scmp.ge.s32.totalorder %s25, 2
    %s27 = scalar_select %p26, 0, %s25
    %s29 = sadd.s32 %s28, 1
    %p32 = scmp.eq.s32.totalorder %s8, 1
    %p33 = scmp.ne.s32.totalorder %s28, %s30
    %p34 = scmp.eq.s32.totalorder %s8, 0
    %p35 = por %p33, %p34
    %p36 = scmp.ne.s32.totalorder %s28, %s30
    %p37 = scmp.eq.s32.totalorder %s13, 1
    %p38 = por %p36, %p37
    %p39 = scmp.ne.s32.totalorder %s30, %s31
    %p40 = scmp.eq.s32.totalorder %s13, 0
    %p41 = por %p39, %p40
    %p42 = scmp.ne.s32.totalorder %s30, %s31
    %p43 = scmp.eq.s32.totalorder %s14, 1
    %p44 = por %p42, %p43
    %p46 = scmp.ne.s32.totalorder %s31, %s45
    %p47 = scmp.eq.s32.totalorder %s14, 0
    %p48 = por %p46, %p47
    %s49 = sadd.s32 %s15, %s16
    %s50 = sadd.s32 %s27, %s23
    %s51 = ssub.s32 %s49, %s50
    %p52 = scmp.eq.s32.totalorder %s51, 0
    %s54 = sadd.s32 %s53, 1
    %s55 = scalar_select %p52, %s53, %s54
    %p58 = pneg %p52
    %p59 = scmp.eq.s32.totalorder %s8, 1
    %p60 = por %p58, %p59
    %p61 = scmp.ne.s32.totalorder %s53, %s56
    %p62 = scmp.eq.s32.totalorder %s8, 0
    %p63 = por %p61, %p62
    %p64 = scmp.ne.s32.totalorder %s53, %s56
    %p65 = scmp.eq.s32.totalorder %s13, 1
    %p66 = por %p64, %p65
    %p67 = scmp.ne.s32.totalorder %s56, %s57
    %p68 = scmp.eq.s32.totalorder %s13, 0
    %p69 = por %p67, %p68
    %p70 = scmp.ne.s32.totalorder %s56, %s57
    %p71 = scmp.eq.s32.totalorder %s14, 1
    %p72 = por %p70, %p71
    %p74 = scmp.ne.s32.totalorder %s57, %s73
    %p75 = scmp.eq.s32.totalorder %s14, 0
    %p76 = por %p74, %p75
    %p77 = scmp.le.s32.totalorder 1, %s8
    %p78 = scmp.lt.s32.totalorder %s8, 3
    %p79 = pnand %p77, %p78
    %p80 = pneg %p79
    // Predicated region
    $region9: #{generator_forward.39} parent=5 // pred_check
      _
    $region10: #{generator_forward.39} parent=5 // pred_check_branch
      %82 = sbr.rel (%p79) target = $region12
    $region11: #{generator_forward.39} parent=5 // pred_region
      %s83 = ssub.s32 %s8, 1
      // Predicated region
      $region13: #{generator_forward.39} parent=11 // pred_check
        %p84 = pneg %p41
      $region14: #{generator_forward.39} parent=11 // pred_check_branch
        %86 = sbr.rel (%p84) target = $region16
      $region15: #{generator_forward.39} parent=11 // pred_region
        _
      $region16: #{generator_forward.39} parent=11 // pred_fallthru
        _
    $region12: #{generator_forward.39} parent=5 // pred_fallthru
      _
    %p87 = scmp.lt.s32.totalorder %s8, 2
    // Predicated region
    $region17: #{generator_forward.39} parent=5 // pred_check
      %p88 = pneg %p87
    $region18: #{generator_forward.39} parent=5 // pred_check_branch
      %90 = sbr.rel (%p88) target = $region20
    $region19: #{generator_forward.39} parent=5 // pred_region
      _
    $region20: #{generator_forward.39} parent=5 // pred_fallthru
      _
    %p91 = scmp.le.s32.totalorder 1, %s8
    %p92 = scmp.lt.s32.totalorder %s8, 3
    %p93 = pnand %p91, %p92
    %p94 = pneg %p93
    // Predicated region
    $region21: #{generator_forward.39} parent=5 // pred_check
      _
    $region22: #{generator_forward.39} parent=5 // pred_check_branch
      %96 = sbr.rel (%p93) target = $region24
    $region23: #{generator_forward.39} parent=5 // pred_region
      %s97 = ssub.s32 %s8, 1
      %p98 = pneg %p41
      %p99 = pneg %p38
      %p100 = pneg %p69
      %p101 = pneg %p66
      %s102 = sadd.s32 %s17, %s18
      %s103 = smul.u32 6, %s102
      %p104 = scmp.lt.s32.totalorder %s103, 11
      %s105 = scalar_select %p104, %s103, 11
      %s106 = smul.addr %s105, 4
      %s107 = scalar_lea.vmem %s2, %s106
      %s108 = sadd.s32 %s17, %s18
      %s109 = smul.u32 6, %s108
      %p110 = scmp.lt.s32.totalorder %s109, 11
      %s111 = scalar_select %p110, %s109, 11
      %s112 = smul.addr %s111, 4
      %s113 = scalar_lea.vmem %s2, %s112
      %s114 = sadd.s32 %s17, %s18
      %s115 = smul.u32 6, %s114
      %s117 = sadd.s32 %s17, %s18
      %s118 = smul.u32 %s117, 48
      %p119 = scmp.lt.s32.totalorder %s18, 0
      %s120 = ssub.s32 0, %s18
      %s121 = scalar_select %p119, %s120, %s18
      %s122 = sand.u32 %s121, 1
      %s123 = ssub.s32 0, %s122
      %s124 = scalar_select %p119, %s123, %s122
      %p125 = scmp.ne.s32.totalorder %s124, 0
      %p126 = scmp.lt.s32.totalorder %s124, 0
      %p127 = pnand %p126, %p125
      %p128 = pneg %p127
      %s129 = sadd.s32 %s124, 2
      %s130 = scalar_select %p128, %s129, %s124
      %p131 = scmp.eq.s32.totalorder %s18, 0
      // Predicated region
      $region25: #{generator_forward.39} parent=23 // pred_check
        %p132 = pneg %p131
      $region26: #{generator_forward.39} parent=23 // pred_check_branch
        %134 = sbr.rel (%p132) target = $region28
      $region27: #{generator_forward.39} parent=23 // pred_region
        %s135 = sshra.s32 %s118, 3
        %s136 = sand.u32 %s118, 7
        %s137 = smul.addr %s135, 4
        %s138 = scalar_lea.vmem %s0, %s137
        %p140 = scmp.lt.u32.totalorder 32, 8
        %p141 = pneg %p140
        // Predicated region
        $region29: #{generator_forward.39} parent=27 // pred_check
          _
        $region30: #{generator_forward.39} parent=27 // pred_check_branch
          %143 = sbr.rel (%p140) target = $region32
        $region31: #{generator_forward.39} parent=27 // pred_region
          %s158 = sand.u32 32, 7
          %p159 = scmp.eq.s32.totalorder %s158, 0
          // Predicated region
          $region44: #{generator_forward.39} parent=31 // pred_check
            %p160 = pneg %p159
          $region45: #{generator_forward.39} parent=31 // pred_check_branch
            %162 = sbr.rel (%p160) target = $region47
          $region46: #{generator_forward.39} parent=31 // pred_region
            loop: start=0, step=1, limit=1
            $region48: #{generator_forward.39} parent=46 // loop_pre_header
              _
            $region49: #{generator_forward.39} parent=46 // loop_header
              %s164 = sphi 0, %s168
              %p165 = scmp.ge.s32.totalorder %s164, 1
              %s169 = sphi %s138, %s138
              %s170 = sphi [#allocation2], [#allocation2]
            $region50: #{generator_forward.39} parent=46 // loop_header_branch
              %167 = sbr.rel (%p165) target = $region54
            $region51: #{generator_forward.39} parent=46 // loop_body
              %v171 = vld [vmem:[%s169] sm:$0xff]
              %172 = vst [vmem:[%s170] sm:$0xff] %v171
              %v173 = vld [vmem:[%s169 + $0x8] sm:$0xff]
              %174 = vst [vmem:[%s170 + $0x8] sm:$0xff] %v173
              %v175 = vld [vmem:[%s169 + $0x10] sm:$0xff]
              %176 = vst [vmem:[%s170 + $0x10] sm:$0xff] %v175
              %v177 = vld [vmem:[%s169 + $0x18] sm:$0xff]
              %178 = vst [vmem:[%s170 + $0x18] sm:$0xff] %v177
            $region52: #{generator_forward.39} parent=46 // loop_footer
              %s168 = sadd.s32 1, %s164
            $region53: #{generator_forward.39} parent=46 // loop_footer_branch
              %163 = sbr.rel target = $region49
            $region54: #{generator_forward.39} parent=46 // loop_exit
              _
          $region47: #{generator_forward.39} parent=31 // pred_fallthru
            _
          %p179 = pneg %p159
          // Predicated region
          $region55: #{generator_forward.39} parent=31 // pred_check
            _
          $region56: #{generator_forward.39} parent=31 // pred_check_branch
            %181 = sbr.rel (%p159) target = $region58
          $region57: #{generator_forward.39} parent=31 // pred_region
            %s182 = sand.u32 32, 7
          $region58: #{generator_forward.39} parent=31 // pred_fallthru
            _
        $region32: #{generator_forward.39} parent=27 // pred_fallthru
          _
        // Predicated region
        $region33: #{generator_forward.39} parent=27 // pred_check
          %p144 = pneg %p140
        $region34: #{generator_forward.39} parent=27 // pred_check_branch
          %146 = sbr.rel (%p144) target = $region36
        $region35: #{generator_forward.39} parent=27 // pred_region
          %s147 = sshllo.u32 0, 32
          loop: start=0, step=1, limit=1
          $region37: #{generator_forward.39} parent=35 // loop_pre_header
            _
          $region38: #{generator_forward.39} parent=35 // loop_header
            %s149 = sphi 0, %s153
            %p150 = scmp.ge.s32.totalorder %s149, 1
            %s154 = sphi %s138, %s138
            %s155 = sphi [#allocation2], [#allocation2]
          $region39: #{generator_forward.39} parent=35 // loop_header_branch
            %152 = sbr.rel (%p150) target = $region43
          $region40: #{generator_forward.39} parent=35 // loop_body
            %v156 = vld [vmem:[%s154] sm:%s147]
            %157 = vst [vmem:[%s155] sm:%s147] %v156
          $region41: #{generator_forward.39} parent=35 // loop_footer
            %s153 = sadd.s32 1, %s149
          $region42: #{generator_forward.39} parent=35 // loop_footer_branch
            %148 = sbr.rel target = $region38
          $region43: #{generator_forward.39} parent=35 // loop_exit
            _
        $region36: #{generator_forward.39} parent=27 // pred_fallthru
          _
        // Predicated region
        $region59: #{generator_forward.39} parent=27 // pred_check
          _
        $region60: #{generator_forward.39} parent=27 // pred_check_branch
          %185 = sbr.rel (0) target = $region62
        $region61: #{generator_forward.39} parent=27 // pred_region
          %186 = vsyncadd [#allocation3], 512
        $region62: #{generator_forward.39} parent=27 // pred_fallthru
          _
      $region28: #{generator_forward.39} parent=23 // pred_fallthru
        _
      %s187 = sadd.s32 %s18, 1
      %p188 = scmp.lt.s32.totalorder %s187, 1
      // Predicated region
      $region63: #{generator_forward.39} parent=23 // pred_check
        %p189 = pneg %p188
      $region64: #{generator_forward.39} parent=23 // pred_check_branch
        %191 = sbr.rel (%p189) target = $region66
      $region65: #{generator_forward.39} parent=23 // pred_region
        %s192 = sadd.s32 %s118, 48
        %s193 = ssub.s32 1, %s130
        %s194 = sshra.s32 %s192, 3
        %s195 = sand.u32 %s192, 7
        %s196 = smul.addr %s194, 4
        %s197 = scalar_lea.vmem %s0, %s196
        %s198 = smul.u32 %s193, 4
        %s199 = smul.addr %s198, 8
        %s200 = scalar_lea.vmem [#allocation2], %s199
        %s201 = scalar_lea.sflag [#allocation3], %s193
        %p203 = scmp.lt.u32.totalorder 32, 8
        %p204 = pneg %p203
        // Predicated region
        $region67: #{generator_forward.39} parent=65 // pred_check
          _
        $region68: #{generator_forward.39} parent=65 // pred_check_branch
          %206 = sbr.rel (%p203) target = $region70
        $region69: #{generator_forward.39} parent=65 // pred_region
          %s221 = sand.u32 32, 7
          %p222 = scmp.eq.s32.totalorder %s221, 0
          // Predicated region
          $region82: #{generator_forward.39} parent=69 // pred_check
            %p223 = pneg %p222
          $region83: #{generator_forward.39} parent=69 // pred_check_branch
            %225 = sbr.rel (%p223) target = $region85
          $region84: #{generator_forward.39} parent=69 // pred_region
            loop: start=0, step=1, limit=1
            $region86: #{generator_forward.39} parent=84 // loop_pre_header
              _
            $region87: #{generator_forward.39} parent=84 // loop_header
              %s227 = sphi 0, %s231
              %p228 = scmp.ge.s32.totalorder %s227, 1
              %s232 = sphi %s197, %s197
              %s233 = sphi %s200, %s200
            $region88: #{generator_forward.39} parent=84 // loop_header_branch
              %230 = sbr.rel (%p228) target = $region92
            $region89: #{generator_forward.39} parent=84 // loop_body
              %v234 = vld [vmem:[%s232] sm:$0xff]
              %235 = vst [vmem:[%s233] sm:$0xff] %v234
              %v236 = vld [vmem:[%s232 + $0x8] sm:$0xff]
              %237 = vst [vmem:[%s233 + $0x8] sm:$0xff] %v236
              %v238 = vld [vmem:[%s232 + $0x10] sm:$0xff]
              %239 = vst [vmem:[%s233 + $0x10] sm:$0xff] %v238
              %v240 = vld [vmem:[%s232 + $0x18] sm:$0xff]
              %241 = vst [vmem:[%s233 + $0x18] sm:$0xff] %v240
            $region90: #{generator_forward.39} parent=84 // loop_footer
              %s231 = sadd.s32 1, %s227
            $region91: #{generator_forward.39} parent=84 // loop_footer_branch
              %226 = sbr.rel target = $region87
            $region92: #{generator_forward.39} parent=84 // loop_exit
              _
          $region85: #{generator_forward.39} parent=69 // pred_fallthru
            _
          %p242 = pneg %p222
          // Predicated region
          $region93: #{generator_forward.39} parent=69 // pred_check
            _
          $region94: #{generator_forward.39} parent=69 // pred_check_branch
            %244 = sbr.rel (%p222) target = $region96
          $region95: #{generator_forward.39} parent=69 // pred_region
            %s245 = sand.u32 32, 7
          $region96: #{generator_forward.39} parent=69 // pred_fallthru
            _
        $region70: #{generator_forward.39} parent=65 // pred_fallthru
          _
        // Predicated region
        $region71: #{generator_forward.39} parent=65 // pred_check
          %p207 = pneg %p203
        $region72: #{generator_forward.39} parent=65 // pred_check_branch
          %209 = sbr.rel (%p207) target = $region74
        $region73: #{generator_forward.39} parent=65 // pred_region
          %s210 = sshllo.u32 0, 32
          loop: start=0, step=1, limit=1
          $region75: #{generator_forward.39} parent=73 // loop_pre_header
            _
          $region76: #{generator_forward.39} parent=73 // loop_header
            %s212 = sphi 0, %s216
            %p213 = scmp.ge.s32.totalorder %s212, 1
            %s217 = sphi %s197, %s197
            %s218 = sphi %s200, %s200
          $region77: #{generator_forward.39} parent=73 // loop_header_branch
            %215 = sbr.rel (%p213) target = $region81
          $region78: #{generator_forward.39} parent=73 // loop_body
            %v219 = vld [vmem:[%s217] sm:%s210]
            %220 = vst [vmem:[%s218] sm:%s210] %v219
          $region79: #{generator_forward.39} parent=73 // loop_footer
            %s216 = sadd.s32 1, %s212
          $region80: #{generator_forward.39} parent=73 // loop_footer_branch
            %211 = sbr.rel target = $region76
          $region81: #{generator_forward.39} parent=73 // loop_exit
            _
        $region74: #{generator_forward.39} parent=65 // pred_fallthru
          _
        // Predicated region
        $region97: #{generator_forward.39} parent=65 // pred_check
          _
        $region98: #{generator_forward.39} parent=65 // pred_check_branch
          %248 = sbr.rel (0) target = $region100
        $region99: #{generator_forward.39} parent=65 // pred_region
          %249 = vsyncadd %s201, 512
        $region100: #{generator_forward.39} parent=65 // pred_fallthru
          _
      $region66: #{generator_forward.39} parent=23 // pred_fallthru
        _
      %s250 = smul.u32 %s130, 4
      %s251 = smul.addr %s250, 8
      %s252 = scalar_lea.vmem [#allocation2], %s251
      %s253 = scalar_lea.sflag [#allocation3], %s130
      %s254 = smul.u32 4, 8
      %s255 = smul.u32 %s254, 1
      %s256 = sshll.u32 %s255, 4
      %257 = dma.done %s253, %s256
      %v258 = vld [vmem:[%s252] sm:$0xff]
      %v259 = vld [vmem:[%s252 + $0x8] sm:$0xff]
      %v260 = vld [vmem:[%s252 + $0x10] sm:$0xff]
      %v261 = vld [vmem:[%s252 + $0x18] sm:$0xff]
      %vm262 = vsmask.f32 7424
      %v264 = vshrl.u32 %v258, 16
      %v266 = vshll.u32 %v258, 16
      %v268 = vrot.slane %v266, 1
      %v269 = vor.u32 %v264, %v268
      %v271 = vshll.u32 %v259, 16
      %v273 = vrot.slane %v271, 1
      %v274 = vsel %vm262, %v269, %v273
      %v275 = vshrl.u32 %v259, 16
      %v277 = vor.u32 %v275, %v273
      %v279 = vshll.u32 %v260, 16
      %v281 = vrot.slane %v279, 1
      %v282 = vsel %vm262, %v277, %v281
      %v283 = vshrl.u32 %v260, 16
      %v285 = vor.u32 %v283, %v281
      %v287 = vshll.u32 %v261, 16
      %v289 = vrot.slane %v287, 1
      %v290 = vsel %vm262, %v285, %v289
      %vm298 = vcmask 1046528
      %v299 = vrot.slane %v258, 1
      %v300 = vrot.slane %v259, 1
      %v301 = vsel %vm298, %v299, %v300
      %v302 = vrot.slane %v260, 1
      %v303 = vsel %vm298, %v300, %v302
      %v304 = vrot.slane %v261, 1
      %v305 = vsel %vm298, %v302, %v304
      %vm309 = vcmask 1044480
      %v310 = vrot.slane %v258, 3
      %v311 = vrot.slane %v259, 3
      %v312 = vsel %vm309, %v310, %v311
      %v313 = vrot.slane %v260, 3
      %v314 = vsel %vm309, %v311, %v313
      %v315 = vrot.slane %v261, 3
      %v316 = vsel %vm309, %v313, %v315
      %vm320 = vsmask.f32 4352
      %v321 = vrot.slane %v264, 3
      %v322 = vrot.slane %v266, 4
      %v323 = vor.u32 %v321, %v322
      %v324 = vrot.slane %v275, 3
      %v325 = vrot.slane %v271, 4
      %v326 = vor.u32 %v324, %v325
      %v327 = vsel %vm320, %v323, %v326
      %v328 = vrot.slane %v283, 3
      %v329 = vrot.slane %v279, 4
      %v330 = vor.u32 %v328, %v329
      %v331 = vsel %vm320, %v326, %v330
      %v332 = vshrl.u32 %v261, 16
      %v334 = vrot.slane %v332, 3
      %v335 = vrot.slane %v287, 4
      %v336 = vor.u32 %v334, %v335
      %v337 = vsel %vm320, %v330, %v336
      %vm341 = vcmask 1043456
      %v342 = vrot.slane %v258, 4
      %v343 = vrot.slane %v259, 4
      %v344 = vsel %vm341, %v342, %v343
      %v345 = vrot.slane %v260, 4
      %v346 = vsel %vm341, %v343, %v345
      %v347 = vrot.slane %v261, 4
      %v348 = vsel %vm341, %v345, %v347
      %vm352 = vcmask 1041408
      %v353 = vrot.slane %v258, 6
      %v354 = vrot.slane %v259, 6
      %v355 = vsel %vm352, %v353, %v354
      %v356 = vrot.slane %v260, 6
      %v357 = vsel %vm352, %v354, %v356
      %v358 = vrot.slane %v261, 6
      %v359 = vsel %vm352, %v356, %v358
      %vm363 = vsmask.f32 1280
      %v364 = vrot.slane %v264, 6
      %v365 = vrot.slane %v266, 7
      %v366 = vor.u32 %v364, %v365
      %v367 = vrot.slane %v275, 6
      %v368 = vrot.slane %v271, 7
      %v369 = vor.u32 %v367, %v368
      %v370 = vsel %vm363, %v366, %v369
      %v371 = vrot.slane %v283, 6
      %v372 = vrot.slane %v279, 7
      %v373 = vor.u32 %v371, %v372
      %v374 = vsel %vm363, %v369, %v373
      %v375 = vrot.slane %v332, 6
      %v376 = vrot.slane %v287, 7
      %v377 = vor.u32 %v375, %v376
      %v378 = vsel %vm363, %v373, %v377
      %vm382 = vcmask 1040384
      %v383 = vrot.slane %v258, 7
      %v384 = vrot.slane %v259, 7
      %v385 = vsel %vm382, %v383, %v384
      %v386 = vrot.slane %v260, 7
      %v387 = vsel %vm382, %v384, %v386
      %v388 = vrot.slane %v261, 7
      %v389 = vsel %vm382, %v386, %v388
      %v393 = vld [vmem:[%s1] sm:$0xf]
      %v394 = vld [vmem:[%s1 + $0x4] sm:$0xf]
      %v395 = vld [vmem:[%s1 + $0x8] sm:$0xf]
      %v396 = vld [vmem:[%s1 + $0xc] sm:$0xf]
      %v397 = vld [vmem:[%s1 + $0x10] sm:$0xf]
      %v398 = vld [vmem:[%s1 + $0x14] sm:$0xf]
      %v399 = vld [vmem:[%s1 + $0x18] sm:$0xf]
      %v400 = vld [vmem:[%s1 + $0x1c] sm:$0xf]
      %v401 = vld [vmem:[%s1 + $0x20] sm:$0xf]
      %v402 = vld [vmem:[%s1 + $0x24] sm:$0xf]
      %v403 = vld [vmem:[%s1 + $0x28] sm:$0xf]
      %v404 = vld [vmem:[%s1 + $0x2c] sm:$0xf]
      %v405 = vld [vmem:[%s1 + $0x30] sm:$0xf]
      %v406 = vld [vmem:[%s1 + $0x34] sm:$0xf]
      %v407 = vld [vmem:[%s1 + $0x38] sm:$0xf]
      %v408 = vld [vmem:[%s1 + $0x3c] sm:$0xf]
      %v409 = vld [vmem:[%s1 + $0x40] sm:$0xf]
      %v410 = vld [vmem:[%s1 + $0x44] sm:$0xf]
      %v411 = vld [vmem:[%s1 + $0x48] sm:$0xf]
      %v412 = vld [vmem:[%s1 + $0x4c] sm:$0xf]
      %v413 = vld [vmem:[%s1 + $0x50] sm:$0xf]
      %v414 = vld [vmem:[%s1 + $0x54] sm:$0xf]
      %v415 = vld [vmem:[%s1 + $0x58] sm:$0xf]
      %v416 = vld [vmem:[%s1 + $0x5c] sm:$0xf]
      %v417 = vld [vmem:[%s1 + $0x60] sm:$0xf]
      %v418 = vld [vmem:[%s1 + $0x64] sm:$0xf]
      %v419 = vld [vmem:[%s1 + $0x68] sm:$0xf]
      %v420 = vld [vmem:[%s1 + $0x6c] sm:$0xf]
      %v421 = vld [vmem:[%s1 + $0x70] sm:$0xf]
      %v422 = vld [vmem:[%s1 + $0x74] sm:$0xf]
      %v423 = vld [vmem:[%s1 + $0x78] sm:$0xf]
      %v424 = vld [vmem:[%s1 + $0x7c] sm:$0xf]
      %v425 = vld [vmem:[%s1 + $0x80] sm:$0xf]
      %v426 = vld [vmem:[%s1 + $0x84] sm:$0xf]
      %v427 = vld [vmem:[%s1 + $0x88] sm:$0xf]
      %v428 = vld [vmem:[%s1 + $0x8c] sm:$0xf]
      %v429 = vld [vmem:[%s1 + $0x90] sm:$0xf]
      %v430 = vld [vmem:[%s1 + $0x94] sm:$0xf]
      %v431 = vld [vmem:[%s1 + $0x98] sm:$0xf]
      %v432 = vld [vmem:[%s1 + $0x9c] sm:$0xf]
      %v433 = vld [vmem:[%s1 + $0xa0] sm:$0xf]
      %v434 = vld [vmem:[%s1 + $0xa4] sm:$0xf]
      %v435 = vld [vmem:[%s1 + $0xa8] sm:$0xf]
      %v436 = vld [vmem:[%s1 + $0xac] sm:$0xf]
      %v437 = vld [vmem:[%s1 + $0xb0] sm:$0xf]
      %v438 = vld [vmem:[%s1 + $0xb4] sm:$0xf]
      %v439 = vld [vmem:[%s1 + $0xb8] sm:$0xf]
      %v440 = vld [vmem:[%s1 + $0xbc] sm:$0xf]
      %v441 = vld [vmem:[%s1 + $0xc0] sm:$0xf]
      %v442 = vld [vmem:[%s1 + $0xc4] sm:$0xf]
      %v443 = vld [vmem:[%s1 + $0xc8] sm:$0xf]
      %v444 = vld [vmem:[%s1 + $0xcc] sm:$0xf]
      %v445 = vld [vmem:[%s1 + $0xd0] sm:$0xf]
      %v446 = vld [vmem:[%s1 + $0xd4] sm:$0xf]
      %v447 = vld [vmem:[%s1 + $0xd8] sm:$0xf]
      %v448 = vld [vmem:[%s1 + $0xdc] sm:$0xf]
      %v449 = vld [vmem:[%s1 + $0xe0] sm:$0xf]
      %v450 = vld [vmem:[%s1 + $0xe4] sm:$0xf]
      %v451 = vld [vmem:[%s1 + $0xe8] sm:$0xf]
      %v452 = vld [vmem:[%s1 + $0xec] sm:$0xf]
      %v453 = vld [vmem:[%s1 + $0xf0] sm:$0xf]
      %v454 = vld [vmem:[%s1 + $0xf4] sm:$0xf]
      %v455 = vld [vmem:[%s1 + $0xf8] sm:$0xf]
      %v456 = vld [vmem:[%s1 + $0xfc] sm:$0xf]
      %v457 = vld [vmem:[%s1 + $0x100] sm:$0xf]
      %v458 = vld [vmem:[%s1 + $0x104] sm:$0xf]
      %v459 = vld [vmem:[%s1 + $0x108] sm:$0xf]
      %v460 = vld [vmem:[%s1 + $0x10c] sm:$0xf]
      %v461 = vld [vmem:[%s1 + $0x110] sm:$0xf]
      %v462 = vld [vmem:[%s1 + $0x114] sm:$0xf]
      %v463 = vld [vmem:[%s1 + $0x118] sm:$0xf]
      %v464 = vld [vmem:[%s1 + $0x11c] sm:$0xf]
      %v465 = vld [vmem:[%s1 + $0x120] sm:$0xf]
      %v466 = vld [vmem:[%s1 + $0x124] sm:$0xf]
      %v467 = vld [vmem:[%s1 + $0x128] sm:$0xf]
      %v468 = vld [vmem:[%s1 + $0x12c] sm:$0xf]
      %v469 = vld [vmem:[%s1 + $0x130] sm:$0xf]
      %v470 = vld [vmem:[%s1 + $0x134] sm:$0xf]
      %v471 = vld [vmem:[%s1 + $0x138] sm:$0xf]
      %v472 = vld [vmem:[%s1 + $0x13c] sm:$0xf]
      %v473 = vld [vmem:[%s1 + $0x140] sm:$0xf]
      %v474 = vld [vmem:[%s1 + $0x144] sm:$0xf]
      %v475 = vld [vmem:[%s1 + $0x148] sm:$0xf]
      %v476 = vld [vmem:[%s1 + $0x14c] sm:$0xf]
      %v477 = vld [vmem:[%s1 + $0x150] sm:$0xf]
      %v478 = vld [vmem:[%s1 + $0x154] sm:$0xf]
      %v479 = vld [vmem:[%s1 + $0x158] sm:$0xf]
      %v480 = vld [vmem:[%s1 + $0x15c] sm:$0xf]
      %v481 = vld [vmem:[%s1 + $0x160] sm:$0xf]
      %v482 = vld [vmem:[%s1 + $0x164] sm:$0xf]
      %v483 = vld [vmem:[%s1 + $0x168] sm:$0xf]
      %v484 = vld [vmem:[%s1 + $0x16c] sm:$0xf]
      %v485 = vld [vmem:[%s1 + $0x170] sm:$0xf]
      %v486 = vld [vmem:[%s1 + $0x174] sm:$0xf]
      %v487 = vld [vmem:[%s1 + $0x178] sm:$0xf]
      %v488 = vld [vmem:[%s1 + $0x17c] sm:$0xf]
      %v489 = vld [vmem:[%s1 + $0x180] sm:$0xf]
      %v490 = vld [vmem:[%s1 + $0x184] sm:$0xf]
      %v491 = vld [vmem:[%s1 + $0x188] sm:$0xf]
      %v492 = vld [vmem:[%s1 + $0x18c] sm:$0xf]
      %v493 = vld [vmem:[%s1 + $0x190] sm:$0xf]
      %v494 = vld [vmem:[%s1 + $0x194] sm:$0xf]
      %v495 = vld [vmem:[%s1 + $0x198] sm:$0xf]
      %v496 = vld [vmem:[%s1 + $0x19c] sm:$0xf]
      %v497 = vld [vmem:[%s1 + $0x1a0] sm:$0xf]
      %v498 = vld [vmem:[%s1 + $0x1a4] sm:$0xf]
      %v499 = vld [vmem:[%s1 + $0x1a8] sm:$0xf]
      %v500 = vld [vmem:[%s1 + $0x1ac] sm:$0xf]
      %v501 = vld [vmem:[%s1 + $0x1b0] sm:$0xf]
      %v502 = vld [vmem:[%s1 + $0x1b4] sm:$0xf]
      %v503 = vld [vmem:[%s1 + $0x1b8] sm:$0xf]
      %v504 = vld [vmem:[%s1 + $0x1bc] sm:$0xf]
      %v505 = vld [vmem:[%s1 + $0x1c0] sm:$0xf]
      %v506 = vld [vmem:[%s1 + $0x1c4] sm:$0xf]
      %v507 = vld [vmem:[%s1 + $0x1c8] sm:$0xf]
      %v508 = vld [vmem:[%s1 + $0x1cc] sm:$0xf]
      %v509 = vld [vmem:[%s1 + $0x1d0] sm:$0xf]
      %v510 = vld [vmem:[%s1 + $0x1d4] sm:$0xf]
      %v511 = vld [vmem:[%s1 + $0x1d8] sm:$0xf]
      %v512 = vld [vmem:[%s1 + $0x1dc] sm:$0xf]
      %v513 = vld [vmem:[%s1 + $0x1e0] sm:$0xf]
      %v514 = vld [vmem:[%s1 + $0x1e4] sm:$0xf]
      %v515 = vld [vmem:[%s1 + $0x1e8] sm:$0xf]
      %v516 = vld [vmem:[%s1 + $0x1ec] sm:$0xf]
      %v517 = vld [vmem:[%s1 + $0x1f0] sm:$0xf]
      %v518 = vld [vmem:[%s1 + $0x1f4] sm:$0xf]
      %v519 = vld [vmem:[%s1 + $0x1f8] sm:$0xf]
      %v520 = vld [vmem:[%s1 + $0x1fc] sm:$0xf]
      %v521 = vld [vmem:[%s1 + $0x200] sm:$0xf]
      %v522 = vld [vmem:[%s1 + $0x204] sm:$0xf]
      %v523 = vld [vmem:[%s1 + $0x208] sm:$0xf]
      %v524 = vld [vmem:[%s1 + $0x20c] sm:$0xf]
      %v525 = vld [vmem:[%s1 + $0x210] sm:$0xf]
      %v526 = vld [vmem:[%s1 + $0x214] sm:$0xf]
      %v527 = vld [vmem:[%s1 + $0x218] sm:$0xf]
      %v528 = vld [vmem:[%s1 + $0x21c] sm:$0xf]
      %v529 = vld [vmem:[%s1 + $0x220] sm:$0xf]
      %v530 = vld [vmem:[%s1 + $0x224] sm:$0xf]
      %v531 = vld [vmem:[%s1 + $0x228] sm:$0xf]
      %v532 = vld [vmem:[%s1 + $0x22c] sm:$0xf]
      %v533 = vld [vmem:[%s1 + $0x230] sm:$0xf]
      %v534 = vld [vmem:[%s1 + $0x234] sm:$0xf]
      %v535 = vld [vmem:[%s1 + $0x238] sm:$0xf]
      %v536 = vld [vmem:[%s1 + $0x23c] sm:$0xf]
      %v681 = vunpack.c.l.b16 %v393
      %v682 = vunpack.c.l.b16 %v394
      %v683 = vunpack.c.l.b16 %v395
      %v684 = vunpack.c.l.b16 %v396
      %v685 = vunpack.c.l.b16 %v397
      %v686 = vunpack.c.l.b16 %v398
      %v687 = vunpack.c.l.b16 %v399
      %v688 = vunpack.c.l.b16 %v400
      %v689 = vunpack.c.l.b16 %v401
      %v690 = vunpack.c.l.b16 %v402
      %v691 = vunpack.c.l.b16 %v403
      %v692 = vunpack.c.l.b16 %v404
      %v693 = vunpack.c.l.b16 %v405
      %v694 = vunpack.c.l.b16 %v406
      %v695 = vunpack.c.l.b16 %v407
      %v696 = vunpack.c.l.b16 %v408
      %v697 = vunpack.c.l.b16 %v409
      %v698 = vunpack.c.l.b16 %v410
      %v699 = vunpack.c.l.b16 %v411
      %v700 = vunpack.c.l.b16 %v412
      %v701 = vunpack.c.l.b16 %v413
      %v702 = vunpack.c.l.b16 %v414
      %v703 = vunpack.c.l.b16 %v415
      %v704 = vunpack.c.l.b16 %v416
      %v705 = vunpack.c.l.b16 %v417
      %v706 = vunpack.c.l.b16 %v418
      %v707 = vunpack.c.l.b16 %v419
      %v708 = vunpack.c.l.b16 %v420
      %v709 = vunpack.c.l.b16 %v421
      %v710 = vunpack.c.l.b16 %v422
      %v711 = vunpack.c.l.b16 %v423
      %v712 = vunpack.c.l.b16 %v424
      %v713 = vunpack.c.l.b16 %v425
      %v714 = vunpack.c.l.b16 %v426
      %v715 = vunpack.c.l.b16 %v427
      %v716 = vunpack.c.l.b16 %v428
      %v717 = vunpack.c.l.b16 %v429
      %v718 = vunpack.c.l.b16 %v430
      %v719 = vunpack.c.l.b16 %v431
      %v720 = vunpack.c.l.b16 %v432
      %v721 = vunpack.c.l.b16 %v433
      %v722 = vunpack.c.l.b16 %v434
      %v723 = vunpack.c.l.b16 %v435
      %v724 = vunpack.c.l.b16 %v436
      %v725 = vunpack.c.l.b16 %v437
      %v726 = vunpack.c.l.b16 %v438
      %v727 = vunpack.c.l.b16 %v439
      %v728 = vunpack.c.l.b16 %v440
      %v729 = vunpack.c.l.b16 %v441
      %v730 = vunpack.c.l.b16 %v442
      %v731 = vunpack.c.l.b16 %v443
      %v732 = vunpack.c.l.b16 %v444
      %v733 = vunpack.c.l.b16 %v445
      %v734 = vunpack.c.l.b16 %v446
      %v735 = vunpack.c.l.b16 %v447
      %v736 = vunpack.c.l.b16 %v448
      %v737 = vunpack.c.l.b16 %v449
      %v738 = vunpack.c.l.b16 %v450
      %v739 = vunpack.c.l.b16 %v451
      %v740 = vunpack.c.l.b16 %v452
      %v741 = vunpack.c.l.b16 %v453
      %v742 = vunpack.c.l.b16 %v454
      %v743 = vunpack.c.l.b16 %v455
      %v744 = vunpack.c.l.b16 %v456
      %v745 = vunpack.c.l.b16 %v457
      %v746 = vunpack.c.l.b16 %v458
      %v747 = vunpack.c.l.b16 %v459
      %v748 = vunpack.c.l.b16 %v460
      %v749 = vunpack.c.l.b16 %v461
      %v750 = vunpack.c.l.b16 %v462
      %v751 = vunpack.c.l.b16 %v463
      %v752 = vunpack.c.l.b16 %v464
      %v753 = vunpack.c.l.b16 %v465
      %v754 = vunpack.c.l.b16 %v466
      %v755 = vunpack.c.l.b16 %v467
      %v756 = vunpack.c.l.b16 %v468
      %v757 = vunpack.c.l.b16 %v469
      %v758 = vunpack.c.l.b16 %v470
      %v759 = vunpack.c.l.b16 %v471
      %v760 = vunpack.c.l.b16 %v472
      %v761 = vunpack.c.l.b16 %v473
      %v762 = vunpack.c.l.b16 %v474
      %v763 = vunpack.c.l.b16 %v475
      %v764 = vunpack.c.l.b16 %v476
      %v765 = vunpack.c.l.b16 %v477
      %v766 = vunpack.c.l.b16 %v478
      %v767 = vunpack.c.l.b16 %v479
      %v768 = vunpack.c.l.b16 %v480
      %v769 = vunpack.c.l.b16 %v481
      %v770 = vunpack.c.l.b16 %v482
      %v771 = vunpack.c.l.b16 %v483
      %v772 = vunpack.c.l.b16 %v484
      %v773 = vunpack.c.l.b16 %v485
      %v774 = vunpack.c.l.b16 %v486
      %v775 = vunpack.c.l.b16 %v487
      %v776 = vunpack.c.l.b16 %v488
      %v777 = vunpack.c.l.b16 %v489
      %v778 = vunpack.c.l.b16 %v490
      %v779 = vunpack.c.l.b16 %v491
      %v780 = vunpack.c.l.b16 %v492
      %v781 = vunpack.c.l.b16 %v493
      %v782 = vunpack.c.l.b16 %v494
      %v783 = vunpack.c.l.b16 %v495
      %v784 = vunpack.c.l.b16 %v496
      %v785 = vunpack.c.l.b16 %v497
      %v786 = vunpack.c.l.b16 %v498
      %v787 = vunpack.c.l.b16 %v499
      %v788 = vunpack.c.l.b16 %v500
      %v789 = vunpack.c.l.b16 %v501
      %v790 = vunpack.c.l.b16 %v502
      %v791 = vunpack.c.l.b16 %v503
      %v792 = vunpack.c.l.b16 %v504
      %v793 = vunpack.c.l.b16 %v505
      %v794 = vunpack.c.l.b16 %v506
      %v795 = vunpack.c.l.b16 %v507
      %v796 = vunpack.c.l.b16 %v508
      %v797 = vunpack.c.l.b16 %v509
      %v798 = vunpack.c.l.b16 %v510
      %v799 = vunpack.c.l.b16 %v511
      %v800 = vunpack.c.l.b16 %v512
      %v801 = vunpack.c.l.b16 %v513
      %v802 = vunpack.c.l.b16 %v514
      %v803 = vunpack.c.l.b16 %v515
      %v804 = vunpack.c.l.b16 %v516
      %v805 = vunpack.c.l.b16 %v517
      %v806 = vunpack.c.l.b16 %v518
      %v807 = vunpack.c.l.b16 %v519
      %v808 = vunpack.c.l.b16 %v520
      %v809 = vunpack.c.l.b16 %v521
      %v810 = vunpack.c.l.b16 %v522
      %v811 = vunpack.c.l.b16 %v523
      %v812 = vunpack.c.l.b16 %v524
      %v813 = vunpack.c.l.b16 %v525
      %v814 = vunpack.c.l.b16 %v526
      %v815 = vunpack.c.l.b16 %v527
      %v816 = vunpack.c.l.b16 %v528
      %v817 = vunpack.c.l.b16 %v529
      %v818 = vunpack.c.l.b16 %v530
      %v819 = vunpack.c.l.b16 %v531
      %v820 = vunpack.c.l.b16 %v532
      %v821 = vunpack.c.l.b16 %v533
      %v822 = vunpack.c.l.b16 %v534
      %v823 = vunpack.c.l.b16 %v535
      %v824 = vunpack.c.l.b16 %v536
      %v825 = vpack.c.b16 %v682, %v681
      %v826 = vpack.c.b16 %v684, %v683
      %v827 = vpack.c.b16 %v686, %v685
      %v828 = vpack.c.b16 %v688, %v687
      %v829 = vpack.c.b16 %v690, %v689
      %v830 = vpack.c.b16 %v692, %v691
      %v831 = vpack.c.b16 %v694, %v693
      %v832 = vpack.c.b16 %v696, %v695
      %v833 = vpack.c.b16 %v698, %v697
      %v834 = vpack.c.b16 %v700, %v699
      %v835 = vpack.c.b16 %v702, %v701
      %v836 = vpack.c.b16 %v704, %v703
      %v837 = vpack.c.b16 %v706, %v705
      %v838 = vpack.c.b16 %v708, %v707
      %v839 = vpack.c.b16 %v710, %v709
      %v840 = vpack.c.b16 %v712, %v711
      %v841 = vpack.c.b16 %v714, %v713
      %v842 = vpack.c.b16 %v716, %v715
      %v843 = vpack.c.b16 %v718, %v717
      %v844 = vpack.c.b16 %v720, %v719
      %v845 = vpack.c.b16 %v722, %v721
      %v846 = vpack.c.b16 %v724, %v723
      %v847 = vpack.c.b16 %v726, %v725
      %v848 = vpack.c.b16 %v728, %v727
      %v849 = vpack.c.b16 %v730, %v729
      %v850 = vpack.c.b16 %v732, %v731
      %v851 = vpack.c.b16 %v734, %v733
      %v852 = vpack.c.b16 %v736, %v735
      %v853 = vpack.c.b16 %v738, %v737
      %v854 = vpack.c.b16 %v740, %v739
      %v855 = vpack.c.b16 %v742, %v741
      %v856 = vpack.c.b16 %v744, %v743
      %v857 = vpack.c.b16 %v746, %v745
      %v858 = vpack.c.b16 %v748, %v747
      %v859 = vpack.c.b16 %v750, %v749
      %v860 = vpack.c.b16 %v752, %v751
      %v861 = vpack.c.b16 %v754, %v753
      %v862 = vpack.c.b16 %v756, %v755
      %v863 = vpack.c.b16 %v758, %v757
      %v864 = vpack.c.b16 %v760, %v759
      %v865 = vpack.c.b16 %v762, %v761
      %v866 = vpack.c.b16 %v764, %v763
      %v867 = vpack.c.b16 %v766, %v765
      %v868 = vpack.c.b16 %v768, %v767
      %v869 = vpack.c.b16 %v770, %v769
      %v870 = vpack.c.b16 %v772, %v771
      %v871 = vpack.c.b16 %v774, %v773
      %v872 = vpack.c.b16 %v776, %v775
      %v873 = vpack.c.b16 %v778, %v777
      %v874 = vpack.c.b16 %v780, %v779
      %v875 = vpack.c.b16 %v782, %v781
      %v876 = vpack.c.b16 %v784, %v783
      %v877 = vpack.c.b16 %v786, %v785
      %v878 = vpack.c.b16 %v788, %v787
      %v879 = vpack.c.b16 %v790, %v789
      %v880 = vpack.c.b16 %v792, %v791
      %v881 = vpack.c.b16 %v794, %v793
      %v882 = vpack.c.b16 %v796, %v795
      %v883 = vpack.c.b16 %v798, %v797
      %v884 = vpack.c.b16 %v800, %v799
      %v885 = vpack.c.b16 %v802, %v801
      %v886 = vpack.c.b16 %v804, %v803
      %v887 = vpack.c.b16 %v806, %v805
      %v888 = vpack.c.b16 %v808, %v807
      %v889 = vpack.c.b16 %v810, %v809
      %v890 = vpack.c.b16 %v812, %v811
      %v891 = vpack.c.b16 %v814, %v813
      %v892 = vpack.c.b16 %v816, %v815
      %v893 = vpack.c.b16 %v818, %v817
      %v894 = vpack.c.b16 %v820, %v819
      %v895 = vpack.c.b16 %v822, %v821
      %v896 = vpack.c.b16 %v824, %v823
      %969 = vmatprep.subr.bf16.mxu0 0
      %970 = vmatpush1.bf16.msra.mxu0 %v825
      %971 = vmatprep.subr.bf16.mxu0 0
      %972 = vmatpush1.bf16.msra.mxu0 %v826
      %973 = vmatprep.subr.bf16.mxu0 0
      %974 = vmatpush1.bf16.msra.mxu0 %v827
      %975 = vmatprep.subr.bf16.mxu0 0
      %976 = vmatpush1.bf16.msra.mxu0 %v828
      %977 = vmatprep.subr.bf16.mxu0 0
      %978 = vmatpush1.bf16.msra.mxu0 %v829
      %979 = vmatprep.subr.bf16.mxu0 0
      %980 = vmatpush1.bf16.msra.mxu0 %v830
      %981 = vmatprep.subr.bf16.mxu0 0
      %982 = vmatpush1.bf16.msra.mxu0 %v831
      %983 = vmatprep.subr.bf16.mxu0 0
      %984 = vmatpush1.bf16.msra.mxu0 %v832
      %985 = vmatprep.subr.bf16.mxu0 0
      %986 = vmatpush1.bf16.msra.mxu0 %v833
      %987 = vmatprep.subr.bf16.mxu0 0
      %988 = vmatpush1.bf16.msra.mxu0 %v834
      %989 = vmatprep.subr.bf16.mxu0 0
      %990 = vmatpush1.bf16.msra.mxu0 %v835
      %991 = vmatprep.subr.bf16.mxu0 0
      %992 = vmatpush1.bf16.msra.mxu0 %v836
      %993 = vmatprep.subr.bf16.mxu0 0
      %994 = vmatpush1.bf16.msra.mxu0 %v837
      %995 = vmatprep.subr.bf16.mxu0 0
      %996 = vmatpush1.bf16.msra.mxu0 %v838
      %997 = vmatprep.subr.bf16.mxu0 0
      %998 = vmatpush1.bf16.msra.mxu0 %v839
      %999 = vmatprep.subr.bf16.mxu0 0
      %1000 = vmatpush1.bf16.msra.mxu0 %v840
      %1001 = vmatprep.mubr.bf16.mxu0 %v274
      %1002 = vmatmul.mubr.bf16.gmra.mrb[0].mxu0 %v258
      %v1003 = vpop.f32.mrb[0].mxu0
      %v1004 = vadd.f32 0.0, %v1003
      %v1005 = vpop.f32.mrb[0].mxu0
      %v1006 = vpop.f32.mrb[0].mxu0
      %v1007 = vadd.f32 0.0, %v1006
      %v1008 = vpop.f32.mrb[0].mxu0
      %1009 = vmatprep.mubr.bf16.mxu0 %v282
      %1010 = vmatmul.mubr.bf16.gmra.mrb[0].mxu0 %v259
      %v1011 = vpop.f32.mrb[0].mxu0
      %v1012 = vadd.f32 0.0, %v1011
      %v1013 = vpop.f32.mrb[0].mxu0
      %v1014 = vpop.f32.mrb[0].mxu0
      %v1015 = vadd.f32 0.0, %v1014
      %v1016 = vpop.f32.mrb[0].mxu0
      %1017 = vmatprep.mubr.bf16.mxu0 %v290
      %1018 = vmatmul.mubr.bf16.gmra.mrb[0].mxu0 %v260
      %v1019 = vpop.f32.mrb[0].mxu0
      %v1020 = vadd.f32 0.0, %v1019
      %v1021 = vpop.f32.mrb[0].mxu0
      %v1022 = vpop.f32.mrb[0].mxu0
      %v1023 = vadd.f32 0.0, %v1022
      %v1024 = vpop.f32.mrb[0].mxu0
      %1025 = vdwg.mxu0
      %1026 = vmatprep.subr.bf16.mxu0 0
      %1027 = vmatpush1.bf16.msra.mxu0 %v841
      %1028 = vmatprep.subr.bf16.mxu0 0
      %1029 = vmatpush1.bf16.msra.mxu0 %v842
      %1030 = vmatprep.subr.bf16.mxu0 0
      %1031 = vmatpush1.bf16.msra.mxu0 %v843
      %1032 = vmatprep.subr.bf16.mxu0 0
      %1033 = vmatpush1.bf16.msra.mxu0 %v844
      %1034 = vmatprep.subr.bf16.mxu0 0
      %1035 = vmatpush1.bf16.msra.mxu0 %v845
      %1036 = vmatprep.subr.bf16.mxu0 0
      %1037 = vmatpush1.bf16.msra.mxu0 %v846
      %1038 = vmatprep.subr.bf16.mxu0 0
      %1039 = vmatpush1.bf16.msra.mxu0 %v847
      %1040 = vmatprep.subr.bf16.mxu0 0
      %1041 = vmatpush1.bf16.msra.mxu0 %v848
      %1042 = vmatprep.subr.bf16.mxu0 0
      %1043 = vmatpush1.bf16.msra.mxu0 %v849
      %1044 = vmatprep.subr.bf16.mxu0 0
      %1045 = vmatpush1.bf16.msra.mxu0 %v850
      %1046 = vmatprep.subr.bf16.mxu0 0
      %1047 = vmatpush1.bf16.msra.mxu0 %v851
      %1048 = vmatprep.subr.bf16.mxu0 0
      %1049 = vmatpush1.bf16.msra.mxu0 %v852
      %1050 = vmatprep.subr.bf16.mxu0 0
      %1051 = vmatpush1.bf16.msra.mxu0 %v853
      %1052 = vmatprep.subr.bf16.mxu0 0
      %1053 = vmatpush1.bf16.msra.mxu0 %v854
      %1054 = vmatprep.subr.bf16.mxu0 0
      %1055 = vmatpush1.bf16.msra.mxu0 %v855
      %1056 = vmatprep.subr.bf16.mxu0 0
      %1057 = vmatpush1.bf16.msra.mxu0 %v856
      %1058 = vmatprep.mubr.bf16.mxu0 %v312
      %1059 = vmatmul.mubr.bf16.gmra.mrb[0].mxu0 %v301
      %v1060 = vpop.f32.mrb[0].mxu0
      %v1061 = vadd.f32 %v1004, %v1060
      %v1062 = vpop.f32.mrb[0].mxu0
      %v1063 = vpop.f32.mrb[0].mxu0
      %v1064 = vadd.f32 %v1007, %v1063
      %v1065 = vpop.f32.mrb[0].mxu0
      %1066 = vmatprep.mubr.bf16.mxu0 %v314
      %1067 = vmatmul.mubr.bf16.gmra.mrb[0].mxu0 %v303
      %v1068 = vpop.f32.mrb[0].mxu0
      %v1069 = vadd.f32 %v1012, %v1068
      %v1070 = vpop.f32.mrb[0].mxu0
      %v1071 = vpop.f32.mrb[0].mxu0
      %v1072 = vadd.f32 %v1015, %v1071
      %v1073 = vpop.f32.mrb[0].mxu0
      %1074 = vmatprep.mubr.bf16.mxu0 %v316
      %1075 = vmatmul.mubr.bf16.gmra.mrb[0].mxu0 %v305
      %v1076 = vpop.f32.mrb[0].mxu0
      %v1077 = vadd.f32 %v1020, %v1076
      %v1078 = vpop.f32.mrb[0].mxu0
      %v1079 = vpop.f32.mrb[0].mxu0
      %v1080 = vadd.f32 %v1023, %v1079
      %v1081 = vpop.f32.mrb[0].mxu0
      %1082 = vdwg.mxu0
      %1083 = vmatprep.subr.bf16.mxu0 0
      %1084 = vmatpush1.bf16.msra.mxu0 %v857
      %1085 = vmatprep.subr.bf16.mxu0 0
      %1086 = vmatpush1.bf16.msra.mxu0 %v858
      %1087 = vmatprep.subr.bf16.mxu0 0
      %1088 = vmatpush1.bf16.msra.mxu0 %v859
      %1089 = vmatprep.subr.bf16.mxu0 0
      %1090 = vmatpush1.bf16.msra.mxu0 %v860
      %1091 = vmatprep.subr.bf16.mxu0 0
      %1092 = vmatpush1.bf16.msra.mxu0 %v861
      %1093 = vmatprep.subr.bf16.mxu0 0
      %1094 = vmatpush1.bf16.msra.mxu0 %v862
      %1095 = vmatprep.subr.bf16.mxu0 0
      %1096 = vmatpush1.bf16.msra.mxu0 %v863
      %1097 = vmatprep.subr.bf16.mxu0 0
      %1098 = vmatpush1.bf16.msra.mxu0 %v864
      %1099 = vmatprep.subr.bf16.mxu0 0
      %1100 = vmatpush1.bf16.msra.mxu0 %v865
      %1101 = vmatprep.subr.bf16.mxu0 0
      %1102 = vmatpush1.bf16.msra.mxu0 %v866
      %1103 = vmatprep.subr.bf16.mxu0 0
      %1104 = vmatpush1.bf16.msra.mxu0 %v867
      %1105 = vmatprep.subr.bf16.mxu0 0
      %1106 = vmatpush1.bf16.msra.mxu0 %v868
      %1107 = vmatprep.subr.bf16.mxu0 0
      %1108 = vmatpush1.bf16.msra.mxu0 %v869
      %1109 = vmatprep.subr.bf16.mxu0 0
      %1110 = vmatpush1.bf16.msra.mxu0 %v870
      %1111 = vmatprep.subr.bf16.mxu0 0
      %1112 = vmatpush1.bf16.msra.mxu0 %v871
      %1113 = vmatprep.subr.bf16.mxu0 0
      %1114 = vmatpush1.bf16.msra.mxu0 %v872
      %1115 = vmatprep.mubr.bf16.mxu0 %v344
      %1116 = vmatmul.mubr.bf16.gmra.mrb[0].mxu0 %v327
      %v1117 = vpop.f32.mrb[0].mxu0
      %v1118 = vadd.f32 %v1061, %v1117
      %v1119 = vpop.f32.mrb[0].mxu0
      %v1120 = vpop.f32.mrb[0].mxu0
      %v1121 = vadd.f32 %v1064, %v1120
      %v1122 = vpop.f32.mrb[0].mxu0
      %1123 = vmatprep.mubr.bf16.mxu0 %v346
      %1124 = vmatmul.mubr.bf16.gmra.mrb[0].mxu0 %v331
      %v1125 = vpop.f32.mrb[0].mxu0
      %v1126 = vadd.f32 %v1069, %v1125
      %v1127 = vpop.f32.mrb[0].mxu0
      %v1128 = vpop.f32.mrb[0].mxu0
      %v1129 = vadd.f32 %v1072, %v1128
      %v1130 = vpop.f32.mrb[0].mxu0
      %1131 = vmatprep.mubr.bf16.mxu0 %v348
      %1132 = vmatmul.mubr.bf16.gmra.mrb[0].mxu0 %v337
      %v1133 = vpop.f32.mrb[0].mxu0
      %v1134 = vadd.f32 %v1077, %v1133
      %v1135 = vpop.f32.mrb[0].mxu0
      %v1136 = vpop.f32.mrb[0].mxu0
      %v1137 = vadd.f32 %v1080, %v1136
      %v1138 = vpop.f32.mrb[0].mxu0
      %1139 = vdwg.mxu0
      %1140 = vmatprep.subr.bf16.mxu0 0
      %1141 = vmatpush1.bf16.msra.mxu0 %v873
      %1142 = vmatprep.subr.bf16.mxu0 0
      %1143 = vmatpush1.bf16.msra.mxu0 %v874
      %1144 = vmatprep.subr.bf16.mxu0 0
      %1145 = vmatpush1.bf16.msra.mxu0 %v875
      %1146 = vmatprep.subr.bf16.mxu0 0
      %1147 = vmatpush1.bf16.msra.mxu0 %v876
      %1148 = vmatprep.subr.bf16.mxu0 0
      %1149 = vmatpush1.bf16.msra.mxu0 %v877
      %1150 = vmatprep.subr.bf16.mxu0 0
      %1151 = vmatpush1.bf16.msra.mxu0 %v878
      %1152 = vmatprep.subr.bf16.mxu0 0
      %1153 = vmatpush1.bf16.msra.mxu0 %v879
      %1154 = vmatprep.subr.bf16.mxu0 0
      %1155 = vmatpush1.bf16.msra.mxu0 %v880
      %1156 = vmatprep.subr.bf16.mxu0 0
      %1157 = vmatpush1.bf16.msra.mxu0 %v881
      %1158 = vmatprep.subr.bf16.mxu0 0
      %1159 = vmatpush1.bf16.msra.mxu0 %v882
      %1160 = vmatprep.subr.bf16.mxu0 0
      %1161 = vmatpush1.bf16.msra.mxu0 %v883
      %1162 = vmatprep.subr.bf16.mxu0 0
      %1163 = vmatpush1.bf16.msra.mxu0 %v884
      %1164 = vmatprep.subr.bf16.mxu0 0
      %1165 = vmatpush1.bf16.msra.mxu0 %v885
      %1166 = vmatprep.subr.bf16.mxu0 0
      %1167 = vmatpush1.bf16.msra.mxu0 %v886
      %1168 = vmatprep.subr.bf16.mxu0 0
      %1169 = vmatpush1.bf16.msra.mxu0 %v887
      %1170 = vmatprep.subr.bf16.mxu0 0
      %1171 = vmatpush1.bf16.msra.mxu0 %v888
      %1172 = vmatprep.mubr.bf16.mxu0 %v370
      %1173 = vmatmul.mubr.bf16.gmra.mrb[0].mxu0 %v355
      %v1174 = vpop.f32.mrb[0].mxu0
      %v1175 = vadd.f32 %v1118, %v1174
      %v1176 = vpop.f32.mrb[0].mxu0
      %v1177 = vpop.f32.mrb[0].mxu0
      %v1178 = vadd.f32 %v1121, %v1177
      %v1179 = vpop.f32.mrb[0].mxu0
      %1180 = vmatprep.mubr.bf16.mxu0 %v374
      %1181 = vmatmul.mubr.bf16.gmra.mrb[0].mxu0 %v357
      %v1182 = vpop.f32.mrb[0].mxu0
      %v1183 = vadd.f32 %v1126, %v1182
      %v1184 = vpop.f32.mrb[0].mxu0
      %v1185 = vpop.f32.mrb[0].mxu0
      %v1186 = vadd.f32 %v1129, %v1185
      %v1187 = vpop.f32.mrb[0].mxu0
      %1188 = vmatprep.mubr.bf16.mxu0 %v378
      %1189 = vmatmul.mubr.bf16.gmra.mrb[0].mxu0 %v359
      %v1190 = vpop.f32.mrb[0].mxu0
      %v1191 = vadd.f32 %v1134, %v1190
      %v1192 = vpop.f32.mrb[0].mxu0
      %v1193 = vpop.f32.mrb[0].mxu0
      %v1194 = vadd.f32 %v1137, %v1193
      %v1195 = vpop.f32.mrb[0].mxu0
      %1196 = vdwg.mxu0
      %1197 = vmatprep.subr.bf16.mxu0 0
      %1198 = vmatpush1.bf16.msra.mxu0 %v889
      %1199 = vmatprep.subr.bf16.mxu0 0
      %1200 = vmatpush1.bf16.msra.mxu0 %v890
      %1201 = vmatprep.subr.bf16.mxu0 0
      %1202 = vmatpush1.bf16.msra.mxu0 %v891
      %1203 = vmatprep.subr.bf16.mxu0 0
      %1204 = vmatpush1.bf16.msra.mxu0 %v892
      %1205 = vmatprep.subr.bf16.mxu0 0
      %1206 = vmatpush1.bf16.msra.mxu0 %v893
      %1207 = vmatprep.subr.bf16.mxu0 0
      %1208 = vmatpush1.bf16.msra.mxu0 %v894
      %1209 = vmatprep.subr.bf16.mxu0 0
      %1210 = vmatpush1.bf16.msra.mxu0 %v895
      %1211 = vmatprep.subr.bf16.mxu0 0
      %1212 = vmatpush1.bf16.msra.mxu0 %v896
      %1213 = vmatprep.subr.bf16.mxu0 0
      %1214 = vmatpush1.bf16.msra.mxu0 0
      %1215 = vmatprep.subr.bf16.mxu0 0
      %1216 = vmatpush1.bf16.msra.mxu0 0
      %1217 = vmatprep.subr.bf16.mxu0 0
      %1218 = vmatpush1.bf16.msra.mxu0 0
      %1219 = vmatprep.subr.bf16.mxu0 0
      %1220 = vmatpush1.bf16.msra.mxu0 0
      %1221 = vmatprep.subr.bf16.mxu0 0
      %1222 = vmatpush1.bf16.msra.mxu0 0
      %1223 = vmatprep.subr.bf16.mxu0 0
      %1224 = vmatpush1.bf16.msra.mxu0 0
      %1225 = vmatprep.subr.bf16.mxu0 0
      %1226 = vmatpush1.bf16.msra.mxu0 0
      %1227 = vmatprep.subr.bf16.mxu0 0
      %1228 = vmatpush1.bf16.msra.mxu0 0
      %1229 = vmatprep.mubr.bf16.mxu0 0
      %1230 = vmatmul.mubr.bf16.gmra.mrb[0].mxu0 %v385
      %v1231 = vpop.f32.mrb[0].mxu0
      %v1232 = vadd.f32 %v1175, %v1231
      %v1233 = vpop.f32.mrb[0].mxu0
      %v1234 = vpop.f32.mrb[0].mxu0
      %v1235 = vadd.f32 %v1178, %v1234
      %v1236 = vpop.f32.mrb[0].mxu0
      %1237 = vmatprep.mubr.bf16.mxu0 0
      %1238 = vmatmul.mubr.bf16.gmra.mrb[0].mxu0 %v387
      %v1239 = vpop.f32.mrb[0].mxu0
      %v1240 = vadd.f32 %v1183, %v1239
      %v1241 = vpop.f32.mrb[0].mxu0
      %v1242 = vpop.f32.mrb[0].mxu0
      %v1243 = vadd.f32 %v1186, %v1242
      %v1244 = vpop.f32.mrb[0].mxu0
      %1245 = vmatprep.mubr.bf16.mxu0 0
      %1246 = vmatmul.mubr.bf16.gmra.mrb[0].mxu0 %v389
      %v1247 = vpop.f32.mrb[0].mxu0
      %v1248 = vadd.f32 %v1191, %v1247
      %v1249 = vpop.f32.mrb[0].mxu0
      %v1250 = vpop.f32.mrb[0].mxu0
      %v1251 = vadd.f32 %v1194, %v1250
      %v1252 = vpop.f32.mrb[0].mxu0
      %1253 = vdwg.mxu0
      %v1254 = vpack.c.bf16 %v1235, %v1232
      %v1255 = vpack.c.bf16 %v1243, %v1240
      %v1256 = vpack.c.bf16 %v1251, %v1248
      %v1260 = vunpack.c.l.b16 %v1254
      %v1261 = vunpack.c.h.b16 %v1254
      %v1262 = vunpack.c.l.b16 %v1255
      %v1263 = vunpack.c.h.b16 %v1255
      %v1264 = vunpack.c.l.b16 %v1256
      %v1265 = vunpack.c.h.b16 %v1256
      %v1266 = vpack.c.b16 %v1260, %v1260
      %v1267 = vpack.c.b16 %v1261, %v1261
      %v1268 = vpack.c.b16 %v1262, %v1262
      %v1269 = vpack.c.b16 %v1263, %v1263
      %v1270 = vpack.c.b16 %v1264, %v1264
      %v1271 = vpack.c.b16 %v1265, %v1265
      %1278 = vst [vmem:[%s113] sm:$0xf] %v1266
      %1279 = vst [vmem:[%s113 + $0x4] sm:$0xf] %v1267
      %1280 = vst [vmem:[%s113 + $0x8] sm:$0xf] %v1268
      %1281 = vst [vmem:[%s113 + $0xc] sm:$0xf] %v1269
      %1282 = vst [vmem:[%s113 + $0x10] sm:$0xf] %v1270
      %1283 = vst [vmem:[%s113 + $0x14] sm:$0xf] %v1271
      %s1284 = sadd.s32 %s17, %s18
      %s1285 = smul.u32 6, %s1284
      %p1286 = scmp.lt.s32.totalorder %s1285, 11
      %s1287 = scalar_select %p1286, %s1285, 11
      %s1288 = smul.addr %s1287, 4
      %s1289 = scalar_lea.vmem %s2, %s1288
      // Predicated region
      $region101: #{generator_forward.39} parent=23 // pred_check
        %p1290 = pneg %p66
      $region102: #{generator_forward.39} parent=23 // pred_check_branch
        %1292 = sbr.rel (%p1290) target = $region104
      $region103: #{generator_forward.39} parent=23 // pred_region
        %s1293 = sadd.s32 %s17, %s18
        %s1294 = smul.u32 6, %s1293
      $region104: #{generator_forward.39} parent=23 // pred_fallthru
        _
    $region24: #{generator_forward.39} parent=5 // pred_fallthru
      _
    %p1295 = scmp.le.s32.totalorder 2, %s8
    // Predicated region
    $region105: #{generator_forward.39} parent=5 // pred_check
      %p1296 = pneg %p1295
    $region106: #{generator_forward.39} parent=5 // pred_check_branch
      %1298 = sbr.rel (%p1296) target = $region108
    $region107: #{generator_forward.39} parent=5 // pred_region
      %s1299 = ssub.s32 %s8, 2
      // Predicated region
      $region109: #{generator_forward.39} parent=107 // pred_check
        %p1300 = pneg %p72
      $region110: #{generator_forward.39} parent=107 // pred_check_branch
        %1302 = sbr.rel (%p1300) target = $region112
      $region111: #{generator_forward.39} parent=107 // pred_region
        %s1303 = sadd.s32 %s19, %s20
        %s1304 = smul.u32 6, %s1303
        %p1305 = scmp.lt.s32.totalorder %s1304, 11
        %s1306 = scalar_select %p1305, %s1304, 11
        %s1307 = smul.addr %s1306, 4
        %s1308 = scalar_lea.vmem %s2, %s1307
      $region112: #{generator_forward.39} parent=107 // pred_fallthru
        _
    $region108: #{generator_forward.39} parent=5 // pred_fallthru
      _
  $region6: #{generator_forward.39} parent=0 // loop_footer
    %s12 = sadd.s32 1, %s8
  $region7: #{generator_forward.39} parent=0 // loop_footer_branch
    %7 = sbr.rel target = $region3
  $region8: #{generator_forward.39} parent=0 // loop_exit
    _
  %1309 = vsyncmov [#allocation3]
  %s1310 = vpop.sfrf %1309
  %p1311 = scmp.eq.s32.totalorder %s1310, 0
  %p1312 = pneg %p1311
  %1314 = shalt.err (%p1312)
  %s1315 = scalar_lea.sflag [#allocation3], 1
  %1316 = vsyncmov %s1315
  %s1317 = vpop.sfrf %1316
  %p1318 = scmp.eq.s32.totalorder %s1317, 0
  %p1319 = pneg %p1318
  %1321 = shalt.err (%p1319)

// kernel: generator_forward.63
$region0: #{generator_forward.63}
  #allocation0 [shape = 'u32[]', space=smem, size = 0x4, offset = 0x4, fixed_abs, tag = 'smem constant byte address 0x4 - core index']
  #allocation1 [shape = 'u32[144,128]{1,0:T(1,128)}', space=vmem, size = 0x12000, scoped, tag = 'internal scratch']
  #allocation2 [shape = 'bf16[2,64,128]{2,1,0:T(16,128)(2,1)}', space=vmem, size = 0x8000, scoped, tag = 'scratch operand']
  #allocation3 [shape = 's32[2]{0}', space=sflag, size = 0x8, scoped, tag = 'scratch operand']
  #allocation4 [shape = 's32[]', space=sflag, size = 0x4, offset = 0, fixed_abs, tag = 'sflag constant byte address 0x0 - dummy sync flag']
  #allocation5 [shape = 's32[]', space=sflag, size = 0x4, offset = 0, fixed_abs, tag = 'sflag constant byte address 0x0 - dummy sync flag']
  %s0 = inlined_call_operand.vmem [shape: bf16[112,128], index: 0, kind: input, shape index: {}]
  %s1 = inlined_call_operand.vmem [shape: bf16[512,256], index: 1, kind: input, shape index: {}]
  %s2 = inlined_call_operand.vmem [shape: bf16[96,256], index: 2, kind: output, shape index: {}]
  %s3 = sld [smem:[#allocation0]]
  $region113: #{generator_forward.63} parent=0
    _
  %s5 = ssub.s32 1, %s3
  %s6 = scalar_select 0, %s5, %s3
  loop: start=0, step=1, limit=4
  $region2: #{generator_forward.63} parent=0 // loop_pre_header
    _
  $region3: #{generator_forward.63} parent=0 // loop_header
    %s8 = sphi 0, %s12
    %p9 = scmp.ge.s32.totalorder %s8, 4
    %s15 = sphi 0, %s27
    %s16 = sphi 0, %s23
    %s17 = sphi 0, %s15
    %s18 = sphi 0, %s16
    %s19 = sphi 0, %s17
    %s20 = sphi 0, %s18
    %s28 = sphi 0, %s28
    %s30 = sphi 0, %s28
    %s31 = sphi 0, %s30
    %s45 = sphi 0, %s31
    %s53 = sphi 0, %s55
    %s56 = sphi 0, %s53
    %s57 = sphi 0, %s56
    %s73 = sphi 0, %s57
  $region4: #{generator_forward.63} parent=0 // loop_header_branch
    %11 = sbr.rel (%p9) target = $region8
  $region5: #{generator_forward.63} parent=0 // loop_body
    %s13 = ssub.s32 %s8, 1
    %s14 = ssub.s32 %s8, 2
    %s21 = sadd.s32 1, %s16
    %p22 = scmp.ge.s32.totalorder %s21, 1
    %s23 = scalar_select %p22, 0, %s21
    %s24 = sadd.s32 1, %s15
    %s25 = scalar_select %p22, %s24, %s15
    %p26 = scmp.ge.s32.totalorder %s25, 2
    %s27 = scalar_select %p26, 0, %s25
    %s29 = sadd.s32 %s28, 1
    %p32 = scmp.eq.s32.totalorder %s8, 1
    %p33 = scmp.ne.s32.totalorder %s28, %s30
    %p34 = scmp.eq.s32.totalorder %s8, 0
    %p35 = por %p33, %p34
    %p36 = scmp.ne.s32.totalorder %s28, %s30
    %p37 = scmp.eq.s32.totalorder %s13, 1
    %p38 = por %p36, %p37
    %p39 = scmp.ne.s32.totalorder %s30, %s31
    %p40 = scmp.eq.s32.totalorder %s13, 0
    %p41 = por %p39, %p40
    %p42 = scmp.ne.s32.totalorder %s30, %s31
    %p43 = scmp.eq.s32.totalorder %s14, 1
    %p44 = por %p42, %p43
    %p46 = scmp.ne.s32.totalorder %s31, %s45
    %p47 = scmp.eq.s32.totalorder %s14, 0
    %p48 = por %p46, %p47
    %s49 = sadd.s32 %s15, %s16
    %s50 = sadd.s32 %s27, %s23
    %s51 = ssub.s32 %s49, %s50
    %p52 = scmp.eq.s32.totalorder %s51, 0
    %s54 = sadd.s32 %s53, 1
    %s55 = scalar_select %p52, %s53, %s54
    %p58 = pneg %p52
    %p59 = scmp.eq.s32.totalorder %s8, 1
    %p60 = por %p58, %p59
    %p61 = scmp.ne.s32.totalorder %s53, %s56
    %p62 = scmp.eq.s32.totalorder %s8, 0
    %p63 = por %p61, %p62
    %p64 = scmp.ne.s32.totalorder %s53, %s56
    %p65 = scmp.eq.s32.totalorder %s13, 1
    %p66 = por %p64, %p65
    %p67 = scmp.ne.s32.totalorder %s56, %s57
    %p68 = scmp.eq.s32.totalorder %s13, 0
    %p69 = por %p67, %p68
    %p70 = scmp.ne.s32.totalorder %s56, %s57
    %p71 = scmp.eq.s32.totalorder %s14, 1
    %p72 = por %p70, %p71
    %p74 = scmp.ne.s32.totalorder %s57, %s73
    %p75 = scmp.eq.s32.totalorder %s14, 0
    %p76 = por %p74, %p75
    %p77 = scmp.le.s32.totalorder 1, %s8
    %p78 = scmp.lt.s32.totalorder %s8, 3
    %p79 = pnand %p77, %p78
    %p80 = pneg %p79
    // Predicated region
    $region9: #{generator_forward.63} parent=5 // pred_check
      _
    $region10: #{generator_forward.63} parent=5 // pred_check_branch
      %82 = sbr.rel (%p79) target = $region12
    $region11: #{generator_forward.63} parent=5 // pred_region
      %s83 = ssub.s32 %s8, 1
      // Predicated region
      $region13: #{generator_forward.63} parent=11 // pred_check
        %p84 = pneg %p41
      $region14: #{generator_forward.63} parent=11 // pred_check_branch
        %86 = sbr.rel (%p84) target = $region16
      $region15: #{generator_forward.63} parent=11 // pred_region
        _
      $region16: #{generator_forward.63} parent=11 // pred_fallthru
        _
    $region12: #{generator_forward.63} parent=5 // pred_fallthru
      _
    %p87 = scmp.lt.s32.totalorder %s8, 2
    // Predicated region
    $region17: #{generator_forward.63} parent=5 // pred_check
      %p88 = pneg %p87
    $region18: #{generator_forward.63} parent=5 // pred_check_branch
      %90 = sbr.rel (%p88) target = $region20
    $region19: #{generator_forward.63} parent=5 // pred_region
      _
    $region20: #{generator_forward.63} parent=5 // pred_fallthru
      _
    %p91 = scmp.le.s32.totalorder 1, %s8
    %p92 = scmp.lt.s32.totalorder %s8, 3
    %p93 = pnand %p91, %p92
    %p94 = pneg %p93
    // Predicated region
    $region21: #{generator_forward.63} parent=5 // pred_check
      _
    $region22: #{generator_forward.63} parent=5 // pred_check_branch
      %96 = sbr.rel (%p93) target = $region24
    $region23: #{generator_forward.63} parent=5 // pred_region
      %s97 = ssub.s32 %s8, 1
      %p98 = pneg %p41
      %p99 = pneg %p38
      %p100 = pneg %p69
      %p101 = pneg %p66
      %s102 = sadd.s32 %s17, %s18
      %s103 = smul.u32 6, %s102
      %p104 = scmp.lt.s32.totalorder %s103, 11
      %s105 = scalar_select %p104, %s103, 11
      %s106 = smul.addr %s105, 2
      %s107 = smul.addr %s106, 4
      %s108 = scalar_lea.vmem %s2, %s107
      %s109 = sadd.s32 %s17, %s18
      %s110 = smul.u32 6, %s109
      %p111 = scmp.lt.s32.totalorder %s110, 11
      %s112 = scalar_select %p111, %s110, 11
      %s113 = smul.addr %s112, 2
      %s114 = smul.addr %s113, 4
      %s115 = scalar_lea.vmem %s2, %s114
      %s116 = sadd.s32 %s17, %s18
      %s117 = smul.u32 6, %s116
      %s118 = sadd.s32 %s17, %s18
      %s119 = smul.u32 %s118, 48
      %p120 = scmp.lt.s32.totalorder %s18, 0
      %s121 = ssub.s32 0, %s18
      %s122 = scalar_select %p120, %s121, %s18
      %s123 = sand.u32 %s122, 1
      %s124 = ssub.s32 0, %s123
      %s125 = scalar_select %p120, %s124, %s123
      %p126 = scmp.ne.s32.totalorder %s125, 0
      %p127 = scmp.lt.s32.totalorder %s125, 0
      %p128 = pnand %p127, %p126
      %p129 = pneg %p128
      %s130 = sadd.s32 %s125, 2
      %s131 = scalar_select %p129, %s130, %s125
      %p132 = scmp.eq.s32.totalorder %s18, 0
      // Predicated region
      $region25: #{generator_forward.63} parent=23 // pred_check
        %p133 = pneg %p132
      $region26: #{generator_forward.63} parent=23 // pred_check_branch
        %135 = sbr.rel (%p133) target = $region28
      $region27: #{generator_forward.63} parent=23 // pred_region
        %s136 = sshra.s32 %s119, 3
        %s137 = sand.u32 %s119, 7
        %s138 = smul.addr %s136, 4
        %s139 = scalar_lea.vmem %s0, %s138
        %p141 = scmp.lt.u32.totalorder 32, 8
        %p142 = pneg %p141
        // Predicated region
        $region29: #{generator_forward.63} parent=27 // pred_check
          _
        $region30: #{generator_forward.63} parent=27 // pred_check_branch
          %144 = sbr.rel (%p141) target = $region32
        $region31: #{generator_forward.63} parent=27 // pred_region
          %s159 = sand.u32 32, 7
          %p160 = scmp.eq.s32.totalorder %s159, 0
          // Predicated region
          $region44: #{generator_forward.63} parent=31 // pred_check
            %p161 = pneg %p160
          $region45: #{generator_forward.63} parent=31 // pred_check_branch
            %163 = sbr.rel (%p161) target = $region47
          $region46: #{generator_forward.63} parent=31 // pred_region
            loop: start=0, step=1, limit=1
            $region48: #{generator_forward.63} parent=46 // loop_pre_header
              _
            $region49: #{generator_forward.63} parent=46 // loop_header
              %s165 = sphi 0, %s169
              %p166 = scmp.ge.s32.totalorder %s165, 1
              %s170 = sphi %s139, %s139
              %s171 = sphi [#allocation2], [#allocation2]
            $region50: #{generator_forward.63} parent=46 // loop_header_branch
              %168 = sbr.rel (%p166) target = $region54
            $region51: #{generator_forward.63} parent=46 // loop_body
              %v172 = vld [vmem:[%s170] sm:$0xff]
              %173 = vst [vmem:[%s171] sm:$0xff] %v172
              %v174 = vld [vmem:[%s170 + $0x8] sm:$0xff]
              %175 = vst [vmem:[%s171 + $0x8] sm:$0xff] %v174
              %v176 = vld [vmem:[%s170 + $0x10] sm:$0xff]
              %177 = vst [vmem:[%s171 + $0x10] sm:$0xff] %v176
              %v178 = vld [vmem:[%s170 + $0x18] sm:$0xff]
              %179 = vst [vmem:[%s171 + $0x18] sm:$0xff] %v178
            $region52: #{generator_forward.63} parent=46 // loop_footer
              %s169 = sadd.s32 1, %s165
            $region53: #{generator_forward.63} parent=46 // loop_footer_branch
              %164 = sbr.rel target = $region49
            $region54: #{generator_forward.63} parent=46 // loop_exit
              _
          $region47: #{generator_forward.63} parent=31 // pred_fallthru
            _
          %p180 = pneg %p160
          // Predicated region
          $region55: #{generator_forward.63} parent=31 // pred_check
            _
          $region56: #{generator_forward.63} parent=31 // pred_check_branch
            %182 = sbr.rel (%p160) target = $region58
          $region57: #{generator_forward.63} parent=31 // pred_region
            %s183 = sand.u32 32, 7
          $region58: #{generator_forward.63} parent=31 // pred_fallthru
            _
        $region32: #{generator_forward.63} parent=27 // pred_fallthru
          _
        // Predicated region
        $region33: #{generator_forward.63} parent=27 // pred_check
          %p145 = pneg %p141
        $region34: #{generator_forward.63} parent=27 // pred_check_branch
          %147 = sbr.rel (%p145) target = $region36
        $region35: #{generator_forward.63} parent=27 // pred_region
          %s148 = sshllo.u32 0, 32
          loop: start=0, step=1, limit=1
          $region37: #{generator_forward.63} parent=35 // loop_pre_header
            _
          $region38: #{generator_forward.63} parent=35 // loop_header
            %s150 = sphi 0, %s154
            %p151 = scmp.ge.s32.totalorder %s150, 1
            %s155 = sphi %s139, %s139
            %s156 = sphi [#allocation2], [#allocation2]
          $region39: #{generator_forward.63} parent=35 // loop_header_branch
            %153 = sbr.rel (%p151) target = $region43
          $region40: #{generator_forward.63} parent=35 // loop_body
            %v157 = vld [vmem:[%s155] sm:%s148]
            %158 = vst [vmem:[%s156] sm:%s148] %v157
          $region41: #{generator_forward.63} parent=35 // loop_footer
            %s154 = sadd.s32 1, %s150
          $region42: #{generator_forward.63} parent=35 // loop_footer_branch
            %149 = sbr.rel target = $region38
          $region43: #{generator_forward.63} parent=35 // loop_exit
            _
        $region36: #{generator_forward.63} parent=27 // pred_fallthru
          _
        // Predicated region
        $region59: #{generator_forward.63} parent=27 // pred_check
          _
        $region60: #{generator_forward.63} parent=27 // pred_check_branch
          %186 = sbr.rel (0) target = $region62
        $region61: #{generator_forward.63} parent=27 // pred_region
          %187 = vsyncadd [#allocation3], 512
        $region62: #{generator_forward.63} parent=27 // pred_fallthru
          _
      $region28: #{generator_forward.63} parent=23 // pred_fallthru
        _
      %s188 = sadd.s32 %s18, 1
      %p189 = scmp.lt.s32.totalorder %s188, 1
      // Predicated region
      $region63: #{generator_forward.63} parent=23 // pred_check
        %p190 = pneg %p189
      $region64: #{generator_forward.63} parent=23 // pred_check_branch
        %192 = sbr.rel (%p190) target = $region66
      $region65: #{generator_forward.63} parent=23 // pred_region
        %s193 = sadd.s32 %s119, 48
        %s194 = ssub.s32 1, %s131
        %s195 = sshra.s32 %s193, 3
        %s196 = sand.u32 %s193, 7
        %s197 = smul.addr %s195, 4
        %s198 = scalar_lea.vmem %s0, %s197
        %s199 = smul.u32 %s194, 4
        %s200 = smul.addr %s199, 8
        %s201 = scalar_lea.vmem [#allocation2], %s200
        %s202 = scalar_lea.sflag [#allocation3], %s194
        %p204 = scmp.lt.u32.totalorder 32, 8
        %p205 = pneg %p204
        // Predicated region
        $region67: #{generator_forward.63} parent=65 // pred_check
          _
        $region68: #{generator_forward.63} parent=65 // pred_check_branch
          %207 = sbr.rel (%p204) target = $region70
        $region69: #{generator_forward.63} parent=65 // pred_region
          %s222 = sand.u32 32, 7
          %p223 = scmp.eq.s32.totalorder %s222, 0
          // Predicated region
          $region82: #{generator_forward.63} parent=69 // pred_check
            %p224 = pneg %p223
          $region83: #{generator_forward.63} parent=69 // pred_check_branch
            %226 = sbr.rel (%p224) target = $region85
          $region84: #{generator_forward.63} parent=69 // pred_region
            loop: start=0, step=1, limit=1
            $region86: #{generator_forward.63} parent=84 // loop_pre_header
              _
            $region87: #{generator_forward.63} parent=84 // loop_header
              %s228 = sphi 0, %s232
              %p229 = scmp.ge.s32.totalorder %s228, 1
              %s233 = sphi %s198, %s198
              %s234 = sphi %s201, %s201
            $region88: #{generator_forward.63} parent=84 // loop_header_branch
              %231 = sbr.rel (%p229) target = $region92
            $region89: #{generator_forward.63} parent=84 // loop_body
              %v235 = vld [vmem:[%s233] sm:$0xff]
              %236 = vst [vmem:[%s234] sm:$0xff] %v235
              %v237 = vld [vmem:[%s233 + $0x8] sm:$0xff]
              %238 = vst [vmem:[%s234 + $0x8] sm:$0xff] %v237
              %v239 = vld [vmem:[%s233 + $0x10] sm:$0xff]
              %240 = vst [vmem:[%s234 + $0x10] sm:$0xff] %v239
              %v241 = vld [vmem:[%s233 + $0x18] sm:$0xff]
              %242 = vst [vmem:[%s234 + $0x18] sm:$0xff] %v241
            $region90: #{generator_forward.63} parent=84 // loop_footer
              %s232 = sadd.s32 1, %s228
            $region91: #{generator_forward.63} parent=84 // loop_footer_branch
              %227 = sbr.rel target = $region87
            $region92: #{generator_forward.63} parent=84 // loop_exit
              _
          $region85: #{generator_forward.63} parent=69 // pred_fallthru
            _
          %p243 = pneg %p223
          // Predicated region
          $region93: #{generator_forward.63} parent=69 // pred_check
            _
          $region94: #{generator_forward.63} parent=69 // pred_check_branch
            %245 = sbr.rel (%p223) target = $region96
          $region95: #{generator_forward.63} parent=69 // pred_region
            %s246 = sand.u32 32, 7
          $region96: #{generator_forward.63} parent=69 // pred_fallthru
            _
        $region70: #{generator_forward.63} parent=65 // pred_fallthru
          _
        // Predicated region
        $region71: #{generator_forward.63} parent=65 // pred_check
          %p208 = pneg %p204
        $region72: #{generator_forward.63} parent=65 // pred_check_branch
          %210 = sbr.rel (%p208) target = $region74
        $region73: #{generator_forward.63} parent=65 // pred_region
          %s211 = sshllo.u32 0, 32
          loop: start=0, step=1, limit=1
          $region75: #{generator_forward.63} parent=73 // loop_pre_header
            _
          $region76: #{generator_forward.63} parent=73 // loop_header
            %s213 = sphi 0, %s217
            %p214 = scmp.ge.s32.totalorder %s213, 1
            %s218 = sphi %s198, %s198
            %s219 = sphi %s201, %s201
          $region77: #{generator_forward.63} parent=73 // loop_header_branch
            %216 = sbr.rel (%p214) target = $region81
          $region78: #{generator_forward.63} parent=73 // loop_body
            %v220 = vld [vmem:[%s218] sm:%s211]
            %221 = vst [vmem:[%s219] sm:%s211] %v220
          $region79: #{generator_forward.63} parent=73 // loop_footer
            %s217 = sadd.s32 1, %s213
          $region80: #{generator_forward.63} parent=73 // loop_footer_branch
            %212 = sbr.rel target = $region76
          $region81: #{generator_forward.63} parent=73 // loop_exit
            _
        $region74: #{generator_forward.63} parent=65 // pred_fallthru
          _
        // Predicated region
        $region97: #{generator_forward.63} parent=65 // pred_check
          _
        $region98: #{generator_forward.63} parent=65 // pred_check_branch
          %249 = sbr.rel (0) target = $region100
        $region99: #{generator_forward.63} parent=65 // pred_region
          %250 = vsyncadd %s202, 512
        $region100: #{generator_forward.63} parent=65 // pred_fallthru
          _
      $region66: #{generator_forward.63} parent=23 // pred_fallthru
        _
      %s251 = smul.u32 %s131, 4
      %s252 = smul.addr %s251, 8
      %s253 = scalar_lea.vmem [#allocation2], %s252
      %s254 = scalar_lea.sflag [#allocation3], %s131
      %s255 = smul.u32 4, 8
      %s256 = smul.u32 %s255, 1
      %s257 = sshll.u32 %s256, 4
      %258 = dma.done %s254, %s257
      %v259 = vld [vmem:[%s253] sm:$0xff]
      %v260 = vld [vmem:[%s253 + $0x8] sm:$0xff]
      %v261 = vld [vmem:[%s253 + $0x10] sm:$0xff]
      %v262 = vld [vmem:[%s253 + $0x18] sm:$0xff]
      %vm263 = vsmask.f32 7424
      %v265 = vshrl.u32 %v259, 16
      %v267 = vshll.u32 %v259, 16
      %v269 = vrot.slane %v267, 1
      %v270 = vor.u32 %v265, %v269
      %v272 = vshll.u32 %v260, 16
      %v274 = vrot.slane %v272, 1
      %v275 = vsel %vm263, %v270, %v274
      %v276 = vshrl.u32 %v260, 16
      %v278 = vor.u32 %v276, %v274
      %v280 = vshll.u32 %v261, 16
      %v282 = vrot.slane %v280, 1
      %v283 = vsel %vm263, %v278, %v282
      %v284 = vshrl.u32 %v261, 16
      %v286 = vor.u32 %v284, %v282
      %v288 = vshll.u32 %v262, 16
      %v290 = vrot.slane %v288, 1
      %v291 = vsel %vm263, %v286, %v290
      %vm299 = vcmask 1044480
      %v300 = vrot.slane %v259, 3
      %v301 = vrot.slane %v260, 3
      %v302 = vsel %vm299, %v300, %v301
      %v303 = vrot.slane %v261, 3
      %v304 = vsel %vm299, %v301, %v303
      %v305 = vrot.slane %v262, 3
      %v306 = vsel %vm299, %v303, %v305
      %vm310 = vsmask.f32 4352
      %v311 = vrot.slane %v265, 3
      %v312 = vrot.slane %v267, 4
      %v313 = vor.u32 %v311, %v312
      %v314 = vrot.slane %v276, 3
      %v315 = vrot.slane %v272, 4
      %v316 = vor.u32 %v314, %v315
      %v317 = vsel %vm310, %v313, %v316
      %v318 = vrot.slane %v284, 3
      %v319 = vrot.slane %v280, 4
      %v320 = vor.u32 %v318, %v319
      %v321 = vsel %vm310, %v316, %v320
      %v322 = vshrl.u32 %v262, 16
      %v324 = vrot.slane %v322, 3
      %v325 = vrot.slane %v288, 4
      %v326 = vor.u32 %v324, %v325
      %v327 = vsel %vm310, %v320, %v326
      %v331 = vld [vmem:[%s1] sm:$0xff]
      %v332 = vld [vmem:[%s1 + $0x8] sm:$0xff]
      %v333 = vld [vmem:[%s1 + $0x10] sm:$0xff]
      %v334 = vld [vmem:[%s1 + $0x18] sm:$0xff]
      %v335 = vld [vmem:[%s1 + $0x20] sm:$0xff]
      %v336 = vld [vmem:[%s1 + $0x28] sm:$0xff]
      %v337 = vld [vmem:[%s1 + $0x30] sm:$0xff]
      %v338 = vld [vmem:[%s1 + $0x38] sm:$0xff]
      %v339 = vld [vmem:[%s1 + $0x40] sm:$0xff]
      %v340 = vld [vmem:[%s1 + $0x48] sm:$0xff]
      %v341 = vld [vmem:[%s1 + $0x50] sm:$0xff]
      %v342 = vld [vmem:[%s1 + $0x58] sm:$0xff]
      %v343 = vld [vmem:[%s1 + $0x60] sm:$0xff]
      %v344 = vld [vmem:[%s1 + $0x68] sm:$0xff]
      %v345 = vld [vmem:[%s1 + $0x70] sm:$0xff]
      %v346 = vld [vmem:[%s1 + $0x78] sm:$0xff]
      %v347 = vld [vmem:[%s1 + $0x80] sm:$0xff]
      %v348 = vld [vmem:[%s1 + $0x88] sm:$0xff]
      %v349 = vld [vmem:[%s1 + $0x90] sm:$0xff]
      %v350 = vld [vmem:[%s1 + $0x98] sm:$0xff]
      %v351 = vld [vmem:[%s1 + $0xa0] sm:$0xff]
      %v352 = vld [vmem:[%s1 + $0xa8] sm:$0xff]
      %v353 = vld [vmem:[%s1 + $0xb0] sm:$0xff]
      %v354 = vld [vmem:[%s1 + $0xb8] sm:$0xff]
      %v355 = vld [vmem:[%s1 + $0xc0] sm:$0xff]
      %v356 = vld [vmem:[%s1 + $0xc8] sm:$0xff]
      %v357 = vld [vmem:[%s1 + $0xd0] sm:$0xff]
      %v358 = vld [vmem:[%s1 + $0xd8] sm:$0xff]
      %v359 = vld [vmem:[%s1 + $0xe0] sm:$0xff]
      %v360 = vld [vmem:[%s1 + $0xe8] sm:$0xff]
      %v361 = vld [vmem:[%s1 + $0xf0] sm:$0xff]
      %v362 = vld [vmem:[%s1 + $0xf8] sm:$0xff]
      %v363 = vld [vmem:[%s1 + $0x100] sm:$0xff]
      %v364 = vld [vmem:[%s1 + $0x108] sm:$0xff]
      %v365 = vld [vmem:[%s1 + $0x110] sm:$0xff]
      %v366 = vld [vmem:[%s1 + $0x118] sm:$0xff]
      %v367 = vld [vmem:[%s1 + $0x120] sm:$0xff]
      %v368 = vld [vmem:[%s1 + $0x128] sm:$0xff]
      %v369 = vld [vmem:[%s1 + $0x130] sm:$0xff]
      %v370 = vld [vmem:[%s1 + $0x138] sm:$0xff]
      %v371 = vld [vmem:[%s1 + $0x140] sm:$0xff]
      %v372 = vld [vmem:[%s1 + $0x148] sm:$0xff]
      %v373 = vld [vmem:[%s1 + $0x150] sm:$0xff]
      %v374 = vld [vmem:[%s1 + $0x158] sm:$0xff]
      %v375 = vld [vmem:[%s1 + $0x160] sm:$0xff]
      %v376 = vld [vmem:[%s1 + $0x168] sm:$0xff]
      %v377 = vld [vmem:[%s1 + $0x170] sm:$0xff]
      %v378 = vld [vmem:[%s1 + $0x178] sm:$0xff]
      %v379 = vld [vmem:[%s1 + $0x180] sm:$0xff]
      %v380 = vld [vmem:[%s1 + $0x188] sm:$0xff]
      %v381 = vld [vmem:[%s1 + $0x190] sm:$0xff]
      %v382 = vld [vmem:[%s1 + $0x198] sm:$0xff]
      %v383 = vld [vmem:[%s1 + $0x1a0] sm:$0xff]
      %v384 = vld [vmem:[%s1 + $0x1a8] sm:$0xff]
      %v385 = vld [vmem:[%s1 + $0x1b0] sm:$0xff]
      %v386 = vld [vmem:[%s1 + $0x1b8] sm:$0xff]
      %v387 = vld [vmem:[%s1 + $0x1c0] sm:$0xff]
      %v388 = vld [vmem:[%s1 + $0x1c8] sm:$0xff]
      %v389 = vld [vmem:[%s1 + $0x1d0] sm:$0xff]
      %v390 = vld [vmem:[%s1 + $0x1d8] sm:$0xff]
      %v391 = vld [vmem:[%s1 + $0x1e0] sm:$0xff]
      %v392 = vld [vmem:[%s1 + $0x1e8] sm:$0xff]
      %v393 = vld [vmem:[%s1 + $0x1f0] sm:$0xff]
      %v394 = vld [vmem:[%s1 + $0x1f8] sm:$0xff]
      %v459 = vunpack.c.l.b16 %v331
      %v460 = vunpack.c.h.b16 %v331
      %v461 = vunpack.c.l.b16 %v332
      %v462 = vunpack.c.h.b16 %v332
      %v463 = vunpack.c.l.b16 %v333
      %v464 = vunpack.c.h.b16 %v333
      %v465 = vunpack.c.l.b16 %v334
      %v466 = vunpack.c.h.b16 %v334
      %v467 = vunpack.c.l.b16 %v335
      %v468 = vunpack.c.h.b16 %v335
      %v469 = vunpack.c.l.b16 %v336
      %v470 = vunpack.c.h.b16 %v336
      %v471 = vunpack.c.l.b16 %v337
      %v472 = vunpack.c.h.b16 %v337
      %v473 = vunpack.c.l.b16 %v338
      %v474 = vunpack.c.h.b16 %v338
      %v475 = vunpack.c.l.b16 %v339
      %v476 = vunpack.c.h.b16 %v339
      %v477 = vunpack.c.l.b16 %v340
      %v478 = vunpack.c.h.b16 %v340
      %v479 = vunpack.c.l.b16 %v341
      %v480 = vunpack.c.h.b16 %v341
      %v481 = vunpack.c.l.b16 %v342
      %v482 = vunpack.c.h.b16 %v342
      %v483 = vunpack.c.l.b16 %v343
      %v484 = vunpack.c.h.b16 %v343
      %v485 = vunpack.c.l.b16 %v344
      %v486 = vunpack.c.h.b16 %v344
      %v487 = vunpack.c.l.b16 %v345
      %v488 = vunpack.c.h.b16 %v345
      %v489 = vunpack.c.l.b16 %v346
      %v490 = vunpack.c.h.b16 %v346
      %v491 = vunpack.c.l.b16 %v347
      %v492 = vunpack.c.h.b16 %v347
      %v493 = vunpack.c.l.b16 %v348
      %v494 = vunpack.c.h.b16 %v348
      %v495 = vunpack.c.l.b16 %v349
      %v496 = vunpack.c.h.b16 %v349
      %v497 = vunpack.c.l.b16 %v350
      %v498 = vunpack.c.h.b16 %v350
      %v499 = vunpack.c.l.b16 %v351
      %v500 = vunpack.c.h.b16 %v351
      %v501 = vunpack.c.l.b16 %v352
      %v502 = vunpack.c.h.b16 %v352
      %v503 = vunpack.c.l.b16 %v353
      %v504 = vunpack.c.h.b16 %v353
      %v505 = vunpack.c.l.b16 %v354
      %v506 = vunpack.c.h.b16 %v354
      %v507 = vunpack.c.l.b16 %v355
      %v508 = vunpack.c.h.b16 %v355
      %v509 = vunpack.c.l.b16 %v356
      %v510 = vunpack.c.h.b16 %v356
      %v511 = vunpack.c.l.b16 %v357
      %v512 = vunpack.c.h.b16 %v357
      %v513 = vunpack.c.l.b16 %v358
      %v514 = vunpack.c.h.b16 %v358
      %v515 = vunpack.c.l.b16 %v359
      %v516 = vunpack.c.h.b16 %v359
      %v517 = vunpack.c.l.b16 %v360
      %v518 = vunpack.c.h.b16 %v360
      %v519 = vunpack.c.l.b16 %v361
      %v520 = vunpack.c.h.b16 %v361
      %v521 = vunpack.c.l.b16 %v362
      %v522 = vunpack.c.h.b16 %v362
      %v523 = vunpack.c.l.b16 %v363
      %v524 = vunpack.c.h.b16 %v363
      %v525 = vunpack.c.l.b16 %v364
      %v526 = vunpack.c.h.b16 %v364
      %v527 = vunpack.c.l.b16 %v365
      %v528 = vunpack.c.h.b16 %v365
      %v529 = vunpack.c.l.b16 %v366
      %v530 = vunpack.c.h.b16 %v366
      %v531 = vunpack.c.l.b16 %v367
      %v532 = vunpack.c.h.b16 %v367
      %v533 = vunpack.c.l.b16 %v368
      %v534 = vunpack.c.h.b16 %v368
      %v535 = vunpack.c.l.b16 %v369
      %v536 = vunpack.c.h.b16 %v369
      %v537 = vunpack.c.l.b16 %v370
      %v538 = vunpack.c.h.b16 %v370
      %v539 = vunpack.c.l.b16 %v371
      %v540 = vunpack.c.h.b16 %v371
      %v541 = vunpack.c.l.b16 %v372
      %v542 = vunpack.c.h.b16 %v372
      %v543 = vunpack.c.l.b16 %v373
      %v544 = vunpack.c.h.b16 %v373
      %v545 = vunpack.c.l.b16 %v374
      %v546 = vunpack.c.h.b16 %v374
      %v547 = vunpack.c.l.b16 %v375
      %v548 = vunpack.c.h.b16 %v375
      %v549 = vunpack.c.l.b16 %v376
      %v550 = vunpack.c.h.b16 %v376
      %v551 = vunpack.c.l.b16 %v377
      %v552 = vunpack.c.h.b16 %v377
      %v553 = vunpack.c.l.b16 %v378
      %v554 = vunpack.c.h.b16 %v378
      %v555 = vunpack.c.l.b16 %v379
      %v556 = vunpack.c.h.b16 %v379
      %v557 = vunpack.c.l.b16 %v380
      %v558 = vunpack.c.h.b16 %v380
      %v559 = vunpack.c.l.b16 %v381
      %v560 = vunpack.c.h.b16 %v381
      %v561 = vunpack.c.l.b16 %v382
      %v562 = vunpack.c.h.b16 %v382
      %v563 = vunpack.c.l.b16 %v383
      %v564 = vunpack.c.h.b16 %v383
      %v565 = vunpack.c.l.b16 %v384
      %v566 = vunpack.c.h.b16 %v384
      %v567 = vunpack.c.l.b16 %v385
      %v568 = vunpack.c.h.b16 %v385
      %v569 = vunpack.c.l.b16 %v386
      %v570 = vunpack.c.h.b16 %v386
      %v571 = vunpack.c.l.b16 %v387
      %v572 = vunpack.c.h.b16 %v387
      %v573 = vunpack.c.l.b16 %v388
      %v574 = vunpack.c.h.b16 %v388
      %v575 = vunpack.c.l.b16 %v389
      %v576 = vunpack.c.h.b16 %v389
      %v577 = vunpack.c.l.b16 %v390
      %v578 = vunpack.c.h.b16 %v390
      %v579 = vunpack.c.l.b16 %v391
      %v580 = vunpack.c.h.b16 %v391
      %v581 = vunpack.c.l.b16 %v392
      %v582 = vunpack.c.h.b16 %v392
      %v583 = vunpack.c.l.b16 %v393
      %v584 = vunpack.c.h.b16 %v393
      %v585 = vunpack.c.l.b16 %v394
      %v586 = vunpack.c.h.b16 %v394
      %v587 = vpack.c.b16 %v461, %v459
      %v588 = vpack.c.b16 %v462, %v460
      %v589 = vpack.c.b16 %v465, %v463
      %v590 = vpack.c.b16 %v466, %v464
      %v591 = vpack.c.b16 %v469, %v467
      %v592 = vpack.c.b16 %v470, %v468
      %v593 = vpack.c.b16 %v473, %v471
      %v594 = vpack.c.b16 %v474, %v472
      %v595 = vpack.c.b16 %v477, %v475
      %v596 = vpack.c.b16 %v478, %v476
      %v597 = vpack.c.b16 %v481, %v479
      %v598 = vpack.c.b16 %v482, %v480
      %v599 = vpack.c.b16 %v485, %v483
      %v600 = vpack.c.b16 %v486, %v484
      %v601 = vpack.c.b16 %v489, %v487
      %v602 = vpack.c.b16 %v490, %v488
      %v603 = vpack.c.b16 %v493, %v491
      %v604 = vpack.c.b16 %v494, %v492
      %v605 = vpack.c.b16 %v497, %v495
      %v606 = vpack.c.b16 %v498, %v496
      %v607 = vpack.c.b16 %v501, %v499
      %v608 = vpack.c.b16 %v502, %v500
      %v609 = vpack.c.b16 %v505, %v503
      %v610 = vpack.c.b16 %v506, %v504
      %v611 = vpack.c.b16 %v509, %v507
      %v612 = vpack.c.b16 %v510, %v508
      %v613 = vpack.c.b16 %v513, %v511
      %v614 = vpack.c.b16 %v514, %v512
      %v615 = vpack.c.b16 %v517, %v515
      %v616 = vpack.c.b16 %v518, %v516
      %v617 = vpack.c.b16 %v521, %v519
      %v618 = vpack.c.b16 %v522, %v520
      %v619 = vpack.c.b16 %v525, %v523
      %v620 = vpack.c.b16 %v526, %v524
      %v621 = vpack.c.b16 %v529, %v527
      %v622 = vpack.c.b16 %v530, %v528
      %v623 = vpack.c.b16 %v533, %v531
      %v624 = vpack.c.b16 %v534, %v532
      %v625 = vpack.c.b16 %v537, %v535
      %v626 = vpack.c.b16 %v538, %v536
      %v627 = vpack.c.b16 %v541, %v539
      %v628 = vpack.c.b16 %v542, %v540
      %v629 = vpack.c.b16 %v545, %v543
      %v630 = vpack.c.b16 %v546, %v544
      %v631 = vpack.c.b16 %v549, %v547
      %v632 = vpack.c.b16 %v550, %v548
      %v633 = vpack.c.b16 %v553, %v551
      %v634 = vpack.c.b16 %v554, %v552
      %v635 = vpack.c.b16 %v557, %v555
      %v636 = vpack.c.b16 %v558, %v556
      %v637 = vpack.c.b16 %v561, %v559
      %v638 = vpack.c.b16 %v562, %v560
      %v639 = vpack.c.b16 %v565, %v563
      %v640 = vpack.c.b16 %v566, %v564
      %v641 = vpack.c.b16 %v569, %v567
      %v642 = vpack.c.b16 %v570, %v568
      %v643 = vpack.c.b16 %v573, %v571
      %v644 = vpack.c.b16 %v574, %v572
      %v645 = vpack.c.b16 %v577, %v575
      %v646 = vpack.c.b16 %v578, %v576
      %v647 = vpack.c.b16 %v581, %v579
      %v648 = vpack.c.b16 %v582, %v580
      %v649 = vpack.c.b16 %v585, %v583
      %v650 = vpack.c.b16 %v586, %v584
      %715 = vmatprep.subr.bf16.mxu0 %v588
      %716 = vmatpush1.bf16.msra.mxu0 %v587
      %717 = vmatprep.subr.bf16.mxu0 %v590
      %718 = vmatpush1.bf16.msra.mxu0 %v589
      %719 = vmatprep.subr.bf16.mxu0 %v592
      %720 = vmatpush1.bf16.msra.mxu0 %v591
      %721 = vmatprep.subr.bf16.mxu0 %v594
      %722 = vmatpush1.bf16.msra.mxu0 %v593
      %723 = vmatprep.subr.bf16.mxu0 %v596
      %724 = vmatpush1.bf16.msra.mxu0 %v595
      %725 = vmatprep.subr.bf16.mxu0 %v598
      %726 = vmatpush1.bf16.msra.mxu0 %v597
      %727 = vmatprep.subr.bf16.mxu0 %v600
      %728 = vmatpush1.bf16.msra.mxu0 %v599
      %729 = vmatprep.subr.bf16.mxu0 %v602
      %730 = vmatpush1.bf16.msra.mxu0 %v601
      %731 = vmatprep.subr.bf16.mxu0 %v604
      %732 = vmatpush1.bf16.msra.mxu0 %v603
      %733 = vmatprep.subr.bf16.mxu0 %v606
      %734 = vmatpush1.bf16.msra.mxu0 %v605
      %735 = vmatprep.subr.bf16.mxu0 %v608
      %736 = vmatpush1.bf16.msra.mxu0 %v607
      %737 = vmatprep.subr.bf16.mxu0 %v610
      %738 = vmatpush1.bf16.msra.mxu0 %v609
      %739 = vmatprep.subr.bf16.mxu0 %v612
      %740 = vmatpush1.bf16.msra.mxu0 %v611
      %741 = vmatprep.subr.bf16.mxu0 %v614
      %742 = vmatpush1.bf16.msra.mxu0 %v613
      %743 = vmatprep.subr.bf16.mxu0 %v616
      %744 = vmatpush1.bf16.msra.mxu0 %v615
      %745 = vmatprep.subr.bf16.mxu0 %v618
      %746 = vmatpush1.bf16.msra.mxu0 %v617
      %747 = vmatprep.mubr.bf16.mxu0 %v275
      %748 = vmatmul.mubr.bf16.gmra.mrb[0].mxu0 %v259
      %v749 = vpop.f32.mrb[0].mxu0
      %v750 = vadd.f32 0.0, %v749
      %v751 = vpop.f32.mrb[0].mxu0
      %v752 = vadd.f32 0.0, %v751
      %v753 = vpop.f32.mrb[0].mxu0
      %v754 = vadd.f32 0.0, %v753
      %v755 = vpop.f32.mrb[0].mxu0
      %v756 = vadd.f32 0.0, %v755
      %757 = vmatprep.mubr.bf16.mxu0 %v283
      %758 = vmatmul.mubr.bf16.gmra.mrb[0].mxu0 %v260
      %v759 = vpop.f32.mrb[0].mxu0
      %v760 = vadd.f32 0.0, %v759
      %v761 = vpop.f32.mrb[0].mxu0
      %v762 = vadd.f32 0.0, %v761
      %v763 = vpop.f32.mrb[0].mxu0
      %v764 = vadd.f32 0.0, %v763
      %v765 = vpop.f32.mrb[0].mxu0
      %v766 = vadd.f32 0.0, %v765
      %767 = vmatprep.mubr.bf16.mxu0 %v291
      %768 = vmatmul.mubr.bf16.gmra.mrb[0].mxu0 %v261
      %v769 = vpop.f32.mrb[0].mxu0
      %v770 = vadd.f32 0.0, %v769
      %v771 = vpop.f32.mrb[0].mxu0
      %v772 = vadd.f32 0.0, %v771
      %v773 = vpop.f32.mrb[0].mxu0
      %v774 = vadd.f32 0.0, %v773
      %v775 = vpop.f32.mrb[0].mxu0
      %v776 = vadd.f32 0.0, %v775
      %777 = vdwg.mxu0
      %778 = vmatprep.subr.bf16.mxu0 %v620
      %779 = vmatpush1.bf16.msra.mxu0 %v619
      %780 = vmatprep.subr.bf16.mxu0 %v622
      %781 = vmatpush1.bf16.msra.mxu0 %v621
      %782 = vmatprep.subr.bf16.mxu0 %v624
      %783 = vmatpush1.bf16.msra.mxu0 %v623
      %784 = vmatprep.subr.bf16.mxu0 %v626
      %785 = vmatpush1.bf16.msra.mxu0 %v625
      %786 = vmatprep.subr.bf16.mxu0 %v628
      %787 = vmatpush1.bf16.msra.mxu0 %v627
      %788 = vmatprep.subr.bf16.mxu0 %v630
      %789 = vmatpush1.bf16.msra.mxu0 %v629
      %790 = vmatprep.subr.bf16.mxu0 %v632
      %791 = vmatpush1.bf16.msra.mxu0 %v631
      %792 = vmatprep.subr.bf16.mxu0 %v634
      %793 = vmatpush1.bf16.msra.mxu0 %v633
      %794 = vmatprep.subr.bf16.mxu0 %v636
      %795 = vmatpush1.bf16.msra.mxu0 %v635
      %796 = vmatprep.subr.bf16.mxu0 %v638
      %797 = vmatpush1.bf16.msra.mxu0 %v637
      %798 = vmatprep.subr.bf16.mxu0 %v640
      %799 = vmatpush1.bf16.msra.mxu0 %v639
      %800 = vmatprep.subr.bf16.mxu0 %v642
      %801 = vmatpush1.bf16.msra.mxu0 %v641
      %802 = vmatprep.subr.bf16.mxu0 %v644
      %803 = vmatpush1.bf16.msra.mxu0 %v643
      %804 = vmatprep.subr.bf16.mxu0 %v646
      %805 = vmatpush1.bf16.msra.mxu0 %v645
      %806 = vmatprep.subr.bf16.mxu0 %v648
      %807 = vmatpush1.bf16.msra.mxu0 %v647
      %808 = vmatprep.subr.bf16.mxu0 %v650
      %809 = vmatpush1.bf16.msra.mxu0 %v649
      %810 = vmatprep.mubr.bf16.mxu0 %v317
      %811 = vmatmul.mubr.bf16.gmra.mrb[0].mxu0 %v302
      %v812 = vpop.f32.mrb[0].mxu0
      %v813 = vadd.f32 %v750, %v812
      %v814 = vpop.f32.mrb[0].mxu0
      %v815 = vadd.f32 %v752, %v814
      %v816 = vpop.f32.mrb[0].mxu0
      %v817 = vadd.f32 %v754, %v816
      %v818 = vpop.f32.mrb[0].mxu0
      %v819 = vadd.f32 %v756, %v818
      %820 = vmatprep.mubr.bf16.mxu0 %v321
      %821 = vmatmul.mubr.bf16.gmra.mrb[0].mxu0 %v304
      %v822 = vpop.f32.mrb[0].mxu0
      %v823 = vadd.f32 %v760, %v822
      %v824 = vpop.f32.mrb[0].mxu0
      %v825 = vadd.f32 %v762, %v824
      %v826 = vpop.f32.mrb[0].mxu0
      %v827 = vadd.f32 %v764, %v826
      %v828 = vpop.f32.mrb[0].mxu0
      %v829 = vadd.f32 %v766, %v828
      %830 = vmatprep.mubr.bf16.mxu0 %v327
      %831 = vmatmul.mubr.bf16.gmra.mrb[0].mxu0 %v306
      %v832 = vpop.f32.mrb[0].mxu0
      %v833 = vadd.f32 %v770, %v832
      %v834 = vpop.f32.mrb[0].mxu0
      %v835 = vadd.f32 %v772, %v834
      %v836 = vpop.f32.mrb[0].mxu0
      %v837 = vadd.f32 %v774, %v836
      %v838 = vpop.f32.mrb[0].mxu0
      %v839 = vadd.f32 %v776, %v838
      %840 = vdwg.mxu0
      %v841 = vpack.c.bf16 %v817, %v813
      %v842 = vpack.c.bf16 %v819, %v815
      %v843 = vpack.c.bf16 %v827, %v823
      %v844 = vpack.c.bf16 %v829, %v825
      %v845 = vpack.c.bf16 %v837, %v833
      %v846 = vpack.c.bf16 %v839, %v835
      %v853 = vunpack.c.l.b16 %v841
      %v854 = vunpack.c.l.b16 %v842
      %v855 = vunpack.c.h.b16 %v841
      %v856 = vunpack.c.h.b16 %v842
      %v857 = vunpack.c.l.b16 %v843
      %v858 = vunpack.c.l.b16 %v844
      %v859 = vunpack.c.h.b16 %v843
      %v860 = vunpack.c.h.b16 %v844
      %v861 = vunpack.c.l.b16 %v845
      %v862 = vunpack.c.l.b16 %v846
      %v863 = vunpack.c.h.b16 %v845
      %v864 = vunpack.c.h.b16 %v846
      %v865 = vpack.c.b16 %v854, %v853
      %v866 = vpack.c.b16 %v856, %v855
      %v867 = vpack.c.b16 %v858, %v857
      %v868 = vpack.c.b16 %v860, %v859
      %v869 = vpack.c.b16 %v862, %v861
      %v870 = vpack.c.b16 %v864, %v863
      %877 = vst [vmem:[%s115] sm:$0xff] %v865
      %878 = vst [vmem:[%s115 + $0x8] sm:$0xff] %v866
      %879 = vst [vmem:[%s115 + $0x10] sm:$0xff] %v867
      %880 = vst [vmem:[%s115 + $0x18] sm:$0xff] %v868
      %881 = vst [vmem:[%s115 + $0x20] sm:$0xff] %v869
      %882 = vst [vmem:[%s115 + $0x28] sm:$0xff] %v870
      %s883 = sadd.s32 %s17, %s18
      %s884 = smul.u32 6, %s883
      %p885 = scmp.lt.s32.totalorder %s884, 11
      %s886 = scalar_select %p885, %s884, 11
      %s887 = smul.addr %s886, 2
      %s888 = smul.addr %s887, 4
      %s889 = scalar_lea.vmem %s2, %s888
      // Predicated region
      $region101: #{generator_forward.63} parent=23 // pred_check
        %p890 = pneg %p66
      $region102: #{generator_forward.63} parent=23 // pred_check_branch
        %892 = sbr.rel (%p890) target = $region104
      $region103: #{generator_forward.63} parent=23 // pred_region
        %s893 = sadd.s32 %s17, %s18
        %s894 = smul.u32 6, %s893
      $region104: #{generator_forward.63} parent=23 // pred_fallthru
        _
    $region24: #{generator_forward.63} parent=5 // pred_fallthru
      _
    %p895 = scmp.le.s32.totalorder 2, %s8
    // Predicated region
    $region105: #{generator_forward.63} parent=5 // pred_check
      %p896 = pneg %p895
    $region106: #{generator_forward.63} parent=5 // pred_check_branch
      %898 = sbr.rel (%p896) target = $region108
    $region107: #{generator_forward.63} parent=5 // pred_region
      %s899 = ssub.s32 %s8, 2
      // Predicated region
      $region109: #{generator_forward.63} parent=107 // pred_check
        %p900 = pneg %p72
      $region110: #{generator_forward.63} parent=107 // pred_check_branch
        %902 = sbr.rel (%p900) target = $region112
      $region111: #{generator_forward.63} parent=107 // pred_region
        %s903 = sadd.s32 %s19, %s20
        %s904 = smul.u32 6, %s903
        %p905 = scmp.lt.s32.totalorder %s904, 11
        %s906 = scalar_select %p905, %s904, 11
        %s907 = smul.addr %s906, 2
        %s908 = smul.addr %s907, 4
        %s909 = scalar_lea.vmem %s2, %s908
      $region112: #{generator_forward.63} parent=107 // pred_fallthru
        _
    $region108: #{generator_forward.63} parent=5 // pred_fallthru
      _
  $region6: #{generator_forward.63} parent=0 // loop_footer
    %s12 = sadd.s32 1, %s8
  $region7: #{generator_forward.63} parent=0 // loop_footer_branch
    %7 = sbr.rel target = $region3
  $region8: #{generator_forward.63} parent=0 // loop_exit
    _
  %910 = vsyncmov [#allocation3]
  %s911 = vpop.sfrf %910
  %p912 = scmp.eq.s32.totalorder %s911, 0
  %p913 = pneg %p912
  %915 = shalt.err (%p913)
  %s916 = scalar_lea.sflag [#allocation3], 1
  %917 = vsyncmov %s916
  %s918 = vpop.sfrf %917
  %p919 = scmp.eq.s32.totalorder %s918, 0
  %p920 = pneg %p919
  %922 = shalt.err (%p920)

// kernel: generator_forward.64
$region0: #{generator_forward.64}
  #allocation0 [shape = 'u32[]', space=smem, size = 0x4, offset = 0x4, fixed_abs, tag = 'smem constant byte address 0x4 - core index']
  #allocation1 [shape = 'u32[144,128]{1,0:T(1,128)}', space=vmem, size = 0x12000, scoped, tag = 'internal scratch']
  %s0 = inlined_call_operand.vmem [shape: bf16[2,64,64], index: 0, kind: input, shape index: {}]
  %s1 = inlined_call_operand.vmem [shape: bf16[2,64,64], index: 1, kind: output, shape index: {}]
  %s2 = sld [smem:[#allocation0]]
  $region37: #{generator_forward.64} parent=0
    _
  %s4 = ssub.s32 1, %s2
  %s5 = scalar_select 0, %s4, %s2
  loop: start=0, step=1, limit=4
  $region2: #{generator_forward.64} parent=0 // loop_pre_header
    _
  $region3: #{generator_forward.64} parent=0 // loop_header
    %s7 = sphi 0, %s11
    %p8 = scmp.ge.s32.totalorder %s7, 4
    %s17 = sphi 0, %s19
    %s20 = sphi 0, %s17
    %s21 = sphi 0, %s20
    %s37 = sphi 0, %s21
    %s43 = sphi 0, %s45
    %s46 = sphi 0, %s43
    %s47 = sphi 0, %s46
    %s63 = sphi 0, %s47
  $region4: #{generator_forward.64} parent=0 // loop_header_branch
    %10 = sbr.rel (%p8) target = $region8
  $region5: #{generator_forward.64} parent=0 // loop_body
    %s12 = ssub.s32 %s7, 1
    %s13 = ssub.s32 %s7, 2
    %s14 = sadd.s32 %s7, 1
    %s15 = ssub.s32 %s7, %s14
    %p16 = scmp.eq.s32.totalorder %s15, 0
    %s18 = sadd.s32 %s17, 1
    %s19 = scalar_select %p16, %s17, %s18
    %p22 = pneg %p16
    %p23 = scmp.eq.s32.totalorder %s7, 1
    %p24 = por %p22, %p23
    %p25 = scmp.ne.s32.totalorder %s17, %s20
    %p26 = scmp.eq.s32.totalorder %s7, 0
    %p27 = por %p25, %p26
    %p28 = scmp.ne.s32.totalorder %s17, %s20
    %p29 = scmp.eq.s32.totalorder %s12, 1
    %p30 = por %p28, %p29
    %p31 = scmp.ne.s32.totalorder %s20, %s21
    %p32 = scmp.eq.s32.totalorder %s12, 0
    %p33 = por %p31, %p32
    %p34 = scmp.ne.s32.totalorder %s20, %s21
    %p35 = scmp.eq.s32.totalorder %s13, 1
    %p36 = por %p34, %p35
    %p38 = scmp.ne.s32.totalorder %s21, %s37
    %p39 = scmp.eq.s32.totalorder %s13, 0
    %p40 = por %p38, %p39
    %s41 = ssub.s32 %s7, %s14
    %p42 = scmp.eq.s32.totalorder %s41, 0
    %s44 = sadd.s32 %s43, 1
    %s45 = scalar_select %p42, %s43, %s44
    %p48 = pneg %p42
    %p49 = scmp.eq.s32.totalorder %s7, 1
    %p50 = por %p48, %p49
    %p51 = scmp.ne.s32.totalorder %s43, %s46
    %p52 = scmp.eq.s32.totalorder %s7, 0
    %p53 = por %p51, %p52
    %p54 = scmp.ne.s32.totalorder %s43, %s46
    %p55 = scmp.eq.s32.totalorder %s12, 1
    %p56 = por %p54, %p55
    %p57 = scmp.ne.s32.totalorder %s46, %s47
    %p58 = scmp.eq.s32.totalorder %s12, 0
    %p59 = por %p57, %p58
    %p60 = scmp.ne.s32.totalorder %s46, %s47
    %p61 = scmp.eq.s32.totalorder %s13, 1
    %p62 = por %p60, %p61
    %p64 = scmp.ne.s32.totalorder %s47, %s63
    %p65 = scmp.eq.s32.totalorder %s13, 0
    %p66 = por %p64, %p65
    %p67 = scmp.le.s32.totalorder 1, %s7
    %p68 = scmp.lt.s32.totalorder %s7, 3
    %p69 = pnand %p67, %p68
    %p70 = pneg %p69
    // Predicated region
    $region9: #{generator_forward.64} parent=5 // pred_check
      _
    $region10: #{generator_forward.64} parent=5 // pred_check_branch
      %72 = sbr.rel (%p69) target = $region12
    $region11: #{generator_forward.64} parent=5 // pred_region
      %s73 = ssub.s32 %s7, 1
    $region12: #{generator_forward.64} parent=5 // pred_fallthru
      _
    %p74 = scmp.lt.s32.totalorder %s7, 2
    // Predicated region
    $region13: #{generator_forward.64} parent=5 // pred_check
      %p75 = pneg %p74
    $region14: #{generator_forward.64} parent=5 // pred_check_branch
      %77 = sbr.rel (%p75) target = $region16
    $region15: #{generator_forward.64} parent=5 // pred_region
      // Predicated region
      $region17: #{generator_forward.64} parent=15 // pred_check
        %p78 = pneg %p27
      $region18: #{generator_forward.64} parent=15 // pred_check_branch
        %80 = sbr.rel (%p78) target = $region20
      $region19: #{generator_forward.64} parent=15 // pred_region
        %p81 = scmp.lt.s32.totalorder %s7, 1
        %s82 = scalar_select %p81, %s7, 1
        %s83 = smul.addr %s82, 8
        %s84 = smul.addr %s83, 4
        %s85 = scalar_lea.vmem %s0, %s84
      $region20: #{generator_forward.64} parent=15 // pred_fallthru
        _
    $region16: #{generator_forward.64} parent=5 // pred_fallthru
      _
    %p86 = scmp.le.s32.totalorder 1, %s7
    %p87 = scmp.lt.s32.totalorder %s7, 3
    %p88 = pnand %p86, %p87
    %p89 = pneg %p88
    // Predicated region
    $region21: #{generator_forward.64} parent=5 // pred_check
      _
    $region22: #{generator_forward.64} parent=5 // pred_check_branch
      %91 = sbr.rel (%p88) target = $region24
    $region23: #{generator_forward.64} parent=5 // pred_region
      %s92 = ssub.s32 %s7, 1
      %p93 = scmp.lt.s32.totalorder %s12, 1
      %s94 = scalar_select %p93, %s12, 1
      %s95 = smul.addr %s94, 8
      %s96 = smul.addr %s95, 4
      %s97 = scalar_lea.vmem %s0, %s96
      %p98 = pneg %p33
      %p99 = pneg %p30
      %p100 = pneg %p59
      %p101 = pneg %p56
      %p102 = scmp.lt.s32.totalorder %s12, 1
      %s103 = scalar_select %p102, %s12, 1
      %s104 = smul.addr %s103, 8
      %s105 = smul.addr %s104, 4
      %s106 = scalar_lea.vmem %s1, %s105
      %p107 = scmp.lt.s32.totalorder %s12, 1
      %s108 = scalar_select %p107, %s12, 1
      %s109 = smul.addr %s108, 8
      %s110 = smul.addr %s109, 4
      %s111 = scalar_lea.vmem %s0, %s110
      %p112 = scmp.lt.s32.totalorder %s12, 1
      %s113 = scalar_select %p112, %s12, 1
      %s114 = smul.addr %s113, 8
      %s115 = smul.addr %s114, 4
      %s116 = scalar_lea.vmem %s1, %s115
      %v117 = vld [vmem:[%s111] sm:$0xf]
      %v118 = vld [vmem:[%s111 + $0x4] sm:$0xf]
      %v119 = vld [vmem:[%s111 + $0x8] sm:$0xf]
      %v120 = vld [vmem:[%s111 + $0xc] sm:$0xf]
      %v121 = vld [vmem:[%s111 + $0x10] sm:$0xf]
      %v122 = vld [vmem:[%s111 + $0x14] sm:$0xf]
      %v123 = vld [vmem:[%s111 + $0x18] sm:$0xf]
      %v124 = vld [vmem:[%s111 + $0x1c] sm:$0xf]
      %v125 = vunpack.c.l.bf16 %v117
      %v126 = vunpack.c.l.bf16 %v118
      %v127 = vunpack.c.l.bf16 %v119
      %v128 = vunpack.c.l.bf16 %v120
      %v129 = vunpack.c.l.bf16 %v121
      %v130 = vunpack.c.l.bf16 %v122
      %v131 = vunpack.c.l.bf16 %v123
      %v132 = vunpack.c.l.bf16 %v124
      %vm133 = vcmask 523264
      %v134 = vsel %vm133, %v125, 0.0
      %v135 = vsel %vm133, %v126, 0.0
      %v136 = vadd.f32 %v134, %v135
      %v137 = vsel %vm133, %v127, 0.0
      %v138 = vadd.f32 %v136, %v137
      %v139 = vsel %vm133, %v128, 0.0
      %v140 = vadd.f32 %v138, %v139
      %v141 = vsel %vm133, %v129, 0.0
      %v142 = vadd.f32 %v140, %v141
      %v143 = vsel %vm133, %v130, 0.0
      %v144 = vadd.f32 %v142, %v143
      %v145 = vsel %vm133, %v131, 0.0
      %v146 = vadd.f32 %v144, %v145
      %v147 = vsel %vm133, %v132, 0.0
      %v148 = vadd.f32 %v146, %v147
      %v149 = vrot.slane %v148, 4
      %v150 = vadd.f32 %v148, %v149
      %v151 = vrot.slane %v150, 2
      %v152 = vadd.f32 %v150, %v151
      %v153 = vrot.slane %v152, 1
      %v154 = vadd.f32 %v152, %v153
      %v155 = vrcp.pop 64.0
      %v156 = vmul.f32 %v154, %v155
      %v157 = vsub.f32 %v125, %v156
      %v158 = vsub.f32 %v126, %v156
      %v159 = vsub.f32 %v127, %v156
      %v160 = vsub.f32 %v128, %v156
      %v161 = vsub.f32 %v129, %v156
      %v162 = vsub.f32 %v130, %v156
      %v163 = vsub.f32 %v131, %v156
      %v164 = vsub.f32 %v132, %v156
      %v165 = vmul.f32 %v157, %v157
      %v166 = vmul.f32 %v158, %v158
      %v167 = vmul.f32 %v159, %v159
      %v168 = vmul.f32 %v160, %v160
      %v169 = vmul.f32 %v161, %v161
      %v170 = vmul.f32 %v162, %v162
      %v171 = vmul.f32 %v163, %v163
      %v172 = vmul.f32 %v164, %v164
      %v173 = vsel %vm133, %v165, 0.0
      %v174 = vsel %vm133, %v166, 0.0
      %v175 = vadd.f32 %v173, %v174
      %v176 = vsel %vm133, %v167, 0.0
      %v177 = vadd.f32 %v175, %v176
      %v178 = vsel %vm133, %v168, 0.0
      %v179 = vadd.f32 %v177, %v178
      %v180 = vsel %vm133, %v169, 0.0
      %v181 = vadd.f32 %v179, %v180
      %v182 = vsel %vm133, %v170, 0.0
      %v183 = vadd.f32 %v181, %v182
      %v184 = vsel %vm133, %v171, 0.0
      %v185 = vadd.f32 %v183, %v184
      %v186 = vsel %vm133, %v172, 0.0
      %v187 = vadd.f32 %v185, %v186
      %v188 = vrot.slane %v187, 4
      %v189 = vadd.f32 %v187, %v188
      %v190 = vrot.slane %v189, 2
      %v191 = vadd.f32 %v189, %v190
      %v192 = vrot.slane %v191, 1
      %v193 = vadd.f32 %v191, %v192
      %v194 = vmul.f32 %v193, %v155
      %v195 = vadd.f32 %v194, 1e-05
      %v196 = vrsqrt.pop %v195
      %v197 = vmul.f32 %v157, %v196
      %v198 = vmul.f32 %v158, %v196
      %v199 = vmul.f32 %v159, %v196
      %v200 = vmul.f32 %v160, %v196
      %v201 = vmul.f32 %v161, %v196
      %v202 = vmul.f32 %v162, %v196
      %v203 = vmul.f32 %v163, %v196
      %v204 = vmul.f32 %v164, %v196
      %v205 = vmax.f32 %v197, 0.0
      %v206 = vmax.f32 %v198, 0.0
      %v207 = vmax.f32 %v199, 0.0
      %v208 = vmax.f32 %v200, 0.0
      %v209 = vmax.f32 %v201, 0.0
      %v210 = vmax.f32 %v202, 0.0
      %v211 = vmax.f32 %v203, 0.0
      %v212 = vmax.f32 %v204, 0.0
      %v213 = vpack.c.bf16 %v206, %v205
      %v214 = vpack.c.bf16 %v208, %v207
      %v215 = vpack.c.bf16 %v210, %v209
      %v216 = vpack.c.bf16 %v212, %v211
      %v221 = vunpack.c.l.b16 %v213
      %v222 = vunpack.c.h.b16 %v213
      %v223 = vunpack.c.l.b16 %v214
      %v224 = vunpack.c.h.b16 %v214
      %v225 = vunpack.c.l.b16 %v215
      %v226 = vunpack.c.h.b16 %v215
      %v227 = vunpack.c.l.b16 %v216
      %v228 = vunpack.c.h.b16 %v216
      %v229 = vpack.c.b16 %v221, %v221
      %v230 = vpack.c.b16 %v222, %v222
      %v231 = vpack.c.b16 %v223, %v223
      %v232 = vpack.c.b16 %v224, %v224
      %v233 = vpack.c.b16 %v225, %v225
      %v234 = vpack.c.b16 %v226, %v226
      %v235 = vpack.c.b16 %v227, %v227
      %v236 = vpack.c.b16 %v228, %v228
      %vm245 = vcmask 519168
      %246 = vst.msk [vmem:[%s116] sm:$0xf] %vm245, %v229
      %247 = vst.msk [vmem:[%s116 + $0x4] sm:$0xf] %vm245, %v230
      %248 = vst.msk [vmem:[%s116 + $0x8] sm:$0xf] %vm245, %v231
      %249 = vst.msk [vmem:[%s116 + $0xc] sm:$0xf] %vm245, %v232
      %250 = vst.msk [vmem:[%s116 + $0x10] sm:$0xf] %vm245, %v233
      %251 = vst.msk [vmem:[%s116 + $0x14] sm:$0xf] %vm245, %v234
      %252 = vst.msk [vmem:[%s116 + $0x18] sm:$0xf] %vm245, %v235
      %253 = vst.msk [vmem:[%s116 + $0x1c] sm:$0xf] %vm245, %v236
      %p254 = scmp.lt.s32.totalorder %s12, 1
      %s255 = scalar_select %p254, %s12, 1
      %s256 = smul.addr %s255, 8
      %s257 = smul.addr %s256, 4
      %s258 = scalar_lea.vmem %s1, %s257
      // Predicated region
      $region25: #{generator_forward.64} parent=23 // pred_check
        %p259 = pneg %p56
      $region26: #{generator_forward.64} parent=23 // pred_check_branch
        %261 = sbr.rel (%p259) target = $region28
      $region27: #{generator_forward.64} parent=23 // pred_region
        _
      $region28: #{generator_forward.64} parent=23 // pred_fallthru
        _
    $region24: #{generator_forward.64} parent=5 // pred_fallthru
      _
    %p262 = scmp.le.s32.totalorder 2, %s7
    // Predicated region
    $region29: #{generator_forward.64} parent=5 // pred_check
      %p263 = pneg %p262
    $region30: #{generator_forward.64} parent=5 // pred_check_branch
      %265 = sbr.rel (%p263) target = $region32
    $region31: #{generator_forward.64} parent=5 // pred_region
      %s266 = ssub.s32 %s7, 2
      // Predicated region
      $region33: #{generator_forward.64} parent=31 // pred_check
        %p267 = pneg %p62
      $region34: #{generator_forward.64} parent=31 // pred_check_branch
        %269 = sbr.rel (%p267) target = $region36
      $region35: #{generator_forward.64} parent=31 // pred_region
        %p270 = scmp.lt.s32.totalorder %s13, 1
        %s271 = scalar_select %p270, %s13, 1
        %s272 = smul.addr %s271, 8
        %s273 = smul.addr %s272, 4
        %s274 = scalar_lea.vmem %s1, %s273
      $region36: #{generator_forward.64} parent=31 // pred_fallthru
        _
    $region32: #{generator_forward.64} parent=5 // pred_fallthru
      _
  $region6: #{generator_forward.64} parent=0 // loop_footer
    %s11 = sadd.s32 1, %s7
  $region7: #{generator_forward.64} parent=0 // loop_footer_branch
    %6 = sbr.rel target = $region3
  $region8: #{generator_forward.64} parent=0 // loop_exit
    _

// kernel: generator_forward.65
$region0: #{generator_forward.65}
  #allocation0 [shape = 'u32[]', space=smem, size = 0x4, offset = 0x4, fixed_abs, tag = 'smem constant byte address 0x4 - core index']
  #allocation1 [shape = 'u32[144,128]{1,0:T(1,128)}', space=vmem, size = 0x12000, scoped, tag = 'internal scratch']
  #allocation2 [shape = 'bf16[2,128,128]{2,1,0:T(16,128)(2,1)}', space=vmem, size = 0x10000, scoped, tag = 'scratch operand']
  #allocation3 [shape = 's32[2]{0}', space=sflag, size = 0x8, scoped, tag = 'scratch operand']
  #allocation4 [shape = 's32[]', space=sflag, size = 0x4, offset = 0, fixed_abs, tag = 'sflag constant byte address 0x0 - dummy sync flag']
  #allocation5 [shape = 's32[]', space=sflag, size = 0x4, offset = 0, fixed_abs, tag = 'sflag constant byte address 0x0 - dummy sync flag']
  %s0 = inlined_call_operand.vmem [shape: bf16[240,128], index: 0, kind: input, shape index: {}]
  %s1 = inlined_call_operand.vmem [shape: bf16[512,128], index: 1, kind: input, shape index: {}]
  %s2 = inlined_call_operand.vmem [shape: bf16[224,128], index: 2, kind: output, shape index: {}]
  %s3 = sld [smem:[#allocation0]]
  $region113: #{generator_forward.65} parent=0
    _
  %s5 = ssub.s32 1, %s3
  %s6 = scalar_select 0, %s5, %s3
  loop: start=0, step=1, limit=4
  $region2: #{generator_forward.65} parent=0 // loop_pre_header
    _
  $region3: #{generator_forward.65} parent=0 // loop_header
    %s8 = sphi 0, %s12
    %p9 = scmp.ge.s32.totalorder %s8, 4
    %s15 = sphi 0, %s27
    %s16 = sphi 0, %s23
    %s17 = sphi 0, %s15
    %s18 = sphi 0, %s16
    %s19 = sphi 0, %s17
    %s20 = sphi 0, %s18
    %s28 = sphi 0, %s28
    %s30 = sphi 0, %s28
    %s31 = sphi 0, %s30
    %s45 = sphi 0, %s31
    %s53 = sphi 0, %s55
    %s56 = sphi 0, %s53
    %s57 = sphi 0, %s56
    %s73 = sphi 0, %s57
  $region4: #{generator_forward.65} parent=0 // loop_header_branch
    %11 = sbr.rel (%p9) target = $region8
  $region5: #{generator_forward.65} parent=0 // loop_body
    %s13 = ssub.s32 %s8, 1
    %s14 = ssub.s32 %s8, 2
    %s21 = sadd.s32 1, %s16
    %p22 = scmp.ge.s32.totalorder %s21, 1
    %s23 = scalar_select %p22, 0, %s21
    %s24 = sadd.s32 1, %s15
    %s25 = scalar_select %p22, %s24, %s15
    %p26 = scmp.ge.s32.totalorder %s25, 2
    %s27 = scalar_select %p26, 0, %s25
    %s29 = sadd.s32 %s28, 1
    %p32 = scmp.eq.s32.totalorder %s8, 1
    %p33 = scmp.ne.s32.totalorder %s28, %s30
    %p34 = scmp.eq.s32.totalorder %s8, 0
    %p35 = por %p33, %p34
    %p36 = scmp.ne.s32.totalorder %s28, %s30
    %p37 = scmp.eq.s32.totalorder %s13, 1
    %p38 = por %p36, %p37
    %p39 = scmp.ne.s32.totalorder %s30, %s31
    %p40 = scmp.eq.s32.totalorder %s13, 0
    %p41 = por %p39, %p40
    %p42 = scmp.ne.s32.totalorder %s30, %s31
    %p43 = scmp.eq.s32.totalorder %s14, 1
    %p44 = por %p42, %p43
    %p46 = scmp.ne.s32.totalorder %s31, %s45
    %p47 = scmp.eq.s32.totalorder %s14, 0
    %p48 = por %p46, %p47
    %s49 = sadd.s32 %s15, %s16
    %s50 = sadd.s32 %s27, %s23
    %s51 = ssub.s32 %s49, %s50
    %p52 = scmp.eq.s32.totalorder %s51, 0
    %s54 = sadd.s32 %s53, 1
    %s55 = scalar_select %p52, %s53, %s54
    %p58 = pneg %p52
    %p59 = scmp.eq.s32.totalorder %s8, 1
    %p60 = por %p58, %p59
    %p61 = scmp.ne.s32.totalorder %s53, %s56
    %p62 = scmp.eq.s32.totalorder %s8, 0
    %p63 = por %p61, %p62
    %p64 = scmp.ne.s32.totalorder %s53, %s56
    %p65 = scmp.eq.s32.totalorder %s13, 1
    %p66 = por %p64, %p65
    %p67 = scmp.ne.s32.totalorder %s56, %s57
    %p68 = scmp.eq.s32.totalorder %s13, 0
    %p69 = por %p67, %p68
    %p70 = scmp.ne.s32.totalorder %s56, %s57
    %p71 = scmp.eq.s32.totalorder %s14, 1
    %p72 = por %p70, %p71
    %p74 = scmp.ne.s32.totalorder %s57, %s73
    %p75 = scmp.eq.s32.totalorder %s14, 0
    %p76 = por %p74, %p75
    %p77 = scmp.le.s32.totalorder 1, %s8
    %p78 = scmp.lt.s32.totalorder %s8, 3
    %p79 = pnand %p77, %p78
    %p80 = pneg %p79
    // Predicated region
    $region9: #{generator_forward.65} parent=5 // pred_check
      _
    $region10: #{generator_forward.65} parent=5 // pred_check_branch
      %82 = sbr.rel (%p79) target = $region12
    $region11: #{generator_forward.65} parent=5 // pred_region
      %s83 = ssub.s32 %s8, 1
      // Predicated region
      $region13: #{generator_forward.65} parent=11 // pred_check
        %p84 = pneg %p41
      $region14: #{generator_forward.65} parent=11 // pred_check_branch
        %86 = sbr.rel (%p84) target = $region16
      $region15: #{generator_forward.65} parent=11 // pred_region
        _
      $region16: #{generator_forward.65} parent=11 // pred_fallthru
        _
    $region12: #{generator_forward.65} parent=5 // pred_fallthru
      _
    %p87 = scmp.lt.s32.totalorder %s8, 2
    // Predicated region
    $region17: #{generator_forward.65} parent=5 // pred_check
      %p88 = pneg %p87
    $region18: #{generator_forward.65} parent=5 // pred_check_branch
      %90 = sbr.rel (%p88) target = $region20
    $region19: #{generator_forward.65} parent=5 // pred_region
      _
    $region20: #{generator_forward.65} parent=5 // pred_fallthru
      _
    %p91 = scmp.le.s32.totalorder 1, %s8
    %p92 = scmp.lt.s32.totalorder %s8, 3
    %p93 = pnand %p91, %p92
    %p94 = pneg %p93
    // Predicated region
    $region21: #{generator_forward.65} parent=5 // pred_check
      _
    $region22: #{generator_forward.65} parent=5 // pred_check_branch
      %96 = sbr.rel (%p93) target = $region24
    $region23: #{generator_forward.65} parent=5 // pred_region
      %s97 = ssub.s32 %s8, 1
      %p98 = pneg %p41
      %p99 = pneg %p38
      %p100 = pneg %p69
      %p101 = pneg %p66
      %s102 = sadd.s32 %s17, %s18
      %s103 = smul.u32 14, %s102
      %p104 = scmp.lt.s32.totalorder %s103, 27
      %s105 = scalar_select %p104, %s103, 27
      %s106 = smul.addr %s105, 4
      %s107 = scalar_lea.vmem %s2, %s106
      %s108 = sadd.s32 %s17, %s18
      %s109 = smul.u32 14, %s108
      %p110 = scmp.lt.s32.totalorder %s109, 27
      %s111 = scalar_select %p110, %s109, 27
      %s112 = smul.addr %s111, 4
      %s113 = scalar_lea.vmem %s2, %s112
      %s114 = sadd.s32 %s17, %s18
      %s115 = smul.u32 14, %s114
      %s117 = sadd.s32 %s17, %s18
      %s118 = smul.u32 %s117, 112
      %p119 = scmp.lt.s32.totalorder %s18, 0
      %s120 = ssub.s32 0, %s18
      %s121 = scalar_select %p119, %s120, %s18
      %s122 = sand.u32 %s121, 1
      %s123 = ssub.s32 0, %s122
      %s124 = scalar_select %p119, %s123, %s122
      %p125 = scmp.ne.s32.totalorder %s124, 0
      %p126 = scmp.lt.s32.totalorder %s124, 0
      %p127 = pnand %p126, %p125
      %p128 = pneg %p127
      %s129 = sadd.s32 %s124, 2
      %s130 = scalar_select %p128, %s129, %s124
      %p131 = scmp.eq.s32.totalorder %s18, 0
      // Predicated region
      $region25: #{generator_forward.65} parent=23 // pred_check
        %p132 = pneg %p131
      $region26: #{generator_forward.65} parent=23 // pred_check_branch
        %134 = sbr.rel (%p132) target = $region28
      $region27: #{generator_forward.65} parent=23 // pred_region
        %s135 = sshra.s32 %s118, 3
        %s136 = sand.u32 %s118, 7
        %s137 = smul.addr %s135, 4
        %s138 = scalar_lea.vmem %s0, %s137
        %p140 = scmp.lt.u32.totalorder 64, 8
        %p141 = pneg %p140
        // Predicated region
        $region29: #{generator_forward.65} parent=27 // pred_check
          _
        $region30: #{generator_forward.65} parent=27 // pred_check_branch
          %143 = sbr.rel (%p140) target = $region32
        $region31: #{generator_forward.65} parent=27 // pred_region
          %s158 = sand.u32 64, 7
          %p159 = scmp.eq.s32.totalorder %s158, 0
          // Predicated region
          $region44: #{generator_forward.65} parent=31 // pred_check
            %p160 = pneg %p159
          $region45: #{generator_forward.65} parent=31 // pred_check_branch
            %162 = sbr.rel (%p160) target = $region47
          $region46: #{generator_forward.65} parent=31 // pred_region
            loop: start=0, step=1, limit=1
            $region48: #{generator_forward.65} parent=46 // loop_pre_header
              _
            $region49: #{generator_forward.65} parent=46 // loop_header
              %s164 = sphi 0, %s168
              %p165 = scmp.ge.s32.totalorder %s164, 1
              %s169 = sphi %s138, %s138
              %s170 = sphi [#allocation2], [#allocation2]
            $region50: #{generator_forward.65} parent=46 // loop_header_branch
              %167 = sbr.rel (%p165) target = $region54
            $region51: #{generator_forward.65} parent=46 // loop_body
              %v171 = vld [vmem:[%s169] sm:$0xff]
              %172 = vst [vmem:[%s170] sm:$0xff] %v171
              %v173 = vld [vmem:[%s169 + $0x8] sm:$0xff]
              %174 = vst [vmem:[%s170 + $0x8] sm:$0xff] %v173
              %v175 = vld [vmem:[%s169 + $0x10] sm:$0xff]
              %176 = vst [vmem:[%s170 + $0x10] sm:$0xff] %v175
              %v177 = vld [vmem:[%s169 + $0x18] sm:$0xff]
              %178 = vst [vmem:[%s170 + $0x18] sm:$0xff] %v177
              %v179 = vld [vmem:[%s169 + $0x20] sm:$0xff]
              %180 = vst [vmem:[%s170 + $0x20] sm:$0xff] %v179
              %v181 = vld [vmem:[%s169 + $0x28] sm:$0xff]
              %182 = vst [vmem:[%s170 + $0x28] sm:$0xff] %v181
              %v183 = vld [vmem:[%s169 + $0x30] sm:$0xff]
              %184 = vst [vmem:[%s170 + $0x30] sm:$0xff] %v183
              %v185 = vld [vmem:[%s169 + $0x38] sm:$0xff]
              %186 = vst [vmem:[%s170 + $0x38] sm:$0xff] %v185
            $region52: #{generator_forward.65} parent=46 // loop_footer
              %s168 = sadd.s32 1, %s164
            $region53: #{generator_forward.65} parent=46 // loop_footer_branch
              %163 = sbr.rel target = $region49
            $region54: #{generator_forward.65} parent=46 // loop_exit
              _
          $region47: #{generator_forward.65} parent=31 // pred_fallthru
            _
          %p187 = pneg %p159
          // Predicated region
          $region55: #{generator_forward.65} parent=31 // pred_check
            _
          $region56: #{generator_forward.65} parent=31 // pred_check_branch
            %189 = sbr.rel (%p159) target = $region58
          $region57: #{generator_forward.65} parent=31 // pred_region
            %s190 = sand.u32 64, 7
          $region58: #{generator_forward.65} parent=31 // pred_fallthru
            _
        $region32: #{generator_forward.65} parent=27 // pred_fallthru
          _
        // Predicated region
        $region33: #{generator_forward.65} parent=27 // pred_check
          %p144 = pneg %p140
        $region34: #{generator_forward.65} parent=27 // pred_check_branch
          %146 = sbr.rel (%p144) target = $region36
        $region35: #{generator_forward.65} parent=27 // pred_region
          %s147 = sshllo.u32 0, 64
          loop: start=0, step=1, limit=1
          $region37: #{generator_forward.65} parent=35 // loop_pre_header
            _
          $region38: #{generator_forward.65} parent=35 // loop_header
            %s149 = sphi 0, %s153
            %p150 = scmp.ge.s32.totalorder %s149, 1
            %s154 = sphi %s138, %s138
            %s155 = sphi [#allocation2], [#allocation2]
          $region39: #{generator_forward.65} parent=35 // loop_header_branch
            %152 = sbr.rel (%p150) target = $region43
          $region40: #{generator_forward.65} parent=35 // loop_body
            %v156 = vld [vmem:[%s154] sm:%s147]
            %157 = vst [vmem:[%s155] sm:%s147] %v156
          $region41: #{generator_forward.65} parent=35 // loop_footer
            %s153 = sadd.s32 1, %s149
          $region42: #{generator_forward.65} parent=35 // loop_footer_branch
            %148 = sbr.rel target = $region38
          $region43: #{generator_forward.65} parent=35 // loop_exit
            _
        $region36: #{generator_forward.65} parent=27 // pred_fallthru
          _
        // Predicated region
        $region59: #{generator_forward.65} parent=27 // pred_check
          _
        $region60: #{generator_forward.65} parent=27 // pred_check_branch
          %193 = sbr.rel (0) target = $region62
        $region61: #{generator_forward.65} parent=27 // pred_region
          %194 = vsyncadd [#allocation3], 1024
        $region62: #{generator_forward.65} parent=27 // pred_fallthru
          _
      $region28: #{generator_forward.65} parent=23 // pred_fallthru
        _
      %s195 = sadd.s32 %s18, 1
      %p196 = scmp.lt.s32.totalorder %s195, 1
      // Predicated region
      $region63: #{generator_forward.65} parent=23 // pred_check
        %p197 = pneg %p196
      $region64: #{generator_forward.65} parent=23 // pred_check_branch
        %199 = sbr.rel (%p197) target = $region66
      $region65: #{generator_forward.65} parent=23 // pred_region
        %s200 = sadd.s32 %s118, 112
        %s201 = ssub.s32 1, %s130
        %s202 = sshra.s32 %s200, 3
        %s203 = sand.u32 %s200, 7
        %s204 = smul.addr %s202, 4
        %s205 = scalar_lea.vmem %s0, %s204
        %s206 = smul.u32 %s201, 8
        %s207 = smul.addr %s206, 8
        %s208 = scalar_lea.vmem [#allocation2], %s207
        %s209 = scalar_lea.sflag [#allocation3], %s201
        %p211 = scmp.lt.u32.totalorder 64, 8
        %p212 = pneg %p211
        // Predicated region
        $region67: #{generator_forward.65} parent=65 // pred_check
          _
        $region68: #{generator_forward.65} parent=65 // pred_check_branch
          %214 = sbr.rel (%p211) target = $region70
        $region69: #{generator_forward.65} parent=65 // pred_region
          %s229 = sand.u32 64, 7
          %p230 = scmp.eq.s32.totalorder %s229, 0
          // Predicated region
          $region82: #{generator_forward.65} parent=69 // pred_check
            %p231 = pneg %p230
          $region83: #{generator_forward.65} parent=69 // pred_check_branch
            %233 = sbr.rel (%p231) target = $region85
          $region84: #{generator_forward.65} parent=69 // pred_region
            loop: start=0, step=1, limit=1
            $region86: #{generator_forward.65} parent=84 // loop_pre_header
              _
            $region87: #{generator_forward.65} parent=84 // loop_header
              %s235 = sphi 0, %s239
              %p236 = scmp.ge.s32.totalorder %s235, 1
              %s240 = sphi %s205, %s205
              %s241 = sphi %s208, %s208
            $region88: #{generator_forward.65} parent=84 // loop_header_branch
              %238 = sbr.rel (%p236) target = $region92
            $region89: #{generator_forward.65} parent=84 // loop_body
              %v242 = vld [vmem:[%s240] sm:$0xff]
              %243 = vst [vmem:[%s241] sm:$0xff] %v242
              %v244 = vld [vmem:[%s240 + $0x8] sm:$0xff]
              %245 = vst [vmem:[%s241 + $0x8] sm:$0xff] %v244
              %v246 = vld [vmem:[%s240 + $0x10] sm:$0xff]
              %247 = vst [vmem:[%s241 + $0x10] sm:$0xff] %v246
              %v248 = vld [vmem:[%s240 + $0x18] sm:$0xff]
              %249 = vst [vmem:[%s241 + $0x18] sm:$0xff] %v248
              %v250 = vld [vmem:[%s240 + $0x20] sm:$0xff]
              %251 = vst [vmem:[%s241 + $0x20] sm:$0xff] %v250
              %v252 = vld [vmem:[%s240 + $0x28] sm:$0xff]
              %253 = vst [vmem:[%s241 + $0x28] sm:$0xff] %v252
              %v254 = vld [vmem:[%s240 + $0x30] sm:$0xff]
              %255 = vst [vmem:[%s241 + $0x30] sm:$0xff] %v254
              %v256 = vld [vmem:[%s240 + $0x38] sm:$0xff]
              %257 = vst [vmem:[%s241 + $0x38] sm:$0xff] %v256
            $region90: #{generator_forward.65} parent=84 // loop_footer
              %s239 = sadd.s32 1, %s235
            $region91: #{generator_forward.65} parent=84 // loop_footer_branch
              %234 = sbr.rel target = $region87
            $region92: #{generator_forward.65} parent=84 // loop_exit
              _
          $region85: #{generator_forward.65} parent=69 // pred_fallthru
            _
          %p258 = pneg %p230
          // Predicated region
          $region93: #{generator_forward.65} parent=69 // pred_check
            _
          $region94: #{generator_forward.65} parent=69 // pred_check_branch
            %260 = sbr.rel (%p230) target = $region96
          $region95: #{generator_forward.65} parent=69 // pred_region
            %s261 = sand.u32 64, 7
          $region96: #{generator_forward.65} parent=69 // pred_fallthru
            _
        $region70: #{generator_forward.65} parent=65 // pred_fallthru
          _
        // Predicated region
        $region71: #{generator_forward.65} parent=65 // pred_check
          %p215 = pneg %p211
        $region72: #{generator_forward.65} parent=65 // pred_check_branch
          %217 = sbr.rel (%p215) target = $region74
        $region73: #{generator_forward.65} parent=65 // pred_region
          %s218 = sshllo.u32 0, 64
          loop: start=0, step=1, limit=1
          $region75: #{generator_forward.65} parent=73 // loop_pre_header
            _
          $region76: #{generator_forward.65} parent=73 // loop_header
            %s220 = sphi 0, %s224
            %p221 = scmp.ge.s32.totalorder %s220, 1
            %s225 = sphi %s205, %s205
            %s226 = sphi %s208, %s208
          $region77: #{generator_forward.65} parent=73 // loop_header_branch
            %223 = sbr.rel (%p221) target = $region81
          $region78: #{generator_forward.65} parent=73 // loop_body
            %v227 = vld [vmem:[%s225] sm:%s218]
            %228 = vst [vmem:[%s226] sm:%s218] %v227
          $region79: #{generator_forward.65} parent=73 // loop_footer
            %s224 = sadd.s32 1, %s220
          $region80: #{generator_forward.65} parent=73 // loop_footer_branch
            %219 = sbr.rel target = $region76
          $region81: #{generator_forward.65} parent=73 // loop_exit
            _
        $region74: #{generator_forward.65} parent=65 // pred_fallthru
          _
        // Predicated region
        $region97: #{generator_forward.65} parent=65 // pred_check
          _
        $region98: #{generator_forward.65} parent=65 // pred_check_branch
          %264 = sbr.rel (0) target = $region100
        $region99: #{generator_forward.65} parent=65 // pred_region
          %265 = vsyncadd %s209, 1024
        $region100: #{generator_forward.65} parent=65 // pred_fallthru
          _
      $region66: #{generator_forward.65} parent=23 // pred_fallthru
        _
      %s266 = smul.u32 %s130, 8
      %s267 = smul.addr %s266, 8
      %s268 = scalar_lea.vmem [#allocation2], %s267
      %s269 = scalar_lea.sflag [#allocation3], %s130
      %s270 = smul.u32 4, 16
      %s271 = smul.u32 %s270, 1
      %s272 = sshll.u32 %s271, 4
      %273 = dma.done %s269, %s272
      %v274 = vld [vmem:[%s268] sm:$0xff]
      %v275 = vld [vmem:[%s268 + $0x8] sm:$0xff]
      %v276 = vld [vmem:[%s268 + $0x10] sm:$0xff]
      %v277 = vld [vmem:[%s268 + $0x18] sm:$0xff]
      %v278 = vld [vmem:[%s268 + $0x20] sm:$0xff]
      %v279 = vld [vmem:[%s268 + $0x28] sm:$0xff]
      %v280 = vld [vmem:[%s268 + $0x30] sm:$0xff]
      %v281 = vld [vmem:[%s268 + $0x38] sm:$0xff]
      %vm282 = vsmask.f32 7424
      %v284 = vshrl.u32 %v274, 16
      %v286 = vshll.u32 %v274, 16
      %v288 = vrot.slane %v286, 1
      %v289 = vor.u32 %v284, %v288
      %v291 = vshll.u32 %v275, 16
      %v293 = vrot.slane %v291, 1
      %v294 = vsel %vm282, %v289, %v293
      %v295 = vshrl.u32 %v275, 16
      %v297 = vor.u32 %v295, %v293
      %v299 = vshll.u32 %v276, 16
      %v301 = vrot.slane %v299, 1
      %v302 = vsel %vm282, %v297, %v301
      %v303 = vshrl.u32 %v276, 16
      %v305 = vor.u32 %v303, %v301
      %v307 = vshll.u32 %v277, 16
      %v309 = vrot.slane %v307, 1
      %v310 = vsel %vm282, %v305, %v309
      %v311 = vshrl.u32 %v277, 16
      %v313 = vor.u32 %v311, %v309
      %v315 = vshll.u32 %v278, 16
      %v317 = vrot.slane %v315, 1
      %v318 = vsel %vm282, %v313, %v317
      %v319 = vshrl.u32 %v278, 16
      %v321 = vor.u32 %v319, %v317
      %v323 = vshll.u32 %v279, 16
      %v325 = vrot.slane %v323, 1
      %v326 = vsel %vm282, %v321, %v325
      %v327 = vshrl.u32 %v279, 16
      %v329 = vor.u32 %v327, %v325
      %v331 = vshll.u32 %v280, 16
      %v333 = vrot.slane %v331, 1
      %v334 = vsel %vm282, %v329, %v333
      %v335 = vshrl.u32 %v280, 16
      %v337 = vor.u32 %v335, %v333
      %v339 = vshll.u32 %v281, 16
      %v341 = vrot.slane %v339, 1
      %v342 = vsel %vm282, %v337, %v341
      %vm358 = vcmask 1042432
      %v359 = vrot.slane %v274, 5
      %v360 = vrot.slane %v275, 5
      %v361 = vsel %vm358, %v359, %v360
      %v362 = vrot.slane %v276, 5
      %v363 = vsel %vm358, %v360, %v362
      %v364 = vrot.slane %v277, 5
      %v365 = vsel %vm358, %v362, %v364
      %v366 = vrot.slane %v278, 5
      %v367 = vsel %vm358, %v364, %v366
      %v368 = vrot.slane %v279, 5
      %v369 = vsel %vm358, %v366, %v368
      %v370 = vrot.slane %v280, 5
      %v371 = vsel %vm358, %v368, %v370
      %v372 = vrot.slane %v281, 5
      %v373 = vsel %vm358, %v370, %v372
      %vm381 = vsmask.f32 2304
      %v382 = vrot.slane %v284, 5
      %v383 = vrot.slane %v286, 6
      %v384 = vor.u32 %v382, %v383
      %v385 = vrot.slane %v295, 5
      %v386 = vrot.slane %v291, 6
      %v387 = vor.u32 %v385, %v386
      %v388 = vsel %vm381, %v384, %v387
      %v389 = vrot.slane %v303, 5
      %v390 = vrot.slane %v299, 6
      %v391 = vor.u32 %v389, %v390
      %v392 = vsel %vm381, %v387, %v391
      %v393 = vrot.slane %v311, 5
      %v394 = vrot.slane %v307, 6
      %v395 = vor.u32 %v393, %v394
      %v396 = vsel %vm381, %v391, %v395
      %v397 = vrot.slane %v319, 5
      %v398 = vrot.slane %v315, 6
      %v399 = vor.u32 %v397, %v398
      %v400 = vsel %vm381, %v395, %v399
      %v401 = vrot.slane %v327, 5
      %v402 = vrot.slane %v323, 6
      %v403 = vor.u32 %v401, %v402
      %v404 = vsel %vm381, %v399, %v403
      %v405 = vrot.slane %v335, 5
      %v406 = vrot.slane %v331, 6
      %v407 = vor.u32 %v405, %v406
      %v408 = vsel %vm381, %v403, %v407
      %v409 = vshrl.u32 %v281, 16
      %v411 = vrot.slane %v409, 5
      %v412 = vrot.slane %v339, 6
      %v413 = vor.u32 %v411, %v412
      %v414 = vsel %vm381, %v407, %v413
      %v422 = vld [vmem:[%s1] sm:$0xf]
      %v423 = vld [vmem:[%s1 + $0x4] sm:$0xf]
      %v424 = vld [vmem:[%s1 + $0x8] sm:$0xf]
      %v425 = vld [vmem:[%s1 + $0xc] sm:$0xf]
      %v426 = vld [vmem:[%s1 + $0x10] sm:$0xf]
      %v427 = vld [vmem:[%s1 + $0x14] sm:$0xf]
      %v428 = vld [vmem:[%s1 + $0x18] sm:$0xf]
      %v429 = vld [vmem:[%s1 + $0x1c] sm:$0xf]
      %v430 = vld [vmem:[%s1 + $0x20] sm:$0xf]
      %v431 = vld [vmem:[%s1 + $0x24] sm:$0xf]
      %v432 = vld [vmem:[%s1 + $0x28] sm:$0xf]
      %v433 = vld [vmem:[%s1 + $0x2c] sm:$0xf]
      %v434 = vld [vmem:[%s1 + $0x30] sm:$0xf]
      %v435 = vld [vmem:[%s1 + $0x34] sm:$0xf]
      %v436 = vld [vmem:[%s1 + $0x38] sm:$0xf]
      %v437 = vld [vmem:[%s1 + $0x3c] sm:$0xf]
      %v438 = vld [vmem:[%s1 + $0x40] sm:$0xf]
      %v439 = vld [vmem:[%s1 + $0x44] sm:$0xf]
      %v440 = vld [vmem:[%s1 + $0x48] sm:$0xf]
      %v441 = vld [vmem:[%s1 + $0x4c] sm:$0xf]
      %v442 = vld [vmem:[%s1 + $0x50] sm:$0xf]
      %v443 = vld [vmem:[%s1 + $0x54] sm:$0xf]
      %v444 = vld [vmem:[%s1 + $0x58] sm:$0xf]
      %v445 = vld [vmem:[%s1 + $0x5c] sm:$0xf]
      %v446 = vld [vmem:[%s1 + $0x60] sm:$0xf]
      %v447 = vld [vmem:[%s1 + $0x64] sm:$0xf]
      %v448 = vld [vmem:[%s1 + $0x68] sm:$0xf]
      %v449 = vld [vmem:[%s1 + $0x6c] sm:$0xf]
      %v450 = vld [vmem:[%s1 + $0x70] sm:$0xf]
      %v451 = vld [vmem:[%s1 + $0x74] sm:$0xf]
      %v452 = vld [vmem:[%s1 + $0x78] sm:$0xf]
      %v453 = vld [vmem:[%s1 + $0x7c] sm:$0xf]
      %v454 = vld [vmem:[%s1 + $0x80] sm:$0xf]
      %v455 = vld [vmem:[%s1 + $0x84] sm:$0xf]
      %v456 = vld [vmem:[%s1 + $0x88] sm:$0xf]
      %v457 = vld [vmem:[%s1 + $0x8c] sm:$0xf]
      %v458 = vld [vmem:[%s1 + $0x90] sm:$0xf]
      %v459 = vld [vmem:[%s1 + $0x94] sm:$0xf]
      %v460 = vld [vmem:[%s1 + $0x98] sm:$0xf]
      %v461 = vld [vmem:[%s1 + $0x9c] sm:$0xf]
      %v462 = vld [vmem:[%s1 + $0xa0] sm:$0xf]
      %v463 = vld [vmem:[%s1 + $0xa4] sm:$0xf]
      %v464 = vld [vmem:[%s1 + $0xa8] sm:$0xf]
      %v465 = vld [vmem:[%s1 + $0xac] sm:$0xf]
      %v466 = vld [vmem:[%s1 + $0xb0] sm:$0xf]
      %v467 = vld [vmem:[%s1 + $0xb4] sm:$0xf]
      %v468 = vld [vmem:[%s1 + $0xb8] sm:$0xf]
      %v469 = vld [vmem:[%s1 + $0xbc] sm:$0xf]
      %v470 = vld [vmem:[%s1 + $0xc0] sm:$0xf]
      %v471 = vld [vmem:[%s1 + $0xc4] sm:$0xf]
      %v472 = vld [vmem:[%s1 + $0xc8] sm:$0xf]
      %v473 = vld [vmem:[%s1 + $0xcc] sm:$0xf]
      %v474 = vld [vmem:[%s1 + $0xd0] sm:$0xf]
      %v475 = vld [vmem:[%s1 + $0xd4] sm:$0xf]
      %v476 = vld [vmem:[%s1 + $0xd8] sm:$0xf]
      %v477 = vld [vmem:[%s1 + $0xdc] sm:$0xf]
      %v478 = vld [vmem:[%s1 + $0xe0] sm:$0xf]
      %v479 = vld [vmem:[%s1 + $0xe4] sm:$0xf]
      %v480 = vld [vmem:[%s1 + $0xe8] sm:$0xf]
      %v481 = vld [vmem:[%s1 + $0xec] sm:$0xf]
      %v482 = vld [vmem:[%s1 + $0xf0] sm:$0xf]
      %v483 = vld [vmem:[%s1 + $0xf4] sm:$0xf]
      %v484 = vld [vmem:[%s1 + $0xf8] sm:$0xf]
      %v485 = vld [vmem:[%s1 + $0xfc] sm:$0xf]
      %v550 = vunpack.c.l.b16 %v422
      %v551 = vunpack.c.l.b16 %v423
      %v552 = vunpack.c.l.b16 %v424
      %v553 = vunpack.c.l.b16 %v425
      %v554 = vunpack.c.l.b16 %v426
      %v555 = vunpack.c.l.b16 %v427
      %v556 = vunpack.c.l.b16 %v428
      %v557 = vunpack.c.l.b16 %v429
      %v558 = vunpack.c.l.b16 %v430
      %v559 = vunpack.c.l.b16 %v431
      %v560 = vunpack.c.l.b16 %v432
      %v561 = vunpack.c.l.b16 %v433
      %v562 = vunpack.c.l.b16 %v434
      %v563 = vunpack.c.l.b16 %v435
      %v564 = vunpack.c.l.b16 %v436
      %v565 = vunpack.c.l.b16 %v437
      %v566 = vunpack.c.l.b16 %v438
      %v567 = vunpack.c.l.b16 %v439
      %v568 = vunpack.c.l.b16 %v440
      %v569 = vunpack.c.l.b16 %v441
      %v570 = vunpack.c.l.b16 %v442
      %v571 = vunpack.c.l.b16 %v443
      %v572 = vunpack.c.l.b16 %v444
      %v573 = vunpack.c.l.b16 %v445
      %v574 = vunpack.c.l.b16 %v446
      %v575 = vunpack.c.l.b16 %v447
      %v576 = vunpack.c.l.b16 %v448
      %v577 = vunpack.c.l.b16 %v449
      %v578 = vunpack.c.l.b16 %v450
      %v579 = vunpack.c.l.b16 %v451
      %v580 = vunpack.c.l.b16 %v452
      %v581 = vunpack.c.l.b16 %v453
      %v582 = vunpack.c.l.b16 %v454
      %v583 = vunpack.c.l.b16 %v455
      %v584 = vunpack.c.l.b16 %v456
      %v585 = vunpack.c.l.b16 %v457
      %v586 = vunpack.c.l.b16 %v458
      %v587 = vunpack.c.l.b16 %v459
      %v588 = vunpack.c.l.b16 %v460
      %v589 = vunpack.c.l.b16 %v461
      %v590 = vunpack.c.l.b16 %v462
      %v591 = vunpack.c.l.b16 %v463
      %v592 = vunpack.c.l.b16 %v464
      %v593 = vunpack.c.l.b16 %v465
      %v594 = vunpack.c.l.b16 %v466
      %v595 = vunpack.c.l.b16 %v467
      %v596 = vunpack.c.l.b16 %v468
      %v597 = vunpack.c.l.b16 %v469
      %v598 = vunpack.c.l.b16 %v470
      %v599 = vunpack.c.l.b16 %v471
      %v600 = vunpack.c.l.b16 %v472
      %v601 = vunpack.c.l.b16 %v473
      %v602 = vunpack.c.l.b16 %v474
      %v603 = vunpack.c.l.b16 %v475
      %v604 = vunpack.c.l.b16 %v476
      %v605 = vunpack.c.l.b16 %v477
      %v606 = vunpack.c.l.b16 %v478
      %v607 = vunpack.c.l.b16 %v479
      %v608 = vunpack.c.l.b16 %v480
      %v609 = vunpack.c.l.b16 %v481
      %v610 = vunpack.c.l.b16 %v482
      %v611 = vunpack.c.l.b16 %v483
      %v612 = vunpack.c.l.b16 %v484
      %v613 = vunpack.c.l.b16 %v485
      %v614 = vpack.c.b16 %v551, %v550
      %v615 = vpack.c.b16 %v553, %v552
      %v616 = vpack.c.b16 %v555, %v554
      %v617 = vpack.c.b16 %v557, %v556
      %v618 = vpack.c.b16 %v559, %v558
      %v619 = vpack.c.b16 %v561, %v560
      %v620 = vpack.c.b16 %v563, %v562
      %v621 = vpack.c.b16 %v565, %v564
      %v622 = vpack.c.b16 %v567, %v566
      %v623 = vpack.c.b16 %v569, %v568
      %v624 = vpack.c.b16 %v571, %v570
      %v625 = vpack.c.b16 %v573, %v572
      %v626 = vpack.c.b16 %v575, %v574
      %v627 = vpack.c.b16 %v577, %v576
      %v628 = vpack.c.b16 %v579, %v578
      %v629 = vpack.c.b16 %v581, %v580
      %v630 = vpack.c.b16 %v583, %v582
      %v631 = vpack.c.b16 %v585, %v584
      %v632 = vpack.c.b16 %v587, %v586
      %v633 = vpack.c.b16 %v589, %v588
      %v634 = vpack.c.b16 %v591, %v590
      %v635 = vpack.c.b16 %v593, %v592
      %v636 = vpack.c.b16 %v595, %v594
      %v637 = vpack.c.b16 %v597, %v596
      %v638 = vpack.c.b16 %v599, %v598
      %v639 = vpack.c.b16 %v601, %v600
      %v640 = vpack.c.b16 %v603, %v602
      %v641 = vpack.c.b16 %v605, %v604
      %v642 = vpack.c.b16 %v607, %v606
      %v643 = vpack.c.b16 %v609, %v608
      %v644 = vpack.c.b16 %v611, %v610
      %v645 = vpack.c.b16 %v613, %v612
      %678 = vmatprep.subr.bf16.mxu0 0
      %679 = vmatpush1.bf16.msra.mxu0 %v614
      %680 = vmatprep.subr.bf16.mxu0 0
      %681 = vmatpush1.bf16.msra.mxu0 %v615
      %682 = vmatprep.subr.bf16.mxu0 0
      %683 = vmatpush1.bf16.msra.mxu0 %v616
      %684 = vmatprep.subr.bf16.mxu0 0
      %685 = vmatpush1.bf16.msra.mxu0 %v617
      %686 = vmatprep.subr.bf16.mxu0 0
      %687 = vmatpush1.bf16.msra.mxu0 %v618
      %688 = vmatprep.subr.bf16.mxu0 0
      %689 = vmatpush1.bf16.msra.mxu0 %v619
      %690 = vmatprep.subr.bf16.mxu0 0
      %691 = vmatpush1.bf16.msra.mxu0 %v620
      %692 = vmatprep.subr.bf16.mxu0 0
      %693 = vmatpush1.bf16.msra.mxu0 %v621
      %694 = vmatprep.subr.bf16.mxu0 0
      %695 = vmatpush1.bf16.msra.mxu0 %v622
      %696 = vmatprep.subr.bf16.mxu0 0
      %697 = vmatpush1.bf16.msra.mxu0 %v623
      %698 = vmatprep.subr.bf16.mxu0 0
      %699 = vmatpush1.bf16.msra.mxu0 %v624
      %700 = vmatprep.subr.bf16.mxu0 0
      %701 = vmatpush1.bf16.msra.mxu0 %v625
      %702 = vmatprep.subr.bf16.mxu0 0
      %703 = vmatpush1.bf16.msra.mxu0 %v626
      %704 = vmatprep.subr.bf16.mxu0 0
      %705 = vmatpush1.bf16.msra.mxu0 %v627
      %706 = vmatprep.subr.bf16.mxu0 0
      %707 = vmatpush1.bf16.msra.mxu0 %v628
      %708 = vmatprep.subr.bf16.mxu0 0
      %709 = vmatpush1.bf16.msra.mxu0 %v629
      %710 = vmatprep.mubr.bf16.mxu0 %v294
      %711 = vmatmul.mubr.bf16.gmra.mrb[0].mxu0 %v274
      %v712 = vpop.f32.mrb[0].mxu0
      %v713 = vadd.f32 0.0, %v712
      %v714 = vpop.f32.mrb[0].mxu0
      %v715 = vpop.f32.mrb[0].mxu0
      %v716 = vadd.f32 0.0, %v715
      %v717 = vpop.f32.mrb[0].mxu0
      %718 = vmatprep.mubr.bf16.mxu0 %v302
      %719 = vmatmul.mubr.bf16.gmra.mrb[0].mxu0 %v275
      %v720 = vpop.f32.mrb[0].mxu0
      %v721 = vadd.f32 0.0, %v720
      %v722 = vpop.f32.mrb[0].mxu0
      %v723 = vpop.f32.mrb[0].mxu0
      %v724 = vadd.f32 0.0, %v723
      %v725 = vpop.f32.mrb[0].mxu0
      %726 = vmatprep.mubr.bf16.mxu0 %v310
      %727 = vmatmul.mubr.bf16.gmra.mrb[0].mxu0 %v276
      %v728 = vpop.f32.mrb[0].mxu0
      %v729 = vadd.f32 0.0, %v728
      %v730 = vpop.f32.mrb[0].mxu0
      %v731 = vpop.f32.mrb[0].mxu0
      %v732 = vadd.f32 0.0, %v731
      %v733 = vpop.f32.mrb[0].mxu0
      %734 = vmatprep.mubr.bf16.mxu0 %v318
      %735 = vmatmul.mubr.bf16.gmra.mrb[0].mxu0 %v277
      %v736 = vpop.f32.mrb[0].mxu0
      %v737 = vadd.f32 0.0, %v736
      %v738 = vpop.f32.mrb[0].mxu0
      %v739 = vpop.f32.mrb[0].mxu0
      %v740 = vadd.f32 0.0, %v739
      %v741 = vpop.f32.mrb[0].mxu0
      %742 = vmatprep.mubr.bf16.mxu0 %v326
      %743 = vmatmul.mubr.bf16.gmra.mrb[0].mxu0 %v278
      %v744 = vpop.f32.mrb[0].mxu0
      %v745 = vadd.f32 0.0, %v744
      %v746 = vpop.f32.mrb[0].mxu0
      %v747 = vpop.f32.mrb[0].mxu0
      %v748 = vadd.f32 0.0, %v747
      %v749 = vpop.f32.mrb[0].mxu0
      %750 = vmatprep.mubr.bf16.mxu0 %v334
      %751 = vmatmul.mubr.bf16.gmra.mrb[0].mxu0 %v279
      %v752 = vpop.f32.mrb[0].mxu0
      %v753 = vadd.f32 0.0, %v752
      %v754 = vpop.f32.mrb[0].mxu0
      %v755 = vpop.f32.mrb[0].mxu0
      %v756 = vadd.f32 0.0, %v755
      %v757 = vpop.f32.mrb[0].mxu0
      %758 = vmatprep.mubr.bf16.mxu0 %v342
      %759 = vmatmul.mubr.bf16.gmra.mrb[0].mxu0 %v280
      %v760 = vpop.f32.mrb[0].mxu0
      %v761 = vadd.f32 0.0, %v760
      %v762 = vpop.f32.mrb[0].mxu0
      %v763 = vpop.f32.mrb[0].mxu0
      %v764 = vadd.f32 0.0, %v763
      %v765 = vpop.f32.mrb[0].mxu0
      %766 = vdwg.mxu0
      %767 = vmatprep.subr.bf16.mxu0 0
      %768 = vmatpush1.bf16.msra.mxu0 %v630
      %769 = vmatprep.subr.bf16.mxu0 0
      %770 = vmatpush1.bf16.msra.mxu0 %v631
      %771 = vmatprep.subr.bf16.mxu0 0
      %772 = vmatpush1.bf16.msra.mxu0 %v632
      %773 = vmatprep.subr.bf16.mxu0 0
      %774 = vmatpush1.bf16.msra.mxu0 %v633
      %775 = vmatprep.subr.bf16.mxu0 0
      %776 = vmatpush1.bf16.msra.mxu0 %v634
      %777 = vmatprep.subr.bf16.mxu0 0
      %778 = vmatpush1.bf16.msra.mxu0 %v635
      %779 = vmatprep.subr.bf16.mxu0 0
      %780 = vmatpush1.bf16.msra.mxu0 %v636
      %781 = vmatprep.subr.bf16.mxu0 0
      %782 = vmatpush1.bf16.msra.mxu0 %v637
      %783 = vmatprep.subr.bf16.mxu0 0
      %784 = vmatpush1.bf16.msra.mxu0 %v638
      %785 = vmatprep.subr.bf16.mxu0 0
      %786 = vmatpush1.bf16.msra.mxu0 %v639
      %787 = vmatprep.subr.bf16.mxu0 0
      %788 = vmatpush1.bf16.msra.mxu0 %v640
      %789 = vmatprep.subr.bf16.mxu0 0
      %790 = vmatpush1.bf16.msra.mxu0 %v641
      %791 = vmatprep.subr.bf16.mxu0 0
      %792 = vmatpush1.bf16.msra.mxu0 %v642
      %793 = vmatprep.subr.bf16.mxu0 0
      %794 = vmatpush1.bf16.msra.mxu0 %v643
      %795 = vmatprep.subr.bf16.mxu0 0
      %796 = vmatpush1.bf16.msra.mxu0 %v644
      %797 = vmatprep.subr.bf16.mxu0 0
      %798 = vmatpush1.bf16.msra.mxu0 %v645
      %799 = vmatprep.mubr.bf16.mxu0 %v388
      %800 = vmatmul.mubr.bf16.gmra.mrb[0].mxu0 %v361
      %v801 = vpop.f32.mrb[0].mxu0
      %v802 = vadd.f32 %v713, %v801
      %v803 = vpop.f32.mrb[0].mxu0
      %v804 = vpop.f32.mrb[0].mxu0
      %v805 = vadd.f32 %v716, %v804
      %v806 = vpop.f32.mrb[0].mxu0
      %807 = vmatprep.mubr.bf16.mxu0 %v392
      %808 = vmatmul.mubr.bf16.gmra.mrb[0].mxu0 %v363
      %v809 = vpop.f32.mrb[0].mxu0
      %v810 = vadd.f32 %v721, %v809
      %v811 = vpop.f32.mrb[0].mxu0
      %v812 = vpop.f32.mrb[0].mxu0
      %v813 = vadd.f32 %v724, %v812
      %v814 = vpop.f32.mrb[0].mxu0
      %815 = vmatprep.mubr.bf16.mxu0 %v396
      %816 = vmatmul.mubr.bf16.gmra.mrb[0].mxu0 %v365
      %v817 = vpop.f32.mrb[0].mxu0
      %v818 = vadd.f32 %v729, %v817
      %v819 = vpop.f32.mrb[0].mxu0
      %v820 = vpop.f32.mrb[0].mxu0
      %v821 = vadd.f32 %v732, %v820
      %v822 = vpop.f32.mrb[0].mxu0
      %823 = vmatprep.mubr.bf16.mxu0 %v400
      %824 = vmatmul.mubr.bf16.gmra.mrb[0].mxu0 %v367
      %v825 = vpop.f32.mrb[0].mxu0
      %v826 = vadd.f32 %v737, %v825
      %v827 = vpop.f32.mrb[0].mxu0
      %v828 = vpop.f32.mrb[0].mxu0
      %v829 = vadd.f32 %v740, %v828
      %v830 = vpop.f32.mrb[0].mxu0
      %831 = vmatprep.mubr.bf16.mxu0 %v404
      %832 = vmatmul.mubr.bf16.gmra.mrb[0].mxu0 %v369
      %v833 = vpop.f32.mrb[0].mxu0
      %v834 = vadd.f32 %v745, %v833
      %v835 = vpop.f32.mrb[0].mxu0
      %v836 = vpop.f32.mrb[0].mxu0
      %v837 = vadd.f32 %v748, %v836
      %v838 = vpop.f32.mrb[0].mxu0
      %839 = vmatprep.mubr.bf16.mxu0 %v408
      %840 = vmatmul.mubr.bf16.gmra.mrb[0].mxu0 %v371
      %v841 = vpop.f32.mrb[0].mxu0
      %v842 = vadd.f32 %v753, %v841
      %v843 = vpop.f32.mrb[0].mxu0
      %v844 = vpop.f32.mrb[0].mxu0
      %v845 = vadd.f32 %v756, %v844
      %v846 = vpop.f32.mrb[0].mxu0
      %847 = vmatprep.mubr.bf16.mxu0 %v414
      %848 = vmatmul.mubr.bf16.gmra.mrb[0].mxu0 %v373
      %v849 = vpop.f32.mrb[0].mxu0
      %v850 = vadd.f32 %v761, %v849
      %v851 = vpop.f32.mrb[0].mxu0
      %v852 = vpop.f32.mrb[0].mxu0
      %v853 = vadd.f32 %v764, %v852
      %v854 = vpop.f32.mrb[0].mxu0
      %855 = vdwg.mxu0
      %v856 = vpack.c.bf16 %v805, %v802
      %v857 = vpack.c.bf16 %v813, %v810
      %v858 = vpack.c.bf16 %v821, %v818
      %v859 = vpack.c.bf16 %v829, %v826
      %v860 = vpack.c.bf16 %v837, %v834
      %v861 = vpack.c.bf16 %v845, %v842
      %v862 = vpack.c.bf16 %v853, %v850
      %v870 = vunpack.c.l.b16 %v856
      %v871 = vunpack.c.h.b16 %v856
      %v872 = vunpack.c.l.b16 %v857
      %v873 = vunpack.c.h.b16 %v857
      %v874 = vunpack.c.l.b16 %v858
      %v875 = vunpack.c.h.b16 %v858
      %v876 = vunpack.c.l.b16 %v859
      %v877 = vunpack.c.h.b16 %v859
      %v878 = vunpack.c.l.b16 %v860
      %v879 = vunpack.c.h.b16 %v860
      %v880 = vunpack.c.l.b16 %v861
      %v881 = vunpack.c.h.b16 %v861
      %v882 = vunpack.c.l.b16 %v862
      %v883 = vunpack.c.h.b16 %v862
      %v884 = vpack.c.b16 %v870, %v870
      %v885 = vpack.c.b16 %v871, %v871
      %v886 = vpack.c.b16 %v872, %v872
      %v887 = vpack.c.b16 %v873, %v873
      %v888 = vpack.c.b16 %v874, %v874
      %v889 = vpack.c.b16 %v875, %v875
      %v890 = vpack.c.b16 %v876, %v876
      %v891 = vpack.c.b16 %v877, %v877
      %v892 = vpack.c.b16 %v878, %v878
      %v893 = vpack.c.b16 %v879, %v879
      %v894 = vpack.c.b16 %v880, %v880
      %v895 = vpack.c.b16 %v881, %v881
      %v896 = vpack.c.b16 %v882, %v882
      %v897 = vpack.c.b16 %v883, %v883
      %912 = vst [vmem:[%s113] sm:$0xf] %v884
      %913 = vst [vmem:[%s113 + $0x4] sm:$0xf] %v885
      %914 = vst [vmem:[%s113 + $0x8] sm:$0xf] %v886
      %915 = vst [vmem:[%s113 + $0xc] sm:$0xf] %v887
      %916 = vst [vmem:[%s113 + $0x10] sm:$0xf] %v888
      %917 = vst [vmem:[%s113 + $0x14] sm:$0xf] %v889
      %918 = vst [vmem:[%s113 + $0x18] sm:$0xf] %v890
      %919 = vst [vmem:[%s113 + $0x1c] sm:$0xf] %v891
      %920 = vst [vmem:[%s113 + $0x20] sm:$0xf] %v892
      %921 = vst [vmem:[%s113 + $0x24] sm:$0xf] %v893
      %922 = vst [vmem:[%s113 + $0x28] sm:$0xf] %v894
      %923 = vst [vmem:[%s113 + $0x2c] sm:$0xf] %v895
      %924 = vst [vmem:[%s113 + $0x30] sm:$0xf] %v896
      %925 = vst [vmem:[%s113 + $0x34] sm:$0xf] %v897
      %s926 = sadd.s32 %s17, %s18
      %s927 = smul.u32 14, %s926
      %p928 = scmp.lt.s32.totalorder %s927, 27
      %s929 = scalar_select %p928, %s927, 27
      %s930 = smul.addr %s929, 4
      %s931 = scalar_lea.vmem %s2, %s930
      // Predicated region
      $region101: #{generator_forward.65} parent=23 // pred_check
        %p932 = pneg %p66
      $region102: #{generator_forward.65} parent=23 // pred_check_branch
        %934 = sbr.rel (%p932) target = $region104
      $region103: #{generator_forward.65} parent=23 // pred_region
        %s935 = sadd.s32 %s17, %s18
        %s936 = smul.u32 14, %s935
      $region104: #{generator_forward.65} parent=23 // pred_fallthru
        _
    $region24: #{generator_forward.65} parent=5 // pred_fallthru
      _
    %p937 = scmp.le.s32.totalorder 2, %s8
    // Predicated region
    $region105: #{generator_forward.65} parent=5 // pred_check
      %p938 = pneg %p937
    $region106: #{generator_forward.65} parent=5 // pred_check_branch
      %940 = sbr.rel (%p938) target = $region108
    $region107: #{generator_forward.65} parent=5 // pred_region
      %s941 = ssub.s32 %s8, 2
      // Predicated region
      $region109: #{generator_forward.65} parent=107 // pred_check
        %p942 = pneg %p72
      $region110: #{generator_forward.65} parent=107 // pred_check_branch
        %944 = sbr.rel (%p942) target = $region112
      $region111: #{generator_forward.65} parent=107 // pred_region
        %s945 = sadd.s32 %s19, %s20
        %s946 = smul.u32 14, %s945
        %p947 = scmp.lt.s32.totalorder %s946, 27
        %s948 = scalar_select %p947, %s946, 27
        %s949 = smul.addr %s948, 4
        %s950 = scalar_lea.vmem %s2, %s949
      $region112: #{generator_forward.65} parent=107 // pred_fallthru
        _
    $region108: #{generator_forward.65} parent=5 // pred_fallthru
      _
  $region6: #{generator_forward.65} parent=0 // loop_footer
    %s12 = sadd.s32 1, %s8
  $region7: #{generator_forward.65} parent=0 // loop_footer_branch
    %7 = sbr.rel target = $region3
  $region8: #{generator_forward.65} parent=0 // loop_exit
    _
  %951 = vsyncmov [#allocation3]
  %s952 = vpop.sfrf %951
  %p953 = scmp.eq.s32.totalorder %s952, 0
  %p954 = pneg %p953
  %956 = shalt.err (%p954)
  %s957 = scalar_lea.sflag [#allocation3], 1
  %958 = vsyncmov %s957
  %s959 = vpop.sfrf %958
  %p960 = scmp.eq.s32.totalorder %s959, 0
  %p961 = pneg %p960
  %963 = shalt.err (%p961)

// kernel: generator_forward.66
$region0: #{generator_forward.66}
  #allocation0 [shape = 'u32[]', space=smem, size = 0x4, offset = 0x4, fixed_abs, tag = 'smem constant byte address 0x4 - core index']
  #allocation1 [shape = 'u32[144,128]{1,0:T(1,128)}', space=vmem, size = 0x12000, scoped, tag = 'internal scratch']
  %s0 = inlined_call_operand.vmem [shape: bf16[2,256,32], index: 0, kind: input, shape index: {}]
  %s1 = inlined_call_operand.vmem [shape: bf16[2,256,32], index: 1, kind: output, shape index: {}]
  %s2 = sld [smem:[#allocation0]]
  $region37: #{generator_forward.66} parent=0
    _
  %s4 = ssub.s32 1, %s2
  %s5 = scalar_select 0, %s4, %s2
  loop: start=0, step=1, limit=4
  $region2: #{generator_forward.66} parent=0 // loop_pre_header
    _
  $region3: #{generator_forward.66} parent=0 // loop_header
    %s7 = sphi 0, %s11
    %p8 = scmp.ge.s32.totalorder %s7, 4
    %s17 = sphi 0, %s19
    %s20 = sphi 0, %s17
    %s21 = sphi 0, %s20
    %s37 = sphi 0, %s21
    %s43 = sphi 0, %s45
    %s46 = sphi 0, %s43
    %s47 = sphi 0, %s46
    %s63 = sphi 0, %s47
  $region4: #{generator_forward.66} parent=0 // loop_header_branch
    %10 = sbr.rel (%p8) target = $region8
  $region5: #{generator_forward.66} parent=0 // loop_body
    %s12 = ssub.s32 %s7, 1
    %s13 = ssub.s32 %s7, 2
    %s14 = sadd.s32 %s7, 1
    %s15 = ssub.s32 %s7, %s14
    %p16 = scmp.eq.s32.totalorder %s15, 0
    %s18 = sadd.s32 %s17, 1
    %s19 = scalar_select %p16, %s17, %s18
    %p22 = pneg %p16
    %p23 = scmp.eq.s32.totalorder %s7, 1
    %p24 = por %p22, %p23
    %p25 = scmp.ne.s32.totalorder %s17, %s20
    %p26 = scmp.eq.s32.totalorder %s7, 0
    %p27 = por %p25, %p26
    %p28 = scmp.ne.s32.totalorder %s17, %s20
    %p29 = scmp.eq.s32.totalorder %s12, 1
    %p30 = por %p28, %p29
    %p31 = scmp.ne.s32.totalorder %s20, %s21
    %p32 = scmp.eq.s32.totalorder %s12, 0
    %p33 = por %p31, %p32
    %p34 = scmp.ne.s32.totalorder %s20, %s21
    %p35 = scmp.eq.s32.totalorder %s13, 1
    %p36 = por %p34, %p35
    %p38 = scmp.ne.s32.totalorder %s21, %s37
    %p39 = scmp.eq.s32.totalorder %s13, 0
    %p40 = por %p38, %p39
    %s41 = ssub.s32 %s7, %s14
    %p42 = scmp.eq.s32.totalorder %s41, 0
    %s44 = sadd.s32 %s43, 1
    %s45 = scalar_select %p42, %s43, %s44
    %p48 = pneg %p42
    %p49 = scmp.eq.s32.totalorder %s7, 1
    %p50 = por %p48, %p49
    %p51 = scmp.ne.s32.totalorder %s43, %s46
    %p52 = scmp.eq.s32.totalorder %s7, 0
    %p53 = por %p51, %p52
    %p54 = scmp.ne.s32.totalorder %s43, %s46
    %p55 = scmp.eq.s32.totalorder %s12, 1
    %p56 = por %p54, %p55
    %p57 = scmp.ne.s32.totalorder %s46, %s47
    %p58 = scmp.eq.s32.totalorder %s12, 0
    %p59 = por %p57, %p58
    %p60 = scmp.ne.s32.totalorder %s46, %s47
    %p61 = scmp.eq.s32.totalorder %s13, 1
    %p62 = por %p60, %p61
    %p64 = scmp.ne.s32.totalorder %s47, %s63
    %p65 = scmp.eq.s32.totalorder %s13, 0
    %p66 = por %p64, %p65
    %p67 = scmp.le.s32.totalorder 1, %s7
    %p68 = scmp.lt.s32.totalorder %s7, 3
    %p69 = pnand %p67, %p68
    %p70 = pneg %p69
    // Predicated region
    $region9: #{generator_forward.66} parent=5 // pred_check
      _
    $region10: #{generator_forward.66} parent=5 // pred_check_branch
      %72 = sbr.rel (%p69) target = $region12
    $region11: #{generator_forward.66} parent=5 // pred_region
      %s73 = ssub.s32 %s7, 1
    $region12: #{generator_forward.66} parent=5 // pred_fallthru
      _
    %p74 = scmp.lt.s32.totalorder %s7, 2
    // Predicated region
    $region13: #{generator_forward.66} parent=5 // pred_check
      %p75 = pneg %p74
    $region14: #{generator_forward.66} parent=5 // pred_check_branch
      %77 = sbr.rel (%p75) target = $region16
    $region15: #{generator_forward.66} parent=5 // pred_region
      // Predicated region
      $region17: #{generator_forward.66} parent=15 // pred_check
        %p78 = pneg %p27
      $region18: #{generator_forward.66} parent=15 // pred_check_branch
        %80 = sbr.rel (%p78) target = $region20
      $region19: #{generator_forward.66} parent=15 // pred_region
        %p81 = scmp.lt.s32.totalorder %s7, 1
        %s82 = scalar_select %p81, %s7, 1
        %s83 = smul.addr %s82, 32
        %s84 = smul.addr %s83, 4
        %s85 = scalar_lea.vmem %s0, %s84
      $region20: #{generator_forward.66} parent=15 // pred_fallthru
        _
    $region16: #{generator_forward.66} parent=5 // pred_fallthru
      _
    %p86 = scmp.le.s32.totalorder 1, %s7
    %p87 = scmp.lt.s32.totalorder %s7, 3
    %p88 = pnand %p86, %p87
    %p89 = pneg %p88
    // Predicated region
    $region21: #{generator_forward.66} parent=5 // pred_check
      _
    $region22: #{generator_forward.66} parent=5 // pred_check_branch
      %91 = sbr.rel (%p88) target = $region24
    $region23: #{generator_forward.66} parent=5 // pred_region
      %s92 = ssub.s32 %s7, 1
      %p93 = scmp.lt.s32.totalorder %s12, 1
      %s94 = scalar_select %p93, %s12, 1
      %s95 = smul.addr %s94, 32
      %s96 = smul.addr %s95, 4
      %s97 = scalar_lea.vmem %s0, %s96
      %p98 = pneg %p33
      %p99 = pneg %p30
      %p100 = pneg %p59
      %p101 = pneg %p56
      %p102 = scmp.lt.s32.totalorder %s12, 1
      %s103 = scalar_select %p102, %s12, 1
      %s104 = smul.addr %s103, 32
      %s105 = smul.addr %s104, 4
      %s106 = scalar_lea.vmem %s1, %s105
      %p107 = scmp.lt.s32.totalorder %s12, 1
      %s108 = scalar_select %p107, %s12, 1
      %s109 = smul.addr %s108, 32
      %s110 = smul.addr %s109, 4
      %s111 = scalar_lea.vmem %s0, %s110
      %p112 = scmp.lt.s32.totalorder %s12, 1
      %s113 = scalar_select %p112, %s12, 1
      %s114 = smul.addr %s113, 32
      %s115 = smul.addr %s114, 4
      %s116 = scalar_lea.vmem %s1, %s115
      %v117 = vld [vmem:[%s111] sm:$0xf]
      %v118 = vld [vmem:[%s111 + $0x4] sm:$0xf]
      %v119 = vld [vmem:[%s111 + $0x8] sm:$0xf]
      %v120 = vld [vmem:[%s111 + $0xc] sm:$0xf]
      %v121 = vld [vmem:[%s111 + $0x10] sm:$0xf]
      %v122 = vld [vmem:[%s111 + $0x14] sm:$0xf]
      %v123 = vld [vmem:[%s111 + $0x18] sm:$0xf]
      %v124 = vld [vmem:[%s111 + $0x1c] sm:$0xf]
      %v125 = vld [vmem:[%s111 + $0x20] sm:$0xf]
      %v126 = vld [vmem:[%s111 + $0x24] sm:$0xf]
      %v127 = vld [vmem:[%s111 + $0x28] sm:$0xf]
      %v128 = vld [vmem:[%s111 + $0x2c] sm:$0xf]
      %v129 = vld [vmem:[%s111 + $0x30] sm:$0xf]
      %v130 = vld [vmem:[%s111 + $0x34] sm:$0xf]
      %v131 = vld [vmem:[%s111 + $0x38] sm:$0xf]
      %v132 = vld [vmem:[%s111 + $0x3c] sm:$0xf]
      %v133 = vld [vmem:[%s111 + $0x40] sm:$0xf]
      %v134 = vld [vmem:[%s111 + $0x44] sm:$0xf]
      %v135 = vld [vmem:[%s111 + $0x48] sm:$0xf]
      %v136 = vld [vmem:[%s111 + $0x4c] sm:$0xf]
      %v137 = vld [vmem:[%s111 + $0x50] sm:$0xf]
      %v138 = vld [vmem:[%s111 + $0x54] sm:$0xf]
      %v139 = vld [vmem:[%s111 + $0x58] sm:$0xf]
      %v140 = vld [vmem:[%s111 + $0x5c] sm:$0xf]
      %v141 = vld [vmem:[%s111 + $0x60] sm:$0xf]
      %v142 = vld [vmem:[%s111 + $0x64] sm:$0xf]
      %v143 = vld [vmem:[%s111 + $0x68] sm:$0xf]
      %v144 = vld [vmem:[%s111 + $0x6c] sm:$0xf]
      %v145 = vld [vmem:[%s111 + $0x70] sm:$0xf]
      %v146 = vld [vmem:[%s111 + $0x74] sm:$0xf]
      %v147 = vld [vmem:[%s111 + $0x78] sm:$0xf]
      %v148 = vld [vmem:[%s111 + $0x7c] sm:$0xf]
      %v149 = vunpack.c.l.bf16 %v117
      %v150 = vunpack.c.l.bf16 %v118
      %v151 = vunpack.c.l.bf16 %v119
      %v152 = vunpack.c.l.bf16 %v120
      %v153 = vunpack.c.l.bf16 %v121
      %v154 = vunpack.c.l.bf16 %v122
      %v155 = vunpack.c.l.bf16 %v123
      %v156 = vunpack.c.l.bf16 %v124
      %v157 = vunpack.c.l.bf16 %v125
      %v158 = vunpack.c.l.bf16 %v126
      %v159 = vunpack.c.l.bf16 %v127
      %v160 = vunpack.c.l.bf16 %v128
      %v161 = vunpack.c.l.bf16 %v129
      %v162 = vunpack.c.l.bf16 %v130
      %v163 = vunpack.c.l.bf16 %v131
      %v164 = vunpack.c.l.bf16 %v132
      %v165 = vunpack.c.l.bf16 %v133
      %v166 = vunpack.c.l.bf16 %v134
      %v167 = vunpack.c.l.bf16 %v135
      %v168 = vunpack.c.l.bf16 %v136
      %v169 = vunpack.c.l.bf16 %v137
      %v170 = vunpack.c.l.bf16 %v138
      %v171 = vunpack.c.l.bf16 %v139
      %v172 = vunpack.c.l.bf16 %v140
      %v173 = vunpack.c.l.bf16 %v141
      %v174 = vunpack.c.l.bf16 %v142
      %v175 = vunpack.c.l.bf16 %v143
      %v176 = vunpack.c.l.bf16 %v144
      %v177 = vunpack.c.l.bf16 %v145
      %v178 = vunpack.c.l.bf16 %v146
      %v179 = vunpack.c.l.bf16 %v147
      %v180 = vunpack.c.l.bf16 %v148
      %vm181 = vcmask 261120
      %v182 = vsel %vm181, %v149, 0.0
      %v183 = vsel %vm181, %v150, 0.0
      %v184 = vadd.f32 %v182, %v183
      %v185 = vsel %vm181, %v151, 0.0
      %v186 = vadd.f32 %v184, %v185
      %v187 = vsel %vm181, %v152, 0.0
      %v188 = vadd.f32 %v186, %v187
      %v189 = vsel %vm181, %v153, 0.0
      %v190 = vadd.f32 %v188, %v189
      %v191 = vsel %vm181, %v154, 0.0
      %v192 = vadd.f32 %v190, %v191
      %v193 = vsel %vm181, %v155, 0.0
      %v194 = vadd.f32 %v192, %v193
      %v195 = vsel %vm181, %v156, 0.0
      %v196 = vadd.f32 %v194, %v195
      %v197 = vsel %vm181, %v157, 0.0
      %v198 = vadd.f32 %v196, %v197
      %v199 = vsel %vm181, %v158, 0.0
      %v200 = vadd.f32 %v198, %v199
      %v201 = vsel %vm181, %v159, 0.0
      %v202 = vadd.f32 %v200, %v201
      %v203 = vsel %vm181, %v160, 0.0
      %v204 = vadd.f32 %v202, %v203
      %v205 = vsel %vm181, %v161, 0.0
      %v206 = vadd.f32 %v204, %v205
      %v207 = vsel %vm181, %v162, 0.0
      %v208 = vadd.f32 %v206, %v207
      %v209 = vsel %vm181, %v163, 0.0
      %v210 = vadd.f32 %v208, %v209
      %v211 = vsel %vm181, %v164, 0.0
      %v212 = vadd.f32 %v210, %v211
      %v213 = vsel %vm181, %v165, 0.0
      %v214 = vadd.f32 %v212, %v213
      %v215 = vsel %vm181, %v166, 0.0
      %v216 = vadd.f32 %v214, %v215
      %v217 = vsel %vm181, %v167, 0.0
      %v218 = vadd.f32 %v216, %v217
      %v219 = vsel %vm181, %v168, 0.0
      %v220 = vadd.f32 %v218, %v219
      %v221 = vsel %vm181, %v169, 0.0
      %v222 = vadd.f32 %v220, %v221
      %v223 = vsel %vm181, %v170, 0.0
      %v224 = vadd.f32 %v222, %v223
      %v225 = vsel %vm181, %v171, 0.0
      %v226 = vadd.f32 %v224, %v225
      %v227 = vsel %vm181, %v172, 0.0
      %v228 = vadd.f32 %v226, %v227
      %v229 = vsel %vm181, %v173, 0.0
      %v230 = vadd.f32 %v228, %v229
      %v231 = vsel %vm181, %v174, 0.0
      %v232 = vadd.f32 %v230, %v231
      %v233 = vsel %vm181, %v175, 0.0
      %v234 = vadd.f32 %v232, %v233
      %v235 = vsel %vm181, %v176, 0.0
      %v236 = vadd.f32 %v234, %v235
      %v237 = vsel %vm181, %v177, 0.0
      %v238 = vadd.f32 %v236, %v237
      %v239 = vsel %vm181, %v178, 0.0
      %v240 = vadd.f32 %v238, %v239
      %v241 = vsel %vm181, %v179, 0.0
      %v242 = vadd.f32 %v240, %v241
      %v243 = vsel %vm181, %v180, 0.0
      %v244 = vadd.f32 %v242, %v243
      %v245 = vrot.slane %v244, 4
      %v246 = vadd.f32 %v244, %v245
      %v247 = vrot.slane %v246, 2
      %v248 = vadd.f32 %v246, %v247
      %v249 = vrot.slane %v248, 1
      %v250 = vadd.f32 %v248, %v249
      %v251 = vrcp.pop 256.0
      %v252 = vmul.f32 %v250, %v251
      %v253 = vsub.f32 %v149, %v252
      %v254 = vsub.f32 %v150, %v252
      %v255 = vsub.f32 %v151, %v252
      %v256 = vsub.f32 %v152, %v252
      %v257 = vsub.f32 %v153, %v252
      %v258 = vsub.f32 %v154, %v252
      %v259 = vsub.f32 %v155, %v252
      %v260 = vsub.f32 %v156, %v252
      %v261 = vsub.f32 %v157, %v252
      %v262 = vsub.f32 %v158, %v252
      %v263 = vsub.f32 %v159, %v252
      %v264 = vsub.f32 %v160, %v252
      %v265 = vsub.f32 %v161, %v252
      %v266 = vsub.f32 %v162, %v252
      %v267 = vsub.f32 %v163, %v252
      %v268 = vsub.f32 %v164, %v252
      %v269 = vsub.f32 %v165, %v252
      %v270 = vsub.f32 %v166, %v252
      %v271 = vsub.f32 %v167, %v252
      %v272 = vsub.f32 %v168, %v252
      %v273 = vsub.f32 %v169, %v252
      %v274 = vsub.f32 %v170, %v252
      %v275 = vsub.f32 %v171, %v252
      %v276 = vsub.f32 %v172, %v252
      %v277 = vsub.f32 %v173, %v252
      %v278 = vsub.f32 %v174, %v252
      %v279 = vsub.f32 %v175, %v252
      %v280 = vsub.f32 %v176, %v252
      %v281 = vsub.f32 %v177, %v252
      %v282 = vsub.f32 %v178, %v252
      %v283 = vsub.f32 %v179, %v252
      %v284 = vsub.f32 %v180, %v252
      %v285 = vmul.f32 %v253, %v253
      %v286 = vmul.f32 %v254, %v254
      %v287 = vmul.f32 %v255, %v255
      %v288 = vmul.f32 %v256, %v256
      %v289 = vmul.f32 %v257, %v257
      %v290 = vmul.f32 %v258, %v258
      %v291 = vmul.f32 %v259, %v259
      %v292 = vmul.f32 %v260, %v260
      %v293 = vmul.f32 %v261, %v261
      %v294 = vmul.f32 %v262, %v262
      %v295 = vmul.f32 %v263, %v263
      %v296 = vmul.f32 %v264, %v264
      %v297 = vmul.f32 %v265, %v265
      %v298 = vmul.f32 %v266, %v266
      %v299 = vmul.f32 %v267, %v267
      %v300 = vmul.f32 %v268, %v268
      %v301 = vmul.f32 %v269, %v269
      %v302 = vmul.f32 %v270, %v270
      %v303 = vmul.f32 %v271, %v271
      %v304 = vmul.f32 %v272, %v272
      %v305 = vmul.f32 %v273, %v273
      %v306 = vmul.f32 %v274, %v274
      %v307 = vmul.f32 %v275, %v275
      %v308 = vmul.f32 %v276, %v276
      %v309 = vmul.f32 %v277, %v277
      %v310 = vmul.f32 %v278, %v278
      %v311 = vmul.f32 %v279, %v279
      %v312 = vmul.f32 %v280, %v280
      %v313 = vmul.f32 %v281, %v281
      %v314 = vmul.f32 %v282, %v282
      %v315 = vmul.f32 %v283, %v283
      %v316 = vmul.f32 %v284, %v284
      %v317 = vsel %vm181, %v285, 0.0
      %v318 = vsel %vm181, %v286, 0.0
      %v319 = vadd.f32 %v317, %v318
      %v320 = vsel %vm181, %v287, 0.0
      %v321 = vadd.f32 %v319, %v320
      %v322 = vsel %vm181, %v288, 0.0
      %v323 = vadd.f32 %v321, %v322
      %v324 = vsel %vm181, %v289, 0.0
      %v325 = vadd.f32 %v323, %v324
      %v326 = vsel %vm181, %v290, 0.0
      %v327 = vadd.f32 %v325, %v326
      %v328 = vsel %vm181, %v291, 0.0
      %v329 = vadd.f32 %v327, %v328
      %v330 = vsel %vm181, %v292, 0.0
      %v331 = vadd.f32 %v329, %v330
      %v332 = vsel %vm181, %v293, 0.0
      %v333 = vadd.f32 %v331, %v332
      %v334 = vsel %vm181, %v294, 0.0
      %v335 = vadd.f32 %v333, %v334
      %v336 = vsel %vm181, %v295, 0.0
      %v337 = vadd.f32 %v335, %v336
      %v338 = vsel %vm181, %v296, 0.0
      %v339 = vadd.f32 %v337, %v338
      %v340 = vsel %vm181, %v297, 0.0
      %v341 = vadd.f32 %v339, %v340
      %v342 = vsel %vm181, %v298, 0.0
      %v343 = vadd.f32 %v341, %v342
      %v344 = vsel %vm181, %v299, 0.0
      %v345 = vadd.f32 %v343, %v344
      %v346 = vsel %vm181, %v300, 0.0
      %v347 = vadd.f32 %v345, %v346
      %v348 = vsel %vm181, %v301, 0.0
      %v349 = vadd.f32 %v347, %v348
      %v350 = vsel %vm181, %v302, 0.0
      %v351 = vadd.f32 %v349, %v350
      %v352 = vsel %vm181, %v303, 0.0
      %v353 = vadd.f32 %v351, %v352
      %v354 = vsel %vm181, %v304, 0.0
      %v355 = vadd.f32 %v353, %v354
      %v356 = vsel %vm181, %v305, 0.0
      %v357 = vadd.f32 %v355, %v356
      %v358 = vsel %vm181, %v306, 0.0
      %v359 = vadd.f32 %v357, %v358
      %v360 = vsel %vm181, %v307, 0.0
      %v361 = vadd.f32 %v359, %v360
      %v362 = vsel %vm181, %v308, 0.0
      %v363 = vadd.f32 %v361, %v362
      %v364 = vsel %vm181, %v309, 0.0
      %v365 = vadd.f32 %v363, %v364
      %v366 = vsel %vm181, %v310, 0.0
      %v367 = vadd.f32 %v365, %v366
      %v368 = vsel %vm181, %v311, 0.0
      %v369 = vadd.f32 %v367, %v368
      %v370 = vsel %vm181, %v312, 0.0
      %v371 = vadd.f32 %v369, %v370
      %v372 = vsel %vm181, %v313, 0.0
      %v373 = vadd.f32 %v371, %v372
      %v374 = vsel %vm181, %v314, 0.0
      %v375 = vadd.f32 %v373, %v374
      %v376 = vsel %vm181, %v315, 0.0
      %v377 = vadd.f32 %v375, %v376
      %v378 = vsel %vm181, %v316, 0.0
      %v379 = vadd.f32 %v377, %v378
      %v380 = vrot.slane %v379, 4
      %v381 = vadd.f32 %v379, %v380
      %v382 = vrot.slane %v381, 2
      %v383 = vadd.f32 %v381, %v382
      %v384 = vrot.slane %v383, 1
      %v385 = vadd.f32 %v383, %v384
      %v386 = vmul.f32 %v385, %v251
      %v387 = vadd.f32 %v386, 1e-05
      %v388 = vrsqrt.pop %v387
      %v389 = vmul.f32 %v253, %v388
      %v390 = vmul.f32 %v254, %v388
      %v391 = vmul.f32 %v255, %v388
      %v392 = vmul.f32 %v256, %v388
      %v393 = vmul.f32 %v257, %v388
      %v394 = vmul.f32 %v258, %v388
      %v395 = vmul.f32 %v259, %v388
      %v396 = vmul.f32 %v260, %v388
      %v397 = vmul.f32 %v261, %v388
      %v398 = vmul.f32 %v262, %v388
      %v399 = vmul.f32 %v263, %v388
      %v400 = vmul.f32 %v264, %v388
      %v401 = vmul.f32 %v265, %v388
      %v402 = vmul.f32 %v266, %v388
      %v403 = vmul.f32 %v267, %v388
      %v404 = vmul.f32 %v268, %v388
      %v405 = vmul.f32 %v269, %v388
      %v406 = vmul.f32 %v270, %v388
      %v407 = vmul.f32 %v271, %v388
      %v408 = vmul.f32 %v272, %v388
      %v409 = vmul.f32 %v273, %v388
      %v410 = vmul.f32 %v274, %v388
      %v411 = vmul.f32 %v275, %v388
      %v412 = vmul.f32 %v276, %v388
      %v413 = vmul.f32 %v277, %v388
      %v414 = vmul.f32 %v278, %v388
      %v415 = vmul.f32 %v279, %v388
      %v416 = vmul.f32 %v280, %v388
      %v417 = vmul.f32 %v281, %v388
      %v418 = vmul.f32 %v282, %v388
      %v419 = vmul.f32 %v283, %v388
      %v420 = vmul.f32 %v284, %v388
      %v421 = vmax.f32 %v389, 0.0
      %v422 = vmax.f32 %v390, 0.0
      %v423 = vmax.f32 %v391, 0.0
      %v424 = vmax.f32 %v392, 0.0
      %v425 = vmax.f32 %v393, 0.0
      %v426 = vmax.f32 %v394, 0.0
      %v427 = vmax.f32 %v395, 0.0
      %v428 = vmax.f32 %v396, 0.0
      %v429 = vmax.f32 %v397, 0.0
      %v430 = vmax.f32 %v398, 0.0
      %v431 = vmax.f32 %v399, 0.0
      %v432 = vmax.f32 %v400, 0.0
      %v433 = vmax.f32 %v401, 0.0
      %v434 = vmax.f32 %v402, 0.0
      %v435 = vmax.f32 %v403, 0.0
      %v436 = vmax.f32 %v404, 0.0
      %v437 = vmax.f32 %v405, 0.0
      %v438 = vmax.f32 %v406, 0.0
      %v439 = vmax.f32 %v407, 0.0
      %v440 = vmax.f32 %v408, 0.0
      %v441 = vmax.f32 %v409, 0.0
      %v442 = vmax.f32 %v410, 0.0
      %v443 = vmax.f32 %v411, 0.0
      %v444 = vmax.f32 %v412, 0.0
      %v445 = vmax.f32 %v413, 0.0
      %v446 = vmax.f32 %v414, 0.0
      %v447 = vmax.f32 %v415, 0.0
      %v448 = vmax.f32 %v416, 0.0
      %v449 = vmax.f32 %v417, 0.0
      %v450 = vmax.f32 %v418, 0.0
      %v451 = vmax.f32 %v419, 0.0
      %v452 = vmax.f32 %v420, 0.0
      %v453 = vpack.c.bf16 %v422, %v421
      %v454 = vpack.c.bf16 %v424, %v423
      %v455 = vpack.c.bf16 %v426, %v425
      %v456 = vpack.c.bf16 %v428, %v427
      %v457 = vpack.c.bf16 %v430, %v429
      %v458 = vpack.c.bf16 %v432, %v431
      %v459 = vpack.c.bf16 %v434, %v433
      %v460 = vpack.c.bf16 %v436, %v435
      %v461 = vpack.c.bf16 %v438, %v437
      %v462 = vpack.c.bf16 %v440, %v439
      %v463 = vpack.c.bf16 %v442, %v441
      %v464 = vpack.c.bf16 %v444, %v443
      %v465 = vpack.c.bf16 %v446, %v445
      %v466 = vpack.c.bf16 %v448, %v447
      %v467 = vpack.c.bf16 %v450, %v449
      %v468 = vpack.c.bf16 %v452, %v451
      %v485 = vunpack.c.l.b16 %v453
      %v486 = vunpack.c.h.b16 %v453
      %v487 = vunpack.c.l.b16 %v454
      %v488 = vunpack.c.h.b16 %v454
      %v489 = vunpack.c.l.b16 %v455
      %v490 = vunpack.c.h.b16 %v455
      %v491 = vunpack.c.l.b16 %v456
      %v492 = vunpack.c.h.b16 %v456
      %v493 = vunpack.c.l.b16 %v457
      %v494 = vunpack.c.h.b16 %v457
      %v495 = vunpack.c.l.b16 %v458
      %v496 = vunpack.c.h.b16 %v458
      %v497 = vunpack.c.l.b16 %v459
      %v498 = vunpack.c.h.b16 %v459
      %v499 = vunpack.c.l.b16 %v460
      %v500 = vunpack.c.h.b16 %v460
      %v501 = vunpack.c.l.b16 %v461
      %v502 = vunpack.c.h.b16 %v461
      %v503 = vunpack.c.l.b16 %v462
      %v504 = vunpack.c.h.b16 %v462
      %v505 = vunpack.c.l.b16 %v463
      %v506 = vunpack.c.h.b16 %v463
      %v507 = vunpack.c.l.b16 %v464
      %v508 = vunpack.c.h.b16 %v464
      %v509 = vunpack.c.l.b16 %v465
      %v510 = vunpack.c.h.b16 %v465
      %v511 = vunpack.c.l.b16 %v466
      %v512 = vunpack.c.h.b16 %v466
      %v513 = vunpack.c.l.b16 %v467
      %v514 = vunpack.c.h.b16 %v467
      %v515 = vunpack.c.l.b16 %v468
      %v516 = vunpack.c.h.b16 %v468
      %v517 = vpack.c.b16 %v485, %v485
      %v518 = vpack.c.b16 %v486, %v486
      %v519 = vpack.c.b16 %v487, %v487
      %v520 = vpack.c.b16 %v488, %v488
      %v521 = vpack.c.b16 %v489, %v489
      %v522 = vpack.c.b16 %v490, %v490
      %v523 = vpack.c.b16 %v491, %v491
      %v524 = vpack.c.b16 %v492, %v492
      %v525 = vpack.c.b16 %v493, %v493
      %v526 = vpack.c.b16 %v494, %v494
      %v527 = vpack.c.b16 %v495, %v495
      %v528 = vpack.c.b16 %v496, %v496
      %v529 = vpack.c.b16 %v497, %v497
      %v530 = vpack.c.b16 %v498, %v498
      %v531 = vpack.c.b16 %v499, %v499
      %v532 = vpack.c.b16 %v500, %v500
      %v533 = vpack.c.b16 %v501, %v501
      %v534 = vpack.c.b16 %v502, %v502
      %v535 = vpack.c.b16 %v503, %v503
      %v536 = vpack.c.b16 %v504, %v504
      %v537 = vpack.c.b16 %v505, %v505
      %v538 = vpack.c.b16 %v506, %v506
      %v539 = vpack.c.b16 %v507, %v507
      %v540 = vpack.c.b16 %v508, %v508
      %v541 = vpack.c.b16 %v509, %v509
      %v542 = vpack.c.b16 %v510, %v510
      %v543 = vpack.c.b16 %v511, %v511
      %v544 = vpack.c.b16 %v512, %v512
      %v545 = vpack.c.b16 %v513, %v513
      %v546 = vpack.c.b16 %v514, %v514
      %v547 = vpack.c.b16 %v515, %v515
      %v548 = vpack.c.b16 %v516, %v516
      %vm581 = vcmask 257024
      %582 = vst.msk [vmem:[%s116] sm:$0xf] %vm581, %v517
      %583 = vst.msk [vmem:[%s116 + $0x4] sm:$0xf] %vm581, %v518
      %584 = vst.msk [vmem:[%s116 + $0x8] sm:$0xf] %vm581, %v519
      %585 = vst.msk [vmem:[%s116 + $0xc] sm:$0xf] %vm581, %v520
      %586 = vst.msk [vmem:[%s116 + $0x10] sm:$0xf] %vm581, %v521
      %587 = vst.msk [vmem:[%s116 + $0x14] sm:$0xf] %vm581, %v522
      %588 = vst.msk [vmem:[%s116 + $0x18] sm:$0xf] %vm581, %v523
      %589 = vst.msk [vmem:[%s116 + $0x1c] sm:$0xf] %vm581, %v524
      %590 = vst.msk [vmem:[%s116 + $0x20] sm:$0xf] %vm581, %v525
      %591 = vst.msk [vmem:[%s116 + $0x24] sm:$0xf] %vm581, %v526
      %592 = vst.msk [vmem:[%s116 + $0x28] sm:$0xf] %vm581, %v527
      %593 = vst.msk [vmem:[%s116 + $0x2c] sm:$0xf] %vm581, %v528
      %594 = vst.msk [vmem:[%s116 + $0x30] sm:$0xf] %vm581, %v529
      %595 = vst.msk [vmem:[%s116 + $0x34] sm:$0xf] %vm581, %v530
      %596 = vst.msk [vmem:[%s116 + $0x38] sm:$0xf] %vm581, %v531
      %597 = vst.msk [vmem:[%s116 + $0x3c] sm:$0xf] %vm581, %v532
      %598 = vst.msk [vmem:[%s116 + $0x40] sm:$0xf] %vm581, %v533
      %599 = vst.msk [vmem:[%s116 + $0x44] sm:$0xf] %vm581, %v534
      %600 = vst.msk [vmem:[%s116 + $0x48] sm:$0xf] %vm581, %v535
      %601 = vst.msk [vmem:[%s116 + $0x4c] sm:$0xf] %vm581, %v536
      %602 = vst.msk [vmem:[%s116 + $0x50] sm:$0xf] %vm581, %v537
      %603 = vst.msk [vmem:[%s116 + $0x54] sm:$0xf] %vm581, %v538
      %604 = vst.msk [vmem:[%s116 + $0x58] sm:$0xf] %vm581, %v539
      %605 = vst.msk [vmem:[%s116 + $0x5c] sm:$0xf] %vm581, %v540
      %606 = vst.msk [vmem:[%s116 + $0x60] sm:$0xf] %vm581, %v541
      %607 = vst.msk [vmem:[%s116 + $0x64] sm:$0xf] %vm581, %v542
      %608 = vst.msk [vmem:[%s116 + $0x68] sm:$0xf] %vm581, %v543
      %609 = vst.msk [vmem:[%s116 + $0x6c] sm:$0xf] %vm581, %v544
      %610 = vst.msk [vmem:[%s116 + $0x70] sm:$0xf] %vm581, %v545
      %611 = vst.msk [vmem:[%s116 + $0x74] sm:$0xf] %vm581, %v546
      %612 = vst.msk [vmem:[%s116 + $0x78] sm:$0xf] %vm581, %v547
      %613 = vst.msk [vmem:[%s116 + $0x7c] sm:$0xf] %vm581, %v548
      %p614 = scmp.lt.s32.totalorder %s12, 1
      %s615 = scalar_select %p614, %s12, 1
      %s616 = smul.addr %s615, 32
      %s617 = smul.addr %s616, 4
      %s618 = scalar_lea.vmem %s1, %s617
      // Predicated region
      $region25: #{generator_forward.66} parent=23 // pred_check
        %p619 = pneg %p56
      $region26: #{generator_forward.66} parent=23 // pred_check_branch
        %621 = sbr.rel (%p619) target = $region28
      $region27: #{generator_forward.66} parent=23 // pred_region
        _
      $region28: #{generator_forward.66} parent=23 // pred_fallthru
        _
    $region24: #{generator_forward.66} parent=5 // pred_fallthru
      _
    %p622 = scmp.le.s32.totalorder 2, %s7
    // Predicated region
    $region29: #{generator_forward.66} parent=5 // pred_check
      %p623 = pneg %p622
    $region30: #{generator_forward.66} parent=5 // pred_check_branch
      %625 = sbr.rel (%p623) target = $region32
    $region31: #{generator_forward.66} parent=5 // pred_region
      %s626 = ssub.s32 %s7, 2
      // Predicated region
      $region33: #{generator_forward.66} parent=31 // pred_check
        %p627 = pneg %p62
      $region34: #{generator_forward.66} parent=31 // pred_check_branch
        %629 = sbr.rel (%p627) target = $region36
      $region35: #{generator_forward.66} parent=31 // pred_region
        %p630 = scmp.lt.s32.totalorder %s13, 1
        %s631 = scalar_select %p630, %s13, 1
        %s632 = smul.addr %s631, 32
        %s633 = smul.addr %s632, 4
        %s634 = scalar_lea.vmem %s1, %s633
      $region36: #{generator_forward.66} parent=31 // pred_fallthru
        _
    $region32: #{generator_forward.66} parent=5 // pred_fallthru
      _
  $region6: #{generator_forward.66} parent=0 // loop_footer
    %s11 = sadd.s32 1, %s7
  $region7: #{generator_forward.66} parent=0 // loop_footer_branch
    %6 = sbr.rel target = $region3
  $region8: #{generator_forward.66} parent=0 // loop_exit
    _

// kernel: generator_forward.67
$region0: #{generator_forward.67}
  #allocation0 [shape = 'u32[]', space=smem, size = 0x4, offset = 0x4, fixed_abs, tag = 'smem constant byte address 0x4 - core index']
  #allocation1 [shape = 'u32[144,128]{1,0:T(1,128)}', space=vmem, size = 0x12000, scoped, tag = 'internal scratch']
  #allocation2 [shape = 'bf16[2,384,128]{2,1,0:T(16,128)(2,1)}', space=vmem, size = 0x30000, scoped, tag = 'scratch operand']
  #allocation3 [shape = 's32[2]{0}', space=sflag, size = 0x8, scoped, tag = 'scratch operand']
  #allocation4 [shape = 's32[]', space=sflag, size = 0x4, offset = 0, fixed_abs, tag = 'sflag constant byte address 0x0 - dummy sync flag']
  #allocation5 [shape = 's32[]', space=sflag, size = 0x4, offset = 0, fixed_abs, tag = 'sflag constant byte address 0x0 - dummy sync flag']
  %s0 = inlined_call_operand.vmem [shape: bf16[720,128], index: 0, kind: input, shape index: {}]
  %s1 = inlined_call_operand.vmem [shape: bf16[1152,128], index: 1, kind: input, shape index: {}]
  %s2 = inlined_call_operand.vmem [shape: f32[672,128], index: 2, kind: output, shape index: {}]
  %s3 = sld [smem:[#allocation0]]
  $region113: #{generator_forward.67} parent=0
    _
  %s5 = ssub.s32 1, %s3
  %s6 = scalar_select 0, %s5, %s3
  loop: start=0, step=1, limit=4
  $region2: #{generator_forward.67} parent=0 // loop_pre_header
    _
  $region3: #{generator_forward.67} parent=0 // loop_header
    %s8 = sphi 0, %s12
    %p9 = scmp.ge.s32.totalorder %s8, 4
    %s15 = sphi 0, %s27
    %s16 = sphi 0, %s23
    %s17 = sphi 0, %s15
    %s18 = sphi 0, %s16
    %s19 = sphi 0, %s17
    %s20 = sphi 0, %s18
    %s28 = sphi 0, %s28
    %s30 = sphi 0, %s28
    %s31 = sphi 0, %s30
    %s45 = sphi 0, %s31
    %s53 = sphi 0, %s55
    %s56 = sphi 0, %s53
    %s57 = sphi 0, %s56
    %s73 = sphi 0, %s57
  $region4: #{generator_forward.67} parent=0 // loop_header_branch
    %11 = sbr.rel (%p9) target = $region8
  $region5: #{generator_forward.67} parent=0 // loop_body
    %s13 = ssub.s32 %s8, 1
    %s14 = ssub.s32 %s8, 2
    %s21 = sadd.s32 1, %s16
    %p22 = scmp.ge.s32.totalorder %s21, 1
    %s23 = scalar_select %p22, 0, %s21
    %s24 = sadd.s32 1, %s15
    %s25 = scalar_select %p22, %s24, %s15
    %p26 = scmp.ge.s32.totalorder %s25, 2
    %s27 = scalar_select %p26, 0, %s25
    %s29 = sadd.s32 %s28, 1
    %p32 = scmp.eq.s32.totalorder %s8, 1
    %p33 = scmp.ne.s32.totalorder %s28, %s30
    %p34 = scmp.eq.s32.totalorder %s8, 0
    %p35 = por %p33, %p34
    %p36 = scmp.ne.s32.totalorder %s28, %s30
    %p37 = scmp.eq.s32.totalorder %s13, 1
    %p38 = por %p36, %p37
    %p39 = scmp.ne.s32.totalorder %s30, %s31
    %p40 = scmp.eq.s32.totalorder %s13, 0
    %p41 = por %p39, %p40
    %p42 = scmp.ne.s32.totalorder %s30, %s31
    %p43 = scmp.eq.s32.totalorder %s14, 1
    %p44 = por %p42, %p43
    %p46 = scmp.ne.s32.totalorder %s31, %s45
    %p47 = scmp.eq.s32.totalorder %s14, 0
    %p48 = por %p46, %p47
    %s49 = sadd.s32 %s15, %s16
    %s50 = sadd.s32 %s27, %s23
    %s51 = ssub.s32 %s49, %s50
    %p52 = scmp.eq.s32.totalorder %s51, 0
    %s54 = sadd.s32 %s53, 1
    %s55 = scalar_select %p52, %s53, %s54
    %p58 = pneg %p52
    %p59 = scmp.eq.s32.totalorder %s8, 1
    %p60 = por %p58, %p59
    %p61 = scmp.ne.s32.totalorder %s53, %s56
    %p62 = scmp.eq.s32.totalorder %s8, 0
    %p63 = por %p61, %p62
    %p64 = scmp.ne.s32.totalorder %s53, %s56
    %p65 = scmp.eq.s32.totalorder %s13, 1
    %p66 = por %p64, %p65
    %p67 = scmp.ne.s32.totalorder %s56, %s57
    %p68 = scmp.eq.s32.totalorder %s13, 0
    %p69 = por %p67, %p68
    %p70 = scmp.ne.s32.totalorder %s56, %s57
    %p71 = scmp.eq.s32.totalorder %s14, 1
    %p72 = por %p70, %p71
    %p74 = scmp.ne.s32.totalorder %s57, %s73
    %p75 = scmp.eq.s32.totalorder %s14, 0
    %p76 = por %p74, %p75
    %p77 = scmp.le.s32.totalorder 1, %s8
    %p78 = scmp.lt.s32.totalorder %s8, 3
    %p79 = pnand %p77, %p78
    %p80 = pneg %p79
    // Predicated region
    $region9: #{generator_forward.67} parent=5 // pred_check
      _
    $region10: #{generator_forward.67} parent=5 // pred_check_branch
      %82 = sbr.rel (%p79) target = $region12
    $region11: #{generator_forward.67} parent=5 // pred_region
      %s83 = ssub.s32 %s8, 1
      // Predicated region
      $region13: #{generator_forward.67} parent=11 // pred_check
        %p84 = pneg %p41
      $region14: #{generator_forward.67} parent=11 // pred_check_branch
        %86 = sbr.rel (%p84) target = $region16
      $region15: #{generator_forward.67} parent=11 // pred_region
        _
      $region16: #{generator_forward.67} parent=11 // pred_fallthru
        _
    $region12: #{generator_forward.67} parent=5 // pred_fallthru
      _
    %p87 = scmp.lt.s32.totalorder %s8, 2
    // Predicated region
    $region17: #{generator_forward.67} parent=5 // pred_check
      %p88 = pneg %p87
    $region18: #{generator_forward.67} parent=5 // pred_check_branch
      %90 = sbr.rel (%p88) target = $region20
    $region19: #{generator_forward.67} parent=5 // pred_region
      _
    $region20: #{generator_forward.67} parent=5 // pred_fallthru
      _
    %p91 = scmp.le.s32.totalorder 1, %s8
    %p92 = scmp.lt.s32.totalorder %s8, 3
    %p93 = pnand %p91, %p92
    %p94 = pneg %p93
    // Predicated region
    $region21: #{generator_forward.67} parent=5 // pred_check
      _
    $region22: #{generator_forward.67} parent=5 // pred_check_branch
      %96 = sbr.rel (%p93) target = $region24
    $region23: #{generator_forward.67} parent=5 // pred_region
      %s97 = ssub.s32 %s8, 1
      %p98 = pneg %p41
      %p99 = pneg %p38
      %p100 = pneg %p69
      %p101 = pneg %p66
      %s102 = sadd.s32 %s17, %s18
      %s103 = smul.u32 42, %s102
      %p104 = scmp.lt.s32.totalorder %s103, 83
      %s105 = scalar_select %p104, %s103, 83
      %s106 = smul.addr %s105, 8
      %s107 = scalar_lea.vmem %s2, %s106
      %s108 = sadd.s32 %s17, %s18
      %s109 = smul.u32 42, %s108
      %p110 = scmp.lt.s32.totalorder %s109, 83
      %s111 = scalar_select %p110, %s109, 83
      %s112 = smul.addr %s111, 8
      %s113 = scalar_lea.vmem %s2, %s112
      %s114 = sadd.s32 %s17, %s18
      %s115 = smul.u32 42, %s114
      %s117 = sadd.s32 %s17, %s18
      %s118 = smul.u32 %s117, 336
      %p119 = scmp.lt.s32.totalorder %s18, 0
      %s120 = ssub.s32 0, %s18
      %s121 = scalar_select %p119, %s120, %s18
      %s122 = sand.u32 %s121, 1
      %s123 = ssub.s32 0, %s122
      %s124 = scalar_select %p119, %s123, %s122
      %p125 = scmp.ne.s32.totalorder %s124, 0
      %p126 = scmp.lt.s32.totalorder %s124, 0
      %p127 = pnand %p126, %p125
      %p128 = pneg %p127
      %s129 = sadd.s32 %s124, 2
      %s130 = scalar_select %p128, %s129, %s124
      %p131 = scmp.eq.s32.totalorder %s18, 0
      // Predicated region
      $region25: #{generator_forward.67} parent=23 // pred_check
        %p132 = pneg %p131
      $region26: #{generator_forward.67} parent=23 // pred_check_branch
        %134 = sbr.rel (%p132) target = $region28
      $region27: #{generator_forward.67} parent=23 // pred_region
        %s135 = sshra.s32 %s118, 3
        %s136 = sand.u32 %s118, 7
        %s137 = smul.addr %s135, 4
        %s138 = scalar_lea.vmem %s0, %s137
        %p140 = scmp.lt.u32.totalorder 192, 8
        %p141 = pneg %p140
        // Predicated region
        $region29: #{generator_forward.67} parent=27 // pred_check
          _
        $region30: #{generator_forward.67} parent=27 // pred_check_branch
          %143 = sbr.rel (%p140) target = $region32
        $region31: #{generator_forward.67} parent=27 // pred_region
          %s158 = sand.u32 192, 7
          %p159 = scmp.eq.s32.totalorder %s158, 0
          // Predicated region
          $region44: #{generator_forward.67} parent=31 // pred_check
            %p160 = pneg %p159
          $region45: #{generator_forward.67} parent=31 // pred_check_branch
            %162 = sbr.rel (%p160) target = $region47
          $region46: #{generator_forward.67} parent=31 // pred_region
            loop: start=0, step=1, limit=1
            $region48: #{generator_forward.67} parent=46 // loop_pre_header
              _
            $region49: #{generator_forward.67} parent=46 // loop_header
              %s164 = sphi 0, %s168
              %p165 = scmp.ge.s32.totalorder %s164, 1
              %s169 = sphi %s138, %s138
              %s170 = sphi [#allocation2], [#allocation2]
            $region50: #{generator_forward.67} parent=46 // loop_header_branch
              %167 = sbr.rel (%p165) target = $region54
            $region51: #{generator_forward.67} parent=46 // loop_body
              %v171 = vld [vmem:[%s169] sm:$0xff]
              %172 = vst [vmem:[%s170] sm:$0xff] %v171
              %v173 = vld [vmem:[%s169 + $0x8] sm:$0xff]
              %174 = vst [vmem:[%s170 + $0x8] sm:$0xff] %v173
              %v175 = vld [vmem:[%s169 + $0x10] sm:$0xff]
              %176 = vst [vmem:[%s170 + $0x10] sm:$0xff] %v175
              %v177 = vld [vmem:[%s169 + $0x18] sm:$0xff]
              %178 = vst [vmem:[%s170 + $0x18] sm:$0xff] %v177
              %v179 = vld [vmem:[%s169 + $0x20] sm:$0xff]
              %180 = vst [vmem:[%s170 + $0x20] sm:$0xff] %v179
              %v181 = vld [vmem:[%s169 + $0x28] sm:$0xff]
              %182 = vst [vmem:[%s170 + $0x28] sm:$0xff] %v181
              %v183 = vld [vmem:[%s169 + $0x30] sm:$0xff]
              %184 = vst [vmem:[%s170 + $0x30] sm:$0xff] %v183
              %v185 = vld [vmem:[%s169 + $0x38] sm:$0xff]
              %186 = vst [vmem:[%s170 + $0x38] sm:$0xff] %v185
              %v187 = vld [vmem:[%s169 + $0x40] sm:$0xff]
              %188 = vst [vmem:[%s170 + $0x40] sm:$0xff] %v187
              %v189 = vld [vmem:[%s169 + $0x48] sm:$0xff]
              %190 = vst [vmem:[%s170 + $0x48] sm:$0xff] %v189
              %v191 = vld [vmem:[%s169 + $0x50] sm:$0xff]
              %192 = vst [vmem:[%s170 + $0x50] sm:$0xff] %v191
              %v193 = vld [vmem:[%s169 + $0x58] sm:$0xff]
              %194 = vst [vmem:[%s170 + $0x58] sm:$0xff] %v193
              %v195 = vld [vmem:[%s169 + $0x60] sm:$0xff]
              %196 = vst [vmem:[%s170 + $0x60] sm:$0xff] %v195
              %v197 = vld [vmem:[%s169 + $0x68] sm:$0xff]
              %198 = vst [vmem:[%s170 + $0x68] sm:$0xff] %v197
              %v199 = vld [vmem:[%s169 + $0x70] sm:$0xff]
              %200 = vst [vmem:[%s170 + $0x70] sm:$0xff] %v199
              %v201 = vld [vmem:[%s169 + $0x78] sm:$0xff]
              %202 = vst [vmem:[%s170 + $0x78] sm:$0xff] %v201
              %v203 = vld [vmem:[%s169 + $0x80] sm:$0xff]
              %204 = vst [vmem:[%s170 + $0x80] sm:$0xff] %v203
              %v205 = vld [vmem:[%s169 + $0x88] sm:$0xff]
              %206 = vst [vmem:[%s170 + $0x88] sm:$0xff] %v205
              %v207 = vld [vmem:[%s169 + $0x90] sm:$0xff]
              %208 = vst [vmem:[%s170 + $0x90] sm:$0xff] %v207
              %v209 = vld [vmem:[%s169 + $0x98] sm:$0xff]
              %210 = vst [vmem:[%s170 + $0x98] sm:$0xff] %v209
              %v211 = vld [vmem:[%s169 + $0xa0] sm:$0xff]
              %212 = vst [vmem:[%s170 + $0xa0] sm:$0xff] %v211
              %v213 = vld [vmem:[%s169 + $0xa8] sm:$0xff]
              %214 = vst [vmem:[%s170 + $0xa8] sm:$0xff] %v213
              %v215 = vld [vmem:[%s169 + $0xb0] sm:$0xff]
              %216 = vst [vmem:[%s170 + $0xb0] sm:$0xff] %v215
              %v217 = vld [vmem:[%s169 + $0xb8] sm:$0xff]
              %218 = vst [vmem:[%s170 + $0xb8] sm:$0xff] %v217
            $region52: #{generator_forward.67} parent=46 // loop_footer
              %s168 = sadd.s32 1, %s164
            $region53: #{generator_forward.67} parent=46 // loop_footer_branch
              %163 = sbr.rel target = $region49
            $region54: #{generator_forward.67} parent=46 // loop_exit
              _
          $region47: #{generator_forward.67} parent=31 // pred_fallthru
            _
          %p219 = pneg %p159
          // Predicated region
          $region55: #{generator_forward.67} parent=31 // pred_check
            _
          $region56: #{generator_forward.67} parent=31 // pred_check_branch
            %221 = sbr.rel (%p159) target = $region58
          $region57: #{generator_forward.67} parent=31 // pred_region
            %s222 = sand.u32 192, 7
          $region58: #{generator_forward.67} parent=31 // pred_fallthru
            _
        $region32: #{generator_forward.67} parent=27 // pred_fallthru
          _
        // Predicated region
        $region33: #{generator_forward.67} parent=27 // pred_check
          %p144 = pneg %p140
        $region34: #{generator_forward.67} parent=27 // pred_check_branch
          %146 = sbr.rel (%p144) target = $region36
        $region35: #{generator_forward.67} parent=27 // pred_region
          %s147 = sshllo.u32 0, 192
          loop: start=0, step=1, limit=1
          $region37: #{generator_forward.67} parent=35 // loop_pre_header
            _
          $region38: #{generator_forward.67} parent=35 // loop_header
            %s149 = sphi 0, %s153
            %p150 = scmp.ge.s32.totalorder %s149, 1
            %s154 = sphi %s138, %s138
            %s155 = sphi [#allocation2], [#allocation2]
          $region39: #{generator_forward.67} parent=35 // loop_header_branch
            %152 = sbr.rel (%p150) target = $region43
          $region40: #{generator_forward.67} parent=35 // loop_body
            %v156 = vld [vmem:[%s154] sm:%s147]
            %157 = vst [vmem:[%s155] sm:%s147] %v156
          $region41: #{generator_forward.67} parent=35 // loop_footer
            %s153 = sadd.s32 1, %s149
          $region42: #{generator_forward.67} parent=35 // loop_footer_branch
            %148 = sbr.rel target = $region38
          $region43: #{generator_forward.67} parent=35 // loop_exit
            _
        $region36: #{generator_forward.67} parent=27 // pred_fallthru
          _
        // Predicated region
        $region59: #{generator_forward.67} parent=27 // pred_check
          _
        $region60: #{generator_forward.67} parent=27 // pred_check_branch
          %225 = sbr.rel (0) target = $region62
        $region61: #{generator_forward.67} parent=27 // pred_region
          %226 = vsyncadd [#allocation3], 3072
        $region62: #{generator_forward.67} parent=27 // pred_fallthru
          _
      $region28: #{generator_forward.67} parent=23 // pred_fallthru
        _
      %s227 = sadd.s32 %s18, 1
      %p228 = scmp.lt.s32.totalorder %s227, 1
      // Predicated region
      $region63: #{generator_forward.67} parent=23 // pred_check
        %p229 = pneg %p228
      $region64: #{generator_forward.67} parent=23 // pred_check_branch
        %231 = sbr.rel (%p229) target = $region66
      $region65: #{generator_forward.67} parent=23 // pred_region
        %s232 = sadd.s32 %s118, 336
        %s233 = ssub.s32 1, %s130
        %s234 = sshra.s32 %s232, 3
        %s235 = sand.u32 %s232, 7
        %s236 = smul.addr %s234, 4
        %s237 = scalar_lea.vmem %s0, %s236
        %s238 = smul.u32 %s233, 24
        %s239 = smul.addr %s238, 8
        %s240 = scalar_lea.vmem [#allocation2], %s239
        %s241 = scalar_lea.sflag [#allocation3], %s233
        %p243 = scmp.lt.u32.totalorder 192, 8
        %p244 = pneg %p243
        // Predicated region
        $region67: #{generator_forward.67} parent=65 // pred_check
          _
        $region68: #{generator_forward.67} parent=65 // pred_check_branch
          %246 = sbr.rel (%p243) target = $region70
        $region69: #{generator_forward.67} parent=65 // pred_region
          %s261 = sand.u32 192, 7
          %p262 = scmp.eq.s32.totalorder %s261, 0
          // Predicated region
          $region82: #{generator_forward.67} parent=69 // pred_check
            %p263 = pneg %p262
          $region83: #{generator_forward.67} parent=69 // pred_check_branch
            %265 = sbr.rel (%p263) target = $region85
          $region84: #{generator_forward.67} parent=69 // pred_region
            loop: start=0, step=1, limit=1
            $region86: #{generator_forward.67} parent=84 // loop_pre_header
              _
            $region87: #{generator_forward.67} parent=84 // loop_header
              %s267 = sphi 0, %s271
              %p268 = scmp.ge.s32.totalorder %s267, 1
              %s272 = sphi %s237, %s237
              %s273 = sphi %s240, %s240
            $region88: #{generator_forward.67} parent=84 // loop_header_branch
              %270 = sbr.rel (%p268) target = $region92
            $region89: #{generator_forward.67} parent=84 // loop_body
              %v274 = vld [vmem:[%s272] sm:$0xff]
              %275 = vst [vmem:[%s273] sm:$0xff] %v274
              %v276 = vld [vmem:[%s272 + $0x8] sm:$0xff]
              %277 = vst [vmem:[%s273 + $0x8] sm:$0xff] %v276
              %v278 = vld [vmem:[%s272 + $0x10] sm:$0xff]
              %279 = vst [vmem:[%s273 + $0x10] sm:$0xff] %v278
              %v280 = vld [vmem:[%s272 + $0x18] sm:$0xff]
              %281 = vst [vmem:[%s273 + $0x18] sm:$0xff] %v280
              %v282 = vld [vmem:[%s272 + $0x20] sm:$0xff]
              %283 = vst [vmem:[%s273 + $0x20] sm:$0xff] %v282
              %v284 = vld [vmem:[%s272 + $0x28] sm:$0xff]
              %285 = vst [vmem:[%s273 + $0x28] sm:$0xff] %v284
              %v286 = vld [vmem:[%s272 + $0x30] sm:$0xff]
              %287 = vst [vmem:[%s273 + $0x30] sm:$0xff] %v286
              %v288 = vld [vmem:[%s272 + $0x38] sm:$0xff]
              %289 = vst [vmem:[%s273 + $0x38] sm:$0xff] %v288
              %v290 = vld [vmem:[%s272 + $0x40] sm:$0xff]
              %291 = vst [vmem:[%s273 + $0x40] sm:$0xff] %v290
              %v292 = vld [vmem:[%s272 + $0x48] sm:$0xff]
              %293 = vst [vmem:[%s273 + $0x48] sm:$0xff] %v292
              %v294 = vld [vmem:[%s272 + $0x50] sm:$0xff]
              %295 = vst [vmem:[%s273 + $0x50] sm:$0xff] %v294
              %v296 = vld [vmem:[%s272 + $0x58] sm:$0xff]
              %297 = vst [vmem:[%s273 + $0x58] sm:$0xff] %v296
              %v298 = vld [vmem:[%s272 + $0x60] sm:$0xff]
              %299 = vst [vmem:[%s273 + $0x60] sm:$0xff] %v298
              %v300 = vld [vmem:[%s272 + $0x68] sm:$0xff]
              %301 = vst [vmem:[%s273 + $0x68] sm:$0xff] %v300
              %v302 = vld [vmem:[%s272 + $0x70] sm:$0xff]
              %303 = vst [vmem:[%s273 + $0x70] sm:$0xff] %v302
              %v304 = vld [vmem:[%s272 + $0x78] sm:$0xff]
              %305 = vst [vmem:[%s273 + $0x78] sm:$0xff] %v304
              %v306 = vld [vmem:[%s272 + $0x80] sm:$0xff]
              %307 = vst [vmem:[%s273 + $0x80] sm:$0xff] %v306
              %v308 = vld [vmem:[%s272 + $0x88] sm:$0xff]
              %309 = vst [vmem:[%s273 + $0x88] sm:$0xff] %v308
              %v310 = vld [vmem:[%s272 + $0x90] sm:$0xff]
              %311 = vst [vmem:[%s273 + $0x90] sm:$0xff] %v310
              %v312 = vld [vmem:[%s272 + $0x98] sm:$0xff]
              %313 = vst [vmem:[%s273 + $0x98] sm:$0xff] %v312
              %v314 = vld [vmem:[%s272 + $0xa0] sm:$0xff]
              %315 = vst [vmem:[%s273 + $0xa0] sm:$0xff] %v314
              %v316 = vld [vmem:[%s272 + $0xa8] sm:$0xff]
              %317 = vst [vmem:[%s273 + $0xa8] sm:$0xff] %v316
              %v318 = vld [vmem:[%s272 + $0xb0] sm:$0xff]
              %319 = vst [vmem:[%s273 + $0xb0] sm:$0xff] %v318
              %v320 = vld [vmem:[%s272 + $0xb8] sm:$0xff]
              %321 = vst [vmem:[%s273 + $0xb8] sm:$0xff] %v320
            $region90: #{generator_forward.67} parent=84 // loop_footer
              %s271 = sadd.s32 1, %s267
            $region91: #{generator_forward.67} parent=84 // loop_footer_branch
              %266 = sbr.rel target = $region87
            $region92: #{generator_forward.67} parent=84 // loop_exit
              _
          $region85: #{generator_forward.67} parent=69 // pred_fallthru
            _
          %p322 = pneg %p262
          // Predicated region
          $region93: #{generator_forward.67} parent=69 // pred_check
            _
          $region94: #{generator_forward.67} parent=69 // pred_check_branch
            %324 = sbr.rel (%p262) target = $region96
          $region95: #{generator_forward.67} parent=69 // pred_region
            %s325 = sand.u32 192, 7
          $region96: #{generator_forward.67} parent=69 // pred_fallthru
            _
        $region70: #{generator_forward.67} parent=65 // pred_fallthru
          _
        // Predicated region
        $region71: #{generator_forward.67} parent=65 // pred_check
          %p247 = pneg %p243
        $region72: #{generator_forward.67} parent=65 // pred_check_branch
          %249 = sbr.rel (%p247) target = $region74
        $region73: #{generator_forward.67} parent=65 // pred_region
          %s250 = sshllo.u32 0, 192
          loop: start=0, step=1, limit=1
          $region75: #{generator_forward.67} parent=73 // loop_pre_header
            _
          $region76: #{generator_forward.67} parent=73 // loop_header
            %s252 = sphi 0, %s256
            %p253 = scmp.ge.s32.totalorder %s252, 1
            %s257 = sphi %s237, %s237
            %s258 = sphi %s240, %s240
          $region77: #{generator_forward.67} parent=73 // loop_header_branch
            %255 = sbr.rel (%p253) target = $region81
          $region78: #{generator_forward.67} parent=73 // loop_body
            %v259 = vld [vmem:[%s257] sm:%s250]
            %260 = vst [vmem:[%s258] sm:%s250] %v259
          $region79: #{generator_forward.67} parent=73 // loop_footer
            %s256 = sadd.s32 1, %s252
          $region80: #{generator_forward.67} parent=73 // loop_footer_branch
            %251 = sbr.rel target = $region76
          $region81: #{generator_forward.67} parent=73 // loop_exit
            _
        $region74: #{generator_forward.67} parent=65 // pred_fallthru
          _
        // Predicated region
        $region97: #{generator_forward.67} parent=65 // pred_check
          _
        $region98: #{generator_forward.67} parent=65 // pred_check_branch
          %328 = sbr.rel (0) target = $region100
        $region99: #{generator_forward.67} parent=65 // pred_region
          %329 = vsyncadd %s241, 3072
        $region100: #{generator_forward.67} parent=65 // pred_fallthru
          _
      $region66: #{generator_forward.67} parent=23 // pred_fallthru
        _
      %s330 = smul.u32 %s130, 24
      %s331 = smul.addr %s330, 8
      %s332 = scalar_lea.vmem [#allocation2], %s331
      %s333 = scalar_lea.sflag [#allocation3], %s130
      %s334 = smul.u32 4, 48
      %s335 = smul.u32 %s334, 1
      %s336 = sshll.u32 %s335, 4
      %337 = dma.done %s333, %s336
      %v338 = vld [vmem:[%s332] sm:$0xff]
      %v339 = vld [vmem:[%s332 + $0x8] sm:$0xff]
      %v340 = vld [vmem:[%s332 + $0x10] sm:$0xff]
      %v341 = vld [vmem:[%s332 + $0x18] sm:$0xff]
      %v342 = vld [vmem:[%s332 + $0x20] sm:$0xff]
      %v343 = vld [vmem:[%s332 + $0x28] sm:$0xff]
      %v344 = vld [vmem:[%s332 + $0x30] sm:$0xff]
      %v345 = vld [vmem:[%s332 + $0x38] sm:$0xff]
      %v346 = vld [vmem:[%s332 + $0x40] sm:$0xff]
      %v347 = vld [vmem:[%s332 + $0x48] sm:$0xff]
      %v348 = vld [vmem:[%s332 + $0x50] sm:$0xff]
      %v349 = vld [vmem:[%s332 + $0x58] sm:$0xff]
      %v350 = vld [vmem:[%s332 + $0x60] sm:$0xff]
      %v351 = vld [vmem:[%s332 + $0x68] sm:$0xff]
      %v352 = vld [vmem:[%s332 + $0x70] sm:$0xff]
      %v353 = vld [vmem:[%s332 + $0x78] sm:$0xff]
      %v354 = vld [vmem:[%s332 + $0x80] sm:$0xff]
      %v355 = vld [vmem:[%s332 + $0x88] sm:$0xff]
      %v356 = vld [vmem:[%s332 + $0x90] sm:$0xff]
      %v357 = vld [vmem:[%s332 + $0x98] sm:$0xff]
      %v358 = vld [vmem:[%s332 + $0xa0] sm:$0xff]
      %v359 = vld [vmem:[%s332 + $0xa8] sm:$0xff]
      %v360 = vld [vmem:[%s332 + $0xb0] sm:$0xff]
      %v361 = vld [vmem:[%s332 + $0xb8] sm:$0xff]
      %vm362 = vsmask.f32 7424
      %v364 = vshrl.u32 %v338, 16
      %v366 = vshll.u32 %v338, 16
      %v368 = vrot.slane %v366, 1
      %v369 = vor.u32 %v364, %v368
      %v371 = vshll.u32 %v339, 16
      %v373 = vrot.slane %v371, 1
      %v374 = vsel %vm362, %v369, %v373
      %v375 = vshrl.u32 %v339, 16
      %v377 = vor.u32 %v375, %v373
      %v379 = vshll.u32 %v340, 16
      %v381 = vrot.slane %v379, 1
      %v382 = vsel %vm362, %v377, %v381
      %v383 = vshrl.u32 %v340, 16
      %v385 = vor.u32 %v383, %v381
      %v387 = vshll.u32 %v341, 16
      %v389 = vrot.slane %v387, 1
      %v390 = vsel %vm362, %v385, %v389
      %v391 = vshrl.u32 %v341, 16
      %v393 = vor.u32 %v391, %v389
      %v395 = vshll.u32 %v342, 16
      %v397 = vrot.slane %v395, 1
      %v398 = vsel %vm362, %v393, %v397
      %v399 = vshrl.u32 %v342, 16
      %v401 = vor.u32 %v399, %v397
      %v403 = vshll.u32 %v343, 16
      %v405 = vrot.slane %v403, 1
      %v406 = vsel %vm362, %v401, %v405
      %v407 = vshrl.u32 %v343, 16
      %v409 = vor.u32 %v407, %v405
      %v411 = vshll.u32 %v344, 16
      %v413 = vrot.slane %v411, 1
      %v414 = vsel %vm362, %v409, %v413
      %v415 = vshrl.u32 %v344, 16
      %v417 = vor.u32 %v415, %v413
      %v419 = vshll.u32 %v345, 16
      %v421 = vrot.slane %v419, 1
      %v422 = vsel %vm362, %v417, %v421
      %v423 = vshrl.u32 %v345, 16
      %v425 = vor.u32 %v423, %v421
      %v427 = vshll.u32 %v346, 16
      %v429 = vrot.slane %v427, 1
      %v430 = vsel %vm362, %v425, %v429
      %v431 = vshrl.u32 %v346, 16
      %v433 = vor.u32 %v431, %v429
      %v435 = vshll.u32 %v347, 16
      %v437 = vrot.slane %v435, 1
      %v438 = vsel %vm362, %v433, %v437
      %v439 = vshrl.u32 %v347, 16
      %v441 = vor.u32 %v439, %v437
      %v443 = vshll.u32 %v348, 16
      %v445 = vrot.slane %v443, 1
      %v446 = vsel %vm362, %v441, %v445
      %v447 = vshrl.u32 %v348, 16
      %v449 = vor.u32 %v447, %v445
      %v451 = vshll.u32 %v349, 16
      %v453 = vrot.slane %v451, 1
      %v454 = vsel %vm362, %v449, %v453
      %v455 = vshrl.u32 %v349, 16
      %v457 = vor.u32 %v455, %v453
      %v459 = vshll.u32 %v350, 16
      %v461 = vrot.slane %v459, 1
      %v462 = vsel %vm362, %v457, %v461
      %v463 = vshrl.u32 %v350, 16
      %v465 = vor.u32 %v463, %v461
      %v467 = vshll.u32 %v351, 16
      %v469 = vrot.slane %v467, 1
      %v470 = vsel %vm362, %v465, %v469
      %v471 = vshrl.u32 %v351, 16
      %v473 = vor.u32 %v471, %v469
      %v475 = vshll.u32 %v352, 16
      %v477 = vrot.slane %v475, 1
      %v478 = vsel %vm362, %v473, %v477
      %v479 = vshrl.u32 %v352, 16
      %v481 = vor.u32 %v479, %v477
      %v483 = vshll.u32 %v353, 16
      %v485 = vrot.slane %v483, 1
      %v486 = vsel %vm362, %v481, %v485
      %v487 = vshrl.u32 %v353, 16
      %v489 = vor.u32 %v487, %v485
      %v491 = vshll.u32 %v354, 16
      %v493 = vrot.slane %v491, 1
      %v494 = vsel %vm362, %v489, %v493
      %v495 = vshrl.u32 %v354, 16
      %v497 = vor.u32 %v495, %v493
      %v499 = vshll.u32 %v355, 16
      %v501 = vrot.slane %v499, 1
      %v502 = vsel %vm362, %v497, %v501
      %v503 = vshrl.u32 %v355, 16
      %v505 = vor.u32 %v503, %v501
      %v507 = vshll.u32 %v356, 16
      %v509 = vrot.slane %v507, 1
      %v510 = vsel %vm362, %v505, %v509
      %v511 = vshrl.u32 %v356, 16
      %v513 = vor.u32 %v511, %v509
      %v515 = vshll.u32 %v357, 16
      %v517 = vrot.slane %v515, 1
      %v518 = vsel %vm362, %v513, %v517
      %v519 = vshrl.u32 %v357, 16
      %v521 = vor.u32 %v519, %v517
      %v523 = vshll.u32 %v358, 16
      %v525 = vrot.slane %v523, 1
      %v526 = vsel %vm362, %v521, %v525
      %v527 = vshrl.u32 %v358, 16
      %v529 = vor.u32 %v527, %v525
      %v531 = vshll.u32 %v359, 16
      %v533 = vrot.slane %v531, 1
      %v534 = vsel %vm362, %v529, %v533
      %vm578 = vcmask 1046528
      %v579 = vrot.slane %v338, 1
      %v580 = vrot.slane %v339, 1
      %v581 = vsel %vm578, %v579, %v580
      %v582 = vrot.slane %v340, 1
      %v583 = vsel %vm578, %v580, %v582
      %v584 = vrot.slane %v341, 1
      %v585 = vsel %vm578, %v582, %v584
      %v586 = vrot.slane %v342, 1
      %v587 = vsel %vm578, %v584, %v586
      %v588 = vrot.slane %v343, 1
      %v589 = vsel %vm578, %v586, %v588
      %v590 = vrot.slane %v344, 1
      %v591 = vsel %vm578, %v588, %v590
      %v592 = vrot.slane %v345, 1
      %v593 = vsel %vm578, %v590, %v592
      %v594 = vrot.slane %v346, 1
      %v595 = vsel %vm578, %v592, %v594
      %v596 = vrot.slane %v347, 1
      %v597 = vsel %vm578, %v594, %v596
      %v598 = vrot.slane %v348, 1
      %v599 = vsel %vm578, %v596, %v598
      %v600 = vrot.slane %v349, 1
      %v601 = vsel %vm578, %v598, %v600
      %v602 = vrot.slane %v350, 1
      %v603 = vsel %vm578, %v600, %v602
      %v604 = vrot.slane %v351, 1
      %v605 = vsel %vm578, %v602, %v604
      %v606 = vrot.slane %v352, 1
      %v607 = vsel %vm578, %v604, %v606
      %v608 = vrot.slane %v353, 1
      %v609 = vsel %vm578, %v606, %v608
      %v610 = vrot.slane %v354, 1
      %v611 = vsel %vm578, %v608, %v610
      %v612 = vrot.slane %v355, 1
      %v613 = vsel %vm578, %v610, %v612
      %v614 = vrot.slane %v356, 1
      %v615 = vsel %vm578, %v612, %v614
      %v616 = vrot.slane %v357, 1
      %v617 = vsel %vm578, %v614, %v616
      %v618 = vrot.slane %v358, 1
      %v619 = vsel %vm578, %v616, %v618
      %v620 = vrot.slane %v359, 1
      %v621 = vsel %vm578, %v618, %v620
      %v644 = vrot.slane %v360, 1
      %v645 = vsel %vm578, %v620, %v644
      %vm647 = vsmask.f32 6400
      %v648 = vrot.slane %v375, 1
      %v649 = vrot.slane %v371, 2
      %v650 = vor.u32 %v648, %v649
      %v651 = vrot.slane %v383, 1
      %v652 = vrot.slane %v379, 2
      %v653 = vor.u32 %v651, %v652
      %v654 = vsel %vm647, %v650, %v653
      %v655 = vrot.slane %v391, 1
      %v656 = vrot.slane %v387, 2
      %v657 = vor.u32 %v655, %v656
      %v658 = vsel %vm647, %v653, %v657
      %v659 = vrot.slane %v399, 1
      %v660 = vrot.slane %v395, 2
      %v661 = vor.u32 %v659, %v660
      %v662 = vsel %vm647, %v657, %v661
      %v663 = vrot.slane %v407, 1
      %v664 = vrot.slane %v403, 2
      %v665 = vor.u32 %v663, %v664
      %v666 = vsel %vm647, %v661, %v665
      %v667 = vrot.slane %v415, 1
      %v668 = vrot.slane %v411, 2
      %v669 = vor.u32 %v667, %v668
      %v670 = vsel %vm647, %v665, %v669
      %v671 = vrot.slane %v423, 1
      %v672 = vrot.slane %v419, 2
      %v673 = vor.u32 %v671, %v672
      %v674 = vsel %vm647, %v669, %v673
      %v675 = vrot.slane %v431, 1
      %v676 = vrot.slane %v427, 2
      %v677 = vor.u32 %v675, %v676
      %v678 = vsel %vm647, %v673, %v677
      %v679 = vrot.slane %v439, 1
      %v680 = vrot.slane %v435, 2
      %v681 = vor.u32 %v679, %v680
      %v682 = vsel %vm647, %v677, %v681
      %v683 = vrot.slane %v447, 1
      %v684 = vrot.slane %v443, 2
      %v685 = vor.u32 %v683, %v684
      %v686 = vsel %vm647, %v681, %v685
      %v687 = vrot.slane %v455, 1
      %v688 = vrot.slane %v451, 2
      %v689 = vor.u32 %v687, %v688
      %v690 = vsel %vm647, %v685, %v689
      %v691 = vrot.slane %v463, 1
      %v692 = vrot.slane %v459, 2
      %v693 = vor.u32 %v691, %v692
      %v694 = vsel %vm647, %v689, %v693
      %v695 = vrot.slane %v471, 1
      %v696 = vrot.slane %v467, 2
      %v697 = vor.u32 %v695, %v696
      %v698 = vsel %vm647, %v693, %v697
      %v699 = vrot.slane %v479, 1
      %v700 = vrot.slane %v475, 2
      %v701 = vor.u32 %v699, %v700
      %v702 = vsel %vm647, %v697, %v701
      %v703 = vrot.slane %v487, 1
      %v704 = vrot.slane %v483, 2
      %v705 = vor.u32 %v703, %v704
      %v706 = vsel %vm647, %v701, %v705
      %v707 = vrot.slane %v495, 1
      %v708 = vrot.slane %v491, 2
      %v709 = vor.u32 %v707, %v708
      %v710 = vsel %vm647, %v705, %v709
      %v711 = vrot.slane %v503, 1
      %v712 = vrot.slane %v499, 2
      %v713 = vor.u32 %v711, %v712
      %v714 = vsel %vm647, %v709, %v713
      %v715 = vrot.slane %v511, 1
      %v716 = vrot.slane %v507, 2
      %v717 = vor.u32 %v715, %v716
      %v718 = vsel %vm647, %v713, %v717
      %v719 = vrot.slane %v519, 1
      %v720 = vrot.slane %v515, 2
      %v721 = vor.u32 %v719, %v720
      %v722 = vsel %vm647, %v717, %v721
      %v723 = vrot.slane %v527, 1
      %v724 = vrot.slane %v523, 2
      %v725 = vor.u32 %v723, %v724
      %v726 = vsel %vm647, %v721, %v725
      %v727 = vshrl.u32 %v359, 16
      %v729 = vrot.slane %v727, 1
      %v730 = vrot.slane %v531, 2
      %v731 = vor.u32 %v729, %v730
      %v732 = vsel %vm647, %v725, %v731
      %v734 = vshrl.u32 %v360, 16
      %v736 = vrot.slane %v734, 1
      %v737 = vshll.u32 %v360, 16
      %v739 = vrot.slane %v737, 2
      %v740 = vor.u32 %v736, %v739
      %v741 = vsel %vm647, %v731, %v740
      %vm763 = vcmask 1045504
      %v764 = vrot.slane %v339, 2
      %v765 = vrot.slane %v340, 2
      %v766 = vsel %vm763, %v764, %v765
      %v767 = vrot.slane %v341, 2
      %v768 = vsel %vm763, %v765, %v767
      %v769 = vrot.slane %v342, 2
      %v770 = vsel %vm763, %v767, %v769
      %v771 = vrot.slane %v343, 2
      %v772 = vsel %vm763, %v769, %v771
      %v773 = vrot.slane %v344, 2
      %v774 = vsel %vm763, %v771, %v773
      %v775 = vrot.slane %v345, 2
      %v776 = vsel %vm763, %v773, %v775
      %v777 = vrot.slane %v346, 2
      %v778 = vsel %vm763, %v775, %v777
      %v779 = vrot.slane %v347, 2
      %v780 = vsel %vm763, %v777, %v779
      %v781 = vrot.slane %v348, 2
      %v782 = vsel %vm763, %v779, %v781
      %v783 = vrot.slane %v349, 2
      %v784 = vsel %vm763, %v781, %v783
      %v785 = vrot.slane %v350, 2
      %v786 = vsel %vm763, %v783, %v785
      %v787 = vrot.slane %v351, 2
      %v788 = vsel %vm763, %v785, %v787
      %v789 = vrot.slane %v352, 2
      %v790 = vsel %vm763, %v787, %v789
      %v791 = vrot.slane %v353, 2
      %v792 = vsel %vm763, %v789, %v791
      %v793 = vrot.slane %v354, 2
      %v794 = vsel %vm763, %v791, %v793
      %v795 = vrot.slane %v355, 2
      %v796 = vsel %vm763, %v793, %v795
      %v797 = vrot.slane %v356, 2
      %v798 = vsel %vm763, %v795, %v797
      %v799 = vrot.slane %v357, 2
      %v800 = vsel %vm763, %v797, %v799
      %v801 = vrot.slane %v358, 2
      %v802 = vsel %vm763, %v799, %v801
      %v803 = vrot.slane %v359, 2
      %v804 = vsel %vm763, %v801, %v803
      %v805 = vrot.slane %v360, 2
      %v806 = vsel %vm763, %v803, %v805
      %v829 = vrot.slane %v361, 2
      %v830 = vsel %vm763, %v805, %v829
      %vm832 = vsmask.f32 5376
      %v833 = vrot.slane %v383, 2
      %v834 = vrot.slane %v379, 3
      %v835 = vor.u32 %v833, %v834
      %v836 = vrot.slane %v391, 2
      %v837 = vrot.slane %v387, 3
      %v838 = vor.u32 %v836, %v837
      %v839 = vsel %vm832, %v835, %v838
      %v840 = vrot.slane %v399, 2
      %v841 = vrot.slane %v395, 3
      %v842 = vor.u32 %v840, %v841
      %v843 = vsel %vm832, %v838, %v842
      %v844 = vrot.slane %v407, 2
      %v845 = vrot.slane %v403, 3
      %v846 = vor.u32 %v844, %v845
      %v847 = vsel %vm832, %v842, %v846
      %v848 = vrot.slane %v415, 2
      %v849 = vrot.slane %v411, 3
      %v850 = vor.u32 %v848, %v849
      %v851 = vsel %vm832, %v846, %v850
      %v852 = vrot.slane %v423, 2
      %v853 = vrot.slane %v419, 3
      %v854 = vor.u32 %v852, %v853
      %v855 = vsel %vm832, %v850, %v854
      %v856 = vrot.slane %v431, 2
      %v857 = vrot.slane %v427, 3
      %v858 = vor.u32 %v856, %v857
      %v859 = vsel %vm832, %v854, %v858
      %v860 = vrot.slane %v439, 2
      %v861 = vrot.slane %v435, 3
      %v862 = vor.u32 %v860, %v861
      %v863 = vsel %vm832, %v858, %v862
      %v864 = vrot.slane %v447, 2
      %v865 = vrot.slane %v443, 3
      %v866 = vor.u32 %v864, %v865
      %v867 = vsel %vm832, %v862, %v866
      %v868 = vrot.slane %v455, 2
      %v869 = vrot.slane %v451, 3
      %v870 = vor.u32 %v868, %v869
      %v871 = vsel %vm832, %v866, %v870
      %v872 = vrot.slane %v463, 2
      %v873 = vrot.slane %v459, 3
      %v874 = vor.u32 %v872, %v873
      %v875 = vsel %vm832, %v870, %v874
      %v876 = vrot.slane %v471, 2
      %v877 = vrot.slane %v467, 3
      %v878 = vor.u32 %v876, %v877
      %v879 = vsel %vm832, %v874, %v878
      %v880 = vrot.slane %v479, 2
      %v881 = vrot.slane %v475, 3
      %v882 = vor.u32 %v880, %v881
      %v883 = vsel %vm832, %v878, %v882
      %v884 = vrot.slane %v487, 2
      %v885 = vrot.slane %v483, 3
      %v886 = vor.u32 %v884, %v885
      %v887 = vsel %vm832, %v882, %v886
      %v888 = vrot.slane %v495, 2
      %v889 = vrot.slane %v491, 3
      %v890 = vor.u32 %v888, %v889
      %v891 = vsel %vm832, %v886, %v890
      %v892 = vrot.slane %v503, 2
      %v893 = vrot.slane %v499, 3
      %v894 = vor.u32 %v892, %v893
      %v895 = vsel %vm832, %v890, %v894
      %v896 = vrot.slane %v511, 2
      %v897 = vrot.slane %v507, 3
      %v898 = vor.u32 %v896, %v897
      %v899 = vsel %vm832, %v894, %v898
      %v900 = vrot.slane %v519, 2
      %v901 = vrot.slane %v515, 3
      %v902 = vor.u32 %v900, %v901
      %v903 = vsel %vm832, %v898, %v902
      %v904 = vrot.slane %v527, 2
      %v905 = vrot.slane %v523, 3
      %v906 = vor.u32 %v904, %v905
      %v907 = vsel %vm832, %v902, %v906
      %v908 = vrot.slane %v727, 2
      %v909 = vrot.slane %v531, 3
      %v910 = vor.u32 %v908, %v909
      %v911 = vsel %vm832, %v906, %v910
      %v912 = vrot.slane %v734, 2
      %v913 = vrot.slane %v737, 3
      %v914 = vor.u32 %v912, %v913
      %v915 = vsel %vm832, %v910, %v914
      %v917 = vshrl.u32 %v361, 16
      %v919 = vrot.slane %v917, 2
      %v920 = vshll.u32 %v361, 16
      %v922 = vrot.slane %v920, 3
      %v923 = vor.u32 %v919, %v922
      %v924 = vsel %vm832, %v914, %v923
      %vm946 = vcmask 1044480
      %v947 = vrot.slane %v340, 3
      %v948 = vrot.slane %v341, 3
      %v949 = vsel %vm946, %v947, %v948
      %v950 = vrot.slane %v342, 3
      %v951 = vsel %vm946, %v948, %v950
      %v952 = vrot.slane %v343, 3
      %v953 = vsel %vm946, %v950, %v952
      %v954 = vrot.slane %v344, 3
      %v955 = vsel %vm946, %v952, %v954
      %v956 = vrot.slane %v345, 3
      %v957 = vsel %vm946, %v954, %v956
      %v958 = vrot.slane %v346, 3
      %v959 = vsel %vm946, %v956, %v958
      %v960 = vrot.slane %v347, 3
      %v961 = vsel %vm946, %v958, %v960
      %v962 = vrot.slane %v348, 3
      %v963 = vsel %vm946, %v960, %v962
      %v964 = vrot.slane %v349, 3
      %v965 = vsel %vm946, %v962, %v964
      %v966 = vrot.slane %v350, 3
      %v967 = vsel %vm946, %v964, %v966
      %v968 = vrot.slane %v351, 3
      %v969 = vsel %vm946, %v966, %v968
      %v970 = vrot.slane %v352, 3
      %v971 = vsel %vm946, %v968, %v970
      %v972 = vrot.slane %v353, 3
      %v973 = vsel %vm946, %v970, %v972
      %v974 = vrot.slane %v354, 3
      %v975 = vsel %vm946, %v972, %v974
      %v976 = vrot.slane %v355, 3
      %v977 = vsel %vm946, %v974, %v976
      %v978 = vrot.slane %v356, 3
      %v979 = vsel %vm946, %v976, %v978
      %v980 = vrot.slane %v357, 3
      %v981 = vsel %vm946, %v978, %v980
      %v982 = vrot.slane %v358, 3
      %v983 = vsel %vm946, %v980, %v982
      %v984 = vrot.slane %v359, 3
      %v985 = vsel %vm946, %v982, %v984
      %v986 = vrot.slane %v360, 3
      %v987 = vsel %vm946, %v984, %v986
      %v988 = vrot.slane %v361, 3
      %v989 = vsel %vm946, %v986, %v988
      %v1011 = vld [vmem:[%s1] sm:$0xf]
      %v1012 = vld [vmem:[%s1 + $0x4] sm:$0xf]
      %v1013 = vld [vmem:[%s1 + $0x8] sm:$0xf]
      %v1014 = vld [vmem:[%s1 + $0xc] sm:$0xf]
      %v1015 = vld [vmem:[%s1 + $0x10] sm:$0xf]
      %v1016 = vld [vmem:[%s1 + $0x14] sm:$0xf]
      %v1017 = vld [vmem:[%s1 + $0x18] sm:$0xf]
      %v1018 = vld [vmem:[%s1 + $0x1c] sm:$0xf]
      %v1019 = vld [vmem:[%s1 + $0x20] sm:$0xf]
      %v1020 = vld [vmem:[%s1 + $0x24] sm:$0xf]
      %v1021 = vld [vmem:[%s1 + $0x28] sm:$0xf]
      %v1022 = vld [vmem:[%s1 + $0x2c] sm:$0xf]
      %v1023 = vld [vmem:[%s1 + $0x30] sm:$0xf]
      %v1024 = vld [vmem:[%s1 + $0x34] sm:$0xf]
      %v1025 = vld [vmem:[%s1 + $0x38] sm:$0xf]
      %v1026 = vld [vmem:[%s1 + $0x3c] sm:$0xf]
      %v1027 = vld [vmem:[%s1 + $0x40] sm:$0xf]
      %v1028 = vld [vmem:[%s1 + $0x44] sm:$0xf]
      %v1029 = vld [vmem:[%s1 + $0x48] sm:$0xf]
      %v1030 = vld [vmem:[%s1 + $0x4c] sm:$0xf]
      %v1031 = vld [vmem:[%s1 + $0x50] sm:$0xf]
      %v1032 = vld [vmem:[%s1 + $0x54] sm:$0xf]
      %v1033 = vld [vmem:[%s1 + $0x58] sm:$0xf]
      %v1034 = vld [vmem:[%s1 + $0x5c] sm:$0xf]
      %v1035 = vld [vmem:[%s1 + $0x60] sm:$0xf]
      %v1036 = vld [vmem:[%s1 + $0x64] sm:$0xf]
      %v1037 = vld [vmem:[%s1 + $0x68] sm:$0xf]
      %v1038 = vld [vmem:[%s1 + $0x6c] sm:$0xf]
      %v1039 = vld [vmem:[%s1 + $0x70] sm:$0xf]
      %v1040 = vld [vmem:[%s1 + $0x74] sm:$0xf]
      %v1041 = vld [vmem:[%s1 + $0x78] sm:$0xf]
      %v1042 = vld [vmem:[%s1 + $0x7c] sm:$0xf]
      %v1043 = vld [vmem:[%s1 + $0x80] sm:$0xf]
      %v1044 = vld [vmem:[%s1 + $0x84] sm:$0xf]
      %v1045 = vld [vmem:[%s1 + $0x88] sm:$0xf]
      %v1046 = vld [vmem:[%s1 + $0x8c] sm:$0xf]
      %v1047 = vld [vmem:[%s1 + $0x90] sm:$0xf]
      %v1048 = vld [vmem:[%s1 + $0x94] sm:$0xf]
      %v1049 = vld [vmem:[%s1 + $0x98] sm:$0xf]
      %v1050 = vld [vmem:[%s1 + $0x9c] sm:$0xf]
      %v1051 = vld [vmem:[%s1 + $0xa0] sm:$0xf]
      %v1052 = vld [vmem:[%s1 + $0xa4] sm:$0xf]
      %v1053 = vld [vmem:[%s1 + $0xa8] sm:$0xf]
      %v1054 = vld [vmem:[%s1 + $0xac] sm:$0xf]
      %v1055 = vld [vmem:[%s1 + $0xb0] sm:$0xf]
      %v1056 = vld [vmem:[%s1 + $0xb4] sm:$0xf]
      %v1057 = vld [vmem:[%s1 + $0xb8] sm:$0xf]
      %v1058 = vld [vmem:[%s1 + $0xbc] sm:$0xf]
      %v1059 = vld [vmem:[%s1 + $0xc0] sm:$0xf]
      %v1060 = vld [vmem:[%s1 + $0xc4] sm:$0xf]
      %v1061 = vld [vmem:[%s1 + $0xc8] sm:$0xf]
      %v1062 = vld [vmem:[%s1 + $0xcc] sm:$0xf]
      %v1063 = vld [vmem:[%s1 + $0xd0] sm:$0xf]
      %v1064 = vld [vmem:[%s1 + $0xd4] sm:$0xf]
      %v1065 = vld [vmem:[%s1 + $0xd8] sm:$0xf]
      %v1066 = vld [vmem:[%s1 + $0xdc] sm:$0xf]
      %v1067 = vld [vmem:[%s1 + $0xe0] sm:$0xf]
      %v1068 = vld [vmem:[%s1 + $0xe4] sm:$0xf]
      %v1069 = vld [vmem:[%s1 + $0xe8] sm:$0xf]
      %v1070 = vld [vmem:[%s1 + $0xec] sm:$0xf]
      %v1071 = vld [vmem:[%s1 + $0xf0] sm:$0xf]
      %v1072 = vld [vmem:[%s1 + $0xf4] sm:$0xf]
      %v1073 = vld [vmem:[%s1 + $0xf8] sm:$0xf]
      %v1074 = vld [vmem:[%s1 + $0xfc] sm:$0xf]
      %v1075 = vld [vmem:[%s1 + $0x100] sm:$0xf]
      %v1076 = vld [vmem:[%s1 + $0x104] sm:$0xf]
      %v1077 = vld [vmem:[%s1 + $0x108] sm:$0xf]
      %v1078 = vld [vmem:[%s1 + $0x10c] sm:$0xf]
      %v1079 = vld [vmem:[%s1 + $0x110] sm:$0xf]
      %v1080 = vld [vmem:[%s1 + $0x114] sm:$0xf]
      %v1081 = vld [vmem:[%s1 + $0x118] sm:$0xf]
      %v1082 = vld [vmem:[%s1 + $0x11c] sm:$0xf]
      %v1083 = vld [vmem:[%s1 + $0x120] sm:$0xf]
      %v1084 = vld [vmem:[%s1 + $0x124] sm:$0xf]
      %v1085 = vld [vmem:[%s1 + $0x128] sm:$0xf]
      %v1086 = vld [vmem:[%s1 + $0x12c] sm:$0xf]
      %v1087 = vld [vmem:[%s1 + $0x130] sm:$0xf]
      %v1088 = vld [vmem:[%s1 + $0x134] sm:$0xf]
      %v1089 = vld [vmem:[%s1 + $0x138] sm:$0xf]
      %v1090 = vld [vmem:[%s1 + $0x13c] sm:$0xf]
      %v1091 = vld [vmem:[%s1 + $0x140] sm:$0xf]
      %v1092 = vld [vmem:[%s1 + $0x144] sm:$0xf]
      %v1093 = vld [vmem:[%s1 + $0x148] sm:$0xf]
      %v1094 = vld [vmem:[%s1 + $0x14c] sm:$0xf]
      %v1095 = vld [vmem:[%s1 + $0x150] sm:$0xf]
      %v1096 = vld [vmem:[%s1 + $0x154] sm:$0xf]
      %v1097 = vld [vmem:[%s1 + $0x158] sm:$0xf]
      %v1098 = vld [vmem:[%s1 + $0x15c] sm:$0xf]
      %v1099 = vld [vmem:[%s1 + $0x160] sm:$0xf]
      %v1100 = vld [vmem:[%s1 + $0x164] sm:$0xf]
      %v1101 = vld [vmem:[%s1 + $0x168] sm:$0xf]
      %v1102 = vld [vmem:[%s1 + $0x16c] sm:$0xf]
      %v1103 = vld [vmem:[%s1 + $0x170] sm:$0xf]
      %v1104 = vld [vmem:[%s1 + $0x174] sm:$0xf]
      %v1105 = vld [vmem:[%s1 + $0x178] sm:$0xf]
      %v1106 = vld [vmem:[%s1 + $0x17c] sm:$0xf]
      %v1107 = vld [vmem:[%s1 + $0x180] sm:$0xf]
      %v1108 = vld [vmem:[%s1 + $0x184] sm:$0xf]
      %v1109 = vld [vmem:[%s1 + $0x188] sm:$0xf]
      %v1110 = vld [vmem:[%s1 + $0x18c] sm:$0xf]
      %v1111 = vld [vmem:[%s1 + $0x190] sm:$0xf]
      %v1112 = vld [vmem:[%s1 + $0x194] sm:$0xf]
      %v1113 = vld [vmem:[%s1 + $0x198] sm:$0xf]
      %v1114 = vld [vmem:[%s1 + $0x19c] sm:$0xf]
      %v1115 = vld [vmem:[%s1 + $0x1a0] sm:$0xf]
      %v1116 = vld [vmem:[%s1 + $0x1a4] sm:$0xf]
      %v1117 = vld [vmem:[%s1 + $0x1a8] sm:$0xf]
      %v1118 = vld [vmem:[%s1 + $0x1ac] sm:$0xf]
      %v1119 = vld [vmem:[%s1 + $0x1b0] sm:$0xf]
      %v1120 = vld [vmem:[%s1 + $0x1b4] sm:$0xf]
      %v1121 = vld [vmem:[%s1 + $0x1b8] sm:$0xf]
      %v1122 = vld [vmem:[%s1 + $0x1bc] sm:$0xf]
      %v1123 = vld [vmem:[%s1 + $0x1c0] sm:$0xf]
      %v1124 = vld [vmem:[%s1 + $0x1c4] sm:$0xf]
      %v1125 = vld [vmem:[%s1 + $0x1c8] sm:$0xf]
      %v1126 = vld [vmem:[%s1 + $0x1cc] sm:$0xf]
      %v1127 = vld [vmem:[%s1 + $0x1d0] sm:$0xf]
      %v1128 = vld [vmem:[%s1 + $0x1d4] sm:$0xf]
      %v1129 = vld [vmem:[%s1 + $0x1d8] sm:$0xf]
      %v1130 = vld [vmem:[%s1 + $0x1dc] sm:$0xf]
      %v1131 = vld [vmem:[%s1 + $0x1e0] sm:$0xf]
      %v1132 = vld [vmem:[%s1 + $0x1e4] sm:$0xf]
      %v1133 = vld [vmem:[%s1 + $0x1e8] sm:$0xf]
      %v1134 = vld [vmem:[%s1 + $0x1ec] sm:$0xf]
      %v1135 = vld [vmem:[%s1 + $0x1f0] sm:$0xf]
      %v1136 = vld [vmem:[%s1 + $0x1f4] sm:$0xf]
      %v1137 = vld [vmem:[%s1 + $0x1f8] sm:$0xf]
      %v1138 = vld [vmem:[%s1 + $0x1fc] sm:$0xf]
      %v1139 = vld [vmem:[%s1 + $0x200] sm:$0xf]
      %v1140 = vld [vmem:[%s1 + $0x204] sm:$0xf]
      %v1141 = vld [vmem:[%s1 + $0x208] sm:$0xf]
      %v1142 = vld [vmem:[%s1 + $0x20c] sm:$0xf]
      %v1143 = vld [vmem:[%s1 + $0x210] sm:$0xf]
      %v1144 = vld [vmem:[%s1 + $0x214] sm:$0xf]
      %v1145 = vld [vmem:[%s1 + $0x218] sm:$0xf]
      %v1146 = vld [vmem:[%s1 + $0x21c] sm:$0xf]
      %v1147 = vld [vmem:[%s1 + $0x220] sm:$0xf]
      %v1148 = vld [vmem:[%s1 + $0x224] sm:$0xf]
      %v1149 = vld [vmem:[%s1 + $0x228] sm:$0xf]
      %v1150 = vld [vmem:[%s1 + $0x22c] sm:$0xf]
      %v1151 = vld [vmem:[%s1 + $0x230] sm:$0xf]
      %v1152 = vld [vmem:[%s1 + $0x234] sm:$0xf]
      %v1153 = vld [vmem:[%s1 + $0x238] sm:$0xf]
      %v1154 = vld [vmem:[%s1 + $0x23c] sm:$0xf]
      %v1299 = vunpack.c.l.b16 %v1011
      %v1300 = vunpack.c.l.b16 %v1012
      %v1301 = vunpack.c.l.b16 %v1013
      %v1302 = vunpack.c.l.b16 %v1014
      %v1303 = vunpack.c.l.b16 %v1015
      %v1304 = vunpack.c.l.b16 %v1016
      %v1305 = vunpack.c.l.b16 %v1017
      %v1306 = vunpack.c.l.b16 %v1018
      %v1307 = vunpack.c.l.b16 %v1019
      %v1308 = vunpack.c.l.b16 %v1020
      %v1309 = vunpack.c.l.b16 %v1021
      %v1310 = vunpack.c.l.b16 %v1022
      %v1311 = vunpack.c.l.b16 %v1023
      %v1312 = vunpack.c.l.b16 %v1024
      %v1313 = vunpack.c.l.b16 %v1025
      %v1314 = vunpack.c.l.b16 %v1026
      %v1315 = vunpack.c.l.b16 %v1027
      %v1316 = vunpack.c.l.b16 %v1028
      %v1317 = vunpack.c.l.b16 %v1029
      %v1318 = vunpack.c.l.b16 %v1030
      %v1319 = vunpack.c.l.b16 %v1031
      %v1320 = vunpack.c.l.b16 %v1032
      %v1321 = vunpack.c.l.b16 %v1033
      %v1322 = vunpack.c.l.b16 %v1034
      %v1323 = vunpack.c.l.b16 %v1035
      %v1324 = vunpack.c.l.b16 %v1036
      %v1325 = vunpack.c.l.b16 %v1037
      %v1326 = vunpack.c.l.b16 %v1038
      %v1327 = vunpack.c.l.b16 %v1039
      %v1328 = vunpack.c.l.b16 %v1040
      %v1329 = vunpack.c.l.b16 %v1041
      %v1330 = vunpack.c.l.b16 %v1042
      %v1331 = vunpack.c.l.b16 %v1043
      %v1332 = vunpack.c.l.b16 %v1044
      %v1333 = vunpack.c.l.b16 %v1045
      %v1334 = vunpack.c.l.b16 %v1046
      %v1335 = vunpack.c.l.b16 %v1047
      %v1336 = vunpack.c.l.b16 %v1048
      %v1337 = vunpack.c.l.b16 %v1049
      %v1338 = vunpack.c.l.b16 %v1050
      %v1339 = vunpack.c.l.b16 %v1051
      %v1340 = vunpack.c.l.b16 %v1052
      %v1341 = vunpack.c.l.b16 %v1053
      %v1342 = vunpack.c.l.b16 %v1054
      %v1343 = vunpack.c.l.b16 %v1055
      %v1344 = vunpack.c.l.b16 %v1056
      %v1345 = vunpack.c.l.b16 %v1057
      %v1346 = vunpack.c.l.b16 %v1058
      %v1347 = vunpack.c.l.b16 %v1059
      %v1348 = vunpack.c.l.b16 %v1060
      %v1349 = vunpack.c.l.b16 %v1061
      %v1350 = vunpack.c.l.b16 %v1062
      %v1351 = vunpack.c.l.b16 %v1063
      %v1352 = vunpack.c.l.b16 %v1064
      %v1353 = vunpack.c.l.b16 %v1065
      %v1354 = vunpack.c.l.b16 %v1066
      %v1355 = vunpack.c.l.b16 %v1067
      %v1356 = vunpack.c.l.b16 %v1068
      %v1357 = vunpack.c.l.b16 %v1069
      %v1358 = vunpack.c.l.b16 %v1070
      %v1359 = vunpack.c.l.b16 %v1071
      %v1360 = vunpack.c.l.b16 %v1072
      %v1361 = vunpack.c.l.b16 %v1073
      %v1362 = vunpack.c.l.b16 %v1074
      %v1363 = vunpack.c.l.b16 %v1075
      %v1364 = vunpack.c.l.b16 %v1076
      %v1365 = vunpack.c.l.b16 %v1077
      %v1366 = vunpack.c.l.b16 %v1078
      %v1367 = vunpack.c.l.b16 %v1079
      %v1368 = vunpack.c.l.b16 %v1080
      %v1369 = vunpack.c.l.b16 %v1081
      %v1370 = vunpack.c.l.b16 %v1082
      %v1371 = vunpack.c.l.b16 %v1083
      %v1372 = vunpack.c.l.b16 %v1084
      %v1373 = vunpack.c.l.b16 %v1085
      %v1374 = vunpack.c.l.b16 %v1086
      %v1375 = vunpack.c.l.b16 %v1087
      %v1376 = vunpack.c.l.b16 %v1088
      %v1377 = vunpack.c.l.b16 %v1089
      %v1378 = vunpack.c.l.b16 %v1090
      %v1379 = vunpack.c.l.b16 %v1091
      %v1380 = vunpack.c.l.b16 %v1092
      %v1381 = vunpack.c.l.b16 %v1093
      %v1382 = vunpack.c.l.b16 %v1094
      %v1383 = vunpack.c.l.b16 %v1095
      %v1384 = vunpack.c.l.b16 %v1096
      %v1385 = vunpack.c.l.b16 %v1097
      %v1386 = vunpack.c.l.b16 %v1098
      %v1387 = vunpack.c.l.b16 %v1099
      %v1388 = vunpack.c.l.b16 %v1100
      %v1389 = vunpack.c.l.b16 %v1101
      %v1390 = vunpack.c.l.b16 %v1102
      %v1391 = vunpack.c.l.b16 %v1103
      %v1392 = vunpack.c.l.b16 %v1104
      %v1393 = vunpack.c.l.b16 %v1105
      %v1394 = vunpack.c.l.b16 %v1106
      %v1395 = vunpack.c.l.b16 %v1107
      %v1396 = vunpack.c.l.b16 %v1108
      %v1397 = vunpack.c.l.b16 %v1109
      %v1398 = vunpack.c.l.b16 %v1110
      %v1399 = vunpack.c.l.b16 %v1111
      %v1400 = vunpack.c.l.b16 %v1112
      %v1401 = vunpack.c.l.b16 %v1113
      %v1402 = vunpack.c.l.b16 %v1114
      %v1403 = vunpack.c.l.b16 %v1115
      %v1404 = vunpack.c.l.b16 %v1116
      %v1405 = vunpack.c.l.b16 %v1117
      %v1406 = vunpack.c.l.b16 %v1118
      %v1407 = vunpack.c.l.b16 %v1119
      %v1408 = vunpack.c.l.b16 %v1120
      %v1409 = vunpack.c.l.b16 %v1121
      %v1410 = vunpack.c.l.b16 %v1122
      %v1411 = vunpack.c.l.b16 %v1123
      %v1412 = vunpack.c.l.b16 %v1124
      %v1413 = vunpack.c.l.b16 %v1125
      %v1414 = vunpack.c.l.b16 %v1126
      %v1415 = vunpack.c.l.b16 %v1127
      %v1416 = vunpack.c.l.b16 %v1128
      %v1417 = vunpack.c.l.b16 %v1129
      %v1418 = vunpack.c.l.b16 %v1130
      %v1419 = vunpack.c.l.b16 %v1131
      %v1420 = vunpack.c.l.b16 %v1132
      %v1421 = vunpack.c.l.b16 %v1133
      %v1422 = vunpack.c.l.b16 %v1134
      %v1423 = vunpack.c.l.b16 %v1135
      %v1424 = vunpack.c.l.b16 %v1136
      %v1425 = vunpack.c.l.b16 %v1137
      %v1426 = vunpack.c.l.b16 %v1138
      %v1427 = vunpack.c.l.b16 %v1139
      %v1428 = vunpack.c.l.b16 %v1140
      %v1429 = vunpack.c.l.b16 %v1141
      %v1430 = vunpack.c.l.b16 %v1142
      %v1431 = vunpack.c.l.b16 %v1143
      %v1432 = vunpack.c.l.b16 %v1144
      %v1433 = vunpack.c.l.b16 %v1145
      %v1434 = vunpack.c.l.b16 %v1146
      %v1435 = vunpack.c.l.b16 %v1147
      %v1436 = vunpack.c.l.b16 %v1148
      %v1437 = vunpack.c.l.b16 %v1149
      %v1438 = vunpack.c.l.b16 %v1150
      %v1439 = vunpack.c.l.b16 %v1151
      %v1440 = vunpack.c.l.b16 %v1152
      %v1441 = vunpack.c.l.b16 %v1153
      %v1442 = vunpack.c.l.b16 %v1154
      %v1443 = vpack.c.b16 %v1300, %v1299
      %v1444 = vpack.c.b16 %v1302, %v1301
      %v1445 = vpack.c.b16 %v1304, %v1303
      %v1446 = vpack.c.b16 %v1306, %v1305
      %v1447 = vpack.c.b16 %v1308, %v1307
      %v1448 = vpack.c.b16 %v1310, %v1309
      %v1449 = vpack.c.b16 %v1312, %v1311
      %v1450 = vpack.c.b16 %v1314, %v1313
      %v1451 = vpack.c.b16 %v1316, %v1315
      %v1452 = vpack.c.b16 %v1318, %v1317
      %v1453 = vpack.c.b16 %v1320, %v1319
      %v1454 = vpack.c.b16 %v1322, %v1321
      %v1455 = vpack.c.b16 %v1324, %v1323
      %v1456 = vpack.c.b16 %v1326, %v1325
      %v1457 = vpack.c.b16 %v1328, %v1327
      %v1458 = vpack.c.b16 %v1330, %v1329
      %v1459 = vpack.c.b16 %v1332, %v1331
      %v1460 = vpack.c.b16 %v1334, %v1333
      %v1461 = vpack.c.b16 %v1336, %v1335
      %v1462 = vpack.c.b16 %v1338, %v1337
      %v1463 = vpack.c.b16 %v1340, %v1339
      %v1464 = vpack.c.b16 %v1342, %v1341
      %v1465 = vpack.c.b16 %v1344, %v1343
      %v1466 = vpack.c.b16 %v1346, %v1345
      %v1467 = vpack.c.b16 %v1348, %v1347
      %v1468 = vpack.c.b16 %v1350, %v1349
      %v1469 = vpack.c.b16 %v1352, %v1351
      %v1470 = vpack.c.b16 %v1354, %v1353
      %v1471 = vpack.c.b16 %v1356, %v1355
      %v1472 = vpack.c.b16 %v1358, %v1357
      %v1473 = vpack.c.b16 %v1360, %v1359
      %v1474 = vpack.c.b16 %v1362, %v1361
      %v1475 = vpack.c.b16 %v1364, %v1363
      %v1476 = vpack.c.b16 %v1366, %v1365
      %v1477 = vpack.c.b16 %v1368, %v1367
      %v1478 = vpack.c.b16 %v1370, %v1369
      %v1479 = vpack.c.b16 %v1372, %v1371
      %v1480 = vpack.c.b16 %v1374, %v1373
      %v1481 = vpack.c.b16 %v1376, %v1375
      %v1482 = vpack.c.b16 %v1378, %v1377
      %v1483 = vpack.c.b16 %v1380, %v1379
      %v1484 = vpack.c.b16 %v1382, %v1381
      %v1485 = vpack.c.b16 %v1384, %v1383
      %v1486 = vpack.c.b16 %v1386, %v1385
      %v1487 = vpack.c.b16 %v1388, %v1387
      %v1488 = vpack.c.b16 %v1390, %v1389
      %v1489 = vpack.c.b16 %v1392, %v1391
      %v1490 = vpack.c.b16 %v1394, %v1393
      %v1491 = vpack.c.b16 %v1396, %v1395
      %v1492 = vpack.c.b16 %v1398, %v1397
      %v1493 = vpack.c.b16 %v1400, %v1399
      %v1494 = vpack.c.b16 %v1402, %v1401
      %v1495 = vpack.c.b16 %v1404, %v1403
      %v1496 = vpack.c.b16 %v1406, %v1405
      %v1497 = vpack.c.b16 %v1408, %v1407
      %v1498 = vpack.c.b16 %v1410, %v1409
      %v1499 = vpack.c.b16 %v1412, %v1411
      %v1500 = vpack.c.b16 %v1414, %v1413
      %v1501 = vpack.c.b16 %v1416, %v1415
      %v1502 = vpack.c.b16 %v1418, %v1417
      %v1503 = vpack.c.b16 %v1420, %v1419
      %v1504 = vpack.c.b16 %v1422, %v1421
      %v1505 = vpack.c.b16 %v1424, %v1423
      %v1506 = vpack.c.b16 %v1426, %v1425
      %v1507 = vpack.c.b16 %v1428, %v1427
      %v1508 = vpack.c.b16 %v1430, %v1429
      %v1509 = vpack.c.b16 %v1432, %v1431
      %v1510 = vpack.c.b16 %v1434, %v1433
      %v1511 = vpack.c.b16 %v1436, %v1435
      %v1512 = vpack.c.b16 %v1438, %v1437
      %v1513 = vpack.c.b16 %v1440, %v1439
      %v1514 = vpack.c.b16 %v1442, %v1441
      %1587 = vmatprep.subr.bf16.mxu0 0
      %1588 = vmatpush1.bf16.msra.mxu0 %v1443
      %1589 = vmatprep.subr.bf16.mxu0 0
      %1590 = vmatpush1.bf16.msra.mxu0 %v1444
      %1591 = vmatprep.subr.bf16.mxu0 0
      %1592 = vmatpush1.bf16.msra.mxu0 %v1445
      %1593 = vmatprep.subr.bf16.mxu0 0
      %1594 = vmatpush1.bf16.msra.mxu0 %v1446
      %1595 = vmatprep.subr.bf16.mxu0 0
      %1596 = vmatpush1.bf16.msra.mxu0 %v1447
      %1597 = vmatprep.subr.bf16.mxu0 0
      %1598 = vmatpush1.bf16.msra.mxu0 %v1448
      %1599 = vmatprep.subr.bf16.mxu0 0
      %1600 = vmatpush1.bf16.msra.mxu0 %v1449
      %1601 = vmatprep.subr.bf16.mxu0 0
      %1602 = vmatpush1.bf16.msra.mxu0 %v1450
      %1603 = vmatprep.subr.bf16.mxu0 0
      %1604 = vmatpush1.bf16.msra.mxu0 %v1451
      %1605 = vmatprep.subr.bf16.mxu0 0
      %1606 = vmatpush1.bf16.msra.mxu0 %v1452
      %1607 = vmatprep.subr.bf16.mxu0 0
      %1608 = vmatpush1.bf16.msra.mxu0 %v1453
      %1609 = vmatprep.subr.bf16.mxu0 0
      %1610 = vmatpush1.bf16.msra.mxu0 %v1454
      %1611 = vmatprep.subr.bf16.mxu0 0
      %1612 = vmatpush1.bf16.msra.mxu0 %v1455
      %1613 = vmatprep.subr.bf16.mxu0 0
      %1614 = vmatpush1.bf16.msra.mxu0 %v1456
      %1615 = vmatprep.subr.bf16.mxu0 0
      %1616 = vmatpush1.bf16.msra.mxu0 %v1457
      %1617 = vmatprep.subr.bf16.mxu0 0
      %1618 = vmatpush1.bf16.msra.mxu0 %v1458
      %1619 = vmatprep.mubr.bf16.mxu0 %v374
      %1620 = vmatmul.mubr.bf16.gmra.mrb[0].mxu0 %v338
      %v1621 = vpop.f32.mrb[0].mxu0
      %v1622 = vadd.f32 0.0, %v1621
      %v1623 = vpop.f32.mrb[0].mxu0
      %v1624 = vpop.f32.mrb[0].mxu0
      %v1625 = vadd.f32 0.0, %v1624
      %v1626 = vpop.f32.mrb[0].mxu0
      %1627 = vmatprep.mubr.bf16.mxu0 %v382
      %1628 = vmatmul.mubr.bf16.gmra.mrb[0].mxu0 %v339
      %v1629 = vpop.f32.mrb[0].mxu0
      %v1630 = vadd.f32 0.0, %v1629
      %v1631 = vpop.f32.mrb[0].mxu0
      %v1632 = vpop.f32.mrb[0].mxu0
      %v1633 = vadd.f32 0.0, %v1632
      %v1634 = vpop.f32.mrb[0].mxu0
      %1635 = vmatprep.mubr.bf16.mxu0 %v390
      %1636 = vmatmul.mubr.bf16.gmra.mrb[0].mxu0 %v340
      %v1637 = vpop.f32.mrb[0].mxu0
      %v1638 = vadd.f32 0.0, %v1637
      %v1639 = vpop.f32.mrb[0].mxu0
      %v1640 = vpop.f32.mrb[0].mxu0
      %v1641 = vadd.f32 0.0, %v1640
      %v1642 = vpop.f32.mrb[0].mxu0
      %1643 = vmatprep.mubr.bf16.mxu0 %v398
      %1644 = vmatmul.mubr.bf16.gmra.mrb[0].mxu0 %v341
      %v1645 = vpop.f32.mrb[0].mxu0
      %v1646 = vadd.f32 0.0, %v1645
      %v1647 = vpop.f32.mrb[0].mxu0
      %v1648 = vpop.f32.mrb[0].mxu0
      %v1649 = vadd.f32 0.0, %v1648
      %v1650 = vpop.f32.mrb[0].mxu0
      %1651 = vmatprep.mubr.bf16.mxu0 %v406
      %1652 = vmatmul.mubr.bf16.gmra.mrb[0].mxu0 %v342
      %v1653 = vpop.f32.mrb[0].mxu0
      %v1654 = vadd.f32 0.0, %v1653
      %v1655 = vpop.f32.mrb[0].mxu0
      %v1656 = vpop.f32.mrb[0].mxu0
      %v1657 = vadd.f32 0.0, %v1656
      %v1658 = vpop.f32.mrb[0].mxu0
      %1659 = vmatprep.mubr.bf16.mxu0 %v414
      %1660 = vmatmul.mubr.bf16.gmra.mrb[0].mxu0 %v343
      %v1661 = vpop.f32.mrb[0].mxu0
      %v1662 = vadd.f32 0.0, %v1661
      %v1663 = vpop.f32.mrb[0].mxu0
      %v1664 = vpop.f32.mrb[0].mxu0
      %v1665 = vadd.f32 0.0, %v1664
      %v1666 = vpop.f32.mrb[0].mxu0
      %1667 = vmatprep.mubr.bf16.mxu0 %v422
      %1668 = vmatmul.mubr.bf16.gmra.mrb[0].mxu0 %v344
      %v1669 = vpop.f32.mrb[0].mxu0
      %v1670 = vadd.f32 0.0, %v1669
      %v1671 = vpop.f32.mrb[0].mxu0
      %v1672 = vpop.f32.mrb[0].mxu0
      %v1673 = vadd.f32 0.0, %v1672
      %v1674 = vpop.f32.mrb[0].mxu0
      %1675 = vmatprep.mubr.bf16.mxu0 %v430
      %1676 = vmatmul.mubr.bf16.gmra.mrb[0].mxu0 %v345
      %v1677 = vpop.f32.mrb[0].mxu0
      %v1678 = vadd.f32 0.0, %v1677
      %v1679 = vpop.f32.mrb[0].mxu0
      %v1680 = vpop.f32.mrb[0].mxu0
      %v1681 = vadd.f32 0.0, %v1680
      %v1682 = vpop.f32.mrb[0].mxu0
      %1683 = vmatprep.mubr.bf16.mxu0 %v438
      %1684 = vmatmul.mubr.bf16.gmra.mrb[0].mxu0 %v346
      %v1685 = vpop.f32.mrb[0].mxu0
      %v1686 = vadd.f32 0.0, %v1685
      %v1687 = vpop.f32.mrb[0].mxu0
      %v1688 = vpop.f32.mrb[0].mxu0
      %v1689 = vadd.f32 0.0, %v1688
      %v1690 = vpop.f32.mrb[0].mxu0
      %1691 = vmatprep.mubr.bf16.mxu0 %v446
      %1692 = vmatmul.mubr.bf16.gmra.mrb[0].mxu0 %v347
      %v1693 = vpop.f32.mrb[0].mxu0
      %v1694 = vadd.f32 0.0, %v1693
      %v1695 = vpop.f32.mrb[0].mxu0
      %v1696 = vpop.f32.mrb[0].mxu0
      %v1697 = vadd.f32 0.0, %v1696
      %v1698 = vpop.f32.mrb[0].mxu0
      %1699 = vmatprep.mubr.bf16.mxu0 %v454
      %1700 = vmatmul.mubr.bf16.gmra.mrb[0].mxu0 %v348
      %v1701 = vpop.f32.mrb[0].mxu0
      %v1702 = vadd.f32 0.0, %v1701
      %v1703 = vpop.f32.mrb[0].mxu0
      %v1704 = vpop.f32.mrb[0].mxu0
      %v1705 = vadd.f32 0.0, %v1704
      %v1706 = vpop.f32.mrb[0].mxu0
      %1707 = vmatprep.mubr.bf16.mxu0 %v462
      %1708 = vmatmul.mubr.bf16.gmra.mrb[0].mxu0 %v349
      %v1709 = vpop.f32.mrb[0].mxu0
      %v1710 = vadd.f32 0.0, %v1709
      %v1711 = vpop.f32.mrb[0].mxu0
      %v1712 = vpop.f32.mrb[0].mxu0
      %v1713 = vadd.f32 0.0, %v1712
      %v1714 = vpop.f32.mrb[0].mxu0
      %1715 = vmatprep.mubr.bf16.mxu0 %v470
      %1716 = vmatmul.mubr.bf16.gmra.mrb[0].mxu0 %v350
      %v1717 = vpop.f32.mrb[0].mxu0
      %v1718 = vadd.f32 0.0, %v1717
      %v1719 = vpop.f32.mrb[0].mxu0
      %v1720 = vpop.f32.mrb[0].mxu0
      %v1721 = vadd.f32 0.0, %v1720
      %v1722 = vpop.f32.mrb[0].mxu0
      %1723 = vmatprep.mubr.bf16.mxu0 %v478
      %1724 = vmatmul.mubr.bf16.gmra.mrb[0].mxu0 %v351
      %v1725 = vpop.f32.mrb[0].mxu0
      %v1726 = vadd.f32 0.0, %v1725
      %v1727 = vpop.f32.mrb[0].mxu0
      %v1728 = vpop.f32.mrb[0].mxu0
      %v1729 = vadd.f32 0.0, %v1728
      %v1730 = vpop.f32.mrb[0].mxu0
      %1731 = vmatprep.mubr.bf16.mxu0 %v486
      %1732 = vmatmul.mubr.bf16.gmra.mrb[0].mxu0 %v352
      %v1733 = vpop.f32.mrb[0].mxu0
      %v1734 = vadd.f32 0.0, %v1733
      %v1735 = vpop.f32.mrb[0].mxu0
      %v1736 = vpop.f32.mrb[0].mxu0
      %v1737 = vadd.f32 0.0, %v1736
      %v1738 = vpop.f32.mrb[0].mxu0
      %1739 = vmatprep.mubr.bf16.mxu0 %v494
      %1740 = vmatmul.mubr.bf16.gmra.mrb[0].mxu0 %v353
      %v1741 = vpop.f32.mrb[0].mxu0
      %v1742 = vadd.f32 0.0, %v1741
      %v1743 = vpop.f32.mrb[0].mxu0
      %v1744 = vpop.f32.mrb[0].mxu0
      %v1745 = vadd.f32 0.0, %v1744
      %v1746 = vpop.f32.mrb[0].mxu0
      %1747 = vmatprep.mubr.bf16.mxu0 %v502
      %1748 = vmatmul.mubr.bf16.gmra.mrb[0].mxu0 %v354
      %v1749 = vpop.f32.mrb[0].mxu0
      %v1750 = vadd.f32 0.0, %v1749
      %v1751 = vpop.f32.mrb[0].mxu0
      %v1752 = vpop.f32.mrb[0].mxu0
      %v1753 = vadd.f32 0.0, %v1752
      %v1754 = vpop.f32.mrb[0].mxu0
      %1755 = vmatprep.mubr.bf16.mxu0 %v510
      %1756 = vmatmul.mubr.bf16.gmra.mrb[0].mxu0 %v355
      %v1757 = vpop.f32.mrb[0].mxu0
      %v1758 = vadd.f32 0.0, %v1757
      %v1759 = vpop.f32.mrb[0].mxu0
      %v1760 = vpop.f32.mrb[0].mxu0
      %v1761 = vadd.f32 0.0, %v1760
      %v1762 = vpop.f32.mrb[0].mxu0
      %1763 = vmatprep.mubr.bf16.mxu0 %v518
      %1764 = vmatmul.mubr.bf16.gmra.mrb[0].mxu0 %v356
      %v1765 = vpop.f32.mrb[0].mxu0
      %v1766 = vadd.f32 0.0, %v1765
      %v1767 = vpop.f32.mrb[0].mxu0
      %v1768 = vpop.f32.mrb[0].mxu0
      %v1769 = vadd.f32 0.0, %v1768
      %v1770 = vpop.f32.mrb[0].mxu0
      %1771 = vmatprep.mubr.bf16.mxu0 %v526
      %1772 = vmatmul.mubr.bf16.gmra.mrb[0].mxu0 %v357
      %v1773 = vpop.f32.mrb[0].mxu0
      %v1774 = vadd.f32 0.0, %v1773
      %v1775 = vpop.f32.mrb[0].mxu0
      %v1776 = vpop.f32.mrb[0].mxu0
      %v1777 = vadd.f32 0.0, %v1776
      %v1778 = vpop.f32.mrb[0].mxu0
      %1779 = vmatprep.mubr.bf16.mxu0 %v534
      %1780 = vmatmul.mubr.bf16.gmra.mrb[0].mxu0 %v358
      %v1781 = vpop.f32.mrb[0].mxu0
      %v1782 = vadd.f32 0.0, %v1781
      %v1783 = vpop.f32.mrb[0].mxu0
      %v1784 = vpop.f32.mrb[0].mxu0
      %v1785 = vadd.f32 0.0, %v1784
      %v1786 = vpop.f32.mrb[0].mxu0
      %1787 = vdwg.mxu0
      %1788 = vmatprep.subr.bf16.mxu0 0
      %1789 = vmatpush1.bf16.msra.mxu0 %v1459
      %1790 = vmatprep.subr.bf16.mxu0 0
      %1791 = vmatpush1.bf16.msra.mxu0 %v1460
      %1792 = vmatprep.subr.bf16.mxu0 0
      %1793 = vmatpush1.bf16.msra.mxu0 %v1461
      %1794 = vmatprep.subr.bf16.mxu0 0
      %1795 = vmatpush1.bf16.msra.mxu0 %v1462
      %1796 = vmatprep.subr.bf16.mxu0 0
      %1797 = vmatpush1.bf16.msra.mxu0 %v1463
      %1798 = vmatprep.subr.bf16.mxu0 0
      %1799 = vmatpush1.bf16.msra.mxu0 %v1464
      %1800 = vmatprep.subr.bf16.mxu0 0
      %1801 = vmatpush1.bf16.msra.mxu0 %v1465
      %1802 = vmatprep.subr.bf16.mxu0 0
      %1803 = vmatpush1.bf16.msra.mxu0 %v1466
      %1804 = vmatprep.subr.bf16.mxu0 0
      %1805 = vmatpush1.bf16.msra.mxu0 %v1467
      %1806 = vmatprep.subr.bf16.mxu0 0
      %1807 = vmatpush1.bf16.msra.mxu0 %v1468
      %1808 = vmatprep.subr.bf16.mxu0 0
      %1809 = vmatpush1.bf16.msra.mxu0 %v1469
      %1810 = vmatprep.subr.bf16.mxu0 0
      %1811 = vmatpush1.bf16.msra.mxu0 %v1470
      %1812 = vmatprep.subr.bf16.mxu0 0
      %1813 = vmatpush1.bf16.msra.mxu0 %v1471
      %1814 = vmatprep.subr.bf16.mxu0 0
      %1815 = vmatpush1.bf16.msra.mxu0 %v1472
      %1816 = vmatprep.subr.bf16.mxu0 0
      %1817 = vmatpush1.bf16.msra.mxu0 %v1473
      %1818 = vmatprep.subr.bf16.mxu0 0
      %1819 = vmatpush1.bf16.msra.mxu0 %v1474
      %1820 = vmatprep.mubr.bf16.mxu0 %v583
      %1821 = vmatmul.mubr.bf16.gmra.mrb[0].mxu0 %v581
      %v1822 = vpop.f32.mrb[0].mxu0
      %v1823 = vadd.f32 %v1622, %v1822
      %v1824 = vpop.f32.mrb[0].mxu0
      %v1825 = vpop.f32.mrb[0].mxu0
      %v1826 = vadd.f32 %v1625, %v1825
      %v1827 = vpop.f32.mrb[0].mxu0
      %1828 = vmatprep.mubr.bf16.mxu0 %v585
      %1829 = vmatmul.mubr.bf16.gmra.mrb[0].mxu0 %v583
      %v1830 = vpop.f32.mrb[0].mxu0
      %v1831 = vadd.f32 %v1630, %v1830
      %v1832 = vpop.f32.mrb[0].mxu0
      %v1833 = vpop.f32.mrb[0].mxu0
      %v1834 = vadd.f32 %v1633, %v1833
      %v1835 = vpop.f32.mrb[0].mxu0
      %1836 = vmatprep.mubr.bf16.mxu0 %v587
      %1837 = vmatmul.mubr.bf16.gmra.mrb[0].mxu0 %v585
      %v1838 = vpop.f32.mrb[0].mxu0
      %v1839 = vadd.f32 %v1638, %v1838
      %v1840 = vpop.f32.mrb[0].mxu0
      %v1841 = vpop.f32.mrb[0].mxu0
      %v1842 = vadd.f32 %v1641, %v1841
      %v1843 = vpop.f32.mrb[0].mxu0
      %1844 = vmatprep.mubr.bf16.mxu0 %v589
      %1845 = vmatmul.mubr.bf16.gmra.mrb[0].mxu0 %v587
      %v1846 = vpop.f32.mrb[0].mxu0
      %v1847 = vadd.f32 %v1646, %v1846
      %v1848 = vpop.f32.mrb[0].mxu0
      %v1849 = vpop.f32.mrb[0].mxu0
      %v1850 = vadd.f32 %v1649, %v1849
      %v1851 = vpop.f32.mrb[0].mxu0
      %1852 = vmatprep.mubr.bf16.mxu0 %v591
      %1853 = vmatmul.mubr.bf16.gmra.mrb[0].mxu0 %v589
      %v1854 = vpop.f32.mrb[0].mxu0
      %v1855 = vadd.f32 %v1654, %v1854
      %v1856 = vpop.f32.mrb[0].mxu0
      %v1857 = vpop.f32.mrb[0].mxu0
      %v1858 = vadd.f32 %v1657, %v1857
      %v1859 = vpop.f32.mrb[0].mxu0
      %1860 = vmatprep.mubr.bf16.mxu0 %v593
      %1861 = vmatmul.mubr.bf16.gmra.mrb[0].mxu0 %v591
      %v1862 = vpop.f32.mrb[0].mxu0
      %v1863 = vadd.f32 %v1662, %v1862
      %v1864 = vpop.f32.mrb[0].mxu0
      %v1865 = vpop.f32.mrb[0].mxu0
      %v1866 = vadd.f32 %v1665, %v1865
      %v1867 = vpop.f32.mrb[0].mxu0
      %1868 = vmatprep.mubr.bf16.mxu0 %v595
      %1869 = vmatmul.mubr.bf16.gmra.mrb[0].mxu0 %v593
      %v1870 = vpop.f32.mrb[0].mxu0
      %v1871 = vadd.f32 %v1670, %v1870
      %v1872 = vpop.f32.mrb[0].mxu0
      %v1873 = vpop.f32.mrb[0].mxu0
      %v1874 = vadd.f32 %v1673, %v1873
      %v1875 = vpop.f32.mrb[0].mxu0
      %1876 = vmatprep.mubr.bf16.mxu0 %v597
      %1877 = vmatmul.mubr.bf16.gmra.mrb[0].mxu0 %v595
      %v1878 = vpop.f32.mrb[0].mxu0
      %v1879 = vadd.f32 %v1678, %v1878
      %v1880 = vpop.f32.mrb[0].mxu0
      %v1881 = vpop.f32.mrb[0].mxu0
      %v1882 = vadd.f32 %v1681, %v1881
      %v1883 = vpop.f32.mrb[0].mxu0
      %1884 = vmatprep.mubr.bf16.mxu0 %v599
      %1885 = vmatmul.mubr.bf16.gmra.mrb[0].mxu0 %v597
      %v1886 = vpop.f32.mrb[0].mxu0
      %v1887 = vadd.f32 %v1686, %v1886
      %v1888 = vpop.f32.mrb[0].mxu0
      %v1889 = vpop.f32.mrb[0].mxu0
      %v1890 = vadd.f32 %v1689, %v1889
      %v1891 = vpop.f32.mrb[0].mxu0
      %1892 = vmatprep.mubr.bf16.mxu0 %v601
      %1893 = vmatmul.mubr.bf16.gmra.mrb[0].mxu0 %v599
      %v1894 = vpop.f32.mrb[0].mxu0
      %v1895 = vadd.f32 %v1694, %v1894
      %v1896 = vpop.f32.mrb[0].mxu0
      %v1897 = vpop.f32.mrb[0].mxu0
      %v1898 = vadd.f32 %v1697, %v1897
      %v1899 = vpop.f32.mrb[0].mxu0
      %1900 = vmatprep.mubr.bf16.mxu0 %v603
      %1901 = vmatmul.mubr.bf16.gmra.mrb[0].mxu0 %v601
      %v1902 = vpop.f32.mrb[0].mxu0
      %v1903 = vadd.f32 %v1702, %v1902
      %v1904 = vpop.f32.mrb[0].mxu0
      %v1905 = vpop.f32.mrb[0].mxu0
      %v1906 = vadd.f32 %v1705, %v1905
      %v1907 = vpop.f32.mrb[0].mxu0
      %1908 = vmatprep.mubr.bf16.mxu0 %v605
      %1909 = vmatmul.mubr.bf16.gmra.mrb[0].mxu0 %v603
      %v1910 = vpop.f32.mrb[0].mxu0
      %v1911 = vadd.f32 %v1710, %v1910
      %v1912 = vpop.f32.mrb[0].mxu0
      %v1913 = vpop.f32.mrb[0].mxu0
      %v1914 = vadd.f32 %v1713, %v1913
      %v1915 = vpop.f32.mrb[0].mxu0
      %1916 = vmatprep.mubr.bf16.mxu0 %v607
      %1917 = vmatmul.mubr.bf16.gmra.mrb[0].mxu0 %v605
      %v1918 = vpop.f32.mrb[0].mxu0
      %v1919 = vadd.f32 %v1718, %v1918
      %v1920 = vpop.f32.mrb[0].mxu0
      %v1921 = vpop.f32.mrb[0].mxu0
      %v1922 = vadd.f32 %v1721, %v1921
      %v1923 = vpop.f32.mrb[0].mxu0
      %1924 = vmatprep.mubr.bf16.mxu0 %v609
      %1925 = vmatmul.mubr.bf16.gmra.mrb[0].mxu0 %v607
      %v1926 = vpop.f32.mrb[0].mxu0
      %v1927 = vadd.f32 %v1726, %v1926
      %v1928 = vpop.f32.mrb[0].mxu0
      %v1929 = vpop.f32.mrb[0].mxu0
      %v1930 = vadd.f32 %v1729, %v1929
      %v1931 = vpop.f32.mrb[0].mxu0
      %1932 = vmatprep.mubr.bf16.mxu0 %v611
      %1933 = vmatmul.mubr.bf16.gmra.mrb[0].mxu0 %v609
      %v1934 = vpop.f32.mrb[0].mxu0
      %v1935 = vadd.f32 %v1734, %v1934
      %v1936 = vpop.f32.mrb[0].mxu0
      %v1937 = vpop.f32.mrb[0].mxu0
      %v1938 = vadd.f32 %v1737, %v1937
      %v1939 = vpop.f32.mrb[0].mxu0
      %1940 = vmatprep.mubr.bf16.mxu0 %v613
      %1941 = vmatmul.mubr.bf16.gmra.mrb[0].mxu0 %v611
      %v1942 = vpop.f32.mrb[0].mxu0
      %v1943 = vadd.f32 %v1742, %v1942
      %v1944 = vpop.f32.mrb[0].mxu0
      %v1945 = vpop.f32.mrb[0].mxu0
      %v1946 = vadd.f32 %v1745, %v1945
      %v1947 = vpop.f32.mrb[0].mxu0
      %1948 = vmatprep.mubr.bf16.mxu0 %v615
      %1949 = vmatmul.mubr.bf16.gmra.mrb[0].mxu0 %v613
      %v1950 = vpop.f32.mrb[0].mxu0
      %v1951 = vadd.f32 %v1750, %v1950
      %v1952 = vpop.f32.mrb[0].mxu0
      %v1953 = vpop.f32.mrb[0].mxu0
      %v1954 = vadd.f32 %v1753, %v1953
      %v1955 = vpop.f32.mrb[0].mxu0
      %1956 = vmatprep.mubr.bf16.mxu0 %v617
      %1957 = vmatmul.mubr.bf16.gmra.mrb[0].mxu0 %v615
      %v1958 = vpop.f32.mrb[0].mxu0
      %v1959 = vadd.f32 %v1758, %v1958
      %v1960 = vpop.f32.mrb[0].mxu0
      %v1961 = vpop.f32.mrb[0].mxu0
      %v1962 = vadd.f32 %v1761, %v1961
      %v1963 = vpop.f32.mrb[0].mxu0
      %1964 = vmatprep.mubr.bf16.mxu0 %v619
      %1965 = vmatmul.mubr.bf16.gmra.mrb[0].mxu0 %v617
      %v1966 = vpop.f32.mrb[0].mxu0
      %v1967 = vadd.f32 %v1766, %v1966
      %v1968 = vpop.f32.mrb[0].mxu0
      %v1969 = vpop.f32.mrb[0].mxu0
      %v1970 = vadd.f32 %v1769, %v1969
      %v1971 = vpop.f32.mrb[0].mxu0
      %1972 = vmatprep.mubr.bf16.mxu0 %v621
      %1973 = vmatmul.mubr.bf16.gmra.mrb[0].mxu0 %v619
      %v1974 = vpop.f32.mrb[0].mxu0
      %v1975 = vadd.f32 %v1774, %v1974
      %v1976 = vpop.f32.mrb[0].mxu0
      %v1977 = vpop.f32.mrb[0].mxu0
      %v1978 = vadd.f32 %v1777, %v1977
      %v1979 = vpop.f32.mrb[0].mxu0
      %1980 = vmatprep.mubr.bf16.mxu0 %v645
      %1981 = vmatmul.mubr.bf16.gmra.mrb[0].mxu0 %v621
      %v1982 = vpop.f32.mrb[0].mxu0
      %v1983 = vadd.f32 %v1782, %v1982
      %v1984 = vpop.f32.mrb[0].mxu0
      %v1985 = vpop.f32.mrb[0].mxu0
      %v1986 = vadd.f32 %v1785, %v1985
      %v1987 = vpop.f32.mrb[0].mxu0
      %1988 = vdwg.mxu0
      %1989 = vmatprep.subr.bf16.mxu0 0
      %1990 = vmatpush1.bf16.msra.mxu0 %v1475
      %1991 = vmatprep.subr.bf16.mxu0 0
      %1992 = vmatpush1.bf16.msra.mxu0 %v1476
      %1993 = vmatprep.subr.bf16.mxu0 0
      %1994 = vmatpush1.bf16.msra.mxu0 %v1477
      %1995 = vmatprep.subr.bf16.mxu0 0
      %1996 = vmatpush1.bf16.msra.mxu0 %v1478
      %1997 = vmatprep.subr.bf16.mxu0 0
      %1998 = vmatpush1.bf16.msra.mxu0 %v1479
      %1999 = vmatprep.subr.bf16.mxu0 0
      %2000 = vmatpush1.bf16.msra.mxu0 %v1480
      %2001 = vmatprep.subr.bf16.mxu0 0
      %2002 = vmatpush1.bf16.msra.mxu0 %v1481
      %2003 = vmatprep.subr.bf16.mxu0 0
      %2004 = vmatpush1.bf16.msra.mxu0 %v1482
      %2005 = vmatprep.subr.bf16.mxu0 0
      %2006 = vmatpush1.bf16.msra.mxu0 %v1483
      %2007 = vmatprep.subr.bf16.mxu0 0
      %2008 = vmatpush1.bf16.msra.mxu0 %v1484
      %2009 = vmatprep.subr.bf16.mxu0 0
      %2010 = vmatpush1.bf16.msra.mxu0 %v1485
      %2011 = vmatprep.subr.bf16.mxu0 0
      %2012 = vmatpush1.bf16.msra.mxu0 %v1486
      %2013 = vmatprep.subr.bf16.mxu0 0
      %2014 = vmatpush1.bf16.msra.mxu0 %v1487
      %2015 = vmatprep.subr.bf16.mxu0 0
      %2016 = vmatpush1.bf16.msra.mxu0 %v1488
      %2017 = vmatprep.subr.bf16.mxu0 0
      %2018 = vmatpush1.bf16.msra.mxu0 %v1489
      %2019 = vmatprep.subr.bf16.mxu0 0
      %2020 = vmatpush1.bf16.msra.mxu0 %v1490
      %2021 = vmatprep.mubr.bf16.mxu0 %v766
      %2022 = vmatmul.mubr.bf16.gmra.mrb[0].mxu0 %v654
      %v2023 = vpop.f32.mrb[0].mxu0
      %v2024 = vadd.f32 %v1823, %v2023
      %v2025 = vpop.f32.mrb[0].mxu0
      %v2026 = vpop.f32.mrb[0].mxu0
      %v2027 = vadd.f32 %v1826, %v2026
      %v2028 = vpop.f32.mrb[0].mxu0
      %2029 = vmatprep.mubr.bf16.mxu0 %v768
      %2030 = vmatmul.mubr.bf16.gmra.mrb[0].mxu0 %v658
      %v2031 = vpop.f32.mrb[0].mxu0
      %v2032 = vadd.f32 %v1831, %v2031
      %v2033 = vpop.f32.mrb[0].mxu0
      %v2034 = vpop.f32.mrb[0].mxu0
      %v2035 = vadd.f32 %v1834, %v2034
      %v2036 = vpop.f32.mrb[0].mxu0
      %2037 = vmatprep.mubr.bf16.mxu0 %v770
      %2038 = vmatmul.mubr.bf16.gmra.mrb[0].mxu0 %v662
      %v2039 = vpop.f32.mrb[0].mxu0
      %v2040 = vadd.f32 %v1839, %v2039
      %v2041 = vpop.f32.mrb[0].mxu0
      %v2042 = vpop.f32.mrb[0].mxu0
      %v2043 = vadd.f32 %v1842, %v2042
      %v2044 = vpop.f32.mrb[0].mxu0
      %2045 = vmatprep.mubr.bf16.mxu0 %v772
      %2046 = vmatmul.mubr.bf16.gmra.mrb[0].mxu0 %v666
      %v2047 = vpop.f32.mrb[0].mxu0
      %v2048 = vadd.f32 %v1847, %v2047
      %v2049 = vpop.f32.mrb[0].mxu0
      %v2050 = vpop.f32.mrb[0].mxu0
      %v2051 = vadd.f32 %v1850, %v2050
      %v2052 = vpop.f32.mrb[0].mxu0
      %2053 = vmatprep.mubr.bf16.mxu0 %v774
      %2054 = vmatmul.mubr.bf16.gmra.mrb[0].mxu0 %v670
      %v2055 = vpop.f32.mrb[0].mxu0
      %v2056 = vadd.f32 %v1855, %v2055
      %v2057 = vpop.f32.mrb[0].mxu0
      %v2058 = vpop.f32.mrb[0].mxu0
      %v2059 = vadd.f32 %v1858, %v2058
      %v2060 = vpop.f32.mrb[0].mxu0
      %2061 = vmatprep.mubr.bf16.mxu0 %v776
      %2062 = vmatmul.mubr.bf16.gmra.mrb[0].mxu0 %v674
      %v2063 = vpop.f32.mrb[0].mxu0
      %v2064 = vadd.f32 %v1863, %v2063
      %v2065 = vpop.f32.mrb[0].mxu0
      %v2066 = vpop.f32.mrb[0].mxu0
      %v2067 = vadd.f32 %v1866, %v2066
      %v2068 = vpop.f32.mrb[0].mxu0
      %2069 = vmatprep.mubr.bf16.mxu0 %v778
      %2070 = vmatmul.mubr.bf16.gmra.mrb[0].mxu0 %v678
      %v2071 = vpop.f32.mrb[0].mxu0
      %v2072 = vadd.f32 %v1871, %v2071
      %v2073 = vpop.f32.mrb[0].mxu0
      %v2074 = vpop.f32.mrb[0].mxu0
      %v2075 = vadd.f32 %v1874, %v2074
      %v2076 = vpop.f32.mrb[0].mxu0
      %2077 = vmatprep.mubr.bf16.mxu0 %v780
      %2078 = vmatmul.mubr.bf16.gmra.mrb[0].mxu0 %v682
      %v2079 = vpop.f32.mrb[0].mxu0
      %v2080 = vadd.f32 %v1879, %v2079
      %v2081 = vpop.f32.mrb[0].mxu0
      %v2082 = vpop.f32.mrb[0].mxu0
      %v2083 = vadd.f32 %v1882, %v2082
      %v2084 = vpop.f32.mrb[0].mxu0
      %2085 = vmatprep.mubr.bf16.mxu0 %v782
      %2086 = vmatmul.mubr.bf16.gmra.mrb[0].mxu0 %v686
      %v2087 = vpop.f32.mrb[0].mxu0
      %v2088 = vadd.f32 %v1887, %v2087
      %v2089 = vpop.f32.mrb[0].mxu0
      %v2090 = vpop.f32.mrb[0].mxu0
      %v2091 = vadd.f32 %v1890, %v2090
      %v2092 = vpop.f32.mrb[0].mxu0
      %2093 = vmatprep.mubr.bf16.mxu0 %v784
      %2094 = vmatmul.mubr.bf16.gmra.mrb[0].mxu0 %v690
      %v2095 = vpop.f32.mrb[0].mxu0
      %v2096 = vadd.f32 %v1895, %v2095
      %v2097 = vpop.f32.mrb[0].mxu0
      %v2098 = vpop.f32.mrb[0].mxu0
      %v2099 = vadd.f32 %v1898, %v2098
      %v2100 = vpop.f32.mrb[0].mxu0
      %2101 = vmatprep.mubr.bf16.mxu0 %v786
      %2102 = vmatmul.mubr.bf16.gmra.mrb[0].mxu0 %v694
      %v2103 = vpop.f32.mrb[0].mxu0
      %v2104 = vadd.f32 %v1903, %v2103
      %v2105 = vpop.f32.mrb[0].mxu0
      %v2106 = vpop.f32.mrb[0].mxu0
      %v2107 = vadd.f32 %v1906, %v2106
      %v2108 = vpop.f32.mrb[0].mxu0
      %2109 = vmatprep.mubr.bf16.mxu0 %v788
      %2110 = vmatmul.mubr.bf16.gmra.mrb[0].mxu0 %v698
      %v2111 = vpop.f32.mrb[0].mxu0
      %v2112 = vadd.f32 %v1911, %v2111
      %v2113 = vpop.f32.mrb[0].mxu0
      %v2114 = vpop.f32.mrb[0].mxu0
      %v2115 = vadd.f32 %v1914, %v2114
      %v2116 = vpop.f32.mrb[0].mxu0
      %2117 = vmatprep.mubr.bf16.mxu0 %v790
      %2118 = vmatmul.mubr.bf16.gmra.mrb[0].mxu0 %v702
      %v2119 = vpop.f32.mrb[0].mxu0
      %v2120 = vadd.f32 %v1919, %v2119
      %v2121 = vpop.f32.mrb[0].mxu0
      %v2122 = vpop.f32.mrb[0].mxu0
      %v2123 = vadd.f32 %v1922, %v2122
      %v2124 = vpop.f32.mrb[0].mxu0
      %2125 = vmatprep.mubr.bf16.mxu0 %v792
      %2126 = vmatmul.mubr.bf16.gmra.mrb[0].mxu0 %v706
      %v2127 = vpop.f32.mrb[0].mxu0
      %v2128 = vadd.f32 %v1927, %v2127
      %v2129 = vpop.f32.mrb[0].mxu0
      %v2130 = vpop.f32.mrb[0].mxu0
      %v2131 = vadd.f32 %v1930, %v2130
      %v2132 = vpop.f32.mrb[0].mxu0
      %2133 = vmatprep.mubr.bf16.mxu0 %v794
      %2134 = vmatmul.mubr.bf16.gmra.mrb[0].mxu0 %v710
      %v2135 = vpop.f32.mrb[0].mxu0
      %v2136 = vadd.f32 %v1935, %v2135
      %v2137 = vpop.f32.mrb[0].mxu0
      %v2138 = vpop.f32.mrb[0].mxu0
      %v2139 = vadd.f32 %v1938, %v2138
      %v2140 = vpop.f32.mrb[0].mxu0
      %2141 = vmatprep.mubr.bf16.mxu0 %v796
      %2142 = vmatmul.mubr.bf16.gmra.mrb[0].mxu0 %v714
      %v2143 = vpop.f32.mrb[0].mxu0
      %v2144 = vadd.f32 %v1943, %v2143
      %v2145 = vpop.f32.mrb[0].mxu0
      %v2146 = vpop.f32.mrb[0].mxu0
      %v2147 = vadd.f32 %v1946, %v2146
      %v2148 = vpop.f32.mrb[0].mxu0
      %2149 = vmatprep.mubr.bf16.mxu0 %v798
      %2150 = vmatmul.mubr.bf16.gmra.mrb[0].mxu0 %v718
      %v2151 = vpop.f32.mrb[0].mxu0
      %v2152 = vadd.f32 %v1951, %v2151
      %v2153 = vpop.f32.mrb[0].mxu0
      %v2154 = vpop.f32.mrb[0].mxu0
      %v2155 = vadd.f32 %v1954, %v2154
      %v2156 = vpop.f32.mrb[0].mxu0
      %2157 = vmatprep.mubr.bf16.mxu0 %v800
      %2158 = vmatmul.mubr.bf16.gmra.mrb[0].mxu0 %v722
      %v2159 = vpop.f32.mrb[0].mxu0
      %v2160 = vadd.f32 %v1959, %v2159
      %v2161 = vpop.f32.mrb[0].mxu0
      %v2162 = vpop.f32.mrb[0].mxu0
      %v2163 = vadd.f32 %v1962, %v2162
      %v2164 = vpop.f32.mrb[0].mxu0
      %2165 = vmatprep.mubr.bf16.mxu0 %v802
      %2166 = vmatmul.mubr.bf16.gmra.mrb[0].mxu0 %v726
      %v2167 = vpop.f32.mrb[0].mxu0
      %v2168 = vadd.f32 %v1967, %v2167
      %v2169 = vpop.f32.mrb[0].mxu0
      %v2170 = vpop.f32.mrb[0].mxu0
      %v2171 = vadd.f32 %v1970, %v2170
      %v2172 = vpop.f32.mrb[0].mxu0
      %2173 = vmatprep.mubr.bf16.mxu0 %v804
      %2174 = vmatmul.mubr.bf16.gmra.mrb[0].mxu0 %v732
      %v2175 = vpop.f32.mrb[0].mxu0
      %v2176 = vadd.f32 %v1975, %v2175
      %v2177 = vpop.f32.mrb[0].mxu0
      %v2178 = vpop.f32.mrb[0].mxu0
      %v2179 = vadd.f32 %v1978, %v2178
      %v2180 = vpop.f32.mrb[0].mxu0
      %2181 = vmatprep.mubr.bf16.mxu0 %v806
      %2182 = vmatmul.mubr.bf16.gmra.mrb[0].mxu0 %v741
      %v2183 = vpop.f32.mrb[0].mxu0
      %v2184 = vadd.f32 %v1983, %v2183
      %v2185 = vpop.f32.mrb[0].mxu0
      %v2186 = vpop.f32.mrb[0].mxu0
      %v2187 = vadd.f32 %v1986, %v2186
      %v2188 = vpop.f32.mrb[0].mxu0
      %2189 = vdwg.mxu0
      %2190 = vmatprep.subr.bf16.mxu0 0
      %2191 = vmatpush1.bf16.msra.mxu0 %v1491
      %2192 = vmatprep.subr.bf16.mxu0 0
      %2193 = vmatpush1.bf16.msra.mxu0 %v1492
      %2194 = vmatprep.subr.bf16.mxu0 0
      %2195 = vmatpush1.bf16.msra.mxu0 %v1493
      %2196 = vmatprep.subr.bf16.mxu0 0
      %2197 = vmatpush1.bf16.msra.mxu0 %v1494
      %2198 = vmatprep.subr.bf16.mxu0 0
      %2199 = vmatpush1.bf16.msra.mxu0 %v1495
      %2200 = vmatprep.subr.bf16.mxu0 0
      %2201 = vmatpush1.bf16.msra.mxu0 %v1496
      %2202 = vmatprep.subr.bf16.mxu0 0
      %2203 = vmatpush1.bf16.msra.mxu0 %v1497
      %2204 = vmatprep.subr.bf16.mxu0 0
      %2205 = vmatpush1.bf16.msra.mxu0 %v1498
      %2206 = vmatprep.subr.bf16.mxu0 0
      %2207 = vmatpush1.bf16.msra.mxu0 %v1499
      %2208 = vmatprep.subr.bf16.mxu0 0
      %2209 = vmatpush1.bf16.msra.mxu0 %v1500
      %2210 = vmatprep.subr.bf16.mxu0 0
      %2211 = vmatpush1.bf16.msra.mxu0 %v1501
      %2212 = vmatprep.subr.bf16.mxu0 0
      %2213 = vmatpush1.bf16.msra.mxu0 %v1502
      %2214 = vmatprep.subr.bf16.mxu0 0
      %2215 = vmatpush1.bf16.msra.mxu0 %v1503
      %2216 = vmatprep.subr.bf16.mxu0 0
      %2217 = vmatpush1.bf16.msra.mxu0 %v1504
      %2218 = vmatprep.subr.bf16.mxu0 0
      %2219 = vmatpush1.bf16.msra.mxu0 %v1505
      %2220 = vmatprep.subr.bf16.mxu0 0
      %2221 = vmatpush1.bf16.msra.mxu0 %v1506
      %2222 = vmatprep.mubr.bf16.mxu0 %v839
      %2223 = vmatmul.mubr.bf16.gmra.mrb[0].mxu0 %v768
      %v2224 = vpop.f32.mrb[0].mxu0
      %v2225 = vadd.f32 %v2024, %v2224
      %v2226 = vpop.f32.mrb[0].mxu0
      %v2227 = vpop.f32.mrb[0].mxu0
      %v2228 = vadd.f32 %v2027, %v2227
      %v2229 = vpop.f32.mrb[0].mxu0
      %2230 = vmatprep.mubr.bf16.mxu0 %v843
      %2231 = vmatmul.mubr.bf16.gmra.mrb[0].mxu0 %v770
      %v2232 = vpop.f32.mrb[0].mxu0
      %v2233 = vadd.f32 %v2032, %v2232
      %v2234 = vpop.f32.mrb[0].mxu0
      %v2235 = vpop.f32.mrb[0].mxu0
      %v2236 = vadd.f32 %v2035, %v2235
      %v2237 = vpop.f32.mrb[0].mxu0
      %2238 = vmatprep.mubr.bf16.mxu0 %v847
      %2239 = vmatmul.mubr.bf16.gmra.mrb[0].mxu0 %v772
      %v2240 = vpop.f32.mrb[0].mxu0
      %v2241 = vadd.f32 %v2040, %v2240
      %v2242 = vpop.f32.mrb[0].mxu0
      %v2243 = vpop.f32.mrb[0].mxu0
      %v2244 = vadd.f32 %v2043, %v2243
      %v2245 = vpop.f32.mrb[0].mxu0
      %2246 = vmatprep.mubr.bf16.mxu0 %v851
      %2247 = vmatmul.mubr.bf16.gmra.mrb[0].mxu0 %v774
      %v2248 = vpop.f32.mrb[0].mxu0
      %v2249 = vadd.f32 %v2048, %v2248
      %v2250 = vpop.f32.mrb[0].mxu0
      %v2251 = vpop.f32.mrb[0].mxu0
      %v2252 = vadd.f32 %v2051, %v2251
      %v2253 = vpop.f32.mrb[0].mxu0
      %2254 = vmatprep.mubr.bf16.mxu0 %v855
      %2255 = vmatmul.mubr.bf16.gmra.mrb[0].mxu0 %v776
      %v2256 = vpop.f32.mrb[0].mxu0
      %v2257 = vadd.f32 %v2056, %v2256
      %v2258 = vpop.f32.mrb[0].mxu0
      %v2259 = vpop.f32.mrb[0].mxu0
      %v2260 = vadd.f32 %v2059, %v2259
      %v2261 = vpop.f32.mrb[0].mxu0
      %2262 = vmatprep.mubr.bf16.mxu0 %v859
      %2263 = vmatmul.mubr.bf16.gmra.mrb[0].mxu0 %v778
      %v2264 = vpop.f32.mrb[0].mxu0
      %v2265 = vadd.f32 %v2064, %v2264
      %v2266 = vpop.f32.mrb[0].mxu0
      %v2267 = vpop.f32.mrb[0].mxu0
      %v2268 = vadd.f32 %v2067, %v2267
      %v2269 = vpop.f32.mrb[0].mxu0
      %2270 = vmatprep.mubr.bf16.mxu0 %v863
      %2271 = vmatmul.mubr.bf16.gmra.mrb[0].mxu0 %v780
      %v2272 = vpop.f32.mrb[0].mxu0
      %v2273 = vadd.f32 %v2072, %v2272
      %v2274 = vpop.f32.mrb[0].mxu0
      %v2275 = vpop.f32.mrb[0].mxu0
      %v2276 = vadd.f32 %v2075, %v2275
      %v2277 = vpop.f32.mrb[0].mxu0
      %2278 = vmatprep.mubr.bf16.mxu0 %v867
      %2279 = vmatmul.mubr.bf16.gmra.mrb[0].mxu0 %v782
      %v2280 = vpop.f32.mrb[0].mxu0
      %v2281 = vadd.f32 %v2080, %v2280
      %v2282 = vpop.f32.mrb[0].mxu0
      %v2283 = vpop.f32.mrb[0].mxu0
      %v2284 = vadd.f32 %v2083, %v2283
      %v2285 = vpop.f32.mrb[0].mxu0
      %2286 = vmatprep.mubr.bf16.mxu0 %v871
      %2287 = vmatmul.mubr.bf16.gmra.mrb[0].mxu0 %v784
      %v2288 = vpop.f32.mrb[0].mxu0
      %v2289 = vadd.f32 %v2088, %v2288
      %v2290 = vpop.f32.mrb[0].mxu0
      %v2291 = vpop.f32.mrb[0].mxu0
      %v2292 = vadd.f32 %v2091, %v2291
      %v2293 = vpop.f32.mrb[0].mxu0
      %2294 = vmatprep.mubr.bf16.mxu0 %v875
      %2295 = vmatmul.mubr.bf16.gmra.mrb[0].mxu0 %v786
      %v2296 = vpop.f32.mrb[0].mxu0
      %v2297 = vadd.f32 %v2096, %v2296
      %v2298 = vpop.f32.mrb[0].mxu0
      %v2299 = vpop.f32.mrb[0].mxu0
      %v2300 = vadd.f32 %v2099, %v2299
      %v2301 = vpop.f32.mrb[0].mxu0
      %2302 = vmatprep.mubr.bf16.mxu0 %v879
      %2303 = vmatmul.mubr.bf16.gmra.mrb[0].mxu0 %v788
      %v2304 = vpop.f32.mrb[0].mxu0
      %v2305 = vadd.f32 %v2104, %v2304
      %v2306 = vpop.f32.mrb[0].mxu0
      %v2307 = vpop.f32.mrb[0].mxu0
      %v2308 = vadd.f32 %v2107, %v2307
      %v2309 = vpop.f32.mrb[0].mxu0
      %2310 = vmatprep.mubr.bf16.mxu0 %v883
      %2311 = vmatmul.mubr.bf16.gmra.mrb[0].mxu0 %v790
      %v2312 = vpop.f32.mrb[0].mxu0
      %v2313 = vadd.f32 %v2112, %v2312
      %v2314 = vpop.f32.mrb[0].mxu0
      %v2315 = vpop.f32.mrb[0].mxu0
      %v2316 = vadd.f32 %v2115, %v2315
      %v2317 = vpop.f32.mrb[0].mxu0
      %2318 = vmatprep.mubr.bf16.mxu0 %v887
      %2319 = vmatmul.mubr.bf16.gmra.mrb[0].mxu0 %v792
      %v2320 = vpop.f32.mrb[0].mxu0
      %v2321 = vadd.f32 %v2120, %v2320
      %v2322 = vpop.f32.mrb[0].mxu0
      %v2323 = vpop.f32.mrb[0].mxu0
      %v2324 = vadd.f32 %v2123, %v2323
      %v2325 = vpop.f32.mrb[0].mxu0
      %2326 = vmatprep.mubr.bf16.mxu0 %v891
      %2327 = vmatmul.mubr.bf16.gmra.mrb[0].mxu0 %v794
      %v2328 = vpop.f32.mrb[0].mxu0
      %v2329 = vadd.f32 %v2128, %v2328
      %v2330 = vpop.f32.mrb[0].mxu0
      %v2331 = vpop.f32.mrb[0].mxu0
      %v2332 = vadd.f32 %v2131, %v2331
      %v2333 = vpop.f32.mrb[0].mxu0
      %2334 = vmatprep.mubr.bf16.mxu0 %v895
      %2335 = vmatmul.mubr.bf16.gmra.mrb[0].mxu0 %v796
      %v2336 = vpop.f32.mrb[0].mxu0
      %v2337 = vadd.f32 %v2136, %v2336
      %v2338 = vpop.f32.mrb[0].mxu0
      %v2339 = vpop.f32.mrb[0].mxu0
      %v2340 = vadd.f32 %v2139, %v2339
      %v2341 = vpop.f32.mrb[0].mxu0
      %2342 = vmatprep.mubr.bf16.mxu0 %v899
      %2343 = vmatmul.mubr.bf16.gmra.mrb[0].mxu0 %v798
      %v2344 = vpop.f32.mrb[0].mxu0
      %v2345 = vadd.f32 %v2144, %v2344
      %v2346 = vpop.f32.mrb[0].mxu0
      %v2347 = vpop.f32.mrb[0].mxu0
      %v2348 = vadd.f32 %v2147, %v2347
      %v2349 = vpop.f32.mrb[0].mxu0
      %2350 = vmatprep.mubr.bf16.mxu0 %v903
      %2351 = vmatmul.mubr.bf16.gmra.mrb[0].mxu0 %v800
      %v2352 = vpop.f32.mrb[0].mxu0
      %v2353 = vadd.f32 %v2152, %v2352
      %v2354 = vpop.f32.mrb[0].mxu0
      %v2355 = vpop.f32.mrb[0].mxu0
      %v2356 = vadd.f32 %v2155, %v2355
      %v2357 = vpop.f32.mrb[0].mxu0
      %2358 = vmatprep.mubr.bf16.mxu0 %v907
      %2359 = vmatmul.mubr.bf16.gmra.mrb[0].mxu0 %v802
      %v2360 = vpop.f32.mrb[0].mxu0
      %v2361 = vadd.f32 %v2160, %v2360
      %v2362 = vpop.f32.mrb[0].mxu0
      %v2363 = vpop.f32.mrb[0].mxu0
      %v2364 = vadd.f32 %v2163, %v2363
      %v2365 = vpop.f32.mrb[0].mxu0
      %2366 = vmatprep.mubr.bf16.mxu0 %v911
      %2367 = vmatmul.mubr.bf16.gmra.mrb[0].mxu0 %v804
      %v2368 = vpop.f32.mrb[0].mxu0
      %v2369 = vadd.f32 %v2168, %v2368
      %v2370 = vpop.f32.mrb[0].mxu0
      %v2371 = vpop.f32.mrb[0].mxu0
      %v2372 = vadd.f32 %v2171, %v2371
      %v2373 = vpop.f32.mrb[0].mxu0
      %2374 = vmatprep.mubr.bf16.mxu0 %v915
      %2375 = vmatmul.mubr.bf16.gmra.mrb[0].mxu0 %v806
      %v2376 = vpop.f32.mrb[0].mxu0
      %v2377 = vadd.f32 %v2176, %v2376
      %v2378 = vpop.f32.mrb[0].mxu0
      %v2379 = vpop.f32.mrb[0].mxu0
      %v2380 = vadd.f32 %v2179, %v2379
      %v2381 = vpop.f32.mrb[0].mxu0
      %2382 = vmatprep.mubr.bf16.mxu0 %v924
      %2383 = vmatmul.mubr.bf16.gmra.mrb[0].mxu0 %v830
      %v2384 = vpop.f32.mrb[0].mxu0
      %v2385 = vadd.f32 %v2184, %v2384
      %v2386 = vpop.f32.mrb[0].mxu0
      %v2387 = vpop.f32.mrb[0].mxu0
      %v2388 = vadd.f32 %v2187, %v2387
      %v2389 = vpop.f32.mrb[0].mxu0
      %2390 = vdwg.mxu0
      %2391 = vmatprep.subr.bf16.mxu0 0
      %2392 = vmatpush1.bf16.msra.mxu0 %v1507
      %2393 = vmatprep.subr.bf16.mxu0 0
      %2394 = vmatpush1.bf16.msra.mxu0 %v1508
      %2395 = vmatprep.subr.bf16.mxu0 0
      %2396 = vmatpush1.bf16.msra.mxu0 %v1509
      %2397 = vmatprep.subr.bf16.mxu0 0
      %2398 = vmatpush1.bf16.msra.mxu0 %v1510
      %2399 = vmatprep.subr.bf16.mxu0 0
      %2400 = vmatpush1.bf16.msra.mxu0 %v1511
      %2401 = vmatprep.subr.bf16.mxu0 0
      %2402 = vmatpush1.bf16.msra.mxu0 %v1512
      %2403 = vmatprep.subr.bf16.mxu0 0
      %2404 = vmatpush1.bf16.msra.mxu0 %v1513
      %2405 = vmatprep.subr.bf16.mxu0 0
      %2406 = vmatpush1.bf16.msra.mxu0 %v1514
      %2407 = vmatprep.subr.bf16.mxu0 0
      %2408 = vmatpush1.bf16.msra.mxu0 0
      %2409 = vmatprep.subr.bf16.mxu0 0
      %2410 = vmatpush1.bf16.msra.mxu0 0
      %2411 = vmatprep.subr.bf16.mxu0 0
      %2412 = vmatpush1.bf16.msra.mxu0 0
      %2413 = vmatprep.subr.bf16.mxu0 0
      %2414 = vmatpush1.bf16.msra.mxu0 0
      %2415 = vmatprep.subr.bf16.mxu0 0
      %2416 = vmatpush1.bf16.msra.mxu0 0
      %2417 = vmatprep.subr.bf16.mxu0 0
      %2418 = vmatpush1.bf16.msra.mxu0 0
      %2419 = vmatprep.subr.bf16.mxu0 0
      %2420 = vmatpush1.bf16.msra.mxu0 0
      %2421 = vmatprep.subr.bf16.mxu0 0
      %2422 = vmatpush1.bf16.msra.mxu0 0
      %2423 = vmatprep.mubr.bf16.mxu0 0
      %2424 = vmatmul.mubr.bf16.gmra.mrb[0].mxu0 %v949
      %v2425 = vpop.f32.mrb[0].mxu0
      %v2426 = vadd.f32 %v2225, %v2425
      %v2427 = vpop.f32.mrb[0].mxu0
      %v2428 = vpop.f32.mrb[0].mxu0
      %v2429 = vadd.f32 %v2228, %v2428
      %v2430 = vpop.f32.mrb[0].mxu0
      %2431 = vmatprep.mubr.bf16.mxu0 0
      %2432 = vmatmul.mubr.bf16.gmra.mrb[0].mxu0 %v951
      %v2433 = vpop.f32.mrb[0].mxu0
      %v2434 = vadd.f32 %v2233, %v2433
      %v2435 = vpop.f32.mrb[0].mxu0
      %v2436 = vpop.f32.mrb[0].mxu0
      %v2437 = vadd.f32 %v2236, %v2436
      %v2438 = vpop.f32.mrb[0].mxu0
      %2439 = vmatprep.mubr.bf16.mxu0 0
      %2440 = vmatmul.mubr.bf16.gmra.mrb[0].mxu0 %v953
      %v2441 = vpop.f32.mrb[0].mxu0
      %v2442 = vadd.f32 %v2241, %v2441
      %v2443 = vpop.f32.mrb[0].mxu0
      %v2444 = vpop.f32.mrb[0].mxu0
      %v2445 = vadd.f32 %v2244, %v2444
      %v2446 = vpop.f32.mrb[0].mxu0
      %2447 = vmatprep.mubr.bf16.mxu0 0
      %2448 = vmatmul.mubr.bf16.gmra.mrb[0].mxu0 %v955
      %v2449 = vpop.f32.mrb[0].mxu0
      %v2450 = vadd.f32 %v2249, %v2449
      %v2451 = vpop.f32.mrb[0].mxu0
      %v2452 = vpop.f32.mrb[0].mxu0
      %v2453 = vadd.f32 %v2252, %v2452
      %v2454 = vpop.f32.mrb[0].mxu0
      %2455 = vmatprep.mubr.bf16.mxu0 0
      %2456 = vmatmul.mubr.bf16.gmra.mrb[0].mxu0 %v957
      %v2457 = vpop.f32.mrb[0].mxu0
      %v2458 = vadd.f32 %v2257, %v2457
      %v2459 = vpop.f32.mrb[0].mxu0
      %v2460 = vpop.f32.mrb[0].mxu0
      %v2461 = vadd.f32 %v2260, %v2460
      %v2462 = vpop.f32.mrb[0].mxu0
      %2463 = vmatprep.mubr.bf16.mxu0 0
      %2464 = vmatmul.mubr.bf16.gmra.mrb[0].mxu0 %v959
      %v2465 = vpop.f32.mrb[0].mxu0
      %v2466 = vadd.f32 %v2265, %v2465
      %v2467 = vpop.f32.mrb[0].mxu0
      %v2468 = vpop.f32.mrb[0].mxu0
      %v2469 = vadd.f32 %v2268, %v2468
      %v2470 = vpop.f32.mrb[0].mxu0
      %2471 = vmatprep.mubr.bf16.mxu0 0
      %2472 = vmatmul.mubr.bf16.gmra.mrb[0].mxu0 %v961
      %v2473 = vpop.f32.mrb[0].mxu0
      %v2474 = vadd.f32 %v2273, %v2473
      %v2475 = vpop.f32.mrb[0].mxu0
      %v2476 = vpop.f32.mrb[0].mxu0
      %v2477 = vadd.f32 %v2276, %v2476
      %v2478 = vpop.f32.mrb[0].mxu0
      %2479 = vmatprep.mubr.bf16.mxu0 0
      %2480 = vmatmul.mubr.bf16.gmra.mrb[0].mxu0 %v963
      %v2481 = vpop.f32.mrb[0].mxu0
      %v2482 = vadd.f32 %v2281, %v2481
      %v2483 = vpop.f32.mrb[0].mxu0
      %v2484 = vpop.f32.mrb[0].mxu0
      %v2485 = vadd.f32 %v2284, %v2484
      %v2486 = vpop.f32.mrb[0].mxu0
      %2487 = vmatprep.mubr.bf16.mxu0 0
      %2488 = vmatmul.mubr.bf16.gmra.mrb[0].mxu0 %v965
      %v2489 = vpop.f32.mrb[0].mxu0
      %v2490 = vadd.f32 %v2289, %v2489
      %v2491 = vpop.f32.mrb[0].mxu0
      %v2492 = vpop.f32.mrb[0].mxu0
      %v2493 = vadd.f32 %v2292, %v2492
      %v2494 = vpop.f32.mrb[0].mxu0
      %2495 = vmatprep.mubr.bf16.mxu0 0
      %2496 = vmatmul.mubr.bf16.gmra.mrb[0].mxu0 %v967
      %v2497 = vpop.f32.mrb[0].mxu0
      %v2498 = vadd.f32 %v2297, %v2497
      %v2499 = vpop.f32.mrb[0].mxu0
      %v2500 = vpop.f32.mrb[0].mxu0
      %v2501 = vadd.f32 %v2300, %v2500
      %v2502 = vpop.f32.mrb[0].mxu0
      %2503 = vmatprep.mubr.bf16.mxu0 0
      %2504 = vmatmul.mubr.bf16.gmra.mrb[0].mxu0 %v969
      %v2505 = vpop.f32.mrb[0].mxu0
      %v2506 = vadd.f32 %v2305, %v2505
      %v2507 = vpop.f32.mrb[0].mxu0
      %v2508 = vpop.f32.mrb[0].mxu0
      %v2509 = vadd.f32 %v2308, %v2508
      %v2510 = vpop.f32.mrb[0].mxu0
      %2511 = vmatprep.mubr.bf16.mxu0 0
      %2512 = vmatmul.mubr.bf16.gmra.mrb[0].mxu0 %v971
      %v2513 = vpop.f32.mrb[0].mxu0
      %v2514 = vadd.f32 %v2313, %v2513
      %v2515 = vpop.f32.mrb[0].mxu0
      %v2516 = vpop.f32.mrb[0].mxu0
      %v2517 = vadd.f32 %v2316, %v2516
      %v2518 = vpop.f32.mrb[0].mxu0
      %2519 = vmatprep.mubr.bf16.mxu0 0
      %2520 = vmatmul.mubr.bf16.gmra.mrb[0].mxu0 %v973
      %v2521 = vpop.f32.mrb[0].mxu0
      %v2522 = vadd.f32 %v2321, %v2521
      %v2523 = vpop.f32.mrb[0].mxu0
      %v2524 = vpop.f32.mrb[0].mxu0
      %v2525 = vadd.f32 %v2324, %v2524
      %v2526 = vpop.f32.mrb[0].mxu0
      %2527 = vmatprep.mubr.bf16.mxu0 0
      %2528 = vmatmul.mubr.bf16.gmra.mrb[0].mxu0 %v975
      %v2529 = vpop.f32.mrb[0].mxu0
      %v2530 = vadd.f32 %v2329, %v2529
      %v2531 = vpop.f32.mrb[0].mxu0
      %v2532 = vpop.f32.mrb[0].mxu0
      %v2533 = vadd.f32 %v2332, %v2532
      %v2534 = vpop.f32.mrb[0].mxu0
      %2535 = vmatprep.mubr.bf16.mxu0 0
      %2536 = vmatmul.mubr.bf16.gmra.mrb[0].mxu0 %v977
      %v2537 = vpop.f32.mrb[0].mxu0
      %v2538 = vadd.f32 %v2337, %v2537
      %v2539 = vpop.f32.mrb[0].mxu0
      %v2540 = vpop.f32.mrb[0].mxu0
      %v2541 = vadd.f32 %v2340, %v2540
      %v2542 = vpop.f32.mrb[0].mxu0
      %2543 = vmatprep.mubr.bf16.mxu0 0
      %2544 = vmatmul.mubr.bf16.gmra.mrb[0].mxu0 %v979
      %v2545 = vpop.f32.mrb[0].mxu0
      %v2546 = vadd.f32 %v2345, %v2545
      %v2547 = vpop.f32.mrb[0].mxu0
      %v2548 = vpop.f32.mrb[0].mxu0
      %v2549 = vadd.f32 %v2348, %v2548
      %v2550 = vpop.f32.mrb[0].mxu0
      %2551 = vmatprep.mubr.bf16.mxu0 0
      %2552 = vmatmul.mubr.bf16.gmra.mrb[0].mxu0 %v981
      %v2553 = vpop.f32.mrb[0].mxu0
      %v2554 = vadd.f32 %v2353, %v2553
      %v2555 = vpop.f32.mrb[0].mxu0
      %v2556 = vpop.f32.mrb[0].mxu0
      %v2557 = vadd.f32 %v2356, %v2556
      %v2558 = vpop.f32.mrb[0].mxu0
      %2559 = vmatprep.mubr.bf16.mxu0 0
      %2560 = vmatmul.mubr.bf16.gmra.mrb[0].mxu0 %v983
      %v2561 = vpop.f32.mrb[0].mxu0
      %v2562 = vadd.f32 %v2361, %v2561
      %v2563 = vpop.f32.mrb[0].mxu0
      %v2564 = vpop.f32.mrb[0].mxu0
      %v2565 = vadd.f32 %v2364, %v2564
      %v2566 = vpop.f32.mrb[0].mxu0
      %2567 = vmatprep.mubr.bf16.mxu0 0
      %2568 = vmatmul.mubr.bf16.gmra.mrb[0].mxu0 %v985
      %v2569 = vpop.f32.mrb[0].mxu0
      %v2570 = vadd.f32 %v2369, %v2569
      %v2571 = vpop.f32.mrb[0].mxu0
      %v2572 = vpop.f32.mrb[0].mxu0
      %v2573 = vadd.f32 %v2372, %v2572
      %v2574 = vpop.f32.mrb[0].mxu0
      %2575 = vmatprep.mubr.bf16.mxu0 0
      %2576 = vmatmul.mubr.bf16.gmra.mrb[0].mxu0 %v987
      %v2577 = vpop.f32.mrb[0].mxu0
      %v2578 = vadd.f32 %v2377, %v2577
      %v2579 = vpop.f32.mrb[0].mxu0
      %v2580 = vpop.f32.mrb[0].mxu0
      %v2581 = vadd.f32 %v2380, %v2580
      %v2582 = vpop.f32.mrb[0].mxu0
      %2583 = vmatprep.mubr.bf16.mxu0 0
      %2584 = vmatmul.mubr.bf16.gmra.mrb[0].mxu0 %v989
      %v2585 = vpop.f32.mrb[0].mxu0
      %v2586 = vadd.f32 %v2385, %v2585
      %v2587 = vpop.f32.mrb[0].mxu0
      %v2588 = vpop.f32.mrb[0].mxu0
      %v2589 = vadd.f32 %v2388, %v2588
      %v2590 = vpop.f32.mrb[0].mxu0
      %2591 = vdwg.mxu0
      %v2592 = vtanh.pop %v2426
      %v2593 = vtanh.pop %v2429
      %v2594 = vtanh.pop %v2434
      %v2595 = vtanh.pop %v2437
      %v2596 = vtanh.pop %v2442
      %v2597 = vtanh.pop %v2445
      %v2598 = vtanh.pop %v2450
      %v2599 = vtanh.pop %v2453
      %v2600 = vtanh.pop %v2458
      %v2601 = vtanh.pop %v2461
      %v2602 = vtanh.pop %v2466
      %v2603 = vtanh.pop %v2469
      %v2604 = vtanh.pop %v2474
      %v2605 = vtanh.pop %v2477
      %v2606 = vtanh.pop %v2482
      %v2607 = vtanh.pop %v2485
      %v2608 = vtanh.pop %v2490
      %v2609 = vtanh.pop %v2493
      %v2610 = vtanh.pop %v2498
      %v2611 = vtanh.pop %v2501
      %v2612 = vtanh.pop %v2506
      %v2613 = vtanh.pop %v2509
      %v2614 = vtanh.pop %v2514
      %v2615 = vtanh.pop %v2517
      %v2616 = vtanh.pop %v2522
      %v2617 = vtanh.pop %v2525
      %v2618 = vtanh.pop %v2530
      %v2619 = vtanh.pop %v2533
      %v2620 = vtanh.pop %v2538
      %v2621 = vtanh.pop %v2541
      %v2622 = vtanh.pop %v2546
      %v2623 = vtanh.pop %v2549
      %v2624 = vtanh.pop %v2554
      %v2625 = vtanh.pop %v2557
      %v2626 = vtanh.pop %v2562
      %v2627 = vtanh.pop %v2565
      %v2628 = vtanh.pop %v2570
      %v2629 = vtanh.pop %v2573
      %v2630 = vtanh.pop %v2578
      %v2631 = vtanh.pop %v2581
      %v2632 = vtanh.pop %v2586
      %v2633 = vtanh.pop %v2589
      %2634 = vst [vmem:[%s113] sm:$0xff] %v2592
      %2635 = vst [vmem:[%s113 + $0x8] sm:$0xff] %v2593
      %2636 = vst [vmem:[%s113 + $0x10] sm:$0xff] %v2594
      %2637 = vst [vmem:[%s113 + $0x18] sm:$0xff] %v2595
      %2638 = vst [vmem:[%s113 + $0x20] sm:$0xff] %v2596
      %2639 = vst [vmem:[%s113 + $0x28] sm:$0xff] %v2597
      %2640 = vst [vmem:[%s113 + $0x30] sm:$0xff] %v2598
      %2641 = vst [vmem:[%s113 + $0x38] sm:$0xff] %v2599
      %2642 = vst [vmem:[%s113 + $0x40] sm:$0xff] %v2600
      %2643 = vst [vmem:[%s113 + $0x48] sm:$0xff] %v2601
      %2644 = vst [vmem:[%s113 + $0x50] sm:$0xff] %v2602
      %2645 = vst [vmem:[%s113 + $0x58] sm:$0xff] %v2603
      %2646 = vst [vmem:[%s113 + $0x60] sm:$0xff] %v2604
      %2647 = vst [vmem:[%s113 + $0x68] sm:$0xff] %v2605
      %2648 = vst [vmem:[%s113 + $0x70] sm:$0xff] %v2606
      %2649 = vst [vmem:[%s113 + $0x78] sm:$0xff] %v2607
      %2650 = vst [vmem:[%s113 + $0x80] sm:$0xff] %v2608
      %2651 = vst [vmem:[%s113 + $0x88] sm:$0xff] %v2609
      %2652 = vst [vmem:[%s113 + $0x90] sm:$0xff] %v2610
      %2653 = vst [vmem:[%s113 + $0x98] sm:$0xff] %v2611
      %2654 = vst [vmem:[%s113 + $0xa0] sm:$0xff] %v2612
      %2655 = vst [vmem:[%s113 + $0xa8] sm:$0xff] %v2613
      %2656 = vst [vmem:[%s113 + $0xb0] sm:$0xff] %v2614
      %2657 = vst [vmem:[%s113 + $0xb8] sm:$0xff] %v2615
      %2658 = vst [vmem:[%s113 + $0xc0] sm:$0xff] %v2616
      %2659 = vst [vmem:[%s113 + $0xc8] sm:$0xff] %v2617
      %2660 = vst [vmem:[%s113 + $0xd0] sm:$0xff] %v2618
      %2661 = vst [vmem:[%s113 + $0xd8] sm:$0xff] %v2619
      %2662 = vst [vmem:[%s113 + $0xe0] sm:$0xff] %v2620
      %2663 = vst [vmem:[%s113 + $0xe8] sm:$0xff] %v2621
      %2664 = vst [vmem:[%s113 + $0xf0] sm:$0xff] %v2622
      %2665 = vst [vmem:[%s113 + $0xf8] sm:$0xff] %v2623
      %2666 = vst [vmem:[%s113 + $0x100] sm:$0xff] %v2624
      %2667 = vst [vmem:[%s113 + $0x108] sm:$0xff] %v2625
      %2668 = vst [vmem:[%s113 + $0x110] sm:$0xff] %v2626
      %2669 = vst [vmem:[%s113 + $0x118] sm:$0xff] %v2627
      %2670 = vst [vmem:[%s113 + $0x120] sm:$0xff] %v2628
      %2671 = vst [vmem:[%s113 + $0x128] sm:$0xff] %v2629
      %2672 = vst [vmem:[%s113 + $0x130] sm:$0xff] %v2630
      %2673 = vst [vmem:[%s113 + $0x138] sm:$0xff] %v2631
      %2674 = vst [vmem:[%s113 + $0x140] sm:$0xff] %v2632
      %2675 = vst [vmem:[%s113 + $0x148] sm:$0xff] %v2633
      %s2676 = sadd.s32 %s17, %s18
      %s2677 = smul.u32 42, %s2676
      %p2678 = scmp.lt.s32.totalorder %s2677, 83
      %s2679 = scalar_select %p2678, %s2677, 83
      %s2680 = smul.addr %s2679, 8
      %s2681 = scalar_lea.vmem %s2, %s2680
      // Predicated region
      $region101: #{generator_forward.67} parent=23 // pred_check
        %p2682 = pneg %p66
      $region102: #{generator_forward.67} parent=23 // pred_check_branch
        %2684 = sbr.rel (%p2682) target = $region104
      $region103: #{generator_forward.67} parent=23 // pred_region
        %s2685 = sadd.s32 %s17, %s18
        %s2686 = smul.u32 42, %s2685
      $region104: #{generator_forward.67} parent=23 // pred_fallthru
        _
    $region24: #{generator_forward.67} parent=5 // pred_fallthru
      _
    %p2687 = scmp.le.s32.totalorder 2, %s8
    // Predicated region
    $region105: #{generator_forward.67} parent=5 // pred_check
      %p2688 = pneg %p2687
    $region106: #{generator_forward.67} parent=5 // pred_check_branch
      %2690 = sbr.rel (%p2688) target = $region108
    $region107: #{generator_forward.67} parent=5 // pred_region
      %s2691 = ssub.s32 %s8, 2
      // Predicated region
      $region109: #{generator_forward.67} parent=107 // pred_check
        %p2692 = pneg %p72
      $region110: #{generator_forward.67} parent=107 // pred_check_branch
        %2694 = sbr.rel (%p2692) target = $region112
      $region111: #{generator_forward.67} parent=107 // pred_region
        %s2695 = sadd.s32 %s19, %s20
        %s2696 = smul.u32 42, %s2695
        %p2697 = scmp.lt.s32.totalorder %s2696, 83
        %s2698 = scalar_select %p2697, %s2696, 83
        %s2699 = smul.addr %s2698, 8
        %s2700 = scalar_lea.vmem %s2, %s2699
      $region112: #{generator_forward.67} parent=107 // pred_fallthru
        _
    $region108: #{generator_forward.67} parent=5 // pred_fallthru
      _
  $region6: #{generator_forward.67} parent=0 // loop_footer
    %s12 = sadd.s32 1, %s8
  $region7: #{generator_forward.67} parent=0 // loop_footer_branch
    %7 = sbr.rel target = $region3
  $region8: #{generator_forward.67} parent=0 // loop_exit
    _
  %2701 = vsyncmov [#allocation3]
  %s2702 = vpop.sfrf %2701
  %p2703 = scmp.eq.s32.totalorder %s2702, 0
  %p2704 = pneg %p2703
  %2706 = shalt.err (%p2704)
  %s2707 = scalar_lea.sflag [#allocation3], 1
  %2708 = vsyncmov %s2707
  %s2709 = vpop.sfrf %2708
  %p2710 = scmp.eq.s32.totalorder %s2709, 0
  %p2711 = pneg %p2710
  %2713 = shalt.err (%p2711)

</llo_original>
